<compile_context>
chip_gen: v5e
topology: v5e:2x2
jax: 0.10.0
libtpu: 0.0.40
codegen_flags: <defaults>
</compile_context>

<pallas_src>
import jax
import jax.numpy as jnp
from jax import lax
from jax.experimental import pallas as pl
from jax.experimental.pallas import tpu as pltpu

EPS = 1e-5
H = 14
W = 14
HW = H * W
C = 1024
GROUPS = 64
CG = C // GROUPS          # 16 channels per group
CB = 256                  # output channels handled per grid step
GB = CB // CG             # 16 groups per grid step
STEPS = C // CB           # 4 grid steps
PAD = W + 1               # 15 = max |flattened 3x3 tap shift| (dh*W + dw)
NTAPS = 9


def _fused_kernel(x_ref, w1_ref, g1_ref, b1_ref, w2_ref, g2_ref, b2_ref,
                  o_ref, patch_ref):
    # x_ref : (C, HW)    bf16 channel-first input (constant block -> DMA'd once)
    # w1_ref: (CB, C)    bf16 1x1-conv weights for this step's output channels
    # g1_ref, b1_ref: (CB, 1) f32
    # w2_ref: (GB, CG, 9*CG) bf16 grouped 3x3 weights, last axis = (tap*CG + ci)
    # g2_ref, b2_ref: (CB, 1) f32
    # o_ref : (CB, HW)   f32 output
    # patch_ref: (GB, 9*CG, HW) bf16 VMEM scratch (im2col per group)
    inv_hw = 1.0 / HW

    # ---- relu79 -> conv2d85 (1x1 conv == GEMM, bf16 operands, f32 accum) ----
    x = jnp.maximum(x_ref[...], 0)                                       # relu79 (bf16)
    y = jnp.dot(w1_ref[...], x, preferred_element_type=jnp.float32)      # (CB, HW) f32

    # ---- batchnorm2d85 (training-mode batch stats, f32) -> relu82 ----
    m1 = jnp.sum(y, axis=1, keepdims=True) * inv_hw
    v1 = jnp.sum(y * y, axis=1, keepdims=True) * inv_hw - m1 * m1
    s1 = g1_ref[...] * lax.rsqrt(v1 + EPS)
    y = jnp.maximum(y * s1 + (b1_ref[...] - m1 * s1), 0.0)               # relu82, f32

    # ---- conv2d86: 3x3, pad=1, groups. Write 9 shifted taps into scratch ----
    zpad = jnp.zeros((CB, PAD), jnp.float32)
    y_ext = jnp.concatenate([zpad, y, zpad], axis=1)                     # (CB, HW + 2*PAD)
    col = lax.broadcasted_iota(jnp.int32, (1, HW), 1) % W                # w coord per lane
    lmask = col >= 1                                                     # valid for dw = -1
    rmask = col < (W - 1)                                                # valid for dw = +1
    t = 0
    for dh in (-1, 0, 1):
        for dw in (-1, 0, 1):
            s = dh * W + dw
            tap = y_ext[:, PAD + s:PAD + s + HW]                         # zero-filled H edges
            if dw == -1:
                tap = jnp.where(lmask, tap, 0.0)                         # mask W wrap-around
            elif dw == 1:
                tap = jnp.where(rmask, tap, 0.0)
            # one strided store per tap: rows (tap*CG .. tap*CG+CG) of each group
            patch_ref[:, t * CG:(t + 1) * CG, :] = (
                tap.astype(jnp.bfloat16).reshape(GB, CG, HW))
            t += 1

    # ---- 16 per-group GEMMs as a single batched dot (bf16 -> f32 accum) ----
    # (GB, CG, 9*CG) @ (GB, 9*CG, HW) -> (GB, CG, HW)
    z = jnp.einsum("gok,gkp->gop", w2_ref[...], patch_ref[...],
                   preferred_element_type=jnp.float32).reshape(CB, HW)

    # ---- batchnorm2d86 (training-mode batch stats) ----
    m2 = jnp.sum(z, axis=1, keepdims=True) * inv_hw
    v2 = jnp.sum(z * z, axis=1, keepdims=True) * inv_hw - m2 * m2
    s2 = g2_ref[...] * lax.rsqrt(v2 + EPS)
    o_ref[...] = z * s2 + (b2_ref[...] - m2 * s2)


def forward(x, w1, g1, b1, w2, g2, b2):
    n, c, h, w = x.shape
    assert (n, c, h, w) == (1, C, H, W), "module input is x279: [1, 1024, 14, 14]"

    # NCHW with N=1 -> already channel-first; cast matmul operands to bf16.
    x_cm = x.reshape(C, HW).astype(jnp.bfloat16)
    w1_r = w1.reshape(C, C).astype(jnp.bfloat16)              # (Cout, Cin)
    # (Cout, CgIn, 3, 3) -> (G, CgOut, CgIn, 9) -> (G, CgOut, 9, CgIn) -> (G, CgOut, 9*CgIn)
    w2_r = (w2.reshape(GROUPS, CG, CG, 9)
              .transpose(0, 1, 3, 2)
              .reshape(GROUPS, CG, 9 * CG)
              .astype(jnp.bfloat16))
    g1c = g1.reshape(C, 1)
    b1c = b1.reshape(C, 1)
    g2c = g2.reshape(C, 1)
    b2c = b2.reshape(C, 1)

    out = pl.pallas_call(
        _fused_kernel,
        out_shape=jax.ShapeDtypeStruct((C, HW), jnp.float32),
        grid=(STEPS,),
        in_specs=[
            pl.BlockSpec((C, HW), lambda i: (0, 0)),              # x (constant block)
            pl.BlockSpec((CB, C), lambda i: (i, 0)),              # w1 chunk (bf16)
            pl.BlockSpec((CB, 1), lambda i: (i, 0)),              # bn1 gamma
            pl.BlockSpec((CB, 1), lambda i: (i, 0)),              # bn1 beta
            pl.BlockSpec((GB, CG, 9 * CG), lambda i: (i, 0, 0)),  # w2 groups chunk (bf16)
            pl.BlockSpec((CB, 1), lambda i: (i, 0)),              # bn2 gamma
            pl.BlockSpec((CB, 1), lambda i: (i, 0)),              # bn2 beta
        ],
        out_specs=pl.BlockSpec((CB, HW), lambda i: (i, 0)),
        scratch_shapes=[pltpu.VMEM((GB, NTAPS * CG, HW), jnp.bfloat16)],
        compiler_params=pltpu.CompilerParams(
            dimension_semantics=("parallel",),
            vmem_limit_bytes=32 * 1024 * 1024,
        ),
    )(x_cm, w1_r, g1c, b1c, w2_r, g2c, b2c)

    return out.reshape(1, C, H, W)


def reference(x, w1, g1, b1, w2, g2, b2):
    hi = jax.lax.Precision.HIGHEST
    y = jnp.maximum(x, 0.0)
    y = jax.lax.conv_general_dilated(
        y, w1, (1, 1), "VALID",
        dimension_numbers=("NCHW", "OIHW", "NCHW"), precision=hi)
    m = y.mean(axis=(0, 2, 3), keepdims=True)
    v = ((y - m) ** 2).mean(axis=(0, 2, 3), keepdims=True)
    y = (y - m) * jax.lax.rsqrt(v + EPS) * g1.reshape(1, -1, 1, 1) + b1.reshape(1, -1, 1, 1)
    y = jnp.maximum(y, 0.0)
    z = jax.lax.conv_general_dilated(
        y, w2, (1, 1), ((1, 1), (1, 1)),
        dimension_numbers=("NCHW", "OIHW", "NCHW"),
        feature_group_count=GROUPS, precision=hi)
    m = z.mean(axis=(0, 2, 3), keepdims=True)
    v = ((z - m) ** 2).mean(axis=(0, 2, 3), keepdims=True)
    return (z - m) * jax.lax.rsqrt(v + EPS) * g2.reshape(1, -1, 1, 1) + b2.reshape(1, -1, 1, 1)


if __name__ == "__main__":
    key = jax.random.PRNGKey(0)
    k = jax.random.split(key, 7)

    x = jax.random.normal(k[0], (1, C, H, W), jnp.float32)
    # conv2d85: Conv2d(1024, 1024, 1x1, bias=False)
    w1 = jax.random.normal(k[1], (C, C, 1, 1), jnp.float32) * (2.0 / C) ** 0.5
    # batchnorm2d85 affine params
    g1 = 1.0 + 0.1 * jax.random.normal(k[2], (C,), jnp.float32)
    b1 = 0.1 * jax.random.normal(k[3], (C,), jnp.float32)
    # conv2d86: Conv2d(1024, 1024, 3x3, padding=1, groups=64, bias=False)
    w2 = jax.random.normal(k[4], (C, CG, 3, 3), jnp.float32) * (2.0 / (CG * 9)) ** 0.5
    # batchnorm2d86 affine params
    g2 = 1.0 + 0.1 * jax.random.normal(k[5], (C,), jnp.float32)
    b2 = 0.1 * jax.random.normal(k[6], (C,), jnp.float32)

    out = jax.block_until_ready(jax.jit(forward)(x, w1, g1, b1, w2, g2, b2))
    ref = jax.block_until_ready(reference(x, w1, g1, b1, w2, g2, b2))

    assert out.shape == (1, C, H, W), out.shape
    max_err = float(jnp.max(jnp.abs(out - ref)))
    assert max_err < 5e-2, f"max abs error {max_err}"
    print("KERNEL_OK")
</pallas_src>

<mosaic_0001>
module attributes {stable_mosaic.version = 11 : i64} {
  func.func @_fused_kernel(%arg0: i32, %arg1: memref<1024x196xbf16, #tpu.memory_space<vmem>>, %arg2: memref<256x1024xbf16, #tpu.memory_space<vmem>>, %arg3: memref<256x1xf32, #tpu.memory_space<vmem>>, %arg4: memref<256x1xf32, #tpu.memory_space<vmem>>, %arg5: memref<16x16x144xbf16, #tpu.memory_space<vmem>>, %arg6: memref<256x1xf32, #tpu.memory_space<vmem>>, %arg7: memref<256x1xf32, #tpu.memory_space<vmem>>, %arg8: memref<256x196xf32, #tpu.memory_space<vmem>>, %arg9: memref<16x144x196xbf16, #tpu.memory_space<vmem>>) attributes {dimension_semantics = [#tpu.dimension_semantics<parallel>], iteration_bounds = array<i64: 4>, scalar_prefetch = 0 : i64, scratch_operands = 1 : i64, tpu.core_type = #tpu.core_type<tc>, window_params = [{pipeline_mode = #tpu.pipeline_mode<synchronous>, transform_indices = @transform_0, window_bounds = array<i64: 1024, 196>}, {transform_indices = @transform_1, window_bounds = array<i64: 256, 1024>}, {transform_indices = @transform_2, window_bounds = array<i64: 256, 1>}, {transform_indices = @transform_3, window_bounds = array<i64: 256, 1>}, {transform_indices = @transform_4, window_bounds = array<i64: 16, 16, 144>}, {transform_indices = @transform_5, window_bounds = array<i64: 256, 1>}, {transform_indices = @transform_6, window_bounds = array<i64: 256, 1>}, {transform_indices = @transform_7, window_bounds = array<i64: 256, 196>}]} {
    %c0 = arith.constant 0 : index
    %c0_0 = arith.constant 0 : index
    %0 = vector.load %arg1[%c0, %c0_0] : memref<1024x196xbf16, #tpu.memory_space<vmem>>, vector<1024x196xbf16>
    %cst = arith.constant 0.000000e+00 : bf16
    %1 = vector.broadcast %cst : bf16 to vector<1024x196xbf16>
    %2 = arith.maximumf %0, %1 : vector<1024x196xbf16>
    %c0_1 = arith.constant 0 : index
    %c0_2 = arith.constant 0 : index
    %3 = vector.load %arg2[%c0_1, %c0_2] : memref<256x1024xbf16, #tpu.memory_space<vmem>>, vector<256x1024xbf16>
    %cst_3 = arith.constant dense<0.000000e+00> : vector<256x196xf32>
    %4 = tpu.matmul %3, %2, %cst_3 {dimension_numbers = #tpu.dot_dimension_numbers<[1], [0], [0], [1], [0, 0, 1, 1], [], []>} : vector<256x1024xbf16>, vector<1024x196xbf16>, vector<256x196xf32> -> vector<256x196xf32>
    %cst_4 = arith.constant dense<0.000000e+00> : vector<256xf32>
    %5 = vector.multi_reduction <add>, %4, %cst_4 [1] : vector<256x196xf32> to vector<256xf32>
    %6 = vector.shape_cast %5 : vector<256xf32> to vector<256x1xf32>
    %cst_5 = arith.constant 0.00510204071 : f32
    %7 = vector.broadcast %cst_5 : f32 to vector<256x1xf32>
    %8 = arith.mulf %6, %7 : vector<256x1xf32>
    %9 = arith.mulf %4, %4 : vector<256x196xf32>
    %cst_6 = arith.constant dense<0.000000e+00> : vector<256xf32>
    %10 = vector.multi_reduction <add>, %9, %cst_6 [1] : vector<256x196xf32> to vector<256xf32>
    %11 = vector.shape_cast %10 : vector<256xf32> to vector<256x1xf32>
    %cst_7 = arith.constant 0.00510204071 : f32
    %12 = vector.broadcast %cst_7 : f32 to vector<256x1xf32>
    %13 = arith.mulf %11, %12 : vector<256x1xf32>
    %14 = arith.mulf %8, %8 : vector<256x1xf32>
    %15 = arith.subf %13, %14 : vector<256x1xf32>
    %c0_8 = arith.constant 0 : index
    %c0_9 = arith.constant 0 : index
    %16 = vector.load %arg3[%c0_8, %c0_9] : memref<256x1xf32, #tpu.memory_space<vmem>>, vector<256x1xf32>
    %cst_10 = arith.constant 9.99999974E-6 : f32
    %17 = vector.broadcast %cst_10 : f32 to vector<256x1xf32>
    %18 = arith.addf %15, %17 : vector<256x1xf32>
    %19 = math.rsqrt %18 : vector<256x1xf32>
    %20 = arith.mulf %16, %19 : vector<256x1xf32>
    %21 = vector.broadcast %20 : vector<256x1xf32> to vector<256x196xf32>
    %22 = arith.mulf %4, %21 : vector<256x196xf32>
    %c0_11 = arith.constant 0 : index
    %c0_12 = arith.constant 0 : index
    %23 = vector.load %arg4[%c0_11, %c0_12] : memref<256x1xf32, #tpu.memory_space<vmem>>, vector<256x1xf32>
    %24 = arith.mulf %8, %20 : vector<256x1xf32>
    %25 = arith.subf %23, %24 : vector<256x1xf32>
    %26 = vector.broadcast %25 : vector<256x1xf32> to vector<256x196xf32>
    %27 = arith.addf %22, %26 : vector<256x196xf32>
    %cst_13 = arith.constant 0.000000e+00 : f32
    %28 = vector.broadcast %cst_13 : f32 to vector<256x196xf32>
    %29 = arith.maximumf %27, %28 : vector<256x196xf32>
    %cst_14 = arith.constant 0.000000e+00 : f32
    %30 = vector.broadcast %cst_14 : f32 to vector<256x15xf32>
    %31 = tpu.concatenate %30, %29, %30 in 1 : vector<256x15xf32>, vector<256x196xf32>, vector<256x15xf32> -> vector<256x226xf32>
    %32 = tpu.iota {dimensions = array<i32: 1>} : vector<1x196xi32>
    %c14_i32 = arith.constant 14 : i32
    %c0_i32 = arith.constant 0 : i32
    %33 = arith.cmpi eq, %c14_i32, %c0_i32 : i32
    %c1_i32 = arith.constant 1 : i32
    %34 = arith.select %33, %c1_i32, %c14_i32 : i32
    %35 = vector.broadcast %34 : i32 to vector<1x196xi32>
    %36 = arith.remsi %32, %35 : vector<1x196xi32>
    %c0_i32_15 = arith.constant 0 : i32
    %37 = vector.broadcast %c0_i32_15 : i32 to vector<1x196xi32>
    %38 = arith.cmpi ne, %36, %37 : vector<1x196xi32>
    %c0_i32_16 = arith.constant 0 : i32
    %39 = vector.broadcast %c0_i32_16 : i32 to vector<1x196xi32>
    %40 = arith.cmpi slt, %36, %39 : vector<1x196xi32>
    %c0_i32_17 = arith.constant 0 : i32
    %41 = arith.cmpi slt, %34, %c0_i32_17 : i32
    %42 = vector.broadcast %41 : i1 to vector<1x196xi1>
    %43 = vector.broadcast %42 : vector<1x196xi1> to vector<1x196xi1>
    %44 = arith.xori %40, %43 : vector<1x196xi1>
    %45 = arith.andi %44, %38 : vector<1x196xi1>
    %46 = vector.broadcast %34 : i32 to vector<1x196xi32>
    %47 = arith.addi %36, %46 : vector<1x196xi32>
    %48 = arith.select %45, %47, %36 : vector<1x196xi1>, vector<1x196xi32>
    %c1_i32_18 = arith.constant 1 : i32
    %49 = vector.broadcast %c1_i32_18 : i32 to vector<1x196xi32>
    %50 = arith.cmpi sge, %48, %49 : vector<1x196xi32>
    %c13_i32 = arith.constant 13 : i32
    %51 = vector.broadcast %c13_i32 : i32 to vector<1x196xi32>
    %52 = arith.cmpi slt, %48, %51 : vector<1x196xi32>
    %53 = vector.extract_strided_slice %31 {offsets = [0, 0], sizes = [256, 196], strides = [1, 1]} : vector<256x226xf32> to vector<256x196xf32>
    %cst_19 = arith.constant 0.000000e+00 : f32
    %54 = vector.shape_cast %50 : vector<1x196xi1> to vector<1x196xi1>
    %55 = vector.broadcast %54 : vector<1x196xi1> to vector<256x196xi1>
    %56 = vector.broadcast %cst_19 : f32 to vector<256x196xf32>
    %57 = arith.select %55, %53, %56 : vector<256x196xi1>, vector<256x196xf32>
    %58 = arith.truncf %57 : vector<256x196xf32> to vector<256x196xbf16>
    %59 = vector.shape_cast %58 : vector<256x196xbf16> to vector<16x16x196xbf16>
    %c0_20 = arith.constant 0 : index
    %c0_21 = arith.constant 0 : index
    %c0_22 = arith.constant 0 : index
    %60 = vector.load %arg9[%c0_20, %c0_21, %c0_22] : memref<16x144x196xbf16, #tpu.memory_space<vmem>>, vector<16x16x196xbf16>
    tpu.vector_store %arg9[%c0_20, %c0_21, %c0_22], %59 {strides = array<i32>} : memref<16x144x196xbf16, #tpu.memory_space<vmem>>, vector<16x16x196xbf16>,
    %61 = vector.extract_strided_slice %31 {offsets = [0, 1], sizes = [256, 196], strides = [1, 1]} : vector<256x226xf32> to vector<256x196xf32>
    %62 = arith.truncf %61 : vector<256x196xf32> to vector<256x196xbf16>
    %63 = vector.shape_cast %62 : vector<256x196xbf16> to vector<16x16x196xbf16>
    %c0_23 = arith.constant 0 : index
    %c16 = arith.constant 16 : index
    %c0_24 = arith.constant 0 : index
    %64 = vector.load %arg9[%c0_23, %c16, %c0_24] : memref<16x144x196xbf16, #tpu.memory_space<vmem>>, vector<16x16x196xbf16>
    tpu.vector_store %arg9[%c0_23, %c16, %c0_24], %63 {strides = array<i32>} : memref<16x144x196xbf16, #tpu.memory_space<vmem>>, vector<16x16x196xbf16>,
    %65 = vector.extract_strided_slice %31 {offsets = [0, 2], sizes = [256, 196], strides = [1, 1]} : vector<256x226xf32> to vector<256x196xf32>
    %cst_25 = arith.constant 0.000000e+00 : f32
    %66 = vector.shape_cast %52 : vector<1x196xi1> to vector<1x196xi1>
    %67 = vector.broadcast %66 : vector<1x196xi1> to vector<256x196xi1>
    %68 = vector.broadcast %cst_25 : f32 to vector<256x196xf32>
    %69 = arith.select %67, %65, %68 : vector<256x196xi1>, vector<256x196xf32>
    %70 = arith.truncf %69 : vector<256x196xf32> to vector<256x196xbf16>
    %71 = vector.shape_cast %70 : vector<256x196xbf16> to vector<16x16x196xbf16>
    %c0_26 = arith.constant 0 : index
    %c32 = arith.constant 32 : index
    %c0_27 = arith.constant 0 : index
    %72 = vector.load %arg9[%c0_26, %c32, %c0_27] : memref<16x144x196xbf16, #tpu.memory_space<vmem>>, vector<16x16x196xbf16>
    tpu.vector_store %arg9[%c0_26, %c32, %c0_27], %71 {strides = array<i32>} : memref<16x144x196xbf16, #tpu.memory_space<vmem>>, vector<16x16x196xbf16>,
    %73 = vector.extract_strided_slice %31 {offsets = [0, 14], sizes = [256, 196], strides = [1, 1]} : vector<256x226xf32> to vector<256x196xf32>
    %cst_28 = arith.constant 0.000000e+00 : f32
    %74 = vector.shape_cast %50 : vector<1x196xi1> to vector<1x196xi1>
    %75 = vector.broadcast %74 : vector<1x196xi1> to vector<256x196xi1>
    %76 = vector.broadcast %cst_28 : f32 to vector<256x196xf32>
    %77 = arith.select %75, %73, %76 : vector<256x196xi1>, vector<256x196xf32>
    %78 = arith.truncf %77 : vector<256x196xf32> to vector<256x196xbf16>
    %79 = vector.shape_cast %78 : vector<256x196xbf16> to vector<16x16x196xbf16>
    %c0_29 = arith.constant 0 : index
    %c48 = arith.constant 48 : index
    %c0_30 = arith.constant 0 : index
    %80 = vector.load %arg9[%c0_29, %c48, %c0_30] : memref<16x144x196xbf16, #tpu.memory_space<vmem>>, vector<16x16x196xbf16>
    tpu.vector_store %arg9[%c0_29, %c48, %c0_30], %79 {strides = array<i32>} : memref<16x144x196xbf16, #tpu.memory_space<vmem>>, vector<16x16x196xbf16>,
    %81 = vector.extract_strided_slice %31 {offsets = [0, 15], sizes = [256, 196], strides = [1, 1]} : vector<256x226xf32> to vector<256x196xf32>
    %82 = arith.truncf %81 : vector<256x196xf32> to vector<256x196xbf16>
    %83 = vector.shape_cast %82 : vector<256x196xbf16> to vector<16x16x196xbf16>
    %c0_31 = arith.constant 0 : index
    %c64 = arith.constant 64 : index
    %c0_32 = arith.constant 0 : index
    %84 = vector.load %arg9[%c0_31, %c64, %c0_32] : memref<16x144x196xbf16, #tpu.memory_space<vmem>>, vector<16x16x196xbf16>
    tpu.vector_store %arg9[%c0_31, %c64, %c0_32], %83 {strides = array<i32>} : memref<16x144x196xbf16, #tpu.memory_space<vmem>>, vector<16x16x196xbf16>,
    %85 = vector.extract_strided_slice %31 {offsets = [0, 16], sizes = [256, 196], strides = [1, 1]} : vector<256x226xf32> to vector<256x196xf32>
    %cst_33 = arith.constant 0.000000e+00 : f32
    %86 = vector.shape_cast %52 : vector<1x196xi1> to vector<1x196xi1>
    %87 = vector.broadcast %86 : vector<1x196xi1> to vector<256x196xi1>
    %88 = vector.broadcast %cst_33 : f32 to vector<256x196xf32>
    %89 = arith.select %87, %85, %88 : vector<256x196xi1>, vector<256x196xf32>
    %90 = arith.truncf %89 : vector<256x196xf32> to vector<256x196xbf16>
    %91 = vector.shape_cast %90 : vector<256x196xbf16> to vector<16x16x196xbf16>
    %c0_34 = arith.constant 0 : index
    %c80 = arith.constant 80 : index
    %c0_35 = arith.constant 0 : index
    %92 = vector.load %arg9[%c0_34, %c80, %c0_35] : memref<16x144x196xbf16, #tpu.memory_space<vmem>>, vector<16x16x196xbf16>
    tpu.vector_store %arg9[%c0_34, %c80, %c0_35], %91 {strides = array<i32>} : memref<16x144x196xbf16, #tpu.memory_space<vmem>>, vector<16x16x196xbf16>,
    %93 = vector.extract_strided_slice %31 {offsets = [0, 28], sizes = [256, 196], strides = [1, 1]} : vector<256x226xf32> to vector<256x196xf32>
    %cst_36 = arith.constant 0.000000e+00 : f32
    %94 = vector.shape_cast %50 : vector<1x196xi1> to vector<1x196xi1>
    %95 = vector.broadcast %94 : vector<1x196xi1> to vector<256x196xi1>
    %96 = vector.broadcast %cst_36 : f32 to vector<256x196xf32>
    %97 = arith.select %95, %93, %96 : vector<256x196xi1>, vector<256x196xf32>
    %98 = arith.truncf %97 : vector<256x196xf32> to vector<256x196xbf16>
    %99 = vector.shape_cast %98 : vector<256x196xbf16> to vector<16x16x196xbf16>
    %c0_37 = arith.constant 0 : index
    %c96 = arith.constant 96 : index
    %c0_38 = arith.constant 0 : index
    %100 = vector.load %arg9[%c0_37, %c96, %c0_38] : memref<16x144x196xbf16, #tpu.memory_space<vmem>>, vector<16x16x196xbf16>
    tpu.vector_store %arg9[%c0_37, %c96, %c0_38], %99 {strides = array<i32>} : memref<16x144x196xbf16, #tpu.memory_space<vmem>>, vector<16x16x196xbf16>,
    %101 = vector.extract_strided_slice %31 {offsets = [0, 29], sizes = [256, 196], strides = [1, 1]} : vector<256x226xf32> to vector<256x196xf32>
    %102 = arith.truncf %101 : vector<256x196xf32> to vector<256x196xbf16>
    %103 = vector.shape_cast %102 : vector<256x196xbf16> to vector<16x16x196xbf16>
    %c0_39 = arith.constant 0 : index
    %c112 = arith.constant 112 : index
    %c0_40 = arith.constant 0 : index
    %104 = vector.load %arg9[%c0_39, %c112, %c0_40] : memref<16x144x196xbf16, #tpu.memory_space<vmem>>, vector<16x16x196xbf16>
    tpu.vector_store %arg9[%c0_39, %c112, %c0_40], %103 {strides = array<i32>} : memref<16x144x196xbf16, #tpu.memory_space<vmem>>, vector<16x16x196xbf16>,
    %105 = vector.extract_strided_slice %31 {offsets = [0, 30], sizes = [256, 196], strides = [1, 1]} : vector<256x226xf32> to vector<256x196xf32>
    %cst_41 = arith.constant 0.000000e+00 : f32
    %106 = vector.shape_cast %52 : vector<1x196xi1> to vector<1x196xi1>
    %107 = vector.broadcast %106 : vector<1x196xi1> to vector<256x196xi1>
    %108 = vector.broadcast %cst_41 : f32 to vector<256x196xf32>
    %109 = arith.select %107, %105, %108 : vector<256x196xi1>, vector<256x196xf32>
    %110 = arith.truncf %109 : vector<256x196xf32> to vector<256x196xbf16>
    %111 = vector.shape_cast %110 : vector<256x196xbf16> to vector<16x16x196xbf16>
    %c0_42 = arith.constant 0 : index
    %c128 = arith.constant 128 : index
    %c0_43 = arith.constant 0 : index
    %112 = vector.load %arg9[%c0_42, %c128, %c0_43] : memref<16x144x196xbf16, #tpu.memory_space<vmem>>, vector<16x16x196xbf16>
    tpu.vector_store %arg9[%c0_42, %c128, %c0_43], %111 {strides = array<i32>} : memref<16x144x196xbf16, #tpu.memory_space<vmem>>, vector<16x16x196xbf16>,
    %c0_44 = arith.constant 0 : index
    %c0_45 = arith.constant 0 : index
    %c0_46 = arith.constant 0 : index
    %113 = vector.load %arg5[%c0_44, %c0_45, %c0_46] : memref<16x16x144xbf16, #tpu.memory_space<vmem>>, vector<16x16x144xbf16>
    %c0_47 = arith.constant 0 : index
    %c0_48 = arith.constant 0 : index
    %c0_49 = arith.constant 0 : index
    %114 = vector.load %arg9[%c0_47, %c0_48, %c0_49] : memref<16x144x196xbf16, #tpu.memory_space<vmem>>, vector<16x144x196xbf16>
    "tpu.trace_start"() <{level = 10 : i32, message = "gok,gkp->gop"}> : () -> ()
    %cst_50 = arith.constant dense<0.000000e+00> : vector<16x16x196xf32>
    %115 = tpu.matmul %113, %114, %cst_50 {dimension_numbers = #tpu.dot_dimension_numbers<[2], [1], [1], [2], [0, 0, 0, 1, 1, 2], [0], [0]>} : vector<16x16x144xbf16>, vector<16x144x196xbf16>, vector<16x16x196xf32> -> vector<16x16x196xf32>
    "tpu.trace_stop"() : () -> ()
    %116 = vector.shape_cast %115 : vector<16x16x196xf32> to vector<256x196xf32>
    %cst_51 = arith.constant dense<0.000000e+00> : vector<256xf32>
    %117 = vector.multi_reduction <add>, %116, %cst_51 [1] : vector<256x196xf32> to vector<256xf32>
    %118 = vector.shape_cast %117 : vector<256xf32> to vector<256x1xf32>
    %cst_52 = arith.constant 0.00510204071 : f32
    %119 = vector.broadcast %cst_52 : f32 to vector<256x1xf32>
    %120 = arith.mulf %118, %119 : vector<256x1xf32>
    %121 = arith.mulf %116, %116 : vector<256x196xf32>
    %cst_53 = arith.constant dense<0.000000e+00> : vector<256xf32>
    %122 = vector.multi_reduction <add>, %121, %cst_53 [1] : vector<256x196xf32> to vector<256xf32>
    %123 = vector.shape_cast %122 : vector<256xf32> to vector<256x1xf32>
    %cst_54 = arith.constant 0.00510204071 : f32
    %124 = vector.broadcast %cst_54 : f32 to vector<256x1xf32>
    %125 = arith.mulf %123, %124 : vector<256x1xf32>
    %126 = arith.mulf %120, %120 : vector<256x1xf32>
    %127 = arith.subf %125, %126 : vector<256x1xf32>
    %c0_55 = arith.constant 0 : index
    %c0_56 = arith.constant 0 : index
    %128 = vector.load %arg6[%c0_55, %c0_56] : memref<256x1xf32, #tpu.memory_space<vmem>>, vector<256x1xf32>
    %cst_57 = arith.constant 9.99999974E-6 : f32
    %129 = vector.broadcast %cst_57 : f32 to vector<256x1xf32>
    %130 = arith.addf %127, %129 : vector<256x1xf32>
    %131 = math.rsqrt %130 : vector<256x1xf32>
    %132 = arith.mulf %128, %131 : vector<256x1xf32>
    %133 = vector.broadcast %132 : vector<256x1xf32> to vector<256x196xf32>
    %134 = arith.mulf %116, %133 : vector<256x196xf32>
    %c0_58 = arith.constant 0 : index
    %c0_59 = arith.constant 0 : index
    %135 = vector.load %arg7[%c0_58, %c0_59] : memref<256x1xf32, #tpu.memory_space<vmem>>, vector<256x1xf32>
    %136 = arith.mulf %120, %132 : vector<256x1xf32>
    %137 = arith.subf %135, %136 : vector<256x1xf32>
    %138 = vector.broadcast %137 : vector<256x1xf32> to vector<256x196xf32>
    %139 = arith.addf %134, %138 : vector<256x196xf32>
    %c0_60 = arith.constant 0 : index
    %c0_61 = arith.constant 0 : index
    %140 = vector.load %arg8[%c0_60, %c0_61] : memref<256x196xf32, #tpu.memory_space<vmem>>, vector<256x196xf32>
    tpu.vector_store %arg8[%c0_60, %c0_61], %139 {strides = array<i32>} : memref<256x196xf32, #tpu.memory_space<vmem>>, vector<256x196xf32>,
    return
  }
  func.func @transform_0(%arg0: i32) -> (i32, i32) {
    %c0_i32 = arith.constant 0 : i32
    %c0_i32_0 = arith.constant 0 : i32
    %c0_i32_1 = arith.constant 0 : i32
    return %c0_i32, %c0_i32_0 : i32, i32
  }
  func.func @transform_1(%arg0: i32) -> (i32, i32) {
    %c0_i32 = arith.constant 0 : i32
    %c0_i32_0 = arith.constant 0 : i32
    return %arg0, %c0_i32 : i32, i32
  }
  func.func @transform_2(%arg0: i32) -> (i32, i32) {
    %c0_i32 = arith.constant 0 : i32
    %c0_i32_0 = arith.constant 0 : i32
    return %arg0, %c0_i32 : i32, i32
  }
  func.func @transform_3(%arg0: i32) -> (i32, i32) {
    %c0_i32 = arith.constant 0 : i32
    %c0_i32_0 = arith.constant 0 : i32
    return %arg0, %c0_i32 : i32, i32
  }
  func.func @transform_4(%arg0: i32) -> (i32, i32, i32) {
    %c0_i32 = arith.constant 0 : i32
    %c0_i32_0 = arith.constant 0 : i32
    %c0_i32_1 = arith.constant 0 : i32
    return %arg0, %c0_i32, %c0_i32_0 : i32, i32, i32
  }
  func.func @transform_5(%arg0: i32) -> (i32, i32) {
    %c0_i32 = arith.constant 0 : i32
    %c0_i32_0 = arith.constant 0 : i32
    return %arg0, %c0_i32 : i32, i32
  }
  func.func @transform_6(%arg0: i32) -> (i32, i32) {
    %c0_i32 = arith.constant 0 : i32
    %c0_i32_0 = arith.constant 0 : i32
    return %arg0, %c0_i32 : i32, i32
  }
  func.func @transform_7(%arg0: i32) -> (i32, i32) {
    %c0_i32 = arith.constant 0 : i32
    %c0_i32_0 = arith.constant 0 : i32
    return %arg0, %c0_i32 : i32, i32
  }
}

</mosaic_0001>

<llo_original>
// kernel: forward.1
$region0: #{forward.1}
  #allocation0 [shape = 'u32[]', space=smem, size = 0x4, offset = 0x4, fixed_abs, tag = 'smem constant byte address 0x4 - core index']
  #allocation1 [shape = 'u32[72,128]{1,0:T(1,128)}', space=vmem, size = 0x9000, scoped, tag = 'internal scratch']
  #allocation2 [shape = 'bf16[16,144,196]{2,1,0:T(8,128)(2,1)}', space=vmem, size = 0x120000, scoped, tag = 'scratch operand']
  %s0 = inlined_call_operand.vmem [shape: bf16[1024,196], index: 0, kind: input, shape index: {}]
  %s1 = inlined_call_operand.vmem [shape: bf16[1024,1024], index: 1, kind: input, shape index: {}]
  %s2 = inlined_call_operand.vmem [shape: f32[1024,1], index: 2, kind: input, shape index: {}]
  %s3 = inlined_call_operand.vmem [shape: f32[1024,1], index: 3, kind: input, shape index: {}]
  %s4 = inlined_call_operand.vmem [shape: bf16[64,16,144], index: 4, kind: input, shape index: {}]
  %s5 = inlined_call_operand.vmem [shape: f32[1024,1], index: 5, kind: input, shape index: {}]
  %s6 = inlined_call_operand.vmem [shape: f32[1024,1], index: 6, kind: input, shape index: {}]
  %s7 = inlined_call_operand.vmem [shape: f32[1024,196], index: 7, kind: output, shape index: {}]
  %s8 = sld [smem:[#allocation0]]
  $region61: #{forward.1} parent=0
    _
  %s10 = ssub.s32 1, %s8
  %s11 = scalar_select 0, %s10, %s8
  loop: start=0, step=1, limit=6
  $region2: #{forward.1} parent=0 // loop_pre_header
    _
  $region3: #{forward.1} parent=0 // loop_header
    %s13 = sphi 0, %s17
    %p14 = scmp.ge.s32.totalorder %s13, 6
    %s21 = sphi 0, %s21
    %s23 = sphi 0, %s21
    %s24 = sphi 0, %s23
    %s38 = sphi 0, %s24
    %s44 = sphi 0, %s46
    %s47 = sphi 0, %s44
    %s48 = sphi 0, %s47
    %s64 = sphi 0, %s48
    %s70 = sphi 0, %s72
    %s73 = sphi 0, %s70
    %s74 = sphi 0, %s73
    %s90 = sphi 0, %s74
    %s96 = sphi 0, %s98
    %s99 = sphi 0, %s96
    %s100 = sphi 0, %s99
    %s116 = sphi 0, %s100
    %s122 = sphi 0, %s124
    %s125 = sphi 0, %s122
    %s126 = sphi 0, %s125
    %s142 = sphi 0, %s126
    %s148 = sphi 0, %s150
    %s151 = sphi 0, %s148
    %s152 = sphi 0, %s151
    %s168 = sphi 0, %s152
    %s174 = sphi 0, %s176
    %s177 = sphi 0, %s174
    %s178 = sphi 0, %s177
    %s194 = sphi 0, %s178
    %s200 = sphi 0, %s202
    %s203 = sphi 0, %s200
    %s204 = sphi 0, %s203
    %s220 = sphi 0, %s204
  $region4: #{forward.1} parent=0 // loop_header_branch
    %16 = sbr.rel (%p14) target = $region8
  $region5: #{forward.1} parent=0 // loop_body
    %s18 = ssub.s32 %s13, 1
    %s19 = ssub.s32 %s13, 2
    %s20 = sadd.s32 %s13, 1
    %s22 = sadd.s32 %s21, 1
    %p25 = scmp.eq.s32.totalorder %s13, 3
    %p26 = scmp.ne.s32.totalorder %s21, %s23
    %p27 = scmp.eq.s32.totalorder %s13, 0
    %p28 = por %p26, %p27
    %p29 = scmp.ne.s32.totalorder %s21, %s23
    %p30 = scmp.eq.s32.totalorder %s18, 3
    %p31 = por %p29, %p30
    %p32 = scmp.ne.s32.totalorder %s23, %s24
    %p33 = scmp.eq.s32.totalorder %s18, 0
    %p34 = por %p32, %p33
    %p35 = scmp.ne.s32.totalorder %s23, %s24
    %p36 = scmp.eq.s32.totalorder %s19, 3
    %p37 = por %p35, %p36
    %p39 = scmp.ne.s32.totalorder %s24, %s38
    %p40 = scmp.eq.s32.totalorder %s19, 0
    %p41 = por %p39, %p40
    %s42 = ssub.s32 %s13, %s20
    %p43 = scmp.eq.s32.totalorder %s42, 0
    %s45 = sadd.s32 %s44, 1
    %s46 = scalar_select %p43, %s44, %s45
    %p49 = pneg %p43
    %p50 = scmp.eq.s32.totalorder %s13, 3
    %p51 = por %p49, %p50
    %p52 = scmp.ne.s32.totalorder %s44, %s47
    %p53 = scmp.eq.s32.totalorder %s13, 0
    %p54 = por %p52, %p53
    %p55 = scmp.ne.s32.totalorder %s44, %s47
    %p56 = scmp.eq.s32.totalorder %s18, 3
    %p57 = por %p55, %p56
    %p58 = scmp.ne.s32.totalorder %s47, %s48
    %p59 = scmp.eq.s32.totalorder %s18, 0
    %p60 = por %p58, %p59
    %p61 = scmp.ne.s32.totalorder %s47, %s48
    %p62 = scmp.eq.s32.totalorder %s19, 3
    %p63 = por %p61, %p62
    %p65 = scmp.ne.s32.totalorder %s48, %s64
    %p66 = scmp.eq.s32.totalorder %s19, 0
    %p67 = por %p65, %p66
    %s68 = ssub.s32 %s13, %s20
    %p69 = scmp.eq.s32.totalorder %s68, 0
    %s71 = sadd.s32 %s70, 1
    %s72 = scalar_select %p69, %s70, %s71
    %p75 = pneg %p69
    %p76 = scmp.eq.s32.totalorder %s13, 3
    %p77 = por %p75, %p76
    %p78 = scmp.ne.s32.totalorder %s70, %s73
    %p79 = scmp.eq.s32.totalorder %s13, 0
    %p80 = por %p78, %p79
    %p81 = scmp.ne.s32.totalorder %s70, %s73
    %p82 = scmp.eq.s32.totalorder %s18, 3
    %p83 = por %p81, %p82
    %p84 = scmp.ne.s32.totalorder %s73, %s74
    %p85 = scmp.eq.s32.totalorder %s18, 0
    %p86 = por %p84, %p85
    %p87 = scmp.ne.s32.totalorder %s73, %s74
    %p88 = scmp.eq.s32.totalorder %s19, 3
    %p89 = por %p87, %p88
    %p91 = scmp.ne.s32.totalorder %s74, %s90
    %p92 = scmp.eq.s32.totalorder %s19, 0
    %p93 = por %p91, %p92
    %s94 = ssub.s32 %s13, %s20
    %p95 = scmp.eq.s32.totalorder %s94, 0
    %s97 = sadd.s32 %s96, 1
    %s98 = scalar_select %p95, %s96, %s97
    %p101 = pneg %p95
    %p102 = scmp.eq.s32.totalorder %s13, 3
    %p103 = por %p101, %p102
    %p104 = scmp.ne.s32.totalorder %s96, %s99
    %p105 = scmp.eq.s32.totalorder %s13, 0
    %p106 = por %p104, %p105
    %p107 = scmp.ne.s32.totalorder %s96, %s99
    %p108 = scmp.eq.s32.totalorder %s18, 3
    %p109 = por %p107, %p108
    %p110 = scmp.ne.s32.totalorder %s99, %s100
    %p111 = scmp.eq.s32.totalorder %s18, 0
    %p112 = por %p110, %p111
    %p113 = scmp.ne.s32.totalorder %s99, %s100
    %p114 = scmp.eq.s32.totalorder %s19, 3
    %p115 = por %p113, %p114
    %p117 = scmp.ne.s32.totalorder %s100, %s116
    %p118 = scmp.eq.s32.totalorder %s19, 0
    %p119 = por %p117, %p118
    %s120 = ssub.s32 %s13, %s20
    %p121 = scmp.eq.s32.totalorder %s120, 0
    %s123 = sadd.s32 %s122, 1
    %s124 = scalar_select %p121, %s122, %s123
    %p127 = pneg %p121
    %p128 = scmp.eq.s32.totalorder %s13, 3
    %p129 = por %p127, %p128
    %p130 = scmp.ne.s32.totalorder %s122, %s125
    %p131 = scmp.eq.s32.totalorder %s13, 0
    %p132 = por %p130, %p131
    %p133 = scmp.ne.s32.totalorder %s122, %s125
    %p134 = scmp.eq.s32.totalorder %s18, 3
    %p135 = por %p133, %p134
    %p136 = scmp.ne.s32.totalorder %s125, %s126
    %p137 = scmp.eq.s32.totalorder %s18, 0
    %p138 = por %p136, %p137
    %p139 = scmp.ne.s32.totalorder %s125, %s126
    %p140 = scmp.eq.s32.totalorder %s19, 3
    %p141 = por %p139, %p140
    %p143 = scmp.ne.s32.totalorder %s126, %s142
    %p144 = scmp.eq.s32.totalorder %s19, 0
    %p145 = por %p143, %p144
    %s146 = ssub.s32 %s13, %s20
    %p147 = scmp.eq.s32.totalorder %s146, 0
    %s149 = sadd.s32 %s148, 1
    %s150 = scalar_select %p147, %s148, %s149
    %p153 = pneg %p147
    %p154 = scmp.eq.s32.totalorder %s13, 3
    %p155 = por %p153, %p154
    %p156 = scmp.ne.s32.totalorder %s148, %s151
    %p157 = scmp.eq.s32.totalorder %s13, 0
    %p158 = por %p156, %p157
    %p159 = scmp.ne.s32.totalorder %s148, %s151
    %p160 = scmp.eq.s32.totalorder %s18, 3
    %p161 = por %p159, %p160
    %p162 = scmp.ne.s32.totalorder %s151, %s152
    %p163 = scmp.eq.s32.totalorder %s18, 0
    %p164 = por %p162, %p163
    %p165 = scmp.ne.s32.totalorder %s151, %s152
    %p166 = scmp.eq.s32.totalorder %s19, 3
    %p167 = por %p165, %p166
    %p169 = scmp.ne.s32.totalorder %s152, %s168
    %p170 = scmp.eq.s32.totalorder %s19, 0
    %p171 = por %p169, %p170
    %s172 = ssub.s32 %s13, %s20
    %p173 = scmp.eq.s32.totalorder %s172, 0
    %s175 = sadd.s32 %s174, 1
    %s176 = scalar_select %p173, %s174, %s175
    %p179 = pneg %p173
    %p180 = scmp.eq.s32.totalorder %s13, 3
    %p181 = por %p179, %p180
    %p182 = scmp.ne.s32.totalorder %s174, %s177
    %p183 = scmp.eq.s32.totalorder %s13, 0
    %p184 = por %p182, %p183
    %p185 = scmp.ne.s32.totalorder %s174, %s177
    %p186 = scmp.eq.s32.totalorder %s18, 3
    %p187 = por %p185, %p186
    %p188 = scmp.ne.s32.totalorder %s177, %s178
    %p189 = scmp.eq.s32.totalorder %s18, 0
    %p190 = por %p188, %p189
    %p191 = scmp.ne.s32.totalorder %s177, %s178
    %p192 = scmp.eq.s32.totalorder %s19, 3
    %p193 = por %p191, %p192
    %p195 = scmp.ne.s32.totalorder %s178, %s194
    %p196 = scmp.eq.s32.totalorder %s19, 0
    %p197 = por %p195, %p196
    %s198 = ssub.s32 %s13, %s20
    %p199 = scmp.eq.s32.totalorder %s198, 0
    %s201 = sadd.s32 %s200, 1
    %s202 = scalar_select %p199, %s200, %s201
    %p205 = pneg %p199
    %p206 = scmp.eq.s32.totalorder %s13, 3
    %p207 = por %p205, %p206
    %p208 = scmp.ne.s32.totalorder %s200, %s203
    %p209 = scmp.eq.s32.totalorder %s13, 0
    %p210 = por %p208, %p209
    %p211 = scmp.ne.s32.totalorder %s200, %s203
    %p212 = scmp.eq.s32.totalorder %s18, 3
    %p213 = por %p211, %p212
    %p214 = scmp.ne.s32.totalorder %s203, %s204
    %p215 = scmp.eq.s32.totalorder %s18, 0
    %p216 = por %p214, %p215
    %p217 = scmp.ne.s32.totalorder %s203, %s204
    %p218 = scmp.eq.s32.totalorder %s19, 3
    %p219 = por %p217, %p218
    %p221 = scmp.ne.s32.totalorder %s204, %s220
    %p222 = scmp.eq.s32.totalorder %s19, 0
    %p223 = por %p221, %p222
    %p224 = scmp.le.s32.totalorder 1, %s13
    %p225 = scmp.lt.s32.totalorder %s13, 5
    %p226 = pnand %p224, %p225
    %p227 = pneg %p226
    // Predicated region
    $region9: #{forward.1} parent=5 // pred_check
      _
    $region10: #{forward.1} parent=5 // pred_check_branch
      %229 = sbr.rel (%p226) target = $region12
    $region11: #{forward.1} parent=5 // pred_region
      %s230 = ssub.s32 %s13, 1
      // Predicated region
      $region13: #{forward.1} parent=11 // pred_check
        %p231 = pneg %p34
      $region14: #{forward.1} parent=11 // pred_check_branch
        %233 = sbr.rel (%p231) target = $region16
      $region15: #{forward.1} parent=11 // pred_region
        _
      $region16: #{forward.1} parent=11 // pred_fallthru
        _
    $region12: #{forward.1} parent=5 // pred_fallthru
      _
    %p234 = scmp.lt.s32.totalorder %s13, 4
    // Predicated region
    $region17: #{forward.1} parent=5 // pred_check
      %p235 = pneg %p234
    $region18: #{forward.1} parent=5 // pred_check_branch
      %237 = sbr.rel (%p235) target = $region20
    $region19: #{forward.1} parent=5 // pred_region
      // Predicated region
      $region21: #{forward.1} parent=19 // pred_check
        %p238 = pneg %p54
      $region22: #{forward.1} parent=19 // pred_check_branch
        %240 = sbr.rel (%p238) target = $region24
      $region23: #{forward.1} parent=19 // pred_region
        %s241 = smul.u32 32, %s13
        %p242 = scmp.lt.s32.totalorder %s241, 127
        %s243 = scalar_select %p242, %s241, 127
        %s244 = smul.addr %s243, 8
        %s245 = smul.addr %s244, 4
        %s246 = scalar_lea.vmem %s1, %s245
        %s247 = smul.u32 32, %s13
      $region24: #{forward.1} parent=19 // pred_fallthru
        _
      // Predicated region
      $region25: #{forward.1} parent=19 // pred_check
        %p248 = pneg %p80
      $region26: #{forward.1} parent=19 // pred_check_branch
        %250 = sbr.rel (%p248) target = $region28
      $region27: #{forward.1} parent=19 // pred_region
        %s251 = smul.u32 32, %s13
        %p252 = scmp.lt.s32.totalorder %s251, 127
        %s253 = scalar_select %p252, %s251, 127
        %s254 = smul.addr %s253, 8
        %s255 = scalar_lea.vmem %s2, %s254
        %s256 = smul.u32 32, %s13
      $region28: #{forward.1} parent=19 // pred_fallthru
        _
      // Predicated region
      $region29: #{forward.1} parent=19 // pred_check
        %p257 = pneg %p106
      $region30: #{forward.1} parent=19 // pred_check_branch
        %259 = sbr.rel (%p257) target = $region32
      $region31: #{forward.1} parent=19 // pred_region
        %s260 = smul.u32 32, %s13
        %p261 = scmp.lt.s32.totalorder %s260, 127
        %s262 = scalar_select %p261, %s260, 127
        %s263 = smul.addr %s262, 8
        %s264 = scalar_lea.vmem %s3, %s263
        %s265 = smul.u32 32, %s13
      $region32: #{forward.1} parent=19 // pred_fallthru
        _
      // Predicated region
      $region33: #{forward.1} parent=19 // pred_check
        %p266 = pneg %p132
      $region34: #{forward.1} parent=19 // pred_check_branch
        %268 = sbr.rel (%p266) target = $region36
      $region35: #{forward.1} parent=19 // pred_region
        %s269 = smul.u32 16, %s13
        %p270 = scmp.lt.s32.totalorder %s269, 63
        %s271 = scalar_select %p270, %s269, 63
        %s272 = smul.addr %s271, 4
        %s273 = smul.addr %s272, 4
        %s274 = scalar_lea.vmem %s4, %s273
        %s275 = smul.u32 16, %s13
      $region36: #{forward.1} parent=19 // pred_fallthru
        _
      // Predicated region
      $region37: #{forward.1} parent=19 // pred_check
        %p276 = pneg %p158
      $region38: #{forward.1} parent=19 // pred_check_branch
        %278 = sbr.rel (%p276) target = $region40
      $region39: #{forward.1} parent=19 // pred_region
        %s279 = smul.u32 32, %s13
        %p280 = scmp.lt.s32.totalorder %s279, 127
        %s281 = scalar_select %p280, %s279, 127
        %s282 = smul.addr %s281, 8
        %s283 = scalar_lea.vmem %s5, %s282
        %s284 = smul.u32 32, %s13
      $region40: #{forward.1} parent=19 // pred_fallthru
        _
      // Predicated region
      $region41: #{forward.1} parent=19 // pred_check
        %p285 = pneg %p184
      $region42: #{forward.1} parent=19 // pred_check_branch
        %287 = sbr.rel (%p285) target = $region44
      $region43: #{forward.1} parent=19 // pred_region
        %s288 = smul.u32 32, %s13
        %p289 = scmp.lt.s32.totalorder %s288, 127
        %s290 = scalar_select %p289, %s288, 127
        %s291 = smul.addr %s290, 8
        %s292 = scalar_lea.vmem %s6, %s291
        %s293 = smul.u32 32, %s13
      $region44: #{forward.1} parent=19 // pred_fallthru
        _
    $region20: #{forward.1} parent=5 // pred_fallthru
      _
    %p294 = scmp.le.s32.totalorder 1, %s13
    %p295 = scmp.lt.s32.totalorder %s13, 5
    %p296 = pnand %p294, %p295
    %p297 = pneg %p296
    // Predicated region
    $region45: #{forward.1} parent=5 // pred_check
      _
    $region46: #{forward.1} parent=5 // pred_check_branch
      %299 = sbr.rel (%p296) target = $region48
    $region47: #{forward.1} parent=5 // pred_region
      %s300 = ssub.s32 %s13, 1
      %p301 = pneg %p34
      %p302 = pneg %p31
      %s303 = smul.u32 32, %s18
      %p304 = scmp.lt.s32.totalorder %s303, 127
      %s305 = scalar_select %p304, %s303, 127
      %s306 = smul.addr %s305, 8
      %s307 = smul.addr %s306, 4
      %s308 = scalar_lea.vmem %s1, %s307
      %p309 = pneg %p60
      %p310 = pneg %p57
      %s311 = smul.u32 32, %s18
      %p312 = scmp.lt.s32.totalorder %s311, 127
      %s313 = scalar_select %p312, %s311, 127
      %s314 = smul.addr %s313, 8
      %s315 = scalar_lea.vmem %s2, %s314
      %p316 = pneg %p86
      %p317 = pneg %p83
      %s318 = smul.u32 32, %s18
      %p319 = scmp.lt.s32.totalorder %s318, 127
      %s320 = scalar_select %p319, %s318, 127
      %s321 = smul.addr %s320, 8
      %s322 = scalar_lea.vmem %s3, %s321
      %p323 = pneg %p112
      %p324 = pneg %p109
      %s325 = smul.u32 16, %s18
      %p326 = scmp.lt.s32.totalorder %s325, 63
      %s327 = scalar_select %p326, %s325, 63
      %s328 = smul.addr %s327, 4
      %s329 = smul.addr %s328, 4
      %s330 = scalar_lea.vmem %s4, %s329
      %p331 = pneg %p138
      %p332 = pneg %p135
      %s333 = smul.u32 32, %s18
      %p334 = scmp.lt.s32.totalorder %s333, 127
      %s335 = scalar_select %p334, %s333, 127
      %s336 = smul.addr %s335, 8
      %s337 = scalar_lea.vmem %s5, %s336
      %p338 = pneg %p164
      %p339 = pneg %p161
      %s340 = smul.u32 32, %s18
      %p341 = scmp.lt.s32.totalorder %s340, 127
      %s342 = scalar_select %p341, %s340, 127
      %s343 = smul.addr %s342, 8
      %s344 = scalar_lea.vmem %s6, %s343
      %p345 = pneg %p190
      %p346 = pneg %p187
      %p347 = pneg %p216
      %p348 = pneg %p213
      %s349 = smul.u32 32, %s18
      %p350 = scmp.lt.s32.totalorder %s349, 127
      %s351 = scalar_select %p350, %s349, 127
      %s352 = smul.addr %s351, 2
      %s353 = smul.addr %s352, 8
      %s354 = scalar_lea.vmem %s7, %s353
      %s355 = smul.u32 32, %s18
      %p356 = scmp.lt.s32.totalorder %s355, 127
      %s357 = scalar_select %p356, %s355, 127
      %s358 = smul.addr %s357, 8
      %s359 = smul.addr %s358, 4
      %s360 = scalar_lea.vmem %s1, %s359
      %s361 = smul.u32 32, %s18
      %s362 = smul.u32 32, %s18
      %p363 = scmp.lt.s32.totalorder %s362, 127
      %s364 = scalar_select %p363, %s362, 127
      %s365 = smul.addr %s364, 8
      %s366 = scalar_lea.vmem %s2, %s365
      %s367 = smul.u32 32, %s18
      %s368 = smul.u32 32, %s18
      %p369 = scmp.lt.s32.totalorder %s368, 127
      %s370 = scalar_select %p369, %s368, 127
      %s371 = smul.addr %s370, 8
      %s372 = scalar_lea.vmem %s3, %s371
      %s373 = smul.u32 32, %s18
      %s374 = smul.u32 16, %s18
      %p375 = scmp.lt.s32.totalorder %s374, 63
      %s376 = scalar_select %p375, %s374, 63
      %s377 = smul.addr %s376, 4
      %s378 = smul.addr %s377, 4
      %s379 = scalar_lea.vmem %s4, %s378
      %s380 = smul.u32 16, %s18
      %s381 = smul.u32 32, %s18
      %p382 = scmp.lt.s32.totalorder %s381, 127
      %s383 = scalar_select %p382, %s381, 127
      %s384 = smul.addr %s383, 8
      %s385 = scalar_lea.vmem %s5, %s384
      %s386 = smul.u32 32, %s18
      %s387 = smul.u32 32, %s18
      %p388 = scmp.lt.s32.totalorder %s387, 127
      %s389 = scalar_select %p388, %s387, 127
      %s390 = smul.addr %s389, 8
      %s391 = scalar_lea.vmem %s6, %s390
      %s392 = smul.u32 32, %s18
      %s393 = smul.u32 32, %s18
      %p394 = scmp.lt.s32.totalorder %s393, 127
      %s395 = scalar_select %p394, %s393, 127
      %s396 = smul.addr %s395, 2
      %s397 = smul.addr %s396, 8
      %s398 = scalar_lea.vmem %s7, %s397
      %s399 = smul.u32 32, %s18
      %v401 = vld [vmem:[%s0] sm:$0xff]
      %v402 = vld [vmem:[%s0 + $0x8] sm:$0xff]
      %v403 = vld [vmem:[%s0 + $0x10] sm:$0xff]
      %v404 = vld [vmem:[%s0 + $0x18] sm:$0xff]
      %v405 = vld [vmem:[%s0 + $0x20] sm:$0xff]
      %v406 = vld [vmem:[%s0 + $0x28] sm:$0xff]
      %v407 = vld [vmem:[%s0 + $0x30] sm:$0xff]
      %v408 = vld [vmem:[%s0 + $0x38] sm:$0xff]
      %v409 = vld [vmem:[%s0 + $0x40] sm:$0xff]
      %v410 = vld [vmem:[%s0 + $0x48] sm:$0xff]
      %v411 = vld [vmem:[%s0 + $0x50] sm:$0xff]
      %v412 = vld [vmem:[%s0 + $0x58] sm:$0xff]
      %v413 = vld [vmem:[%s0 + $0x60] sm:$0xff]
      %v414 = vld [vmem:[%s0 + $0x68] sm:$0xff]
      %v415 = vld [vmem:[%s0 + $0x70] sm:$0xff]
      %v416 = vld [vmem:[%s0 + $0x78] sm:$0xff]
      %v417 = vld [vmem:[%s0 + $0x80] sm:$0xff]
      %v418 = vld [vmem:[%s0 + $0x88] sm:$0xff]
      %v419 = vld [vmem:[%s0 + $0x90] sm:$0xff]
      %v420 = vld [vmem:[%s0 + $0x98] sm:$0xff]
      %v421 = vld [vmem:[%s0 + $0xa0] sm:$0xff]
      %v422 = vld [vmem:[%s0 + $0xa8] sm:$0xff]
      %v423 = vld [vmem:[%s0 + $0xb0] sm:$0xff]
      %v424 = vld [vmem:[%s0 + $0xb8] sm:$0xff]
      %v425 = vld [vmem:[%s0 + $0xc0] sm:$0xff]
      %v426 = vld [vmem:[%s0 + $0xc8] sm:$0xff]
      %v427 = vld [vmem:[%s0 + $0xd0] sm:$0xff]
      %v428 = vld [vmem:[%s0 + $0xd8] sm:$0xff]
      %v429 = vld [vmem:[%s0 + $0xe0] sm:$0xff]
      %v430 = vld [vmem:[%s0 + $0xe8] sm:$0xff]
      %v431 = vld [vmem:[%s0 + $0xf0] sm:$0xff]
      %v432 = vld [vmem:[%s0 + $0xf8] sm:$0xff]
      %v433 = vld [vmem:[%s0 + $0x100] sm:$0xff]
      %v434 = vld [vmem:[%s0 + $0x108] sm:$0xff]
      %v435 = vld [vmem:[%s0 + $0x110] sm:$0xff]
      %v436 = vld [vmem:[%s0 + $0x118] sm:$0xff]
      %v437 = vld [vmem:[%s0 + $0x120] sm:$0xff]
      %v438 = vld [vmem:[%s0 + $0x128] sm:$0xff]
      %v439 = vld [vmem:[%s0 + $0x130] sm:$0xff]
      %v440 = vld [vmem:[%s0 + $0x138] sm:$0xff]
      %v441 = vld [vmem:[%s0 + $0x140] sm:$0xff]
      %v442 = vld [vmem:[%s0 + $0x148] sm:$0xff]
      %v443 = vld [vmem:[%s0 + $0x150] sm:$0xff]
      %v444 = vld [vmem:[%s0 + $0x158] sm:$0xff]
      %v445 = vld [vmem:[%s0 + $0x160] sm:$0xff]
      %v446 = vld [vmem:[%s0 + $0x168] sm:$0xff]
      %v447 = vld [vmem:[%s0 + $0x170] sm:$0xff]
      %v448 = vld [vmem:[%s0 + $0x178] sm:$0xff]
      %v449 = vld [vmem:[%s0 + $0x180] sm:$0xff]
      %v450 = vld [vmem:[%s0 + $0x188] sm:$0xff]
      %v451 = vld [vmem:[%s0 + $0x190] sm:$0xff]
      %v452 = vld [vmem:[%s0 + $0x198] sm:$0xff]
      %v453 = vld [vmem:[%s0 + $0x1a0] sm:$0xff]
      %v454 = vld [vmem:[%s0 + $0x1a8] sm:$0xff]
      %v455 = vld [vmem:[%s0 + $0x1b0] sm:$0xff]
      %v456 = vld [vmem:[%s0 + $0x1b8] sm:$0xff]
      %v457 = vld [vmem:[%s0 + $0x1c0] sm:$0xff]
      %v458 = vld [vmem:[%s0 + $0x1c8] sm:$0xff]
      %v459 = vld [vmem:[%s0 + $0x1d0] sm:$0xff]
      %v460 = vld [vmem:[%s0 + $0x1d8] sm:$0xff]
      %v461 = vld [vmem:[%s0 + $0x1e0] sm:$0xff]
      %v462 = vld [vmem:[%s0 + $0x1e8] sm:$0xff]
      %v463 = vld [vmem:[%s0 + $0x1f0] sm:$0xff]
      %v464 = vld [vmem:[%s0 + $0x1f8] sm:$0xff]
      %v465 = vld [vmem:[%s0 + $0x200] sm:$0xff]
      %v466 = vld [vmem:[%s0 + $0x208] sm:$0xff]
      %v467 = vld [vmem:[%s0 + $0x210] sm:$0xff]
      %v468 = vld [vmem:[%s0 + $0x218] sm:$0xff]
      %v469 = vld [vmem:[%s0 + $0x220] sm:$0xff]
      %v470 = vld [vmem:[%s0 + $0x228] sm:$0xff]
      %v471 = vld [vmem:[%s0 + $0x230] sm:$0xff]
      %v472 = vld [vmem:[%s0 + $0x238] sm:$0xff]
      %v473 = vld [vmem:[%s0 + $0x240] sm:$0xff]
      %v474 = vld [vmem:[%s0 + $0x248] sm:$0xff]
      %v475 = vld [vmem:[%s0 + $0x250] sm:$0xff]
      %v476 = vld [vmem:[%s0 + $0x258] sm:$0xff]
      %v477 = vld [vmem:[%s0 + $0x260] sm:$0xff]
      %v478 = vld [vmem:[%s0 + $0x268] sm:$0xff]
      %v479 = vld [vmem:[%s0 + $0x270] sm:$0xff]
      %v480 = vld [vmem:[%s0 + $0x278] sm:$0xff]
      %v481 = vld [vmem:[%s0 + $0x280] sm:$0xff]
      %v482 = vld [vmem:[%s0 + $0x288] sm:$0xff]
      %v483 = vld [vmem:[%s0 + $0x290] sm:$0xff]
      %v484 = vld [vmem:[%s0 + $0x298] sm:$0xff]
      %v485 = vld [vmem:[%s0 + $0x2a0] sm:$0xff]
      %v486 = vld [vmem:[%s0 + $0x2a8] sm:$0xff]
      %v487 = vld [vmem:[%s0 + $0x2b0] sm:$0xff]
      %v488 = vld [vmem:[%s0 + $0x2b8] sm:$0xff]
      %v489 = vld [vmem:[%s0 + $0x2c0] sm:$0xff]
      %v490 = vld [vmem:[%s0 + $0x2c8] sm:$0xff]
      %v491 = vld [vmem:[%s0 + $0x2d0] sm:$0xff]
      %v492 = vld [vmem:[%s0 + $0x2d8] sm:$0xff]
      %v493 = vld [vmem:[%s0 + $0x2e0] sm:$0xff]
      %v494 = vld [vmem:[%s0 + $0x2e8] sm:$0xff]
      %v495 = vld [vmem:[%s0 + $0x2f0] sm:$0xff]
      %v496 = vld [vmem:[%s0 + $0x2f8] sm:$0xff]
      %v497 = vld [vmem:[%s0 + $0x300] sm:$0xff]
      %v498 = vld [vmem:[%s0 + $0x308] sm:$0xff]
      %v499 = vld [vmem:[%s0 + $0x310] sm:$0xff]
      %v500 = vld [vmem:[%s0 + $0x318] sm:$0xff]
      %v501 = vld [vmem:[%s0 + $0x320] sm:$0xff]
      %v502 = vld [vmem:[%s0 + $0x328] sm:$0xff]
      %v503 = vld [vmem:[%s0 + $0x330] sm:$0xff]
      %v504 = vld [vmem:[%s0 + $0x338] sm:$0xff]
      %v505 = vld [vmem:[%s0 + $0x340] sm:$0xff]
      %v506 = vld [vmem:[%s0 + $0x348] sm:$0xff]
      %v507 = vld [vmem:[%s0 + $0x350] sm:$0xff]
      %v508 = vld [vmem:[%s0 + $0x358] sm:$0xff]
      %v509 = vld [vmem:[%s0 + $0x360] sm:$0xff]
      %v510 = vld [vmem:[%s0 + $0x368] sm:$0xff]
      %v511 = vld [vmem:[%s0 + $0x370] sm:$0xff]
      %v512 = vld [vmem:[%s0 + $0x378] sm:$0xff]
      %v513 = vld [vmem:[%s0 + $0x380] sm:$0xff]
      %v514 = vld [vmem:[%s0 + $0x388] sm:$0xff]
      %v515 = vld [vmem:[%s0 + $0x390] sm:$0xff]
      %v516 = vld [vmem:[%s0 + $0x398] sm:$0xff]
      %v517 = vld [vmem:[%s0 + $0x3a0] sm:$0xff]
      %v518 = vld [vmem:[%s0 + $0x3a8] sm:$0xff]
      %v519 = vld [vmem:[%s0 + $0x3b0] sm:$0xff]
      %v520 = vld [vmem:[%s0 + $0x3b8] sm:$0xff]
      %v521 = vld [vmem:[%s0 + $0x3c0] sm:$0xff]
      %v522 = vld [vmem:[%s0 + $0x3c8] sm:$0xff]
      %v523 = vld [vmem:[%s0 + $0x3d0] sm:$0xff]
      %v524 = vld [vmem:[%s0 + $0x3d8] sm:$0xff]
      %v525 = vld [vmem:[%s0 + $0x3e0] sm:$0xff]
      %v526 = vld [vmem:[%s0 + $0x3e8] sm:$0xff]
      %v527 = vld [vmem:[%s0 + $0x3f0] sm:$0xff]
      %v528 = vld [vmem:[%s0 + $0x3f8] sm:$0xff]
      %v529 = vunpack.c.l.bf16 %v401
      %v530 = vunpack.c.h.bf16 %v401
      %v531 = vunpack.c.l.bf16 %v402
      %v532 = vunpack.c.h.bf16 %v402
      %v533 = vunpack.c.l.bf16 %v403
      %v534 = vunpack.c.h.bf16 %v403
      %v535 = vunpack.c.l.bf16 %v404
      %v536 = vunpack.c.h.bf16 %v404
      %v537 = vunpack.c.l.bf16 %v405
      %v538 = vunpack.c.h.bf16 %v405
      %v539 = vunpack.c.l.bf16 %v406
      %v540 = vunpack.c.h.bf16 %v406
      %v541 = vunpack.c.l.bf16 %v407
      %v542 = vunpack.c.h.bf16 %v407
      %v543 = vunpack.c.l.bf16 %v408
      %v544 = vunpack.c.h.bf16 %v408
      %v545 = vunpack.c.l.bf16 %v409
      %v546 = vunpack.c.h.bf16 %v409
      %v547 = vunpack.c.l.bf16 %v410
      %v548 = vunpack.c.h.bf16 %v410
      %v549 = vunpack.c.l.bf16 %v411
      %v550 = vunpack.c.h.bf16 %v411
      %v551 = vunpack.c.l.bf16 %v412
      %v552 = vunpack.c.h.bf16 %v412
      %v553 = vunpack.c.l.bf16 %v413
      %v554 = vunpack.c.h.bf16 %v413
      %v555 = vunpack.c.l.bf16 %v414
      %v556 = vunpack.c.h.bf16 %v414
      %v557 = vunpack.c.l.bf16 %v415
      %v558 = vunpack.c.h.bf16 %v415
      %v559 = vunpack.c.l.bf16 %v416
      %v560 = vunpack.c.h.bf16 %v416
      %v561 = vunpack.c.l.bf16 %v417
      %v562 = vunpack.c.h.bf16 %v417
      %v563 = vunpack.c.l.bf16 %v418
      %v564 = vunpack.c.h.bf16 %v418
      %v565 = vunpack.c.l.bf16 %v419
      %v566 = vunpack.c.h.bf16 %v419
      %v567 = vunpack.c.l.bf16 %v420
      %v568 = vunpack.c.h.bf16 %v420
      %v569 = vunpack.c.l.bf16 %v421
      %v570 = vunpack.c.h.bf16 %v421
      %v571 = vunpack.c.l.bf16 %v422
      %v572 = vunpack.c.h.bf16 %v422
      %v573 = vunpack.c.l.bf16 %v423
      %v574 = vunpack.c.h.bf16 %v423
      %v575 = vunpack.c.l.bf16 %v424
      %v576 = vunpack.c.h.bf16 %v424
      %v577 = vunpack.c.l.bf16 %v425
      %v578 = vunpack.c.h.bf16 %v425
      %v579 = vunpack.c.l.bf16 %v426
      %v580 = vunpack.c.h.bf16 %v426
      %v581 = vunpack.c.l.bf16 %v427
      %v582 = vunpack.c.h.bf16 %v427
      %v583 = vunpack.c.l.bf16 %v428
      %v584 = vunpack.c.h.bf16 %v428
      %v585 = vunpack.c.l.bf16 %v429
      %v586 = vunpack.c.h.bf16 %v429
      %v587 = vunpack.c.l.bf16 %v430
      %v588 = vunpack.c.h.bf16 %v430
      %v589 = vunpack.c.l.bf16 %v431
      %v590 = vunpack.c.h.bf16 %v431
      %v591 = vunpack.c.l.bf16 %v432
      %v592 = vunpack.c.h.bf16 %v432
      %v593 = vunpack.c.l.bf16 %v433
      %v594 = vunpack.c.h.bf16 %v433
      %v595 = vunpack.c.l.bf16 %v434
      %v596 = vunpack.c.h.bf16 %v434
      %v597 = vunpack.c.l.bf16 %v435
      %v598 = vunpack.c.h.bf16 %v435
      %v599 = vunpack.c.l.bf16 %v436
      %v600 = vunpack.c.h.bf16 %v436
      %v601 = vunpack.c.l.bf16 %v437
      %v602 = vunpack.c.h.bf16 %v437
      %v603 = vunpack.c.l.bf16 %v438
      %v604 = vunpack.c.h.bf16 %v438
      %v605 = vunpack.c.l.bf16 %v439
      %v606 = vunpack.c.h.bf16 %v439
      %v607 = vunpack.c.l.bf16 %v440
      %v608 = vunpack.c.h.bf16 %v440
      %v609 = vunpack.c.l.bf16 %v441
      %v610 = vunpack.c.h.bf16 %v441
      %v611 = vunpack.c.l.bf16 %v442
      %v612 = vunpack.c.h.bf16 %v442
      %v613 = vunpack.c.l.bf16 %v443
      %v614 = vunpack.c.h.bf16 %v443
      %v615 = vunpack.c.l.bf16 %v444
      %v616 = vunpack.c.h.bf16 %v444
      %v617 = vunpack.c.l.bf16 %v445
      %v618 = vunpack.c.h.bf16 %v445
      %v619 = vunpack.c.l.bf16 %v446
      %v620 = vunpack.c.h.bf16 %v446
      %v621 = vunpack.c.l.bf16 %v447
      %v622 = vunpack.c.h.bf16 %v447
      %v623 = vunpack.c.l.bf16 %v448
      %v624 = vunpack.c.h.bf16 %v448
      %v625 = vunpack.c.l.bf16 %v449
      %v626 = vunpack.c.h.bf16 %v449
      %v627 = vunpack.c.l.bf16 %v450
      %v628 = vunpack.c.h.bf16 %v450
      %v629 = vunpack.c.l.bf16 %v451
      %v630 = vunpack.c.h.bf16 %v451
      %v631 = vunpack.c.l.bf16 %v452
      %v632 = vunpack.c.h.bf16 %v452
      %v633 = vunpack.c.l.bf16 %v453
      %v634 = vunpack.c.h.bf16 %v453
      %v635 = vunpack.c.l.bf16 %v454
      %v636 = vunpack.c.h.bf16 %v454
      %v637 = vunpack.c.l.bf16 %v455
      %v638 = vunpack.c.h.bf16 %v455
      %v639 = vunpack.c.l.bf16 %v456
      %v640 = vunpack.c.h.bf16 %v456
      %v641 = vunpack.c.l.bf16 %v457
      %v642 = vunpack.c.h.bf16 %v457
      %v643 = vunpack.c.l.bf16 %v458
      %v644 = vunpack.c.h.bf16 %v458
      %v645 = vunpack.c.l.bf16 %v459
      %v646 = vunpack.c.h.bf16 %v459
      %v647 = vunpack.c.l.bf16 %v460
      %v648 = vunpack.c.h.bf16 %v460
      %v649 = vunpack.c.l.bf16 %v461
      %v650 = vunpack.c.h.bf16 %v461
      %v651 = vunpack.c.l.bf16 %v462
      %v652 = vunpack.c.h.bf16 %v462
      %v653 = vunpack.c.l.bf16 %v463
      %v654 = vunpack.c.h.bf16 %v463
      %v655 = vunpack.c.l.bf16 %v464
      %v656 = vunpack.c.h.bf16 %v464
      %v657 = vunpack.c.l.bf16 %v465
      %v658 = vunpack.c.h.bf16 %v465
      %v659 = vunpack.c.l.bf16 %v466
      %v660 = vunpack.c.h.bf16 %v466
      %v661 = vunpack.c.l.bf16 %v467
      %v662 = vunpack.c.h.bf16 %v467
      %v663 = vunpack.c.l.bf16 %v468
      %v664 = vunpack.c.h.bf16 %v468
      %v665 = vunpack.c.l.bf16 %v469
      %v666 = vunpack.c.h.bf16 %v469
      %v667 = vunpack.c.l.bf16 %v470
      %v668 = vunpack.c.h.bf16 %v470
      %v669 = vunpack.c.l.bf16 %v471
      %v670 = vunpack.c.h.bf16 %v471
      %v671 = vunpack.c.l.bf16 %v472
      %v672 = vunpack.c.h.bf16 %v472
      %v673 = vunpack.c.l.bf16 %v473
      %v674 = vunpack.c.h.bf16 %v473
      %v675 = vunpack.c.l.bf16 %v474
      %v676 = vunpack.c.h.bf16 %v474
      %v677 = vunpack.c.l.bf16 %v475
      %v678 = vunpack.c.h.bf16 %v475
      %v679 = vunpack.c.l.bf16 %v476
      %v680 = vunpack.c.h.bf16 %v476
      %v681 = vunpack.c.l.bf16 %v477
      %v682 = vunpack.c.h.bf16 %v477
      %v683 = vunpack.c.l.bf16 %v478
      %v684 = vunpack.c.h.bf16 %v478
      %v685 = vunpack.c.l.bf16 %v479
      %v686 = vunpack.c.h.bf16 %v479
      %v687 = vunpack.c.l.bf16 %v480
      %v688 = vunpack.c.h.bf16 %v480
      %v689 = vunpack.c.l.bf16 %v481
      %v690 = vunpack.c.h.bf16 %v481
      %v691 = vunpack.c.l.bf16 %v482
      %v692 = vunpack.c.h.bf16 %v482
      %v693 = vunpack.c.l.bf16 %v483
      %v694 = vunpack.c.h.bf16 %v483
      %v695 = vunpack.c.l.bf16 %v484
      %v696 = vunpack.c.h.bf16 %v484
      %v697 = vunpack.c.l.bf16 %v485
      %v698 = vunpack.c.h.bf16 %v485
      %v699 = vunpack.c.l.bf16 %v486
      %v700 = vunpack.c.h.bf16 %v486
      %v701 = vunpack.c.l.bf16 %v487
      %v702 = vunpack.c.h.bf16 %v487
      %v703 = vunpack.c.l.bf16 %v488
      %v704 = vunpack.c.h.bf16 %v488
      %v705 = vunpack.c.l.bf16 %v489
      %v706 = vunpack.c.h.bf16 %v489
      %v707 = vunpack.c.l.bf16 %v490
      %v708 = vunpack.c.h.bf16 %v490
      %v709 = vunpack.c.l.bf16 %v491
      %v710 = vunpack.c.h.bf16 %v491
      %v711 = vunpack.c.l.bf16 %v492
      %v712 = vunpack.c.h.bf16 %v492
      %v713 = vunpack.c.l.bf16 %v493
      %v714 = vunpack.c.h.bf16 %v493
      %v715 = vunpack.c.l.bf16 %v494
      %v716 = vunpack.c.h.bf16 %v494
      %v717 = vunpack.c.l.bf16 %v495
      %v718 = vunpack.c.h.bf16 %v495
      %v719 = vunpack.c.l.bf16 %v496
      %v720 = vunpack.c.h.bf16 %v496
      %v721 = vunpack.c.l.bf16 %v497
      %v722 = vunpack.c.h.bf16 %v497
      %v723 = vunpack.c.l.bf16 %v498
      %v724 = vunpack.c.h.bf16 %v498
      %v725 = vunpack.c.l.bf16 %v499
      %v726 = vunpack.c.h.bf16 %v499
      %v727 = vunpack.c.l.bf16 %v500
      %v728 = vunpack.c.h.bf16 %v500
      %v729 = vunpack.c.l.bf16 %v501
      %v730 = vunpack.c.h.bf16 %v501
      %v731 = vunpack.c.l.bf16 %v502
      %v732 = vunpack.c.h.bf16 %v502
      %v733 = vunpack.c.l.bf16 %v503
      %v734 = vunpack.c.h.bf16 %v503
      %v735 = vunpack.c.l.bf16 %v504
      %v736 = vunpack.c.h.bf16 %v504
      %v737 = vunpack.c.l.bf16 %v505
      %v738 = vunpack.c.h.bf16 %v505
      %v739 = vunpack.c.l.bf16 %v506
      %v740 = vunpack.c.h.bf16 %v506
      %v741 = vunpack.c.l.bf16 %v507
      %v742 = vunpack.c.h.bf16 %v507
      %v743 = vunpack.c.l.bf16 %v508
      %v744 = vunpack.c.h.bf16 %v508
      %v745 = vunpack.c.l.bf16 %v509
      %v746 = vunpack.c.h.bf16 %v509
      %v747 = vunpack.c.l.bf16 %v510
      %v748 = vunpack.c.h.bf16 %v510
      %v749 = vunpack.c.l.bf16 %v511
      %v750 = vunpack.c.h.bf16 %v511
      %v751 = vunpack.c.l.bf16 %v512
      %v752 = vunpack.c.h.bf16 %v512
      %v753 = vunpack.c.l.bf16 %v513
      %v754 = vunpack.c.h.bf16 %v513
      %v755 = vunpack.c.l.bf16 %v514
      %v756 = vunpack.c.h.bf16 %v514
      %v757 = vunpack.c.l.bf16 %v515
      %v758 = vunpack.c.h.bf16 %v515
      %v759 = vunpack.c.l.bf16 %v516
      %v760 = vunpack.c.h.bf16 %v516
      %v761 = vunpack.c.l.bf16 %v517
      %v762 = vunpack.c.h.bf16 %v517
      %v763 = vunpack.c.l.bf16 %v518
      %v764 = vunpack.c.h.bf16 %v518
      %v765 = vunpack.c.l.bf16 %v519
      %v766 = vunpack.c.h.bf16 %v519
      %v767 = vunpack.c.l.bf16 %v520
      %v768 = vunpack.c.h.bf16 %v520
      %v769 = vunpack.c.l.bf16 %v521
      %v770 = vunpack.c.h.bf16 %v521
      %v771 = vunpack.c.l.bf16 %v522
      %v772 = vunpack.c.h.bf16 %v522
      %v773 = vunpack.c.l.bf16 %v523
      %v774 = vunpack.c.h.bf16 %v523
      %v775 = vunpack.c.l.bf16 %v524
      %v776 = vunpack.c.h.bf16 %v524
      %v777 = vunpack.c.l.bf16 %v525
      %v778 = vunpack.c.h.bf16 %v525
      %v779 = vunpack.c.l.bf16 %v526
      %v780 = vunpack.c.h.bf16 %v526
      %v781 = vunpack.c.l.bf16 %v527
      %v782 = vunpack.c.h.bf16 %v527
      %v783 = vunpack.c.l.bf16 %v528
      %v784 = vunpack.c.h.bf16 %v528
      %v785 = vmax.f32 %v529, 0.0
      %v786 = vmax.f32 %v530, 0.0
      %v787 = vmax.f32 %v531, 0.0
      %v788 = vmax.f32 %v532, 0.0
      %v789 = vmax.f32 %v533, 0.0
      %v790 = vmax.f32 %v534, 0.0
      %v791 = vmax.f32 %v535, 0.0
      %v792 = vmax.f32 %v536, 0.0
      %v793 = vmax.f32 %v537, 0.0
      %v794 = vmax.f32 %v538, 0.0
      %v795 = vmax.f32 %v539, 0.0
      %v796 = vmax.f32 %v540, 0.0
      %v797 = vmax.f32 %v541, 0.0
      %v798 = vmax.f32 %v542, 0.0
      %v799 = vmax.f32 %v543, 0.0
      %v800 = vmax.f32 %v544, 0.0
      %v801 = vmax.f32 %v545, 0.0
      %v802 = vmax.f32 %v546, 0.0
      %v803 = vmax.f32 %v547, 0.0
      %v804 = vmax.f32 %v548, 0.0
      %v805 = vmax.f32 %v549, 0.0
      %v806 = vmax.f32 %v550, 0.0
      %v807 = vmax.f32 %v551, 0.0
      %v808 = vmax.f32 %v552, 0.0
      %v809 = vmax.f32 %v553, 0.0
      %v810 = vmax.f32 %v554, 0.0
      %v811 = vmax.f32 %v555, 0.0
      %v812 = vmax.f32 %v556, 0.0
      %v813 = vmax.f32 %v557, 0.0
      %v814 = vmax.f32 %v558, 0.0
      %v815 = vmax.f32 %v559, 0.0
      %v816 = vmax.f32 %v560, 0.0
      %v817 = vmax.f32 %v561, 0.0
      %v818 = vmax.f32 %v562, 0.0
      %v819 = vmax.f32 %v563, 0.0
      %v820 = vmax.f32 %v564, 0.0
      %v821 = vmax.f32 %v565, 0.0
      %v822 = vmax.f32 %v566, 0.0
      %v823 = vmax.f32 %v567, 0.0
      %v824 = vmax.f32 %v568, 0.0
      %v825 = vmax.f32 %v569, 0.0
      %v826 = vmax.f32 %v570, 0.0
      %v827 = vmax.f32 %v571, 0.0
      %v828 = vmax.f32 %v572, 0.0
      %v829 = vmax.f32 %v573, 0.0
      %v830 = vmax.f32 %v574, 0.0
      %v831 = vmax.f32 %v575, 0.0
      %v832 = vmax.f32 %v576, 0.0
      %v833 = vmax.f32 %v577, 0.0
      %v834 = vmax.f32 %v578, 0.0
      %v835 = vmax.f32 %v579, 0.0
      %v836 = vmax.f32 %v580, 0.0
      %v837 = vmax.f32 %v581, 0.0
      %v838 = vmax.f32 %v582, 0.0
      %v839 = vmax.f32 %v583, 0.0
      %v840 = vmax.f32 %v584, 0.0
      %v841 = vmax.f32 %v585, 0.0
      %v842 = vmax.f32 %v586, 0.0
      %v843 = vmax.f32 %v587, 0.0
      %v844 = vmax.f32 %v588, 0.0
      %v845 = vmax.f32 %v589, 0.0
      %v846 = vmax.f32 %v590, 0.0
      %v847 = vmax.f32 %v591, 0.0
      %v848 = vmax.f32 %v592, 0.0
      %v849 = vmax.f32 %v593, 0.0
      %v850 = vmax.f32 %v594, 0.0
      %v851 = vmax.f32 %v595, 0.0
      %v852 = vmax.f32 %v596, 0.0
      %v853 = vmax.f32 %v597, 0.0
      %v854 = vmax.f32 %v598, 0.0
      %v855 = vmax.f32 %v599, 0.0
      %v856 = vmax.f32 %v600, 0.0
      %v857 = vmax.f32 %v601, 0.0
      %v858 = vmax.f32 %v602, 0.0
      %v859 = vmax.f32 %v603, 0.0
      %v860 = vmax.f32 %v604, 0.0
      %v861 = vmax.f32 %v605, 0.0
      %v862 = vmax.f32 %v606, 0.0
      %v863 = vmax.f32 %v607, 0.0
      %v864 = vmax.f32 %v608, 0.0
      %v865 = vmax.f32 %v609, 0.0
      %v866 = vmax.f32 %v610, 0.0
      %v867 = vmax.f32 %v611, 0.0
      %v868 = vmax.f32 %v612, 0.0
      %v869 = vmax.f32 %v613, 0.0
      %v870 = vmax.f32 %v614, 0.0
      %v871 = vmax.f32 %v615, 0.0
      %v872 = vmax.f32 %v616, 0.0
      %v873 = vmax.f32 %v617, 0.0
      %v874 = vmax.f32 %v618, 0.0
      %v875 = vmax.f32 %v619, 0.0
      %v876 = vmax.f32 %v620, 0.0
      %v877 = vmax.f32 %v621, 0.0
      %v878 = vmax.f32 %v622, 0.0
      %v879 = vmax.f32 %v623, 0.0
      %v880 = vmax.f32 %v624, 0.0
      %v881 = vmax.f32 %v625, 0.0
      %v882 = vmax.f32 %v626, 0.0
      %v883 = vmax.f32 %v627, 0.0
      %v884 = vmax.f32 %v628, 0.0
      %v885 = vmax.f32 %v629, 0.0
      %v886 = vmax.f32 %v630, 0.0
      %v887 = vmax.f32 %v631, 0.0
      %v888 = vmax.f32 %v632, 0.0
      %v889 = vmax.f32 %v633, 0.0
      %v890 = vmax.f32 %v634, 0.0
      %v891 = vmax.f32 %v635, 0.0
      %v892 = vmax.f32 %v636, 0.0
      %v893 = vmax.f32 %v637, 0.0
      %v894 = vmax.f32 %v638, 0.0
      %v895 = vmax.f32 %v639, 0.0
      %v896 = vmax.f32 %v640, 0.0
      %v897 = vmax.f32 %v641, 0.0
      %v898 = vmax.f32 %v642, 0.0
      %v899 = vmax.f32 %v643, 0.0
      %v900 = vmax.f32 %v644, 0.0
      %v901 = vmax.f32 %v645, 0.0
      %v902 = vmax.f32 %v646, 0.0
      %v903 = vmax.f32 %v647, 0.0
      %v904 = vmax.f32 %v648, 0.0
      %v905 = vmax.f32 %v649, 0.0
      %v906 = vmax.f32 %v650, 0.0
      %v907 = vmax.f32 %v651, 0.0
      %v908 = vmax.f32 %v652, 0.0
      %v909 = vmax.f32 %v653, 0.0
      %v910 = vmax.f32 %v654, 0.0
      %v911 = vmax.f32 %v655, 0.0
      %v912 = vmax.f32 %v656, 0.0
      %v913 = vmax.f32 %v657, 0.0
      %v914 = vmax.f32 %v658, 0.0
      %v915 = vmax.f32 %v659, 0.0
      %v916 = vmax.f32 %v660, 0.0
      %v917 = vmax.f32 %v661, 0.0
      %v918 = vmax.f32 %v662, 0.0
      %v919 = vmax.f32 %v663, 0.0
      %v920 = vmax.f32 %v664, 0.0
      %v921 = vmax.f32 %v665, 0.0
      %v922 = vmax.f32 %v666, 0.0
      %v923 = vmax.f32 %v667, 0.0
      %v924 = vmax.f32 %v668, 0.0
      %v925 = vmax.f32 %v669, 0.0
      %v926 = vmax.f32 %v670, 0.0
      %v927 = vmax.f32 %v671, 0.0
      %v928 = vmax.f32 %v672, 0.0
      %v929 = vmax.f32 %v673, 0.0
      %v930 = vmax.f32 %v674, 0.0
      %v931 = vmax.f32 %v675, 0.0
      %v932 = vmax.f32 %v676, 0.0
      %v933 = vmax.f32 %v677, 0.0
      %v934 = vmax.f32 %v678, 0.0
      %v935 = vmax.f32 %v679, 0.0
      %v936 = vmax.f32 %v680, 0.0
      %v937 = vmax.f32 %v681, 0.0
      %v938 = vmax.f32 %v682, 0.0
      %v939 = vmax.f32 %v683, 0.0
      %v940 = vmax.f32 %v684, 0.0
      %v941 = vmax.f32 %v685, 0.0
      %v942 = vmax.f32 %v686, 0.0
      %v943 = vmax.f32 %v687, 0.0
      %v944 = vmax.f32 %v688, 0.0
      %v945 = vmax.f32 %v689, 0.0
      %v946 = vmax.f32 %v690, 0.0
      %v947 = vmax.f32 %v691, 0.0
      %v948 = vmax.f32 %v692, 0.0
      %v949 = vmax.f32 %v693, 0.0
      %v950 = vmax.f32 %v694, 0.0
      %v951 = vmax.f32 %v695, 0.0
      %v952 = vmax.f32 %v696, 0.0
      %v953 = vmax.f32 %v697, 0.0
      %v954 = vmax.f32 %v698, 0.0
      %v955 = vmax.f32 %v699, 0.0
      %v956 = vmax.f32 %v700, 0.0
      %v957 = vmax.f32 %v701, 0.0
      %v958 = vmax.f32 %v702, 0.0
      %v959 = vmax.f32 %v703, 0.0
      %v960 = vmax.f32 %v704, 0.0
      %v961 = vmax.f32 %v705, 0.0
      %v962 = vmax.f32 %v706, 0.0
      %v963 = vmax.f32 %v707, 0.0
      %v964 = vmax.f32 %v708, 0.0
      %v965 = vmax.f32 %v709, 0.0
      %v966 = vmax.f32 %v710, 0.0
      %v967 = vmax.f32 %v711, 0.0
      %v968 = vmax.f32 %v712, 0.0
      %v969 = vmax.f32 %v713, 0.0
      %v970 = vmax.f32 %v714, 0.0
      %v971 = vmax.f32 %v715, 0.0
      %v972 = vmax.f32 %v716, 0.0
      %v973 = vmax.f32 %v717, 0.0
      %v974 = vmax.f32 %v718, 0.0
      %v975 = vmax.f32 %v719, 0.0
      %v976 = vmax.f32 %v720, 0.0
      %v977 = vmax.f32 %v721, 0.0
      %v978 = vmax.f32 %v722, 0.0
      %v979 = vmax.f32 %v723, 0.0
      %v980 = vmax.f32 %v724, 0.0
      %v981 = vmax.f32 %v725, 0.0
      %v982 = vmax.f32 %v726, 0.0
      %v983 = vmax.f32 %v727, 0.0
      %v984 = vmax.f32 %v728, 0.0
      %v985 = vmax.f32 %v729, 0.0
      %v986 = vmax.f32 %v730, 0.0
      %v987 = vmax.f32 %v731, 0.0
      %v988 = vmax.f32 %v732, 0.0
      %v989 = vmax.f32 %v733, 0.0
      %v990 = vmax.f32 %v734, 0.0
      %v991 = vmax.f32 %v735, 0.0
      %v992 = vmax.f32 %v736, 0.0
      %v993 = vmax.f32 %v737, 0.0
      %v994 = vmax.f32 %v738, 0.0
      %v995 = vmax.f32 %v739, 0.0
      %v996 = vmax.f32 %v740, 0.0
      %v997 = vmax.f32 %v741, 0.0
      %v998 = vmax.f32 %v742, 0.0
      %v999 = vmax.f32 %v743, 0.0
      %v1000 = vmax.f32 %v744, 0.0
      %v1001 = vmax.f32 %v745, 0.0
      %v1002 = vmax.f32 %v746, 0.0
      %v1003 = vmax.f32 %v747, 0.0
      %v1004 = vmax.f32 %v748, 0.0
      %v1005 = vmax.f32 %v749, 0.0
      %v1006 = vmax.f32 %v750, 0.0
      %v1007 = vmax.f32 %v751, 0.0
      %v1008 = vmax.f32 %v752, 0.0
      %v1009 = vmax.f32 %v753, 0.0
      %v1010 = vmax.f32 %v754, 0.0
      %v1011 = vmax.f32 %v755, 0.0
      %v1012 = vmax.f32 %v756, 0.0
      %v1013 = vmax.f32 %v757, 0.0
      %v1014 = vmax.f32 %v758, 0.0
      %v1015 = vmax.f32 %v759, 0.0
      %v1016 = vmax.f32 %v760, 0.0
      %v1017 = vmax.f32 %v761, 0.0
      %v1018 = vmax.f32 %v762, 0.0
      %v1019 = vmax.f32 %v763, 0.0
      %v1020 = vmax.f32 %v764, 0.0
      %v1021 = vmax.f32 %v765, 0.0
      %v1022 = vmax.f32 %v766, 0.0
      %v1023 = vmax.f32 %v767, 0.0
      %v1024 = vmax.f32 %v768, 0.0
      %v1025 = vmax.f32 %v769, 0.0
      %v1026 = vmax.f32 %v770, 0.0
      %v1027 = vmax.f32 %v771, 0.0
      %v1028 = vmax.f32 %v772, 0.0
      %v1029 = vmax.f32 %v773, 0.0
      %v1030 = vmax.f32 %v774, 0.0
      %v1031 = vmax.f32 %v775, 0.0
      %v1032 = vmax.f32 %v776, 0.0
      %v1033 = vmax.f32 %v777, 0.0
      %v1034 = vmax.f32 %v778, 0.0
      %v1035 = vmax.f32 %v779, 0.0
      %v1036 = vmax.f32 %v780, 0.0
      %v1037 = vmax.f32 %v781, 0.0
      %v1038 = vmax.f32 %v782, 0.0
      %v1039 = vmax.f32 %v783, 0.0
      %v1040 = vmax.f32 %v784, 0.0
      %v1041 = vpack.c.bf16 %v787, %v785
      %v1042 = vpack.c.bf16 %v788, %v786
      %v1043 = vpack.c.bf16 %v791, %v789
      %v1044 = vpack.c.bf16 %v792, %v790
      %v1045 = vpack.c.bf16 %v795, %v793
      %v1046 = vpack.c.bf16 %v796, %v794
      %v1047 = vpack.c.bf16 %v799, %v797
      %v1048 = vpack.c.bf16 %v800, %v798
      %v1049 = vpack.c.bf16 %v803, %v801
      %v1050 = vpack.c.bf16 %v804, %v802
      %v1051 = vpack.c.bf16 %v807, %v805
      %v1052 = vpack.c.bf16 %v808, %v806
      %v1053 = vpack.c.bf16 %v811, %v809
      %v1054 = vpack.c.bf16 %v812, %v810
      %v1055 = vpack.c.bf16 %v815, %v813
      %v1056 = vpack.c.bf16 %v816, %v814
      %v1057 = vpack.c.bf16 %v819, %v817
      %v1058 = vpack.c.bf16 %v820, %v818
      %v1059 = vpack.c.bf16 %v823, %v821
      %v1060 = vpack.c.bf16 %v824, %v822
      %v1061 = vpack.c.bf16 %v827, %v825
      %v1062 = vpack.c.bf16 %v828, %v826
      %v1063 = vpack.c.bf16 %v831, %v829
      %v1064 = vpack.c.bf16 %v832, %v830
      %v1065 = vpack.c.bf16 %v835, %v833
      %v1066 = vpack.c.bf16 %v836, %v834
      %v1067 = vpack.c.bf16 %v839, %v837
      %v1068 = vpack.c.bf16 %v840, %v838
      %v1069 = vpack.c.bf16 %v843, %v841
      %v1070 = vpack.c.bf16 %v844, %v842
      %v1071 = vpack.c.bf16 %v847, %v845
      %v1072 = vpack.c.bf16 %v848, %v846
      %v1073 = vpack.c.bf16 %v851, %v849
      %v1074 = vpack.c.bf16 %v852, %v850
      %v1075 = vpack.c.bf16 %v855, %v853
      %v1076 = vpack.c.bf16 %v856, %v854
      %v1077 = vpack.c.bf16 %v859, %v857
      %v1078 = vpack.c.bf16 %v860, %v858
      %v1079 = vpack.c.bf16 %v863, %v861
      %v1080 = vpack.c.bf16 %v864, %v862
      %v1081 = vpack.c.bf16 %v867, %v865
      %v1082 = vpack.c.bf16 %v868, %v866
      %v1083 = vpack.c.bf16 %v871, %v869
      %v1084 = vpack.c.bf16 %v872, %v870
      %v1085 = vpack.c.bf16 %v875, %v873
      %v1086 = vpack.c.bf16 %v876, %v874
      %v1087 = vpack.c.bf16 %v879, %v877
      %v1088 = vpack.c.bf16 %v880, %v878
      %v1089 = vpack.c.bf16 %v883, %v881
      %v1090 = vpack.c.bf16 %v884, %v882
      %v1091 = vpack.c.bf16 %v887, %v885
      %v1092 = vpack.c.bf16 %v888, %v886
      %v1093 = vpack.c.bf16 %v891, %v889
      %v1094 = vpack.c.bf16 %v892, %v890
      %v1095 = vpack.c.bf16 %v895, %v893
      %v1096 = vpack.c.bf16 %v896, %v894
      %v1097 = vpack.c.bf16 %v899, %v897
      %v1098 = vpack.c.bf16 %v900, %v898
      %v1099 = vpack.c.bf16 %v903, %v901
      %v1100 = vpack.c.bf16 %v904, %v902
      %v1101 = vpack.c.bf16 %v907, %v905
      %v1102 = vpack.c.bf16 %v908, %v906
      %v1103 = vpack.c.bf16 %v911, %v909
      %v1104 = vpack.c.bf16 %v912, %v910
      %v1105 = vpack.c.bf16 %v915, %v913
      %v1106 = vpack.c.bf16 %v916, %v914
      %v1107 = vpack.c.bf16 %v919, %v917
      %v1108 = vpack.c.bf16 %v920, %v918
      %v1109 = vpack.c.bf16 %v923, %v921
      %v1110 = vpack.c.bf16 %v924, %v922
      %v1111 = vpack.c.bf16 %v927, %v925
      %v1112 = vpack.c.bf16 %v928, %v926
      %v1113 = vpack.c.bf16 %v931, %v929
      %v1114 = vpack.c.bf16 %v932, %v930
      %v1115 = vpack.c.bf16 %v935, %v933
      %v1116 = vpack.c.bf16 %v936, %v934
      %v1117 = vpack.c.bf16 %v939, %v937
      %v1118 = vpack.c.bf16 %v940, %v938
      %v1119 = vpack.c.bf16 %v943, %v941
      %v1120 = vpack.c.bf16 %v944, %v942
      %v1121 = vpack.c.bf16 %v947, %v945
      %v1122 = vpack.c.bf16 %v948, %v946
      %v1123 = vpack.c.bf16 %v951, %v949
      %v1124 = vpack.c.bf16 %v952, %v950
      %v1125 = vpack.c.bf16 %v955, %v953
      %v1126 = vpack.c.bf16 %v956, %v954
      %v1127 = vpack.c.bf16 %v959, %v957
      %v1128 = vpack.c.bf16 %v960, %v958
      %v1129 = vpack.c.bf16 %v963, %v961
      %v1130 = vpack.c.bf16 %v964, %v962
      %v1131 = vpack.c.bf16 %v967, %v965
      %v1132 = vpack.c.bf16 %v968, %v966
      %v1133 = vpack.c.bf16 %v971, %v969
      %v1134 = vpack.c.bf16 %v972, %v970
      %v1135 = vpack.c.bf16 %v975, %v973
      %v1136 = vpack.c.bf16 %v976, %v974
      %v1137 = vpack.c.bf16 %v979, %v977
      %v1138 = vpack.c.bf16 %v980, %v978
      %v1139 = vpack.c.bf16 %v983, %v981
      %v1140 = vpack.c.bf16 %v984, %v982
      %v1141 = vpack.c.bf16 %v987, %v985
      %v1142 = vpack.c.bf16 %v988, %v986
      %v1143 = vpack.c.bf16 %v991, %v989
      %v1144 = vpack.c.bf16 %v992, %v990
      %v1145 = vpack.c.bf16 %v995, %v993
      %v1146 = vpack.c.bf16 %v996, %v994
      %v1147 = vpack.c.bf16 %v999, %v997
      %v1148 = vpack.c.bf16 %v1000, %v998
      %v1149 = vpack.c.bf16 %v1003, %v1001
      %v1150 = vpack.c.bf16 %v1004, %v1002
      %v1151 = vpack.c.bf16 %v1007, %v1005
      %v1152 = vpack.c.bf16 %v1008, %v1006
      %v1153 = vpack.c.bf16 %v1011, %v1009
      %v1154 = vpack.c.bf16 %v1012, %v1010
      %v1155 = vpack.c.bf16 %v1015, %v1013
      %v1156 = vpack.c.bf16 %v1016, %v1014
      %v1157 = vpack.c.bf16 %v1019, %v1017
      %v1158 = vpack.c.bf16 %v1020, %v1018
      %v1159 = vpack.c.bf16 %v1023, %v1021
      %v1160 = vpack.c.bf16 %v1024, %v1022
      %v1161 = vpack.c.bf16 %v1027, %v1025
      %v1162 = vpack.c.bf16 %v1028, %v1026
      %v1163 = vpack.c.bf16 %v1031, %v1029
      %v1164 = vpack.c.bf16 %v1032, %v1030
      %v1165 = vpack.c.bf16 %v1035, %v1033
      %v1166 = vpack.c.bf16 %v1036, %v1034
      %v1167 = vpack.c.bf16 %v1039, %v1037
      %v1168 = vpack.c.bf16 %v1040, %v1038
      %v1169 = vld [vmem:[%s360] sm:$0xff]
      %v1170 = vld [vmem:[%s360 + $0x8] sm:$0xff]
      %v1171 = vld [vmem:[%s360 + $0x10] sm:$0xff]
      %v1172 = vld [vmem:[%s360 + $0x18] sm:$0xff]
      %v1173 = vld [vmem:[%s360 + $0x20] sm:$0xff]
      %v1174 = vld [vmem:[%s360 + $0x28] sm:$0xff]
      %v1175 = vld [vmem:[%s360 + $0x30] sm:$0xff]
      %v1176 = vld [vmem:[%s360 + $0x38] sm:$0xff]
      %v1177 = vld [vmem:[%s360 + $0x40] sm:$0xff]
      %v1178 = vld [vmem:[%s360 + $0x48] sm:$0xff]
      %v1179 = vld [vmem:[%s360 + $0x50] sm:$0xff]
      %v1180 = vld [vmem:[%s360 + $0x58] sm:$0xff]
      %v1181 = vld [vmem:[%s360 + $0x60] sm:$0xff]
      %v1182 = vld [vmem:[%s360 + $0x68] sm:$0xff]
      %v1183 = vld [vmem:[%s360 + $0x70] sm:$0xff]
      %v1184 = vld [vmem:[%s360 + $0x78] sm:$0xff]
      %v1185 = vld [vmem:[%s360 + $0x80] sm:$0xff]
      %v1186 = vld [vmem:[%s360 + $0x88] sm:$0xff]
      %v1187 = vld [vmem:[%s360 + $0x90] sm:$0xff]
      %v1188 = vld [vmem:[%s360 + $0x98] sm:$0xff]
      %v1189 = vld [vmem:[%s360 + $0xa0] sm:$0xff]
      %v1190 = vld [vmem:[%s360 + $0xa8] sm:$0xff]
      %v1191 = vld [vmem:[%s360 + $0xb0] sm:$0xff]
      %v1192 = vld [vmem:[%s360 + $0xb8] sm:$0xff]
      %v1193 = vld [vmem:[%s360 + $0xc0] sm:$0xff]
      %v1194 = vld [vmem:[%s360 + $0xc8] sm:$0xff]
      %v1195 = vld [vmem:[%s360 + $0xd0] sm:$0xff]
      %v1196 = vld [vmem:[%s360 + $0xd8] sm:$0xff]
      %v1197 = vld [vmem:[%s360 + $0xe0] sm:$0xff]
      %v1198 = vld [vmem:[%s360 + $0xe8] sm:$0xff]
      %v1199 = vld [vmem:[%s360 + $0xf0] sm:$0xff]
      %v1200 = vld [vmem:[%s360 + $0xf8] sm:$0xff]
      %v1201 = vld [vmem:[%s360 + $0x100] sm:$0xff]
      %v1202 = vld [vmem:[%s360 + $0x108] sm:$0xff]
      %v1203 = vld [vmem:[%s360 + $0x110] sm:$0xff]
      %v1204 = vld [vmem:[%s360 + $0x118] sm:$0xff]
      %v1205 = vld [vmem:[%s360 + $0x120] sm:$0xff]
      %v1206 = vld [vmem:[%s360 + $0x128] sm:$0xff]
      %v1207 = vld [vmem:[%s360 + $0x130] sm:$0xff]
      %v1208 = vld [vmem:[%s360 + $0x138] sm:$0xff]
      %v1209 = vld [vmem:[%s360 + $0x140] sm:$0xff]
      %v1210 = vld [vmem:[%s360 + $0x148] sm:$0xff]
      %v1211 = vld [vmem:[%s360 + $0x150] sm:$0xff]
      %v1212 = vld [vmem:[%s360 + $0x158] sm:$0xff]
      %v1213 = vld [vmem:[%s360 + $0x160] sm:$0xff]
      %v1214 = vld [vmem:[%s360 + $0x168] sm:$0xff]
      %v1215 = vld [vmem:[%s360 + $0x170] sm:$0xff]
      %v1216 = vld [vmem:[%s360 + $0x178] sm:$0xff]
      %v1217 = vld [vmem:[%s360 + $0x180] sm:$0xff]
      %v1218 = vld [vmem:[%s360 + $0x188] sm:$0xff]
      %v1219 = vld [vmem:[%s360 + $0x190] sm:$0xff]
      %v1220 = vld [vmem:[%s360 + $0x198] sm:$0xff]
      %v1221 = vld [vmem:[%s360 + $0x1a0] sm:$0xff]
      %v1222 = vld [vmem:[%s360 + $0x1a8] sm:$0xff]
      %v1223 = vld [vmem:[%s360 + $0x1b0] sm:$0xff]
      %v1224 = vld [vmem:[%s360 + $0x1b8] sm:$0xff]
      %v1225 = vld [vmem:[%s360 + $0x1c0] sm:$0xff]
      %v1226 = vld [vmem:[%s360 + $0x1c8] sm:$0xff]
      %v1227 = vld [vmem:[%s360 + $0x1d0] sm:$0xff]
      %v1228 = vld [vmem:[%s360 + $0x1d8] sm:$0xff]
      %v1229 = vld [vmem:[%s360 + $0x1e0] sm:$0xff]
      %v1230 = vld [vmem:[%s360 + $0x1e8] sm:$0xff]
      %v1231 = vld [vmem:[%s360 + $0x1f0] sm:$0xff]
      %v1232 = vld [vmem:[%s360 + $0x1f8] sm:$0xff]
      %v1233 = vld [vmem:[%s360 + $0x200] sm:$0xff]
      %v1234 = vld [vmem:[%s360 + $0x208] sm:$0xff]
      %v1235 = vld [vmem:[%s360 + $0x210] sm:$0xff]
      %v1236 = vld [vmem:[%s360 + $0x218] sm:$0xff]
      %v1237 = vld [vmem:[%s360 + $0x220] sm:$0xff]
      %v1238 = vld [vmem:[%s360 + $0x228] sm:$0xff]
      %v1239 = vld [vmem:[%s360 + $0x230] sm:$0xff]
      %v1240 = vld [vmem:[%s360 + $0x238] sm:$0xff]
      %v1241 = vld [vmem:[%s360 + $0x240] sm:$0xff]
      %v1242 = vld [vmem:[%s360 + $0x248] sm:$0xff]
      %v1243 = vld [vmem:[%s360 + $0x250] sm:$0xff]
      %v1244 = vld [vmem:[%s360 + $0x258] sm:$0xff]
      %v1245 = vld [vmem:[%s360 + $0x260] sm:$0xff]
      %v1246 = vld [vmem:[%s360 + $0x268] sm:$0xff]
      %v1247 = vld [vmem:[%s360 + $0x270] sm:$0xff]
      %v1248 = vld [vmem:[%s360 + $0x278] sm:$0xff]
      %v1249 = vld [vmem:[%s360 + $0x280] sm:$0xff]
      %v1250 = vld [vmem:[%s360 + $0x288] sm:$0xff]
      %v1251 = vld [vmem:[%s360 + $0x290] sm:$0xff]
      %v1252 = vld [vmem:[%s360 + $0x298] sm:$0xff]
      %v1253 = vld [vmem:[%s360 + $0x2a0] sm:$0xff]
      %v1254 = vld [vmem:[%s360 + $0x2a8] sm:$0xff]
      %v1255 = vld [vmem:[%s360 + $0x2b0] sm:$0xff]
      %v1256 = vld [vmem:[%s360 + $0x2b8] sm:$0xff]
      %v1257 = vld [vmem:[%s360 + $0x2c0] sm:$0xff]
      %v1258 = vld [vmem:[%s360 + $0x2c8] sm:$0xff]
      %v1259 = vld [vmem:[%s360 + $0x2d0] sm:$0xff]
      %v1260 = vld [vmem:[%s360 + $0x2d8] sm:$0xff]
      %v1261 = vld [vmem:[%s360 + $0x2e0] sm:$0xff]
      %v1262 = vld [vmem:[%s360 + $0x2e8] sm:$0xff]
      %v1263 = vld [vmem:[%s360 + $0x2f0] sm:$0xff]
      %v1264 = vld [vmem:[%s360 + $0x2f8] sm:$0xff]
      %v1265 = vld [vmem:[%s360 + $0x300] sm:$0xff]
      %v1266 = vld [vmem:[%s360 + $0x308] sm:$0xff]
      %v1267 = vld [vmem:[%s360 + $0x310] sm:$0xff]
      %v1268 = vld [vmem:[%s360 + $0x318] sm:$0xff]
      %v1269 = vld [vmem:[%s360 + $0x320] sm:$0xff]
      %v1270 = vld [vmem:[%s360 + $0x328] sm:$0xff]
      %v1271 = vld [vmem:[%s360 + $0x330] sm:$0xff]
      %v1272 = vld [vmem:[%s360 + $0x338] sm:$0xff]
      %v1273 = vld [vmem:[%s360 + $0x340] sm:$0xff]
      %v1274 = vld [vmem:[%s360 + $0x348] sm:$0xff]
      %v1275 = vld [vmem:[%s360 + $0x350] sm:$0xff]
      %v1276 = vld [vmem:[%s360 + $0x358] sm:$0xff]
      %v1277 = vld [vmem:[%s360 + $0x360] sm:$0xff]
      %v1278 = vld [vmem:[%s360 + $0x368] sm:$0xff]
      %v1279 = vld [vmem:[%s360 + $0x370] sm:$0xff]
      %v1280 = vld [vmem:[%s360 + $0x378] sm:$0xff]
      %v1281 = vld [vmem:[%s360 + $0x380] sm:$0xff]
      %v1282 = vld [vmem:[%s360 + $0x388] sm:$0xff]
      %v1283 = vld [vmem:[%s360 + $0x390] sm:$0xff]
      %v1284 = vld [vmem:[%s360 + $0x398] sm:$0xff]
      %v1285 = vld [vmem:[%s360 + $0x3a0] sm:$0xff]
      %v1286 = vld [vmem:[%s360 + $0x3a8] sm:$0xff]
      %v1287 = vld [vmem:[%s360 + $0x3b0] sm:$0xff]
      %v1288 = vld [vmem:[%s360 + $0x3b8] sm:$0xff]
      %v1289 = vld [vmem:[%s360 + $0x3c0] sm:$0xff]
      %v1290 = vld [vmem:[%s360 + $0x3c8] sm:$0xff]
      %v1291 = vld [vmem:[%s360 + $0x3d0] sm:$0xff]
      %v1292 = vld [vmem:[%s360 + $0x3d8] sm:$0xff]
      %v1293 = vld [vmem:[%s360 + $0x3e0] sm:$0xff]
      %v1294 = vld [vmem:[%s360 + $0x3e8] sm:$0xff]
      %v1295 = vld [vmem:[%s360 + $0x3f0] sm:$0xff]
      %v1296 = vld [vmem:[%s360 + $0x3f8] sm:$0xff]
      %v1425 = vunpack.c.l.b16 %v1169
      %v1426 = vunpack.c.h.b16 %v1169
      %v1427 = vunpack.c.l.b16 %v1170
      %v1428 = vunpack.c.h.b16 %v1170
      %v1429 = vunpack.c.l.b16 %v1171
      %v1430 = vunpack.c.h.b16 %v1171
      %v1431 = vunpack.c.l.b16 %v1172
      %v1432 = vunpack.c.h.b16 %v1172
      %v1433 = vunpack.c.l.b16 %v1173
      %v1434 = vunpack.c.h.b16 %v1173
      %v1435 = vunpack.c.l.b16 %v1174
      %v1436 = vunpack.c.h.b16 %v1174
      %v1437 = vunpack.c.l.b16 %v1175
      %v1438 = vunpack.c.h.b16 %v1175
      %v1439 = vunpack.c.l.b16 %v1176
      %v1440 = vunpack.c.h.b16 %v1176
      %v1441 = vunpack.c.l.b16 %v1177
      %v1442 = vunpack.c.h.b16 %v1177
      %v1443 = vunpack.c.l.b16 %v1178
      %v1444 = vunpack.c.h.b16 %v1178
      %v1445 = vunpack.c.l.b16 %v1179
      %v1446 = vunpack.c.h.b16 %v1179
      %v1447 = vunpack.c.l.b16 %v1180
      %v1448 = vunpack.c.h.b16 %v1180
      %v1449 = vunpack.c.l.b16 %v1181
      %v1450 = vunpack.c.h.b16 %v1181
      %v1451 = vunpack.c.l.b16 %v1182
      %v1452 = vunpack.c.h.b16 %v1182
      %v1453 = vunpack.c.l.b16 %v1183
      %v1454 = vunpack.c.h.b16 %v1183
      %v1455 = vunpack.c.l.b16 %v1184
      %v1456 = vunpack.c.h.b16 %v1184
      %v1457 = vunpack.c.l.b16 %v1185
      %v1458 = vunpack.c.h.b16 %v1185
      %v1459 = vunpack.c.l.b16 %v1186
      %v1460 = vunpack.c.h.b16 %v1186
      %v1461 = vunpack.c.l.b16 %v1187
      %v1462 = vunpack.c.h.b16 %v1187
      %v1463 = vunpack.c.l.b16 %v1188
      %v1464 = vunpack.c.h.b16 %v1188
      %v1465 = vunpack.c.l.b16 %v1189
      %v1466 = vunpack.c.h.b16 %v1189
      %v1467 = vunpack.c.l.b16 %v1190
      %v1468 = vunpack.c.h.b16 %v1190
      %v1469 = vunpack.c.l.b16 %v1191
      %v1470 = vunpack.c.h.b16 %v1191
      %v1471 = vunpack.c.l.b16 %v1192
      %v1472 = vunpack.c.h.b16 %v1192
      %v1473 = vunpack.c.l.b16 %v1193
      %v1474 = vunpack.c.h.b16 %v1193
      %v1475 = vunpack.c.l.b16 %v1194
      %v1476 = vunpack.c.h.b16 %v1194
      %v1477 = vunpack.c.l.b16 %v1195
      %v1478 = vunpack.c.h.b16 %v1195
      %v1479 = vunpack.c.l.b16 %v1196
      %v1480 = vunpack.c.h.b16 %v1196
      %v1481 = vunpack.c.l.b16 %v1197
      %v1482 = vunpack.c.h.b16 %v1197
      %v1483 = vunpack.c.l.b16 %v1198
      %v1484 = vunpack.c.h.b16 %v1198
      %v1485 = vunpack.c.l.b16 %v1199
      %v1486 = vunpack.c.h.b16 %v1199
      %v1487 = vunpack.c.l.b16 %v1200
      %v1488 = vunpack.c.h.b16 %v1200
      %v1489 = vunpack.c.l.b16 %v1201
      %v1490 = vunpack.c.h.b16 %v1201
      %v1491 = vunpack.c.l.b16 %v1202
      %v1492 = vunpack.c.h.b16 %v1202
      %v1493 = vunpack.c.l.b16 %v1203
      %v1494 = vunpack.c.h.b16 %v1203
      %v1495 = vunpack.c.l.b16 %v1204
      %v1496 = vunpack.c.h.b16 %v1204
      %v1497 = vunpack.c.l.b16 %v1205
      %v1498 = vunpack.c.h.b16 %v1205
      %v1499 = vunpack.c.l.b16 %v1206
      %v1500 = vunpack.c.h.b16 %v1206
      %v1501 = vunpack.c.l.b16 %v1207
      %v1502 = vunpack.c.h.b16 %v1207
      %v1503 = vunpack.c.l.b16 %v1208
      %v1504 = vunpack.c.h.b16 %v1208
      %v1505 = vunpack.c.l.b16 %v1209
      %v1506 = vunpack.c.h.b16 %v1209
      %v1507 = vunpack.c.l.b16 %v1210
      %v1508 = vunpack.c.h.b16 %v1210
      %v1509 = vunpack.c.l.b16 %v1211
      %v1510 = vunpack.c.h.b16 %v1211
      %v1511 = vunpack.c.l.b16 %v1212
      %v1512 = vunpack.c.h.b16 %v1212
      %v1513 = vunpack.c.l.b16 %v1213
      %v1514 = vunpack.c.h.b16 %v1213
      %v1515 = vunpack.c.l.b16 %v1214
      %v1516 = vunpack.c.h.b16 %v1214
      %v1517 = vunpack.c.l.b16 %v1215
      %v1518 = vunpack.c.h.b16 %v1215
      %v1519 = vunpack.c.l.b16 %v1216
      %v1520 = vunpack.c.h.b16 %v1216
      %v1521 = vunpack.c.l.b16 %v1217
      %v1522 = vunpack.c.h.b16 %v1217
      %v1523 = vunpack.c.l.b16 %v1218
      %v1524 = vunpack.c.h.b16 %v1218
      %v1525 = vunpack.c.l.b16 %v1219
      %v1526 = vunpack.c.h.b16 %v1219
      %v1527 = vunpack.c.l.b16 %v1220
      %v1528 = vunpack.c.h.b16 %v1220
      %v1529 = vunpack.c.l.b16 %v1221
      %v1530 = vunpack.c.h.b16 %v1221
      %v1531 = vunpack.c.l.b16 %v1222
      %v1532 = vunpack.c.h.b16 %v1222
      %v1533 = vunpack.c.l.b16 %v1223
      %v1534 = vunpack.c.h.b16 %v1223
      %v1535 = vunpack.c.l.b16 %v1224
      %v1536 = vunpack.c.h.b16 %v1224
      %v1537 = vunpack.c.l.b16 %v1225
      %v1538 = vunpack.c.h.b16 %v1225
      %v1539 = vunpack.c.l.b16 %v1226
      %v1540 = vunpack.c.h.b16 %v1226
      %v1541 = vunpack.c.l.b16 %v1227
      %v1542 = vunpack.c.h.b16 %v1227
      %v1543 = vunpack.c.l.b16 %v1228
      %v1544 = vunpack.c.h.b16 %v1228
      %v1545 = vunpack.c.l.b16 %v1229
      %v1546 = vunpack.c.h.b16 %v1229
      %v1547 = vunpack.c.l.b16 %v1230
      %v1548 = vunpack.c.h.b16 %v1230
      %v1549 = vunpack.c.l.b16 %v1231
      %v1550 = vunpack.c.h.b16 %v1231
      %v1551 = vunpack.c.l.b16 %v1232
      %v1552 = vunpack.c.h.b16 %v1232
      %v1553 = vunpack.c.l.b16 %v1233
      %v1554 = vunpack.c.h.b16 %v1233
      %v1555 = vunpack.c.l.b16 %v1234
      %v1556 = vunpack.c.h.b16 %v1234
      %v1557 = vunpack.c.l.b16 %v1235
      %v1558 = vunpack.c.h.b16 %v1235
      %v1559 = vunpack.c.l.b16 %v1236
      %v1560 = vunpack.c.h.b16 %v1236
      %v1561 = vunpack.c.l.b16 %v1237
      %v1562 = vunpack.c.h.b16 %v1237
      %v1563 = vunpack.c.l.b16 %v1238
      %v1564 = vunpack.c.h.b16 %v1238
      %v1565 = vunpack.c.l.b16 %v1239
      %v1566 = vunpack.c.h.b16 %v1239
      %v1567 = vunpack.c.l.b16 %v1240
      %v1568 = vunpack.c.h.b16 %v1240
      %v1569 = vunpack.c.l.b16 %v1241
      %v1570 = vunpack.c.h.b16 %v1241
      %v1571 = vunpack.c.l.b16 %v1242
      %v1572 = vunpack.c.h.b16 %v1242
      %v1573 = vunpack.c.l.b16 %v1243
      %v1574 = vunpack.c.h.b16 %v1243
      %v1575 = vunpack.c.l.b16 %v1244
      %v1576 = vunpack.c.h.b16 %v1244
      %v1577 = vunpack.c.l.b16 %v1245
      %v1578 = vunpack.c.h.b16 %v1245
      %v1579 = vunpack.c.l.b16 %v1246
      %v1580 = vunpack.c.h.b16 %v1246
      %v1581 = vunpack.c.l.b16 %v1247
      %v1582 = vunpack.c.h.b16 %v1247
      %v1583 = vunpack.c.l.b16 %v1248
      %v1584 = vunpack.c.h.b16 %v1248
      %v1585 = vunpack.c.l.b16 %v1249
      %v1586 = vunpack.c.h.b16 %v1249
      %v1587 = vunpack.c.l.b16 %v1250
      %v1588 = vunpack.c.h.b16 %v1250
      %v1589 = vunpack.c.l.b16 %v1251
      %v1590 = vunpack.c.h.b16 %v1251
      %v1591 = vunpack.c.l.b16 %v1252
      %v1592 = vunpack.c.h.b16 %v1252
      %v1593 = vunpack.c.l.b16 %v1253
      %v1594 = vunpack.c.h.b16 %v1253
      %v1595 = vunpack.c.l.b16 %v1254
      %v1596 = vunpack.c.h.b16 %v1254
      %v1597 = vunpack.c.l.b16 %v1255
      %v1598 = vunpack.c.h.b16 %v1255
      %v1599 = vunpack.c.l.b16 %v1256
      %v1600 = vunpack.c.h.b16 %v1256
      %v1601 = vunpack.c.l.b16 %v1257
      %v1602 = vunpack.c.h.b16 %v1257
      %v1603 = vunpack.c.l.b16 %v1258
      %v1604 = vunpack.c.h.b16 %v1258
      %v1605 = vunpack.c.l.b16 %v1259
      %v1606 = vunpack.c.h.b16 %v1259
      %v1607 = vunpack.c.l.b16 %v1260
      %v1608 = vunpack.c.h.b16 %v1260
      %v1609 = vunpack.c.l.b16 %v1261
      %v1610 = vunpack.c.h.b16 %v1261
      %v1611 = vunpack.c.l.b16 %v1262
      %v1612 = vunpack.c.h.b16 %v1262
      %v1613 = vunpack.c.l.b16 %v1263
      %v1614 = vunpack.c.h.b16 %v1263
      %v1615 = vunpack.c.l.b16 %v1264
      %v1616 = vunpack.c.h.b16 %v1264
      %v1617 = vunpack.c.l.b16 %v1265
      %v1618 = vunpack.c.h.b16 %v1265
      %v1619 = vunpack.c.l.b16 %v1266
      %v1620 = vunpack.c.h.b16 %v1266
      %v1621 = vunpack.c.l.b16 %v1267
      %v1622 = vunpack.c.h.b16 %v1267
      %v1623 = vunpack.c.l.b16 %v1268
      %v1624 = vunpack.c.h.b16 %v1268
      %v1625 = vunpack.c.l.b16 %v1269
      %v1626 = vunpack.c.h.b16 %v1269
      %v1627 = vunpack.c.l.b16 %v1270
      %v1628 = vunpack.c.h.b16 %v1270
      %v1629 = vunpack.c.l.b16 %v1271
      %v1630 = vunpack.c.h.b16 %v1271
      %v1631 = vunpack.c.l.b16 %v1272
      %v1632 = vunpack.c.h.b16 %v1272
      %v1633 = vunpack.c.l.b16 %v1273
      %v1634 = vunpack.c.h.b16 %v1273
      %v1635 = vunpack.c.l.b16 %v1274
      %v1636 = vunpack.c.h.b16 %v1274
      %v1637 = vunpack.c.l.b16 %v1275
      %v1638 = vunpack.c.h.b16 %v1275
      %v1639 = vunpack.c.l.b16 %v1276
      %v1640 = vunpack.c.h.b16 %v1276
      %v1641 = vunpack.c.l.b16 %v1277
      %v1642 = vunpack.c.h.b16 %v1277
      %v1643 = vunpack.c.l.b16 %v1278
      %v1644 = vunpack.c.h.b16 %v1278
      %v1645 = vunpack.c.l.b16 %v1279
      %v1646 = vunpack.c.h.b16 %v1279
      %v1647 = vunpack.c.l.b16 %v1280
      %v1648 = vunpack.c.h.b16 %v1280
      %v1649 = vunpack.c.l.b16 %v1281
      %v1650 = vunpack.c.h.b16 %v1281
      %v1651 = vunpack.c.l.b16 %v1282
      %v1652 = vunpack.c.h.b16 %v1282
      %v1653 = vunpack.c.l.b16 %v1283
      %v1654 = vunpack.c.h.b16 %v1283
      %v1655 = vunpack.c.l.b16 %v1284
      %v1656 = vunpack.c.h.b16 %v1284
      %v1657 = vunpack.c.l.b16 %v1285
      %v1658 = vunpack.c.h.b16 %v1285
      %v1659 = vunpack.c.l.b16 %v1286
      %v1660 = vunpack.c.h.b16 %v1286
      %v1661 = vunpack.c.l.b16 %v1287
      %v1662 = vunpack.c.h.b16 %v1287
      %v1663 = vunpack.c.l.b16 %v1288
      %v1664 = vunpack.c.h.b16 %v1288
      %v1665 = vunpack.c.l.b16 %v1289
      %v1666 = vunpack.c.h.b16 %v1289
      %v1667 = vunpack.c.l.b16 %v1290
      %v1668 = vunpack.c.h.b16 %v1290
      %v1669 = vunpack.c.l.b16 %v1291
      %v1670 = vunpack.c.h.b16 %v1291
      %v1671 = vunpack.c.l.b16 %v1292
      %v1672 = vunpack.c.h.b16 %v1292
      %v1673 = vunpack.c.l.b16 %v1293
      %v1674 = vunpack.c.h.b16 %v1293
      %v1675 = vunpack.c.l.b16 %v1294
      %v1676 = vunpack.c.h.b16 %v1294
      %v1677 = vunpack.c.l.b16 %v1295
      %v1678 = vunpack.c.h.b16 %v1295
      %v1679 = vunpack.c.l.b16 %v1296
      %v1680 = vunpack.c.h.b16 %v1296
      %v1681 = vpack.c.b16 %v1433, %v1425
      %v1682 = vpack.c.b16 %v1434, %v1426
      %v1683 = vpack.c.b16 %v1435, %v1427
      %v1684 = vpack.c.b16 %v1436, %v1428
      %v1685 = vpack.c.b16 %v1437, %v1429
      %v1686 = vpack.c.b16 %v1438, %v1430
      %v1687 = vpack.c.b16 %v1439, %v1431
      %v1688 = vpack.c.b16 %v1440, %v1432
      %v1689 = vpack.c.b16 %v1449, %v1441
      %v1690 = vpack.c.b16 %v1450, %v1442
      %v1691 = vpack.c.b16 %v1451, %v1443
      %v1692 = vpack.c.b16 %v1452, %v1444
      %v1693 = vpack.c.b16 %v1453, %v1445
      %v1694 = vpack.c.b16 %v1454, %v1446
      %v1695 = vpack.c.b16 %v1455, %v1447
      %v1696 = vpack.c.b16 %v1456, %v1448
      %v1697 = vpack.c.b16 %v1465, %v1457
      %v1698 = vpack.c.b16 %v1466, %v1458
      %v1699 = vpack.c.b16 %v1467, %v1459
      %v1700 = vpack.c.b16 %v1468, %v1460
      %v1701 = vpack.c.b16 %v1469, %v1461
      %v1702 = vpack.c.b16 %v1470, %v1462
      %v1703 = vpack.c.b16 %v1471, %v1463
      %v1704 = vpack.c.b16 %v1472, %v1464
      %v1705 = vpack.c.b16 %v1481, %v1473
      %v1706 = vpack.c.b16 %v1482, %v1474
      %v1707 = vpack.c.b16 %v1483, %v1475
      %v1708 = vpack.c.b16 %v1484, %v1476
      %v1709 = vpack.c.b16 %v1485, %v1477
      %v1710 = vpack.c.b16 %v1486, %v1478
      %v1711 = vpack.c.b16 %v1487, %v1479
      %v1712 = vpack.c.b16 %v1488, %v1480
      %v1713 = vpack.c.b16 %v1497, %v1489
      %v1714 = vpack.c.b16 %v1498, %v1490
      %v1715 = vpack.c.b16 %v1499, %v1491
      %v1716 = vpack.c.b16 %v1500, %v1492
      %v1717 = vpack.c.b16 %v1501, %v1493
      %v1718 = vpack.c.b16 %v1502, %v1494
      %v1719 = vpack.c.b16 %v1503, %v1495
      %v1720 = vpack.c.b16 %v1504, %v1496
      %v1721 = vpack.c.b16 %v1513, %v1505
      %v1722 = vpack.c.b16 %v1514, %v1506
      %v1723 = vpack.c.b16 %v1515, %v1507
      %v1724 = vpack.c.b16 %v1516, %v1508
      %v1725 = vpack.c.b16 %v1517, %v1509
      %v1726 = vpack.c.b16 %v1518, %v1510
      %v1727 = vpack.c.b16 %v1519, %v1511
      %v1728 = vpack.c.b16 %v1520, %v1512
      %v1729 = vpack.c.b16 %v1529, %v1521
      %v1730 = vpack.c.b16 %v1530, %v1522
      %v1731 = vpack.c.b16 %v1531, %v1523
      %v1732 = vpack.c.b16 %v1532, %v1524
      %v1733 = vpack.c.b16 %v1533, %v1525
      %v1734 = vpack.c.b16 %v1534, %v1526
      %v1735 = vpack.c.b16 %v1535, %v1527
      %v1736 = vpack.c.b16 %v1536, %v1528
      %v1737 = vpack.c.b16 %v1545, %v1537
      %v1738 = vpack.c.b16 %v1546, %v1538
      %v1739 = vpack.c.b16 %v1547, %v1539
      %v1740 = vpack.c.b16 %v1548, %v1540
      %v1741 = vpack.c.b16 %v1549, %v1541
      %v1742 = vpack.c.b16 %v1550, %v1542
      %v1743 = vpack.c.b16 %v1551, %v1543
      %v1744 = vpack.c.b16 %v1552, %v1544
      %v1745 = vpack.c.b16 %v1561, %v1553
      %v1746 = vpack.c.b16 %v1562, %v1554
      %v1747 = vpack.c.b16 %v1563, %v1555
      %v1748 = vpack.c.b16 %v1564, %v1556
      %v1749 = vpack.c.b16 %v1565, %v1557
      %v1750 = vpack.c.b16 %v1566, %v1558
      %v1751 = vpack.c.b16 %v1567, %v1559
      %v1752 = vpack.c.b16 %v1568, %v1560
      %v1753 = vpack.c.b16 %v1577, %v1569
      %v1754 = vpack.c.b16 %v1578, %v1570
      %v1755 = vpack.c.b16 %v1579, %v1571
      %v1756 = vpack.c.b16 %v1580, %v1572
      %v1757 = vpack.c.b16 %v1581, %v1573
      %v1758 = vpack.c.b16 %v1582, %v1574
      %v1759 = vpack.c.b16 %v1583, %v1575
      %v1760 = vpack.c.b16 %v1584, %v1576
      %v1761 = vpack.c.b16 %v1593, %v1585
      %v1762 = vpack.c.b16 %v1594, %v1586
      %v1763 = vpack.c.b16 %v1595, %v1587
      %v1764 = vpack.c.b16 %v1596, %v1588
      %v1765 = vpack.c.b16 %v1597, %v1589
      %v1766 = vpack.c.b16 %v1598, %v1590
      %v1767 = vpack.c.b16 %v1599, %v1591
      %v1768 = vpack.c.b16 %v1600, %v1592
      %v1769 = vpack.c.b16 %v1609, %v1601
      %v1770 = vpack.c.b16 %v1610, %v1602
      %v1771 = vpack.c.b16 %v1611, %v1603
      %v1772 = vpack.c.b16 %v1612, %v1604
      %v1773 = vpack.c.b16 %v1613, %v1605
      %v1774 = vpack.c.b16 %v1614, %v1606
      %v1775 = vpack.c.b16 %v1615, %v1607
      %v1776 = vpack.c.b16 %v1616, %v1608
      %v1777 = vpack.c.b16 %v1625, %v1617
      %v1778 = vpack.c.b16 %v1626, %v1618
      %v1779 = vpack.c.b16 %v1627, %v1619
      %v1780 = vpack.c.b16 %v1628, %v1620
      %v1781 = vpack.c.b16 %v1629, %v1621
      %v1782 = vpack.c.b16 %v1630, %v1622
      %v1783 = vpack.c.b16 %v1631, %v1623
      %v1784 = vpack.c.b16 %v1632, %v1624
      %v1785 = vpack.c.b16 %v1641, %v1633
      %v1786 = vpack.c.b16 %v1642, %v1634
      %v1787 = vpack.c.b16 %v1643, %v1635
      %v1788 = vpack.c.b16 %v1644, %v1636
      %v1789 = vpack.c.b16 %v1645, %v1637
      %v1790 = vpack.c.b16 %v1646, %v1638
      %v1791 = vpack.c.b16 %v1647, %v1639
      %v1792 = vpack.c.b16 %v1648, %v1640
      %v1793 = vpack.c.b16 %v1657, %v1649
      %v1794 = vpack.c.b16 %v1658, %v1650
      %v1795 = vpack.c.b16 %v1659, %v1651
      %v1796 = vpack.c.b16 %v1660, %v1652
      %v1797 = vpack.c.b16 %v1661, %v1653
      %v1798 = vpack.c.b16 %v1662, %v1654
      %v1799 = vpack.c.b16 %v1663, %v1655
      %v1800 = vpack.c.b16 %v1664, %v1656
      %v1801 = vpack.c.b16 %v1673, %v1665
      %v1802 = vpack.c.b16 %v1674, %v1666
      %v1803 = vpack.c.b16 %v1675, %v1667
      %v1804 = vpack.c.b16 %v1676, %v1668
      %v1805 = vpack.c.b16 %v1677, %v1669
      %v1806 = vpack.c.b16 %v1678, %v1670
      %v1807 = vpack.c.b16 %v1679, %v1671
      %v1808 = vpack.c.b16 %v1680, %v1672
      %1937 = vmatpush.bf16.msra.mxu0 %v1055
      %1938 = vmatpush.bf16.msra.mxu0 %v1053
      %1939 = vmatpush.bf16.msra.mxu0 %v1051
      %1940 = vmatpush.bf16.msra.mxu0 %v1049
      %1941 = vmatpush.bf16.msra.mxu0 %v1047
      %1942 = vmatpush.bf16.msra.mxu0 %v1045
      %1943 = vmatpush.bf16.msra.mxu0 %v1043
      %1944 = vmatpush.bf16.msra.mxu0 %v1041
      %1945 = vmatmul.bf16.gmra.mxu0 %v1681
      %v1946 = vpop.f32.mrf.mxu0
      %v1947 = vadd.f32 0.0, %v1946
      %v1948 = vpop.f32.mrf.mxu0
      %v1949 = vadd.f32 0.0, %v1948
      %1950 = vmatmul.bf16.gmra.mxu0 %v1689
      %v1951 = vpop.f32.mrf.mxu0
      %v1952 = vadd.f32 0.0, %v1951
      %v1953 = vpop.f32.mrf.mxu0
      %v1954 = vadd.f32 0.0, %v1953
      %1955 = vmatmul.bf16.gmra.mxu0 %v1697
      %v1956 = vpop.f32.mrf.mxu0
      %v1957 = vadd.f32 0.0, %v1956
      %v1958 = vpop.f32.mrf.mxu0
      %v1959 = vadd.f32 0.0, %v1958
      %1960 = vmatmul.bf16.gmra.mxu0 %v1705
      %v1961 = vpop.f32.mrf.mxu0
      %v1962 = vadd.f32 0.0, %v1961
      %v1963 = vpop.f32.mrf.mxu0
      %v1964 = vadd.f32 0.0, %v1963
      %1965 = vmatmul.bf16.gmra.mxu0 %v1713
      %v1966 = vpop.f32.mrf.mxu0
      %v1967 = vadd.f32 0.0, %v1966
      %v1968 = vpop.f32.mrf.mxu0
      %v1969 = vadd.f32 0.0, %v1968
      %1970 = vmatmul.bf16.gmra.mxu0 %v1721
      %v1971 = vpop.f32.mrf.mxu0
      %v1972 = vadd.f32 0.0, %v1971
      %v1973 = vpop.f32.mrf.mxu0
      %v1974 = vadd.f32 0.0, %v1973
      %1975 = vmatmul.bf16.gmra.mxu0 %v1729
      %v1976 = vpop.f32.mrf.mxu0
      %v1977 = vadd.f32 0.0, %v1976
      %v1978 = vpop.f32.mrf.mxu0
      %v1979 = vadd.f32 0.0, %v1978
      %1980 = vmatmul.bf16.gmra.mxu0 %v1737
      %v1981 = vpop.f32.mrf.mxu0
      %v1982 = vadd.f32 0.0, %v1981
      %v1983 = vpop.f32.mrf.mxu0
      %v1984 = vadd.f32 0.0, %v1983
      %1985 = vmatmul.bf16.gmra.mxu0 %v1745
      %v1986 = vpop.f32.mrf.mxu0
      %v1987 = vadd.f32 0.0, %v1986
      %v1988 = vpop.f32.mrf.mxu0
      %v1989 = vadd.f32 0.0, %v1988
      %1990 = vmatmul.bf16.gmra.mxu0 %v1753
      %v1991 = vpop.f32.mrf.mxu0
      %v1992 = vadd.f32 0.0, %v1991
      %v1993 = vpop.f32.mrf.mxu0
      %v1994 = vadd.f32 0.0, %v1993
      %1995 = vmatmul.bf16.gmra.mxu0 %v1761
      %v1996 = vpop.f32.mrf.mxu0
      %v1997 = vadd.f32 0.0, %v1996
      %v1998 = vpop.f32.mrf.mxu0
      %v1999 = vadd.f32 0.0, %v1998
      %2000 = vmatmul.bf16.gmra.mxu0 %v1769
      %v2001 = vpop.f32.mrf.mxu0
      %v2002 = vadd.f32 0.0, %v2001
      %v2003 = vpop.f32.mrf.mxu0
      %v2004 = vadd.f32 0.0, %v2003
      %2005 = vmatmul.bf16.gmra.mxu0 %v1777
      %v2006 = vpop.f32.mrf.mxu0
      %v2007 = vadd.f32 0.0, %v2006
      %v2008 = vpop.f32.mrf.mxu0
      %v2009 = vadd.f32 0.0, %v2008
      %2010 = vmatmul.bf16.gmra.mxu0 %v1785
      %v2011 = vpop.f32.mrf.mxu0
      %v2012 = vadd.f32 0.0, %v2011
      %v2013 = vpop.f32.mrf.mxu0
      %v2014 = vadd.f32 0.0, %v2013
      %2015 = vmatmul.bf16.gmra.mxu0 %v1793
      %v2016 = vpop.f32.mrf.mxu0
      %v2017 = vadd.f32 0.0, %v2016
      %v2018 = vpop.f32.mrf.mxu0
      %v2019 = vadd.f32 0.0, %v2018
      %2020 = vmatmul.bf16.gmra.mxu0 %v1801
      %v2021 = vpop.f32.mrf.mxu0
      %v2022 = vadd.f32 0.0, %v2021
      %v2023 = vpop.f32.mrf.mxu0
      %v2024 = vadd.f32 0.0, %v2023
      %2025 = vdwg.mxu0
      %2026 = vmatpush.bf16.msra.mxu0 %v1071
      %2027 = vmatpush.bf16.msra.mxu0 %v1069
      %2028 = vmatpush.bf16.msra.mxu0 %v1067
      %2029 = vmatpush.bf16.msra.mxu0 %v1065
      %2030 = vmatpush.bf16.msra.mxu0 %v1063
      %2031 = vmatpush.bf16.msra.mxu0 %v1061
      %2032 = vmatpush.bf16.msra.mxu0 %v1059
      %2033 = vmatpush.bf16.msra.mxu0 %v1057
      %2034 = vmatmul.bf16.gmra.mxu0 %v1682
      %v2035 = vpop.f32.mrf.mxu0
      %v2036 = vadd.f32 %v1947, %v2035
      %v2037 = vpop.f32.mrf.mxu0
      %v2038 = vadd.f32 %v1949, %v2037
      %2039 = vmatmul.bf16.gmra.mxu0 %v1690
      %v2040 = vpop.f32.mrf.mxu0
      %v2041 = vadd.f32 %v1952, %v2040
      %v2042 = vpop.f32.mrf.mxu0
      %v2043 = vadd.f32 %v1954, %v2042
      %2044 = vmatmul.bf16.gmra.mxu0 %v1698
      %v2045 = vpop.f32.mrf.mxu0
      %v2046 = vadd.f32 %v1957, %v2045
      %v2047 = vpop.f32.mrf.mxu0
      %v2048 = vadd.f32 %v1959, %v2047
      %2049 = vmatmul.bf16.gmra.mxu0 %v1706
      %v2050 = vpop.f32.mrf.mxu0
      %v2051 = vadd.f32 %v1962, %v2050
      %v2052 = vpop.f32.mrf.mxu0
      %v2053 = vadd.f32 %v1964, %v2052
      %2054 = vmatmul.bf16.gmra.mxu0 %v1714
      %v2055 = vpop.f32.mrf.mxu0
      %v2056 = vadd.f32 %v1967, %v2055
      %v2057 = vpop.f32.mrf.mxu0
      %v2058 = vadd.f32 %v1969, %v2057
      %2059 = vmatmul.bf16.gmra.mxu0 %v1722
      %v2060 = vpop.f32.mrf.mxu0
      %v2061 = vadd.f32 %v1972, %v2060
      %v2062 = vpop.f32.mrf.mxu0
      %v2063 = vadd.f32 %v1974, %v2062
      %2064 = vmatmul.bf16.gmra.mxu0 %v1730
      %v2065 = vpop.f32.mrf.mxu0
      %v2066 = vadd.f32 %v1977, %v2065
      %v2067 = vpop.f32.mrf.mxu0
      %v2068 = vadd.f32 %v1979, %v2067
      %2069 = vmatmul.bf16.gmra.mxu0 %v1738
      %v2070 = vpop.f32.mrf.mxu0
      %v2071 = vadd.f32 %v1982, %v2070
      %v2072 = vpop.f32.mrf.mxu0
      %v2073 = vadd.f32 %v1984, %v2072
      %2074 = vmatmul.bf16.gmra.mxu0 %v1746
      %v2075 = vpop.f32.mrf.mxu0
      %v2076 = vadd.f32 %v1987, %v2075
      %v2077 = vpop.f32.mrf.mxu0
      %v2078 = vadd.f32 %v1989, %v2077
      %2079 = vmatmul.bf16.gmra.mxu0 %v1754
      %v2080 = vpop.f32.mrf.mxu0
      %v2081 = vadd.f32 %v1992, %v2080
      %v2082 = vpop.f32.mrf.mxu0
      %v2083 = vadd.f32 %v1994, %v2082
      %2084 = vmatmul.bf16.gmra.mxu0 %v1762
      %v2085 = vpop.f32.mrf.mxu0
      %v2086 = vadd.f32 %v1997, %v2085
      %v2087 = vpop.f32.mrf.mxu0
      %v2088 = vadd.f32 %v1999, %v2087
      %2089 = vmatmul.bf16.gmra.mxu0 %v1770
      %v2090 = vpop.f32.mrf.mxu0
      %v2091 = vadd.f32 %v2002, %v2090
      %v2092 = vpop.f32.mrf.mxu0
      %v2093 = vadd.f32 %v2004, %v2092
      %2094 = vmatmul.bf16.gmra.mxu0 %v1778
      %v2095 = vpop.f32.mrf.mxu0
      %v2096 = vadd.f32 %v2007, %v2095
      %v2097 = vpop.f32.mrf.mxu0
      %v2098 = vadd.f32 %v2009, %v2097
      %2099 = vmatmul.bf16.gmra.mxu0 %v1786
      %v2100 = vpop.f32.mrf.mxu0
      %v2101 = vadd.f32 %v2012, %v2100
      %v2102 = vpop.f32.mrf.mxu0
      %v2103 = vadd.f32 %v2014, %v2102
      %2104 = vmatmul.bf16.gmra.mxu0 %v1794
      %v2105 = vpop.f32.mrf.mxu0
      %v2106 = vadd.f32 %v2017, %v2105
      %v2107 = vpop.f32.mrf.mxu0
      %v2108 = vadd.f32 %v2019, %v2107
      %2109 = vmatmul.bf16.gmra.mxu0 %v1802
      %v2110 = vpop.f32.mrf.mxu0
      %v2111 = vadd.f32 %v2022, %v2110
      %v2112 = vpop.f32.mrf.mxu0
      %v2113 = vadd.f32 %v2024, %v2112
      %2114 = vdwg.mxu0
      %2115 = vmatpush.bf16.msra.mxu0 %v1087
      %2116 = vmatpush.bf16.msra.mxu0 %v1085
      %2117 = vmatpush.bf16.msra.mxu0 %v1083
      %2118 = vmatpush.bf16.msra.mxu0 %v1081
      %2119 = vmatpush.bf16.msra.mxu0 %v1079
      %2120 = vmatpush.bf16.msra.mxu0 %v1077
      %2121 = vmatpush.bf16.msra.mxu0 %v1075
      %2122 = vmatpush.bf16.msra.mxu0 %v1073
      %2123 = vmatmul.bf16.gmra.mxu0 %v1683
      %v2124 = vpop.f32.mrf.mxu0
      %v2125 = vadd.f32 %v2036, %v2124
      %v2126 = vpop.f32.mrf.mxu0
      %v2127 = vadd.f32 %v2038, %v2126
      %2128 = vmatmul.bf16.gmra.mxu0 %v1691
      %v2129 = vpop.f32.mrf.mxu0
      %v2130 = vadd.f32 %v2041, %v2129
      %v2131 = vpop.f32.mrf.mxu0
      %v2132 = vadd.f32 %v2043, %v2131
      %2133 = vmatmul.bf16.gmra.mxu0 %v1699
      %v2134 = vpop.f32.mrf.mxu0
      %v2135 = vadd.f32 %v2046, %v2134
      %v2136 = vpop.f32.mrf.mxu0
      %v2137 = vadd.f32 %v2048, %v2136
      %2138 = vmatmul.bf16.gmra.mxu0 %v1707
      %v2139 = vpop.f32.mrf.mxu0
      %v2140 = vadd.f32 %v2051, %v2139
      %v2141 = vpop.f32.mrf.mxu0
      %v2142 = vadd.f32 %v2053, %v2141
      %2143 = vmatmul.bf16.gmra.mxu0 %v1715
      %v2144 = vpop.f32.mrf.mxu0
      %v2145 = vadd.f32 %v2056, %v2144
      %v2146 = vpop.f32.mrf.mxu0
      %v2147 = vadd.f32 %v2058, %v2146
      %2148 = vmatmul.bf16.gmra.mxu0 %v1723
      %v2149 = vpop.f32.mrf.mxu0
      %v2150 = vadd.f32 %v2061, %v2149
      %v2151 = vpop.f32.mrf.mxu0
      %v2152 = vadd.f32 %v2063, %v2151
      %2153 = vmatmul.bf16.gmra.mxu0 %v1731
      %v2154 = vpop.f32.mrf.mxu0
      %v2155 = vadd.f32 %v2066, %v2154
      %v2156 = vpop.f32.mrf.mxu0
      %v2157 = vadd.f32 %v2068, %v2156
      %2158 = vmatmul.bf16.gmra.mxu0 %v1739
      %v2159 = vpop.f32.mrf.mxu0
      %v2160 = vadd.f32 %v2071, %v2159
      %v2161 = vpop.f32.mrf.mxu0
      %v2162 = vadd.f32 %v2073, %v2161
      %2163 = vmatmul.bf16.gmra.mxu0 %v1747
      %v2164 = vpop.f32.mrf.mxu0
      %v2165 = vadd.f32 %v2076, %v2164
      %v2166 = vpop.f32.mrf.mxu0
      %v2167 = vadd.f32 %v2078, %v2166
      %2168 = vmatmul.bf16.gmra.mxu0 %v1755
      %v2169 = vpop.f32.mrf.mxu0
      %v2170 = vadd.f32 %v2081, %v2169
      %v2171 = vpop.f32.mrf.mxu0
      %v2172 = vadd.f32 %v2083, %v2171
      %2173 = vmatmul.bf16.gmra.mxu0 %v1763
      %v2174 = vpop.f32.mrf.mxu0
      %v2175 = vadd.f32 %v2086, %v2174
      %v2176 = vpop.f32.mrf.mxu0
      %v2177 = vadd.f32 %v2088, %v2176
      %2178 = vmatmul.bf16.gmra.mxu0 %v1771
      %v2179 = vpop.f32.mrf.mxu0
      %v2180 = vadd.f32 %v2091, %v2179
      %v2181 = vpop.f32.mrf.mxu0
      %v2182 = vadd.f32 %v2093, %v2181
      %2183 = vmatmul.bf16.gmra.mxu0 %v1779
      %v2184 = vpop.f32.mrf.mxu0
      %v2185 = vadd.f32 %v2096, %v2184
      %v2186 = vpop.f32.mrf.mxu0
      %v2187 = vadd.f32 %v2098, %v2186
      %2188 = vmatmul.bf16.gmra.mxu0 %v1787
      %v2189 = vpop.f32.mrf.mxu0
      %v2190 = vadd.f32 %v2101, %v2189
      %v2191 = vpop.f32.mrf.mxu0
      %v2192 = vadd.f32 %v2103, %v2191
      %2193 = vmatmul.bf16.gmra.mxu0 %v1795
      %v2194 = vpop.f32.mrf.mxu0
      %v2195 = vadd.f32 %v2106, %v2194
      %v2196 = vpop.f32.mrf.mxu0
      %v2197 = vadd.f32 %v2108, %v2196
      %2198 = vmatmul.bf16.gmra.mxu0 %v1803
      %v2199 = vpop.f32.mrf.mxu0
      %v2200 = vadd.f32 %v2111, %v2199
      %v2201 = vpop.f32.mrf.mxu0
      %v2202 = vadd.f32 %v2113, %v2201
      %2203 = vdwg.mxu0
      %2204 = vmatpush.bf16.msra.mxu0 %v1103
      %2205 = vmatpush.bf16.msra.mxu0 %v1101
      %2206 = vmatpush.bf16.msra.mxu0 %v1099
      %2207 = vmatpush.bf16.msra.mxu0 %v1097
      %2208 = vmatpush.bf16.msra.mxu0 %v1095
      %2209 = vmatpush.bf16.msra.mxu0 %v1093
      %2210 = vmatpush.bf16.msra.mxu0 %v1091
      %2211 = vmatpush.bf16.msra.mxu0 %v1089
      %2212 = vmatmul.bf16.gmra.mxu0 %v1684
      %v2213 = vpop.f32.mrf.mxu0
      %v2214 = vadd.f32 %v2125, %v2213
      %v2215 = vpop.f32.mrf.mxu0
      %v2216 = vadd.f32 %v2127, %v2215
      %2217 = vmatmul.bf16.gmra.mxu0 %v1692
      %v2218 = vpop.f32.mrf.mxu0
      %v2219 = vadd.f32 %v2130, %v2218
      %v2220 = vpop.f32.mrf.mxu0
      %v2221 = vadd.f32 %v2132, %v2220
      %2222 = vmatmul.bf16.gmra.mxu0 %v1700
      %v2223 = vpop.f32.mrf.mxu0
      %v2224 = vadd.f32 %v2135, %v2223
      %v2225 = vpop.f32.mrf.mxu0
      %v2226 = vadd.f32 %v2137, %v2225
      %2227 = vmatmul.bf16.gmra.mxu0 %v1708
      %v2228 = vpop.f32.mrf.mxu0
      %v2229 = vadd.f32 %v2140, %v2228
      %v2230 = vpop.f32.mrf.mxu0
      %v2231 = vadd.f32 %v2142, %v2230
      %2232 = vmatmul.bf16.gmra.mxu0 %v1716
      %v2233 = vpop.f32.mrf.mxu0
      %v2234 = vadd.f32 %v2145, %v2233
      %v2235 = vpop.f32.mrf.mxu0
      %v2236 = vadd.f32 %v2147, %v2235
      %2237 = vmatmul.bf16.gmra.mxu0 %v1724
      %v2238 = vpop.f32.mrf.mxu0
      %v2239 = vadd.f32 %v2150, %v2238
      %v2240 = vpop.f32.mrf.mxu0
      %v2241 = vadd.f32 %v2152, %v2240
      %2242 = vmatmul.bf16.gmra.mxu0 %v1732
      %v2243 = vpop.f32.mrf.mxu0
      %v2244 = vadd.f32 %v2155, %v2243
      %v2245 = vpop.f32.mrf.mxu0
      %v2246 = vadd.f32 %v2157, %v2245
      %2247 = vmatmul.bf16.gmra.mxu0 %v1740
      %v2248 = vpop.f32.mrf.mxu0
      %v2249 = vadd.f32 %v2160, %v2248
      %v2250 = vpop.f32.mrf.mxu0
      %v2251 = vadd.f32 %v2162, %v2250
      %2252 = vmatmul.bf16.gmra.mxu0 %v1748
      %v2253 = vpop.f32.mrf.mxu0
      %v2254 = vadd.f32 %v2165, %v2253
      %v2255 = vpop.f32.mrf.mxu0
      %v2256 = vadd.f32 %v2167, %v2255
      %2257 = vmatmul.bf16.gmra.mxu0 %v1756
      %v2258 = vpop.f32.mrf.mxu0
      %v2259 = vadd.f32 %v2170, %v2258
      %v2260 = vpop.f32.mrf.mxu0
      %v2261 = vadd.f32 %v2172, %v2260
      %2262 = vmatmul.bf16.gmra.mxu0 %v1764
      %v2263 = vpop.f32.mrf.mxu0
      %v2264 = vadd.f32 %v2175, %v2263
      %v2265 = vpop.f32.mrf.mxu0
      %v2266 = vadd.f32 %v2177, %v2265
      %2267 = vmatmul.bf16.gmra.mxu0 %v1772
      %v2268 = vpop.f32.mrf.mxu0
      %v2269 = vadd.f32 %v2180, %v2268
      %v2270 = vpop.f32.mrf.mxu0
      %v2271 = vadd.f32 %v2182, %v2270
      %2272 = vmatmul.bf16.gmra.mxu0 %v1780
      %v2273 = vpop.f32.mrf.mxu0
      %v2274 = vadd.f32 %v2185, %v2273
      %v2275 = vpop.f32.mrf.mxu0
      %v2276 = vadd.f32 %v2187, %v2275
      %2277 = vmatmul.bf16.gmra.mxu0 %v1788
      %v2278 = vpop.f32.mrf.mxu0
      %v2279 = vadd.f32 %v2190, %v2278
      %v2280 = vpop.f32.mrf.mxu0
      %v2281 = vadd.f32 %v2192, %v2280
      %2282 = vmatmul.bf16.gmra.mxu0 %v1796
      %v2283 = vpop.f32.mrf.mxu0
      %v2284 = vadd.f32 %v2195, %v2283
      %v2285 = vpop.f32.mrf.mxu0
      %v2286 = vadd.f32 %v2197, %v2285
      %2287 = vmatmul.bf16.gmra.mxu0 %v1804
      %v2288 = vpop.f32.mrf.mxu0
      %v2289 = vadd.f32 %v2200, %v2288
      %v2290 = vpop.f32.mrf.mxu0
      %v2291 = vadd.f32 %v2202, %v2290
      %2292 = vdwg.mxu0
      %2293 = vmatpush.bf16.msra.mxu0 %v1119
      %2294 = vmatpush.bf16.msra.mxu0 %v1117
      %2295 = vmatpush.bf16.msra.mxu0 %v1115
      %2296 = vmatpush.bf16.msra.mxu0 %v1113
      %2297 = vmatpush.bf16.msra.mxu0 %v1111
      %2298 = vmatpush.bf16.msra.mxu0 %v1109
      %2299 = vmatpush.bf16.msra.mxu0 %v1107
      %2300 = vmatpush.bf16.msra.mxu0 %v1105
      %2301 = vmatmul.bf16.gmra.mxu0 %v1685
      %v2302 = vpop.f32.mrf.mxu0
      %v2303 = vadd.f32 %v2214, %v2302
      %v2304 = vpop.f32.mrf.mxu0
      %v2305 = vadd.f32 %v2216, %v2304
      %2306 = vmatmul.bf16.gmra.mxu0 %v1693
      %v2307 = vpop.f32.mrf.mxu0
      %v2308 = vadd.f32 %v2219, %v2307
      %v2309 = vpop.f32.mrf.mxu0
      %v2310 = vadd.f32 %v2221, %v2309
      %2311 = vmatmul.bf16.gmra.mxu0 %v1701
      %v2312 = vpop.f32.mrf.mxu0
      %v2313 = vadd.f32 %v2224, %v2312
      %v2314 = vpop.f32.mrf.mxu0
      %v2315 = vadd.f32 %v2226, %v2314
      %2316 = vmatmul.bf16.gmra.mxu0 %v1709
      %v2317 = vpop.f32.mrf.mxu0
      %v2318 = vadd.f32 %v2229, %v2317
      %v2319 = vpop.f32.mrf.mxu0
      %v2320 = vadd.f32 %v2231, %v2319
      %2321 = vmatmul.bf16.gmra.mxu0 %v1717
      %v2322 = vpop.f32.mrf.mxu0
      %v2323 = vadd.f32 %v2234, %v2322
      %v2324 = vpop.f32.mrf.mxu0
      %v2325 = vadd.f32 %v2236, %v2324
      %2326 = vmatmul.bf16.gmra.mxu0 %v1725
      %v2327 = vpop.f32.mrf.mxu0
      %v2328 = vadd.f32 %v2239, %v2327
      %v2329 = vpop.f32.mrf.mxu0
      %v2330 = vadd.f32 %v2241, %v2329
      %2331 = vmatmul.bf16.gmra.mxu0 %v1733
      %v2332 = vpop.f32.mrf.mxu0
      %v2333 = vadd.f32 %v2244, %v2332
      %v2334 = vpop.f32.mrf.mxu0
      %v2335 = vadd.f32 %v2246, %v2334
      %2336 = vmatmul.bf16.gmra.mxu0 %v1741
      %v2337 = vpop.f32.mrf.mxu0
      %v2338 = vadd.f32 %v2249, %v2337
      %v2339 = vpop.f32.mrf.mxu0
      %v2340 = vadd.f32 %v2251, %v2339
      %2341 = vmatmul.bf16.gmra.mxu0 %v1749
      %v2342 = vpop.f32.mrf.mxu0
      %v2343 = vadd.f32 %v2254, %v2342
      %v2344 = vpop.f32.mrf.mxu0
      %v2345 = vadd.f32 %v2256, %v2344
      %2346 = vmatmul.bf16.gmra.mxu0 %v1757
      %v2347 = vpop.f32.mrf.mxu0
      %v2348 = vadd.f32 %v2259, %v2347
      %v2349 = vpop.f32.mrf.mxu0
      %v2350 = vadd.f32 %v2261, %v2349
      %2351 = vmatmul.bf16.gmra.mxu0 %v1765
      %v2352 = vpop.f32.mrf.mxu0
      %v2353 = vadd.f32 %v2264, %v2352
      %v2354 = vpop.f32.mrf.mxu0
      %v2355 = vadd.f32 %v2266, %v2354
      %2356 = vmatmul.bf16.gmra.mxu0 %v1773
      %v2357 = vpop.f32.mrf.mxu0
      %v2358 = vadd.f32 %v2269, %v2357
      %v2359 = vpop.f32.mrf.mxu0
      %v2360 = vadd.f32 %v2271, %v2359
      %2361 = vmatmul.bf16.gmra.mxu0 %v1781
      %v2362 = vpop.f32.mrf.mxu0
      %v2363 = vadd.f32 %v2274, %v2362
      %v2364 = vpop.f32.mrf.mxu0
      %v2365 = vadd.f32 %v2276, %v2364
      %2366 = vmatmul.bf16.gmra.mxu0 %v1789
      %v2367 = vpop.f32.mrf.mxu0
      %v2368 = vadd.f32 %v2279, %v2367
      %v2369 = vpop.f32.mrf.mxu0
      %v2370 = vadd.f32 %v2281, %v2369
      %2371 = vmatmul.bf16.gmra.mxu0 %v1797
      %v2372 = vpop.f32.mrf.mxu0
      %v2373 = vadd.f32 %v2284, %v2372
      %v2374 = vpop.f32.mrf.mxu0
      %v2375 = vadd.f32 %v2286, %v2374
      %2376 = vmatmul.bf16.gmra.mxu0 %v1805
      %v2377 = vpop.f32.mrf.mxu0
      %v2378 = vadd.f32 %v2289, %v2377
      %v2379 = vpop.f32.mrf.mxu0
      %v2380 = vadd.f32 %v2291, %v2379
      %2381 = vdwg.mxu0
      %2382 = vmatpush.bf16.msra.mxu0 %v1135
      %2383 = vmatpush.bf16.msra.mxu0 %v1133
      %2384 = vmatpush.bf16.msra.mxu0 %v1131
      %2385 = vmatpush.bf16.msra.mxu0 %v1129
      %2386 = vmatpush.bf16.msra.mxu0 %v1127
      %2387 = vmatpush.bf16.msra.mxu0 %v1125
      %2388 = vmatpush.bf16.msra.mxu0 %v1123
      %2389 = vmatpush.bf16.msra.mxu0 %v1121
      %2390 = vmatmul.bf16.gmra.mxu0 %v1686
      %v2391 = vpop.f32.mrf.mxu0
      %v2392 = vadd.f32 %v2303, %v2391
      %v2393 = vpop.f32.mrf.mxu0
      %v2394 = vadd.f32 %v2305, %v2393
      %2395 = vmatmul.bf16.gmra.mxu0 %v1694
      %v2396 = vpop.f32.mrf.mxu0
      %v2397 = vadd.f32 %v2308, %v2396
      %v2398 = vpop.f32.mrf.mxu0
      %v2399 = vadd.f32 %v2310, %v2398
      %2400 = vmatmul.bf16.gmra.mxu0 %v1702
      %v2401 = vpop.f32.mrf.mxu0
      %v2402 = vadd.f32 %v2313, %v2401
      %v2403 = vpop.f32.mrf.mxu0
      %v2404 = vadd.f32 %v2315, %v2403
      %2405 = vmatmul.bf16.gmra.mxu0 %v1710
      %v2406 = vpop.f32.mrf.mxu0
      %v2407 = vadd.f32 %v2318, %v2406
      %v2408 = vpop.f32.mrf.mxu0
      %v2409 = vadd.f32 %v2320, %v2408
      %2410 = vmatmul.bf16.gmra.mxu0 %v1718
      %v2411 = vpop.f32.mrf.mxu0
      %v2412 = vadd.f32 %v2323, %v2411
      %v2413 = vpop.f32.mrf.mxu0
      %v2414 = vadd.f32 %v2325, %v2413
      %2415 = vmatmul.bf16.gmra.mxu0 %v1726
      %v2416 = vpop.f32.mrf.mxu0
      %v2417 = vadd.f32 %v2328, %v2416
      %v2418 = vpop.f32.mrf.mxu0
      %v2419 = vadd.f32 %v2330, %v2418
      %2420 = vmatmul.bf16.gmra.mxu0 %v1734
      %v2421 = vpop.f32.mrf.mxu0
      %v2422 = vadd.f32 %v2333, %v2421
      %v2423 = vpop.f32.mrf.mxu0
      %v2424 = vadd.f32 %v2335, %v2423
      %2425 = vmatmul.bf16.gmra.mxu0 %v1742
      %v2426 = vpop.f32.mrf.mxu0
      %v2427 = vadd.f32 %v2338, %v2426
      %v2428 = vpop.f32.mrf.mxu0
      %v2429 = vadd.f32 %v2340, %v2428
      %2430 = vmatmul.bf16.gmra.mxu0 %v1750
      %v2431 = vpop.f32.mrf.mxu0
      %v2432 = vadd.f32 %v2343, %v2431
      %v2433 = vpop.f32.mrf.mxu0
      %v2434 = vadd.f32 %v2345, %v2433
      %2435 = vmatmul.bf16.gmra.mxu0 %v1758
      %v2436 = vpop.f32.mrf.mxu0
      %v2437 = vadd.f32 %v2348, %v2436
      %v2438 = vpop.f32.mrf.mxu0
      %v2439 = vadd.f32 %v2350, %v2438
      %2440 = vmatmul.bf16.gmra.mxu0 %v1766
      %v2441 = vpop.f32.mrf.mxu0
      %v2442 = vadd.f32 %v2353, %v2441
      %v2443 = vpop.f32.mrf.mxu0
      %v2444 = vadd.f32 %v2355, %v2443
      %2445 = vmatmul.bf16.gmra.mxu0 %v1774
      %v2446 = vpop.f32.mrf.mxu0
      %v2447 = vadd.f32 %v2358, %v2446
      %v2448 = vpop.f32.mrf.mxu0
      %v2449 = vadd.f32 %v2360, %v2448
      %2450 = vmatmul.bf16.gmra.mxu0 %v1782
      %v2451 = vpop.f32.mrf.mxu0
      %v2452 = vadd.f32 %v2363, %v2451
      %v2453 = vpop.f32.mrf.mxu0
      %v2454 = vadd.f32 %v2365, %v2453
      %2455 = vmatmul.bf16.gmra.mxu0 %v1790
      %v2456 = vpop.f32.mrf.mxu0
      %v2457 = vadd.f32 %v2368, %v2456
      %v2458 = vpop.f32.mrf.mxu0
      %v2459 = vadd.f32 %v2370, %v2458
      %2460 = vmatmul.bf16.gmra.mxu0 %v1798
      %v2461 = vpop.f32.mrf.mxu0
      %v2462 = vadd.f32 %v2373, %v2461
      %v2463 = vpop.f32.mrf.mxu0
      %v2464 = vadd.f32 %v2375, %v2463
      %2465 = vmatmul.bf16.gmra.mxu0 %v1806
      %v2466 = vpop.f32.mrf.mxu0
      %v2467 = vadd.f32 %v2378, %v2466
      %v2468 = vpop.f32.mrf.mxu0
      %v2469 = vadd.f32 %v2380, %v2468
      %2470 = vdwg.mxu0
      %2471 = vmatpush.bf16.msra.mxu0 %v1151
      %2472 = vmatpush.bf16.msra.mxu0 %v1149
      %2473 = vmatpush.bf16.msra.mxu0 %v1147
      %2474 = vmatpush.bf16.msra.mxu0 %v1145
      %2475 = vmatpush.bf16.msra.mxu0 %v1143
      %2476 = vmatpush.bf16.msra.mxu0 %v1141
      %2477 = vmatpush.bf16.msra.mxu0 %v1139
      %2478 = vmatpush.bf16.msra.mxu0 %v1137
      %2479 = vmatmul.bf16.gmra.mxu0 %v1687
      %v2480 = vpop.f32.mrf.mxu0
      %v2481 = vadd.f32 %v2392, %v2480
      %v2482 = vpop.f32.mrf.mxu0
      %v2483 = vadd.f32 %v2394, %v2482
      %2484 = vmatmul.bf16.gmra.mxu0 %v1695
      %v2485 = vpop.f32.mrf.mxu0
      %v2486 = vadd.f32 %v2397, %v2485
      %v2487 = vpop.f32.mrf.mxu0
      %v2488 = vadd.f32 %v2399, %v2487
      %2489 = vmatmul.bf16.gmra.mxu0 %v1703
      %v2490 = vpop.f32.mrf.mxu0
      %v2491 = vadd.f32 %v2402, %v2490
      %v2492 = vpop.f32.mrf.mxu0
      %v2493 = vadd.f32 %v2404, %v2492
      %2494 = vmatmul.bf16.gmra.mxu0 %v1711
      %v2495 = vpop.f32.mrf.mxu0
      %v2496 = vadd.f32 %v2407, %v2495
      %v2497 = vpop.f32.mrf.mxu0
      %v2498 = vadd.f32 %v2409, %v2497
      %2499 = vmatmul.bf16.gmra.mxu0 %v1719
      %v2500 = vpop.f32.mrf.mxu0
      %v2501 = vadd.f32 %v2412, %v2500
      %v2502 = vpop.f32.mrf.mxu0
      %v2503 = vadd.f32 %v2414, %v2502
      %2504 = vmatmul.bf16.gmra.mxu0 %v1727
      %v2505 = vpop.f32.mrf.mxu0
      %v2506 = vadd.f32 %v2417, %v2505
      %v2507 = vpop.f32.mrf.mxu0
      %v2508 = vadd.f32 %v2419, %v2507
      %2509 = vmatmul.bf16.gmra.mxu0 %v1735
      %v2510 = vpop.f32.mrf.mxu0
      %v2511 = vadd.f32 %v2422, %v2510
      %v2512 = vpop.f32.mrf.mxu0
      %v2513 = vadd.f32 %v2424, %v2512
      %2514 = vmatmul.bf16.gmra.mxu0 %v1743
      %v2515 = vpop.f32.mrf.mxu0
      %v2516 = vadd.f32 %v2427, %v2515
      %v2517 = vpop.f32.mrf.mxu0
      %v2518 = vadd.f32 %v2429, %v2517
      %2519 = vmatmul.bf16.gmra.mxu0 %v1751
      %v2520 = vpop.f32.mrf.mxu0
      %v2521 = vadd.f32 %v2432, %v2520
      %v2522 = vpop.f32.mrf.mxu0
      %v2523 = vadd.f32 %v2434, %v2522
      %2524 = vmatmul.bf16.gmra.mxu0 %v1759
      %v2525 = vpop.f32.mrf.mxu0
      %v2526 = vadd.f32 %v2437, %v2525
      %v2527 = vpop.f32.mrf.mxu0
      %v2528 = vadd.f32 %v2439, %v2527
      %2529 = vmatmul.bf16.gmra.mxu0 %v1767
      %v2530 = vpop.f32.mrf.mxu0
      %v2531 = vadd.f32 %v2442, %v2530
      %v2532 = vpop.f32.mrf.mxu0
      %v2533 = vadd.f32 %v2444, %v2532
      %2534 = vmatmul.bf16.gmra.mxu0 %v1775
      %v2535 = vpop.f32.mrf.mxu0
      %v2536 = vadd.f32 %v2447, %v2535
      %v2537 = vpop.f32.mrf.mxu0
      %v2538 = vadd.f32 %v2449, %v2537
      %2539 = vmatmul.bf16.gmra.mxu0 %v1783
      %v2540 = vpop.f32.mrf.mxu0
      %v2541 = vadd.f32 %v2452, %v2540
      %v2542 = vpop.f32.mrf.mxu0
      %v2543 = vadd.f32 %v2454, %v2542
      %2544 = vmatmul.bf16.gmra.mxu0 %v1791
      %v2545 = vpop.f32.mrf.mxu0
      %v2546 = vadd.f32 %v2457, %v2545
      %v2547 = vpop.f32.mrf.mxu0
      %v2548 = vadd.f32 %v2459, %v2547
      %2549 = vmatmul.bf16.gmra.mxu0 %v1799
      %v2550 = vpop.f32.mrf.mxu0
      %v2551 = vadd.f32 %v2462, %v2550
      %v2552 = vpop.f32.mrf.mxu0
      %v2553 = vadd.f32 %v2464, %v2552
      %2554 = vmatmul.bf16.gmra.mxu0 %v1807
      %v2555 = vpop.f32.mrf.mxu0
      %v2556 = vadd.f32 %v2467, %v2555
      %v2557 = vpop.f32.mrf.mxu0
      %v2558 = vadd.f32 %v2469, %v2557
      %2559 = vdwg.mxu0
      %2560 = vmatpush.bf16.msra.mxu0 %v1167
      %2561 = vmatpush.bf16.msra.mxu0 %v1165
      %2562 = vmatpush.bf16.msra.mxu0 %v1163
      %2563 = vmatpush.bf16.msra.mxu0 %v1161
      %2564 = vmatpush.bf16.msra.mxu0 %v1159
      %2565 = vmatpush.bf16.msra.mxu0 %v1157
      %2566 = vmatpush.bf16.msra.mxu0 %v1155
      %2567 = vmatpush.bf16.msra.mxu0 %v1153
      %2568 = vmatmul.bf16.gmra.mxu0 %v1688
      %v2569 = vpop.f32.mrf.mxu0
      %v2570 = vadd.f32 %v2481, %v2569
      %v2571 = vpop.f32.mrf.mxu0
      %v2572 = vadd.f32 %v2483, %v2571
      %2573 = vmatmul.bf16.gmra.mxu0 %v1696
      %v2574 = vpop.f32.mrf.mxu0
      %v2575 = vadd.f32 %v2486, %v2574
      %v2576 = vpop.f32.mrf.mxu0
      %v2577 = vadd.f32 %v2488, %v2576
      %2578 = vmatmul.bf16.gmra.mxu0 %v1704
      %v2579 = vpop.f32.mrf.mxu0
      %v2580 = vadd.f32 %v2491, %v2579
      %v2581 = vpop.f32.mrf.mxu0
      %v2582 = vadd.f32 %v2493, %v2581
      %2583 = vmatmul.bf16.gmra.mxu0 %v1712
      %v2584 = vpop.f32.mrf.mxu0
      %v2585 = vadd.f32 %v2496, %v2584
      %v2586 = vpop.f32.mrf.mxu0
      %v2587 = vadd.f32 %v2498, %v2586
      %2588 = vmatmul.bf16.gmra.mxu0 %v1720
      %v2589 = vpop.f32.mrf.mxu0
      %v2590 = vadd.f32 %v2501, %v2589
      %v2591 = vpop.f32.mrf.mxu0
      %v2592 = vadd.f32 %v2503, %v2591
      %2593 = vmatmul.bf16.gmra.mxu0 %v1728
      %v2594 = vpop.f32.mrf.mxu0
      %v2595 = vadd.f32 %v2506, %v2594
      %v2596 = vpop.f32.mrf.mxu0
      %v2597 = vadd.f32 %v2508, %v2596
      %2598 = vmatmul.bf16.gmra.mxu0 %v1736
      %v2599 = vpop.f32.mrf.mxu0
      %v2600 = vadd.f32 %v2511, %v2599
      %v2601 = vpop.f32.mrf.mxu0
      %v2602 = vadd.f32 %v2513, %v2601
      %2603 = vmatmul.bf16.gmra.mxu0 %v1744
      %v2604 = vpop.f32.mrf.mxu0
      %v2605 = vadd.f32 %v2516, %v2604
      %v2606 = vpop.f32.mrf.mxu0
      %v2607 = vadd.f32 %v2518, %v2606
      %2608 = vmatmul.bf16.gmra.mxu0 %v1752
      %v2609 = vpop.f32.mrf.mxu0
      %v2610 = vadd.f32 %v2521, %v2609
      %v2611 = vpop.f32.mrf.mxu0
      %v2612 = vadd.f32 %v2523, %v2611
      %2613 = vmatmul.bf16.gmra.mxu0 %v1760
      %v2614 = vpop.f32.mrf.mxu0
      %v2615 = vadd.f32 %v2526, %v2614
      %v2616 = vpop.f32.mrf.mxu0
      %v2617 = vadd.f32 %v2528, %v2616
      %2618 = vmatmul.bf16.gmra.mxu0 %v1768
      %v2619 = vpop.f32.mrf.mxu0
      %v2620 = vadd.f32 %v2531, %v2619
      %v2621 = vpop.f32.mrf.mxu0
      %v2622 = vadd.f32 %v2533, %v2621
      %2623 = vmatmul.bf16.gmra.mxu0 %v1776
      %v2624 = vpop.f32.mrf.mxu0
      %v2625 = vadd.f32 %v2536, %v2624
      %v2626 = vpop.f32.mrf.mxu0
      %v2627 = vadd.f32 %v2538, %v2626
      %2628 = vmatmul.bf16.gmra.mxu0 %v1784
      %v2629 = vpop.f32.mrf.mxu0
      %v2630 = vadd.f32 %v2541, %v2629
      %v2631 = vpop.f32.mrf.mxu0
      %v2632 = vadd.f32 %v2543, %v2631
      %2633 = vmatmul.bf16.gmra.mxu0 %v1792
      %v2634 = vpop.f32.mrf.mxu0
      %v2635 = vadd.f32 %v2546, %v2634
      %v2636 = vpop.f32.mrf.mxu0
      %v2637 = vadd.f32 %v2548, %v2636
      %2638 = vmatmul.bf16.gmra.mxu0 %v1800
      %v2639 = vpop.f32.mrf.mxu0
      %v2640 = vadd.f32 %v2551, %v2639
      %v2641 = vpop.f32.mrf.mxu0
      %v2642 = vadd.f32 %v2553, %v2641
      %2643 = vmatmul.bf16.gmra.mxu0 %v1808
      %v2644 = vpop.f32.mrf.mxu0
      %v2645 = vadd.f32 %v2556, %v2644
      %v2646 = vpop.f32.mrf.mxu0
      %v2647 = vadd.f32 %v2558, %v2646
      %2648 = vdwg.mxu0
      %2649 = vmatpush.bf16.msra.mxu0 %v1056
      %2650 = vmatpush.bf16.msra.mxu0 %v1054
      %2651 = vmatpush.bf16.msra.mxu0 %v1052
      %2652 = vmatpush.bf16.msra.mxu0 %v1050
      %2653 = vmatpush.bf16.msra.mxu0 %v1048
      %2654 = vmatpush.bf16.msra.mxu0 %v1046
      %2655 = vmatpush.bf16.msra.mxu0 %v1044
      %2656 = vmatpush.bf16.msra.mxu0 %v1042
      %2657 = vmatmul.bf16.gmra.mxu0 %v1681
      %v2658 = vpop.f32.mrf.mxu0
      %v2659 = vadd.f32 0.0, %v2658
      %v2660 = vpop.f32.mrf.mxu0
      %v2661 = vadd.f32 0.0, %v2660
      %2662 = vmatmul.bf16.gmra.mxu0 %v1689
      %v2663 = vpop.f32.mrf.mxu0
      %v2664 = vadd.f32 0.0, %v2663
      %v2665 = vpop.f32.mrf.mxu0
      %v2666 = vadd.f32 0.0, %v2665
      %2667 = vmatmul.bf16.gmra.mxu0 %v1697
      %v2668 = vpop.f32.mrf.mxu0
      %v2669 = vadd.f32 0.0, %v2668
      %v2670 = vpop.f32.mrf.mxu0
      %v2671 = vadd.f32 0.0, %v2670
      %2672 = vmatmul.bf16.gmra.mxu0 %v1705
      %v2673 = vpop.f32.mrf.mxu0
      %v2674 = vadd.f32 0.0, %v2673
      %v2675 = vpop.f32.mrf.mxu0
      %v2676 = vadd.f32 0.0, %v2675
      %2677 = vmatmul.bf16.gmra.mxu0 %v1713
      %v2678 = vpop.f32.mrf.mxu0
      %v2679 = vadd.f32 0.0, %v2678
      %v2680 = vpop.f32.mrf.mxu0
      %v2681 = vadd.f32 0.0, %v2680
      %2682 = vmatmul.bf16.gmra.mxu0 %v1721
      %v2683 = vpop.f32.mrf.mxu0
      %v2684 = vadd.f32 0.0, %v2683
      %v2685 = vpop.f32.mrf.mxu0
      %v2686 = vadd.f32 0.0, %v2685
      %2687 = vmatmul.bf16.gmra.mxu0 %v1729
      %v2688 = vpop.f32.mrf.mxu0
      %v2689 = vadd.f32 0.0, %v2688
      %v2690 = vpop.f32.mrf.mxu0
      %v2691 = vadd.f32 0.0, %v2690
      %2692 = vmatmul.bf16.gmra.mxu0 %v1737
      %v2693 = vpop.f32.mrf.mxu0
      %v2694 = vadd.f32 0.0, %v2693
      %v2695 = vpop.f32.mrf.mxu0
      %v2696 = vadd.f32 0.0, %v2695
      %2697 = vmatmul.bf16.gmra.mxu0 %v1745
      %v2698 = vpop.f32.mrf.mxu0
      %v2699 = vadd.f32 0.0, %v2698
      %v2700 = vpop.f32.mrf.mxu0
      %v2701 = vadd.f32 0.0, %v2700
      %2702 = vmatmul.bf16.gmra.mxu0 %v1753
      %v2703 = vpop.f32.mrf.mxu0
      %v2704 = vadd.f32 0.0, %v2703
      %v2705 = vpop.f32.mrf.mxu0
      %v2706 = vadd.f32 0.0, %v2705
      %2707 = vmatmul.bf16.gmra.mxu0 %v1761
      %v2708 = vpop.f32.mrf.mxu0
      %v2709 = vadd.f32 0.0, %v2708
      %v2710 = vpop.f32.mrf.mxu0
      %v2711 = vadd.f32 0.0, %v2710
      %2712 = vmatmul.bf16.gmra.mxu0 %v1769
      %v2713 = vpop.f32.mrf.mxu0
      %v2714 = vadd.f32 0.0, %v2713
      %v2715 = vpop.f32.mrf.mxu0
      %v2716 = vadd.f32 0.0, %v2715
      %2717 = vmatmul.bf16.gmra.mxu0 %v1777
      %v2718 = vpop.f32.mrf.mxu0
      %v2719 = vadd.f32 0.0, %v2718
      %v2720 = vpop.f32.mrf.mxu0
      %v2721 = vadd.f32 0.0, %v2720
      %2722 = vmatmul.bf16.gmra.mxu0 %v1785
      %v2723 = vpop.f32.mrf.mxu0
      %v2724 = vadd.f32 0.0, %v2723
      %v2725 = vpop.f32.mrf.mxu0
      %v2726 = vadd.f32 0.0, %v2725
      %2727 = vmatmul.bf16.gmra.mxu0 %v1793
      %v2728 = vpop.f32.mrf.mxu0
      %v2729 = vadd.f32 0.0, %v2728
      %v2730 = vpop.f32.mrf.mxu0
      %v2731 = vadd.f32 0.0, %v2730
      %2732 = vmatmul.bf16.gmra.mxu0 %v1801
      %v2733 = vpop.f32.mrf.mxu0
      %v2734 = vadd.f32 0.0, %v2733
      %v2735 = vpop.f32.mrf.mxu0
      %v2736 = vadd.f32 0.0, %v2735
      %2737 = vdwg.mxu0
      %2738 = vmatpush.bf16.msra.mxu0 %v1072
      %2739 = vmatpush.bf16.msra.mxu0 %v1070
      %2740 = vmatpush.bf16.msra.mxu0 %v1068
      %2741 = vmatpush.bf16.msra.mxu0 %v1066
      %2742 = vmatpush.bf16.msra.mxu0 %v1064
      %2743 = vmatpush.bf16.msra.mxu0 %v1062
      %2744 = vmatpush.bf16.msra.mxu0 %v1060
      %2745 = vmatpush.bf16.msra.mxu0 %v1058
      %2746 = vmatmul.bf16.gmra.mxu0 %v1682
      %v2747 = vpop.f32.mrf.mxu0
      %v2748 = vadd.f32 %v2659, %v2747
      %v2749 = vpop.f32.mrf.mxu0
      %v2750 = vadd.f32 %v2661, %v2749
      %2751 = vmatmul.bf16.gmra.mxu0 %v1690
      %v2752 = vpop.f32.mrf.mxu0
      %v2753 = vadd.f32 %v2664, %v2752
      %v2754 = vpop.f32.mrf.mxu0
      %v2755 = vadd.f32 %v2666, %v2754
      %2756 = vmatmul.bf16.gmra.mxu0 %v1698
      %v2757 = vpop.f32.mrf.mxu0
      %v2758 = vadd.f32 %v2669, %v2757
      %v2759 = vpop.f32.mrf.mxu0
      %v2760 = vadd.f32 %v2671, %v2759
      %2761 = vmatmul.bf16.gmra.mxu0 %v1706
      %v2762 = vpop.f32.mrf.mxu0
      %v2763 = vadd.f32 %v2674, %v2762
      %v2764 = vpop.f32.mrf.mxu0
      %v2765 = vadd.f32 %v2676, %v2764
      %2766 = vmatmul.bf16.gmra.mxu0 %v1714
      %v2767 = vpop.f32.mrf.mxu0
      %v2768 = vadd.f32 %v2679, %v2767
      %v2769 = vpop.f32.mrf.mxu0
      %v2770 = vadd.f32 %v2681, %v2769
      %2771 = vmatmul.bf16.gmra.mxu0 %v1722
      %v2772 = vpop.f32.mrf.mxu0
      %v2773 = vadd.f32 %v2684, %v2772
      %v2774 = vpop.f32.mrf.mxu0
      %v2775 = vadd.f32 %v2686, %v2774
      %2776 = vmatmul.bf16.gmra.mxu0 %v1730
      %v2777 = vpop.f32.mrf.mxu0
      %v2778 = vadd.f32 %v2689, %v2777
      %v2779 = vpop.f32.mrf.mxu0
      %v2780 = vadd.f32 %v2691, %v2779
      %2781 = vmatmul.bf16.gmra.mxu0 %v1738
      %v2782 = vpop.f32.mrf.mxu0
      %v2783 = vadd.f32 %v2694, %v2782
      %v2784 = vpop.f32.mrf.mxu0
      %v2785 = vadd.f32 %v2696, %v2784
      %2786 = vmatmul.bf16.gmra.mxu0 %v1746
      %v2787 = vpop.f32.mrf.mxu0
      %v2788 = vadd.f32 %v2699, %v2787
      %v2789 = vpop.f32.mrf.mxu0
      %v2790 = vadd.f32 %v2701, %v2789
      %2791 = vmatmul.bf16.gmra.mxu0 %v1754
      %v2792 = vpop.f32.mrf.mxu0
      %v2793 = vadd.f32 %v2704, %v2792
      %v2794 = vpop.f32.mrf.mxu0
      %v2795 = vadd.f32 %v2706, %v2794
      %2796 = vmatmul.bf16.gmra.mxu0 %v1762
      %v2797 = vpop.f32.mrf.mxu0
      %v2798 = vadd.f32 %v2709, %v2797
      %v2799 = vpop.f32.mrf.mxu0
      %v2800 = vadd.f32 %v2711, %v2799
      %2801 = vmatmul.bf16.gmra.mxu0 %v1770
      %v2802 = vpop.f32.mrf.mxu0
      %v2803 = vadd.f32 %v2714, %v2802
      %v2804 = vpop.f32.mrf.mxu0
      %v2805 = vadd.f32 %v2716, %v2804
      %2806 = vmatmul.bf16.gmra.mxu0 %v1778
      %v2807 = vpop.f32.mrf.mxu0
      %v2808 = vadd.f32 %v2719, %v2807
      %v2809 = vpop.f32.mrf.mxu0
      %v2810 = vadd.f32 %v2721, %v2809
      %2811 = vmatmul.bf16.gmra.mxu0 %v1786
      %v2812 = vpop.f32.mrf.mxu0
      %v2813 = vadd.f32 %v2724, %v2812
      %v2814 = vpop.f32.mrf.mxu0
      %v2815 = vadd.f32 %v2726, %v2814
      %2816 = vmatmul.bf16.gmra.mxu0 %v1794
      %v2817 = vpop.f32.mrf.mxu0
      %v2818 = vadd.f32 %v2729, %v2817
      %v2819 = vpop.f32.mrf.mxu0
      %v2820 = vadd.f32 %v2731, %v2819
      %2821 = vmatmul.bf16.gmra.mxu0 %v1802
      %v2822 = vpop.f32.mrf.mxu0
      %v2823 = vadd.f32 %v2734, %v2822
      %v2824 = vpop.f32.mrf.mxu0
      %v2825 = vadd.f32 %v2736, %v2824
      %2826 = vdwg.mxu0
      %2827 = vmatpush.bf16.msra.mxu0 %v1088
      %2828 = vmatpush.bf16.msra.mxu0 %v1086
      %2829 = vmatpush.bf16.msra.mxu0 %v1084
      %2830 = vmatpush.bf16.msra.mxu0 %v1082
      %2831 = vmatpush.bf16.msra.mxu0 %v1080
      %2832 = vmatpush.bf16.msra.mxu0 %v1078
      %2833 = vmatpush.bf16.msra.mxu0 %v1076
      %2834 = vmatpush.bf16.msra.mxu0 %v1074
      %2835 = vmatmul.bf16.gmra.mxu0 %v1683
      %v2836 = vpop.f32.mrf.mxu0
      %v2837 = vadd.f32 %v2748, %v2836
      %v2838 = vpop.f32.mrf.mxu0
      %v2839 = vadd.f32 %v2750, %v2838
      %2840 = vmatmul.bf16.gmra.mxu0 %v1691
      %v2841 = vpop.f32.mrf.mxu0
      %v2842 = vadd.f32 %v2753, %v2841
      %v2843 = vpop.f32.mrf.mxu0
      %v2844 = vadd.f32 %v2755, %v2843
      %2845 = vmatmul.bf16.gmra.mxu0 %v1699
      %v2846 = vpop.f32.mrf.mxu0
      %v2847 = vadd.f32 %v2758, %v2846
      %v2848 = vpop.f32.mrf.mxu0
      %v2849 = vadd.f32 %v2760, %v2848
      %2850 = vmatmul.bf16.gmra.mxu0 %v1707
      %v2851 = vpop.f32.mrf.mxu0
      %v2852 = vadd.f32 %v2763, %v2851
      %v2853 = vpop.f32.mrf.mxu0
      %v2854 = vadd.f32 %v2765, %v2853
      %2855 = vmatmul.bf16.gmra.mxu0 %v1715
      %v2856 = vpop.f32.mrf.mxu0
      %v2857 = vadd.f32 %v2768, %v2856
      %v2858 = vpop.f32.mrf.mxu0
      %v2859 = vadd.f32 %v2770, %v2858
      %2860 = vmatmul.bf16.gmra.mxu0 %v1723
      %v2861 = vpop.f32.mrf.mxu0
      %v2862 = vadd.f32 %v2773, %v2861
      %v2863 = vpop.f32.mrf.mxu0
      %v2864 = vadd.f32 %v2775, %v2863
      %2865 = vmatmul.bf16.gmra.mxu0 %v1731
      %v2866 = vpop.f32.mrf.mxu0
      %v2867 = vadd.f32 %v2778, %v2866
      %v2868 = vpop.f32.mrf.mxu0
      %v2869 = vadd.f32 %v2780, %v2868
      %2870 = vmatmul.bf16.gmra.mxu0 %v1739
      %v2871 = vpop.f32.mrf.mxu0
      %v2872 = vadd.f32 %v2783, %v2871
      %v2873 = vpop.f32.mrf.mxu0
      %v2874 = vadd.f32 %v2785, %v2873
      %2875 = vmatmul.bf16.gmra.mxu0 %v1747
      %v2876 = vpop.f32.mrf.mxu0
      %v2877 = vadd.f32 %v2788, %v2876
      %v2878 = vpop.f32.mrf.mxu0
      %v2879 = vadd.f32 %v2790, %v2878
      %2880 = vmatmul.bf16.gmra.mxu0 %v1755
      %v2881 = vpop.f32.mrf.mxu0
      %v2882 = vadd.f32 %v2793, %v2881
      %v2883 = vpop.f32.mrf.mxu0
      %v2884 = vadd.f32 %v2795, %v2883
      %2885 = vmatmul.bf16.gmra.mxu0 %v1763
      %v2886 = vpop.f32.mrf.mxu0
      %v2887 = vadd.f32 %v2798, %v2886
      %v2888 = vpop.f32.mrf.mxu0
      %v2889 = vadd.f32 %v2800, %v2888
      %2890 = vmatmul.bf16.gmra.mxu0 %v1771
      %v2891 = vpop.f32.mrf.mxu0
      %v2892 = vadd.f32 %v2803, %v2891
      %v2893 = vpop.f32.mrf.mxu0
      %v2894 = vadd.f32 %v2805, %v2893
      %2895 = vmatmul.bf16.gmra.mxu0 %v1779
      %v2896 = vpop.f32.mrf.mxu0
      %v2897 = vadd.f32 %v2808, %v2896
      %v2898 = vpop.f32.mrf.mxu0
      %v2899 = vadd.f32 %v2810, %v2898
      %2900 = vmatmul.bf16.gmra.mxu0 %v1787
      %v2901 = vpop.f32.mrf.mxu0
      %v2902 = vadd.f32 %v2813, %v2901
      %v2903 = vpop.f32.mrf.mxu0
      %v2904 = vadd.f32 %v2815, %v2903
      %2905 = vmatmul.bf16.gmra.mxu0 %v1795
      %v2906 = vpop.f32.mrf.mxu0
      %v2907 = vadd.f32 %v2818, %v2906
      %v2908 = vpop.f32.mrf.mxu0
      %v2909 = vadd.f32 %v2820, %v2908
      %2910 = vmatmul.bf16.gmra.mxu0 %v1803
      %v2911 = vpop.f32.mrf.mxu0
      %v2912 = vadd.f32 %v2823, %v2911
      %v2913 = vpop.f32.mrf.mxu0
      %v2914 = vadd.f32 %v2825, %v2913
      %2915 = vdwg.mxu0
      %2916 = vmatpush.bf16.msra.mxu0 %v1104
      %2917 = vmatpush.bf16.msra.mxu0 %v1102
      %2918 = vmatpush.bf16.msra.mxu0 %v1100
      %2919 = vmatpush.bf16.msra.mxu0 %v1098
      %2920 = vmatpush.bf16.msra.mxu0 %v1096
      %2921 = vmatpush.bf16.msra.mxu0 %v1094
      %2922 = vmatpush.bf16.msra.mxu0 %v1092
      %2923 = vmatpush.bf16.msra.mxu0 %v1090
      %2924 = vmatmul.bf16.gmra.mxu0 %v1684
      %v2925 = vpop.f32.mrf.mxu0
      %v2926 = vadd.f32 %v2837, %v2925
      %v2927 = vpop.f32.mrf.mxu0
      %v2928 = vadd.f32 %v2839, %v2927
      %2929 = vmatmul.bf16.gmra.mxu0 %v1692
      %v2930 = vpop.f32.mrf.mxu0
      %v2931 = vadd.f32 %v2842, %v2930
      %v2932 = vpop.f32.mrf.mxu0
      %v2933 = vadd.f32 %v2844, %v2932
      %2934 = vmatmul.bf16.gmra.mxu0 %v1700
      %v2935 = vpop.f32.mrf.mxu0
      %v2936 = vadd.f32 %v2847, %v2935
      %v2937 = vpop.f32.mrf.mxu0
      %v2938 = vadd.f32 %v2849, %v2937
      %2939 = vmatmul.bf16.gmra.mxu0 %v1708
      %v2940 = vpop.f32.mrf.mxu0
      %v2941 = vadd.f32 %v2852, %v2940
      %v2942 = vpop.f32.mrf.mxu0
      %v2943 = vadd.f32 %v2854, %v2942
      %2944 = vmatmul.bf16.gmra.mxu0 %v1716
      %v2945 = vpop.f32.mrf.mxu0
      %v2946 = vadd.f32 %v2857, %v2945
      %v2947 = vpop.f32.mrf.mxu0
      %v2948 = vadd.f32 %v2859, %v2947
      %2949 = vmatmul.bf16.gmra.mxu0 %v1724
      %v2950 = vpop.f32.mrf.mxu0
      %v2951 = vadd.f32 %v2862, %v2950
      %v2952 = vpop.f32.mrf.mxu0
      %v2953 = vadd.f32 %v2864, %v2952
      %2954 = vmatmul.bf16.gmra.mxu0 %v1732
      %v2955 = vpop.f32.mrf.mxu0
      %v2956 = vadd.f32 %v2867, %v2955
      %v2957 = vpop.f32.mrf.mxu0
      %v2958 = vadd.f32 %v2869, %v2957
      %2959 = vmatmul.bf16.gmra.mxu0 %v1740
      %v2960 = vpop.f32.mrf.mxu0
      %v2961 = vadd.f32 %v2872, %v2960
      %v2962 = vpop.f32.mrf.mxu0
      %v2963 = vadd.f32 %v2874, %v2962
      %2964 = vmatmul.bf16.gmra.mxu0 %v1748
      %v2965 = vpop.f32.mrf.mxu0
      %v2966 = vadd.f32 %v2877, %v2965
      %v2967 = vpop.f32.mrf.mxu0
      %v2968 = vadd.f32 %v2879, %v2967
      %2969 = vmatmul.bf16.gmra.mxu0 %v1756
      %v2970 = vpop.f32.mrf.mxu0
      %v2971 = vadd.f32 %v2882, %v2970
      %v2972 = vpop.f32.mrf.mxu0
      %v2973 = vadd.f32 %v2884, %v2972
      %2974 = vmatmul.bf16.gmra.mxu0 %v1764
      %v2975 = vpop.f32.mrf.mxu0
      %v2976 = vadd.f32 %v2887, %v2975
      %v2977 = vpop.f32.mrf.mxu0
      %v2978 = vadd.f32 %v2889, %v2977
      %2979 = vmatmul.bf16.gmra.mxu0 %v1772
      %v2980 = vpop.f32.mrf.mxu0
      %v2981 = vadd.f32 %v2892, %v2980
      %v2982 = vpop.f32.mrf.mxu0
      %v2983 = vadd.f32 %v2894, %v2982
      %2984 = vmatmul.bf16.gmra.mxu0 %v1780
      %v2985 = vpop.f32.mrf.mxu0
      %v2986 = vadd.f32 %v2897, %v2985
      %v2987 = vpop.f32.mrf.mxu0
      %v2988 = vadd.f32 %v2899, %v2987
      %2989 = vmatmul.bf16.gmra.mxu0 %v1788
      %v2990 = vpop.f32.mrf.mxu0
      %v2991 = vadd.f32 %v2902, %v2990
      %v2992 = vpop.f32.mrf.mxu0
      %v2993 = vadd.f32 %v2904, %v2992
      %2994 = vmatmul.bf16.gmra.mxu0 %v1796
      %v2995 = vpop.f32.mrf.mxu0
      %v2996 = vadd.f32 %v2907, %v2995
      %v2997 = vpop.f32.mrf.mxu0
      %v2998 = vadd.f32 %v2909, %v2997
      %2999 = vmatmul.bf16.gmra.mxu0 %v1804
      %v3000 = vpop.f32.mrf.mxu0
      %v3001 = vadd.f32 %v2912, %v3000
      %v3002 = vpop.f32.mrf.mxu0
      %v3003 = vadd.f32 %v2914, %v3002
      %3004 = vdwg.mxu0
      %3005 = vmatpush.bf16.msra.mxu0 %v1120
      %3006 = vmatpush.bf16.msra.mxu0 %v1118
      %3007 = vmatpush.bf16.msra.mxu0 %v1116
      %3008 = vmatpush.bf16.msra.mxu0 %v1114
      %3009 = vmatpush.bf16.msra.mxu0 %v1112
      %3010 = vmatpush.bf16.msra.mxu0 %v1110
      %3011 = vmatpush.bf16.msra.mxu0 %v1108
      %3012 = vmatpush.bf16.msra.mxu0 %v1106
      %3013 = vmatmul.bf16.gmra.mxu0 %v1685
      %v3014 = vpop.f32.mrf.mxu0
      %v3015 = vadd.f32 %v2926, %v3014
      %v3016 = vpop.f32.mrf.mxu0
      %v3017 = vadd.f32 %v2928, %v3016
      %3018 = vmatmul.bf16.gmra.mxu0 %v1693
      %v3019 = vpop.f32.mrf.mxu0
      %v3020 = vadd.f32 %v2931, %v3019
      %v3021 = vpop.f32.mrf.mxu0
      %v3022 = vadd.f32 %v2933, %v3021
      %3023 = vmatmul.bf16.gmra.mxu0 %v1701
      %v3024 = vpop.f32.mrf.mxu0
      %v3025 = vadd.f32 %v2936, %v3024
      %v3026 = vpop.f32.mrf.mxu0
      %v3027 = vadd.f32 %v2938, %v3026
      %3028 = vmatmul.bf16.gmra.mxu0 %v1709
      %v3029 = vpop.f32.mrf.mxu0
      %v3030 = vadd.f32 %v2941, %v3029
      %v3031 = vpop.f32.mrf.mxu0
      %v3032 = vadd.f32 %v2943, %v3031
      %3033 = vmatmul.bf16.gmra.mxu0 %v1717
      %v3034 = vpop.f32.mrf.mxu0
      %v3035 = vadd.f32 %v2946, %v3034
      %v3036 = vpop.f32.mrf.mxu0
      %v3037 = vadd.f32 %v2948, %v3036
      %3038 = vmatmul.bf16.gmra.mxu0 %v1725
      %v3039 = vpop.f32.mrf.mxu0
      %v3040 = vadd.f32 %v2951, %v3039
      %v3041 = vpop.f32.mrf.mxu0
      %v3042 = vadd.f32 %v2953, %v3041
      %3043 = vmatmul.bf16.gmra.mxu0 %v1733
      %v3044 = vpop.f32.mrf.mxu0
      %v3045 = vadd.f32 %v2956, %v3044
      %v3046 = vpop.f32.mrf.mxu0
      %v3047 = vadd.f32 %v2958, %v3046
      %3048 = vmatmul.bf16.gmra.mxu0 %v1741
      %v3049 = vpop.f32.mrf.mxu0
      %v3050 = vadd.f32 %v2961, %v3049
      %v3051 = vpop.f32.mrf.mxu0
      %v3052 = vadd.f32 %v2963, %v3051
      %3053 = vmatmul.bf16.gmra.mxu0 %v1749
      %v3054 = vpop.f32.mrf.mxu0
      %v3055 = vadd.f32 %v2966, %v3054
      %v3056 = vpop.f32.mrf.mxu0
      %v3057 = vadd.f32 %v2968, %v3056
      %3058 = vmatmul.bf16.gmra.mxu0 %v1757
      %v3059 = vpop.f32.mrf.mxu0
      %v3060 = vadd.f32 %v2971, %v3059
      %v3061 = vpop.f32.mrf.mxu0
      %v3062 = vadd.f32 %v2973, %v3061
      %3063 = vmatmul.bf16.gmra.mxu0 %v1765
      %v3064 = vpop.f32.mrf.mxu0
      %v3065 = vadd.f32 %v2976, %v3064
      %v3066 = vpop.f32.mrf.mxu0
      %v3067 = vadd.f32 %v2978, %v3066
      %3068 = vmatmul.bf16.gmra.mxu0 %v1773
      %v3069 = vpop.f32.mrf.mxu0
      %v3070 = vadd.f32 %v2981, %v3069
      %v3071 = vpop.f32.mrf.mxu0
      %v3072 = vadd.f32 %v2983, %v3071
      %3073 = vmatmul.bf16.gmra.mxu0 %v1781
      %v3074 = vpop.f32.mrf.mxu0
      %v3075 = vadd.f32 %v2986, %v3074
      %v3076 = vpop.f32.mrf.mxu0
      %v3077 = vadd.f32 %v2988, %v3076
      %3078 = vmatmul.bf16.gmra.mxu0 %v1789
      %v3079 = vpop.f32.mrf.mxu0
      %v3080 = vadd.f32 %v2991, %v3079
      %v3081 = vpop.f32.mrf.mxu0
      %v3082 = vadd.f32 %v2993, %v3081
      %3083 = vmatmul.bf16.gmra.mxu0 %v1797
      %v3084 = vpop.f32.mrf.mxu0
      %v3085 = vadd.f32 %v2996, %v3084
      %v3086 = vpop.f32.mrf.mxu0
      %v3087 = vadd.f32 %v2998, %v3086
      %3088 = vmatmul.bf16.gmra.mxu0 %v1805
      %v3089 = vpop.f32.mrf.mxu0
      %v3090 = vadd.f32 %v3001, %v3089
      %v3091 = vpop.f32.mrf.mxu0
      %v3092 = vadd.f32 %v3003, %v3091
      %3093 = vdwg.mxu0
      %3094 = vmatpush.bf16.msra.mxu0 %v1136
      %3095 = vmatpush.bf16.msra.mxu0 %v1134
      %3096 = vmatpush.bf16.msra.mxu0 %v1132
      %3097 = vmatpush.bf16.msra.mxu0 %v1130
      %3098 = vmatpush.bf16.msra.mxu0 %v1128
      %3099 = vmatpush.bf16.msra.mxu0 %v1126
      %3100 = vmatpush.bf16.msra.mxu0 %v1124
      %3101 = vmatpush.bf16.msra.mxu0 %v1122
      %3102 = vmatmul.bf16.gmra.mxu0 %v1686
      %v3103 = vpop.f32.mrf.mxu0
      %v3104 = vadd.f32 %v3015, %v3103
      %v3105 = vpop.f32.mrf.mxu0
      %v3106 = vadd.f32 %v3017, %v3105
      %3107 = vmatmul.bf16.gmra.mxu0 %v1694
      %v3108 = vpop.f32.mrf.mxu0
      %v3109 = vadd.f32 %v3020, %v3108
      %v3110 = vpop.f32.mrf.mxu0
      %v3111 = vadd.f32 %v3022, %v3110
      %3112 = vmatmul.bf16.gmra.mxu0 %v1702
      %v3113 = vpop.f32.mrf.mxu0
      %v3114 = vadd.f32 %v3025, %v3113
      %v3115 = vpop.f32.mrf.mxu0
      %v3116 = vadd.f32 %v3027, %v3115
      %3117 = vmatmul.bf16.gmra.mxu0 %v1710
      %v3118 = vpop.f32.mrf.mxu0
      %v3119 = vadd.f32 %v3030, %v3118
      %v3120 = vpop.f32.mrf.mxu0
      %v3121 = vadd.f32 %v3032, %v3120
      %3122 = vmatmul.bf16.gmra.mxu0 %v1718
      %v3123 = vpop.f32.mrf.mxu0
      %v3124 = vadd.f32 %v3035, %v3123
      %v3125 = vpop.f32.mrf.mxu0
      %v3126 = vadd.f32 %v3037, %v3125
      %3127 = vmatmul.bf16.gmra.mxu0 %v1726
      %v3128 = vpop.f32.mrf.mxu0
      %v3129 = vadd.f32 %v3040, %v3128
      %v3130 = vpop.f32.mrf.mxu0
      %v3131 = vadd.f32 %v3042, %v3130
      %3132 = vmatmul.bf16.gmra.mxu0 %v1734
      %v3133 = vpop.f32.mrf.mxu0
      %v3134 = vadd.f32 %v3045, %v3133
      %v3135 = vpop.f32.mrf.mxu0
      %v3136 = vadd.f32 %v3047, %v3135
      %3137 = vmatmul.bf16.gmra.mxu0 %v1742
      %v3138 = vpop.f32.mrf.mxu0
      %v3139 = vadd.f32 %v3050, %v3138
      %v3140 = vpop.f32.mrf.mxu0
      %v3141 = vadd.f32 %v3052, %v3140
      %3142 = vmatmul.bf16.gmra.mxu0 %v1750
      %v3143 = vpop.f32.mrf.mxu0
      %v3144 = vadd.f32 %v3055, %v3143
      %v3145 = vpop.f32.mrf.mxu0
      %v3146 = vadd.f32 %v3057, %v3145
      %3147 = vmatmul.bf16.gmra.mxu0 %v1758
      %v3148 = vpop.f32.mrf.mxu0
      %v3149 = vadd.f32 %v3060, %v3148
      %v3150 = vpop.f32.mrf.mxu0
      %v3151 = vadd.f32 %v3062, %v3150
      %3152 = vmatmul.bf16.gmra.mxu0 %v1766
      %v3153 = vpop.f32.mrf.mxu0
      %v3154 = vadd.f32 %v3065, %v3153
      %v3155 = vpop.f32.mrf.mxu0
      %v3156 = vadd.f32 %v3067, %v3155
      %3157 = vmatmul.bf16.gmra.mxu0 %v1774
      %v3158 = vpop.f32.mrf.mxu0
      %v3159 = vadd.f32 %v3070, %v3158
      %v3160 = vpop.f32.mrf.mxu0
      %v3161 = vadd.f32 %v3072, %v3160
      %3162 = vmatmul.bf16.gmra.mxu0 %v1782
      %v3163 = vpop.f32.mrf.mxu0
      %v3164 = vadd.f32 %v3075, %v3163
      %v3165 = vpop.f32.mrf.mxu0
      %v3166 = vadd.f32 %v3077, %v3165
      %3167 = vmatmul.bf16.gmra.mxu0 %v1790
      %v3168 = vpop.f32.mrf.mxu0
      %v3169 = vadd.f32 %v3080, %v3168
      %v3170 = vpop.f32.mrf.mxu0
      %v3171 = vadd.f32 %v3082, %v3170
      %3172 = vmatmul.bf16.gmra.mxu0 %v1798
      %v3173 = vpop.f32.mrf.mxu0
      %v3174 = vadd.f32 %v3085, %v3173
      %v3175 = vpop.f32.mrf.mxu0
      %v3176 = vadd.f32 %v3087, %v3175
      %3177 = vmatmul.bf16.gmra.mxu0 %v1806
      %v3178 = vpop.f32.mrf.mxu0
      %v3179 = vadd.f32 %v3090, %v3178
      %v3180 = vpop.f32.mrf.mxu0
      %v3181 = vadd.f32 %v3092, %v3180
      %3182 = vdwg.mxu0
      %3183 = vmatpush.bf16.msra.mxu0 %v1152
      %3184 = vmatpush.bf16.msra.mxu0 %v1150
      %3185 = vmatpush.bf16.msra.mxu0 %v1148
      %3186 = vmatpush.bf16.msra.mxu0 %v1146
      %3187 = vmatpush.bf16.msra.mxu0 %v1144
      %3188 = vmatpush.bf16.msra.mxu0 %v1142
      %3189 = vmatpush.bf16.msra.mxu0 %v1140
      %3190 = vmatpush.bf16.msra.mxu0 %v1138
      %3191 = vmatmul.bf16.gmra.mxu0 %v1687
      %v3192 = vpop.f32.mrf.mxu0
      %v3193 = vadd.f32 %v3104, %v3192
      %v3194 = vpop.f32.mrf.mxu0
      %v3195 = vadd.f32 %v3106, %v3194
      %3196 = vmatmul.bf16.gmra.mxu0 %v1695
      %v3197 = vpop.f32.mrf.mxu0
      %v3198 = vadd.f32 %v3109, %v3197
      %v3199 = vpop.f32.mrf.mxu0
      %v3200 = vadd.f32 %v3111, %v3199
      %3201 = vmatmul.bf16.gmra.mxu0 %v1703
      %v3202 = vpop.f32.mrf.mxu0
      %v3203 = vadd.f32 %v3114, %v3202
      %v3204 = vpop.f32.mrf.mxu0
      %v3205 = vadd.f32 %v3116, %v3204
      %3206 = vmatmul.bf16.gmra.mxu0 %v1711
      %v3207 = vpop.f32.mrf.mxu0
      %v3208 = vadd.f32 %v3119, %v3207
      %v3209 = vpop.f32.mrf.mxu0
      %v3210 = vadd.f32 %v3121, %v3209
      %3211 = vmatmul.bf16.gmra.mxu0 %v1719
      %v3212 = vpop.f32.mrf.mxu0
      %v3213 = vadd.f32 %v3124, %v3212
      %v3214 = vpop.f32.mrf.mxu0
      %v3215 = vadd.f32 %v3126, %v3214
      %3216 = vmatmul.bf16.gmra.mxu0 %v1727
      %v3217 = vpop.f32.mrf.mxu0
      %v3218 = vadd.f32 %v3129, %v3217
      %v3219 = vpop.f32.mrf.mxu0
      %v3220 = vadd.f32 %v3131, %v3219
      %3221 = vmatmul.bf16.gmra.mxu0 %v1735
      %v3222 = vpop.f32.mrf.mxu0
      %v3223 = vadd.f32 %v3134, %v3222
      %v3224 = vpop.f32.mrf.mxu0
      %v3225 = vadd.f32 %v3136, %v3224
      %3226 = vmatmul.bf16.gmra.mxu0 %v1743
      %v3227 = vpop.f32.mrf.mxu0
      %v3228 = vadd.f32 %v3139, %v3227
      %v3229 = vpop.f32.mrf.mxu0
      %v3230 = vadd.f32 %v3141, %v3229
      %3231 = vmatmul.bf16.gmra.mxu0 %v1751
      %v3232 = vpop.f32.mrf.mxu0
      %v3233 = vadd.f32 %v3144, %v3232
      %v3234 = vpop.f32.mrf.mxu0
      %v3235 = vadd.f32 %v3146, %v3234
      %3236 = vmatmul.bf16.gmra.mxu0 %v1759
      %v3237 = vpop.f32.mrf.mxu0
      %v3238 = vadd.f32 %v3149, %v3237
      %v3239 = vpop.f32.mrf.mxu0
      %v3240 = vadd.f32 %v3151, %v3239
      %3241 = vmatmul.bf16.gmra.mxu0 %v1767
      %v3242 = vpop.f32.mrf.mxu0
      %v3243 = vadd.f32 %v3154, %v3242
      %v3244 = vpop.f32.mrf.mxu0
      %v3245 = vadd.f32 %v3156, %v3244
      %3246 = vmatmul.bf16.gmra.mxu0 %v1775
      %v3247 = vpop.f32.mrf.mxu0
      %v3248 = vadd.f32 %v3159, %v3247
      %v3249 = vpop.f32.mrf.mxu0
      %v3250 = vadd.f32 %v3161, %v3249
      %3251 = vmatmul.bf16.gmra.mxu0 %v1783
      %v3252 = vpop.f32.mrf.mxu0
      %v3253 = vadd.f32 %v3164, %v3252
      %v3254 = vpop.f32.mrf.mxu0
      %v3255 = vadd.f32 %v3166, %v3254
      %3256 = vmatmul.bf16.gmra.mxu0 %v1791
      %v3257 = vpop.f32.mrf.mxu0
      %v3258 = vadd.f32 %v3169, %v3257
      %v3259 = vpop.f32.mrf.mxu0
      %v3260 = vadd.f32 %v3171, %v3259
      %3261 = vmatmul.bf16.gmra.mxu0 %v1799
      %v3262 = vpop.f32.mrf.mxu0
      %v3263 = vadd.f32 %v3174, %v3262
      %v3264 = vpop.f32.mrf.mxu0
      %v3265 = vadd.f32 %v3176, %v3264
      %3266 = vmatmul.bf16.gmra.mxu0 %v1807
      %v3267 = vpop.f32.mrf.mxu0
      %v3268 = vadd.f32 %v3179, %v3267
      %v3269 = vpop.f32.mrf.mxu0
      %v3270 = vadd.f32 %v3181, %v3269
      %3271 = vdwg.mxu0
      %3272 = vmatpush.bf16.msra.mxu0 %v1168
      %3273 = vmatpush.bf16.msra.mxu0 %v1166
      %3274 = vmatpush.bf16.msra.mxu0 %v1164
      %3275 = vmatpush.bf16.msra.mxu0 %v1162
      %3276 = vmatpush.bf16.msra.mxu0 %v1160
      %3277 = vmatpush.bf16.msra.mxu0 %v1158
      %3278 = vmatpush.bf16.msra.mxu0 %v1156
      %3279 = vmatpush.bf16.msra.mxu0 %v1154
      %3280 = vmatmul.bf16.gmra.mxu0 %v1688
      %v3281 = vpop.f32.mrf.mxu0
      %v3282 = vadd.f32 %v3193, %v3281
      %v3283 = vpop.f32.mrf.mxu0
      %v3284 = vadd.f32 %v3195, %v3283
      %3285 = vmatmul.bf16.gmra.mxu0 %v1696
      %v3286 = vpop.f32.mrf.mxu0
      %v3287 = vadd.f32 %v3198, %v3286
      %v3288 = vpop.f32.mrf.mxu0
      %v3289 = vadd.f32 %v3200, %v3288
      %3290 = vmatmul.bf16.gmra.mxu0 %v1704
      %v3291 = vpop.f32.mrf.mxu0
      %v3292 = vadd.f32 %v3203, %v3291
      %v3293 = vpop.f32.mrf.mxu0
      %v3294 = vadd.f32 %v3205, %v3293
      %3295 = vmatmul.bf16.gmra.mxu0 %v1712
      %v3296 = vpop.f32.mrf.mxu0
      %v3297 = vadd.f32 %v3208, %v3296
      %v3298 = vpop.f32.mrf.mxu0
      %v3299 = vadd.f32 %v3210, %v3298
      %3300 = vmatmul.bf16.gmra.mxu0 %v1720
      %v3301 = vpop.f32.mrf.mxu0
      %v3302 = vadd.f32 %v3213, %v3301
      %v3303 = vpop.f32.mrf.mxu0
      %v3304 = vadd.f32 %v3215, %v3303
      %3305 = vmatmul.bf16.gmra.mxu0 %v1728
      %v3306 = vpop.f32.mrf.mxu0
      %v3307 = vadd.f32 %v3218, %v3306
      %v3308 = vpop.f32.mrf.mxu0
      %v3309 = vadd.f32 %v3220, %v3308
      %3310 = vmatmul.bf16.gmra.mxu0 %v1736
      %v3311 = vpop.f32.mrf.mxu0
      %v3312 = vadd.f32 %v3223, %v3311
      %v3313 = vpop.f32.mrf.mxu0
      %v3314 = vadd.f32 %v3225, %v3313
      %3315 = vmatmul.bf16.gmra.mxu0 %v1744
      %v3316 = vpop.f32.mrf.mxu0
      %v3317 = vadd.f32 %v3228, %v3316
      %v3318 = vpop.f32.mrf.mxu0
      %v3319 = vadd.f32 %v3230, %v3318
      %3320 = vmatmul.bf16.gmra.mxu0 %v1752
      %v3321 = vpop.f32.mrf.mxu0
      %v3322 = vadd.f32 %v3233, %v3321
      %v3323 = vpop.f32.mrf.mxu0
      %v3324 = vadd.f32 %v3235, %v3323
      %3325 = vmatmul.bf16.gmra.mxu0 %v1760
      %v3326 = vpop.f32.mrf.mxu0
      %v3327 = vadd.f32 %v3238, %v3326
      %v3328 = vpop.f32.mrf.mxu0
      %v3329 = vadd.f32 %v3240, %v3328
      %3330 = vmatmul.bf16.gmra.mxu0 %v1768
      %v3331 = vpop.f32.mrf.mxu0
      %v3332 = vadd.f32 %v3243, %v3331
      %v3333 = vpop.f32.mrf.mxu0
      %v3334 = vadd.f32 %v3245, %v3333
      %3335 = vmatmul.bf16.gmra.mxu0 %v1776
      %v3336 = vpop.f32.mrf.mxu0
      %v3337 = vadd.f32 %v3248, %v3336
      %v3338 = vpop.f32.mrf.mxu0
      %v3339 = vadd.f32 %v3250, %v3338
      %3340 = vmatmul.bf16.gmra.mxu0 %v1784
      %v3341 = vpop.f32.mrf.mxu0
      %v3342 = vadd.f32 %v3253, %v3341
      %v3343 = vpop.f32.mrf.mxu0
      %v3344 = vadd.f32 %v3255, %v3343
      %3345 = vmatmul.bf16.gmra.mxu0 %v1792
      %v3346 = vpop.f32.mrf.mxu0
      %v3347 = vadd.f32 %v3258, %v3346
      %v3348 = vpop.f32.mrf.mxu0
      %v3349 = vadd.f32 %v3260, %v3348
      %3350 = vmatmul.bf16.gmra.mxu0 %v1800
      %v3351 = vpop.f32.mrf.mxu0
      %v3352 = vadd.f32 %v3263, %v3351
      %v3353 = vpop.f32.mrf.mxu0
      %v3354 = vadd.f32 %v3265, %v3353
      %3355 = vmatmul.bf16.gmra.mxu0 %v1808
      %v3356 = vpop.f32.mrf.mxu0
      %v3357 = vadd.f32 %v3268, %v3356
      %v3358 = vpop.f32.mrf.mxu0
      %v3359 = vadd.f32 %v3270, %v3358
      %3360 = vdwg.mxu0
      %vm3361 = vcmask 556032
      %v3362 = vsel %vm3361, %v3282, 0.0
      %v3363 = vadd.f32 %v2570, %v3362
      %3364 = vadd.xlane.f32.xlu0 %v3363
      %v3365 = vpop.xlane.xlu0 %3364
      %v3366 = vsel %vm3361, %v3284, 0.0
      %v3367 = vadd.f32 %v2572, %v3366
      %3368 = vadd.xlane.f32.xlu0 %v3367
      %v3369 = vpop.xlane.xlu0 %3368
      %v3370 = vsel %vm3361, %v3287, 0.0
      %v3371 = vadd.f32 %v2575, %v3370
      %3372 = vadd.xlane.f32.xlu0 %v3371
      %v3373 = vpop.xlane.xlu0 %3372
      %v3374 = vsel %vm3361, %v3289, 0.0
      %v3375 = vadd.f32 %v2577, %v3374
      %3376 = vadd.xlane.f32.xlu0 %v3375
      %v3377 = vpop.xlane.xlu0 %3376
      %v3378 = vsel %vm3361, %v3292, 0.0
      %v3379 = vadd.f32 %v2580, %v3378
      %3380 = vadd.xlane.f32.xlu0 %v3379
      %v3381 = vpop.xlane.xlu0 %3380
      %v3382 = vsel %vm3361, %v3294, 0.0
      %v3383 = vadd.f32 %v2582, %v3382
      %3384 = vadd.xlane.f32.xlu0 %v3383
      %v3385 = vpop.xlane.xlu0 %3384
      %v3386 = vsel %vm3361, %v3297, 0.0
      %v3387 = vadd.f32 %v2585, %v3386
      %3388 = vadd.xlane.f32.xlu0 %v3387
      %v3389 = vpop.xlane.xlu0 %3388
      %v3390 = vsel %vm3361, %v3299, 0.0
      %v3391 = vadd.f32 %v2587, %v3390
      %3392 = vadd.xlane.f32.xlu0 %v3391
      %v3393 = vpop.xlane.xlu0 %3392
      %v3394 = vsel %vm3361, %v3302, 0.0
      %v3395 = vadd.f32 %v2590, %v3394
      %3396 = vadd.xlane.f32.xlu0 %v3395
      %v3397 = vpop.xlane.xlu0 %3396
      %v3398 = vsel %vm3361, %v3304, 0.0
      %v3399 = vadd.f32 %v2592, %v3398
      %3400 = vadd.xlane.f32.xlu0 %v3399
      %v3401 = vpop.xlane.xlu0 %3400
      %v3402 = vsel %vm3361, %v3307, 0.0
      %v3403 = vadd.f32 %v2595, %v3402
      %3404 = vadd.xlane.f32.xlu0 %v3403
      %v3405 = vpop.xlane.xlu0 %3404
      %v3406 = vsel %vm3361, %v3309, 0.0
      %v3407 = vadd.f32 %v2597, %v3406
      %3408 = vadd.xlane.f32.xlu0 %v3407
      %v3409 = vpop.xlane.xlu0 %3408
      %v3410 = vsel %vm3361, %v3312, 0.0
      %v3411 = vadd.f32 %v2600, %v3410
      %3412 = vadd.xlane.f32.xlu0 %v3411
      %v3413 = vpop.xlane.xlu0 %3412
      %v3414 = vsel %vm3361, %v3314, 0.0
      %v3415 = vadd.f32 %v2602, %v3414
      %3416 = vadd.xlane.f32.xlu0 %v3415
      %v3417 = vpop.xlane.xlu0 %3416
      %v3418 = vsel %vm3361, %v3317, 0.0
      %v3419 = vadd.f32 %v2605, %v3418
      %3420 = vadd.xlane.f32.xlu0 %v3419
      %v3421 = vpop.xlane.xlu0 %3420
      %v3422 = vsel %vm3361, %v3319, 0.0
      %v3423 = vadd.f32 %v2607, %v3422
      %3424 = vadd.xlane.f32.xlu0 %v3423
      %v3425 = vpop.xlane.xlu0 %3424
      %v3426 = vsel %vm3361, %v3322, 0.0
      %v3427 = vadd.f32 %v2610, %v3426
      %3428 = vadd.xlane.f32.xlu0 %v3427
      %v3429 = vpop.xlane.xlu0 %3428
      %v3430 = vsel %vm3361, %v3324, 0.0
      %v3431 = vadd.f32 %v2612, %v3430
      %3432 = vadd.xlane.f32.xlu0 %v3431
      %v3433 = vpop.xlane.xlu0 %3432
      %v3434 = vsel %vm3361, %v3327, 0.0
      %v3435 = vadd.f32 %v2615, %v3434
      %3436 = vadd.xlane.f32.xlu0 %v3435
      %v3437 = vpop.xlane.xlu0 %3436
      %v3438 = vsel %vm3361, %v3329, 0.0
      %v3439 = vadd.f32 %v2617, %v3438
      %3440 = vadd.xlane.f32.xlu0 %v3439
      %v3441 = vpop.xlane.xlu0 %3440
      %v3442 = vsel %vm3361, %v3332, 0.0
      %v3443 = vadd.f32 %v2620, %v3442
      %3444 = vadd.xlane.f32.xlu0 %v3443
      %v3445 = vpop.xlane.xlu0 %3444
      %v3446 = vsel %vm3361, %v3334, 0.0
      %v3447 = vadd.f32 %v2622, %v3446
      %3448 = vadd.xlane.f32.xlu0 %v3447
      %v3449 = vpop.xlane.xlu0 %3448
      %v3450 = vsel %vm3361, %v3337, 0.0
      %v3451 = vadd.f32 %v2625, %v3450
      %3452 = vadd.xlane.f32.xlu0 %v3451
      %v3453 = vpop.xlane.xlu0 %3452
      %v3454 = vsel %vm3361, %v3339, 0.0
      %v3455 = vadd.f32 %v2627, %v3454
      %3456 = vadd.xlane.f32.xlu0 %v3455
      %v3457 = vpop.xlane.xlu0 %3456
      %v3458 = vsel %vm3361, %v3342, 0.0
      %v3459 = vadd.f32 %v2630, %v3458
      %3460 = vadd.xlane.f32.xlu0 %v3459
      %v3461 = vpop.xlane.xlu0 %3460
      %v3462 = vsel %vm3361, %v3344, 0.0
      %v3463 = vadd.f32 %v2632, %v3462
      %3464 = vadd.xlane.f32.xlu0 %v3463
      %v3465 = vpop.xlane.xlu0 %3464
      %v3466 = vsel %vm3361, %v3347, 0.0
      %v3467 = vadd.f32 %v2635, %v3466
      %3468 = vadd.xlane.f32.xlu0 %v3467
      %v3469 = vpop.xlane.xlu0 %3468
      %v3470 = vsel %vm3361, %v3349, 0.0
      %v3471 = vadd.f32 %v2637, %v3470
      %3472 = vadd.xlane.f32.xlu0 %v3471
      %v3473 = vpop.xlane.xlu0 %3472
      %v3474 = vsel %vm3361, %v3352, 0.0
      %v3475 = vadd.f32 %v2640, %v3474
      %3476 = vadd.xlane.f32.xlu0 %v3475
      %v3477 = vpop.xlane.xlu0 %3476
      %v3478 = vsel %vm3361, %v3354, 0.0
      %v3479 = vadd.f32 %v2642, %v3478
      %3480 = vadd.xlane.f32.xlu0 %v3479
      %v3481 = vpop.xlane.xlu0 %3480
      %v3482 = vsel %vm3361, %v3357, 0.0
      %v3483 = vadd.f32 %v2645, %v3482
      %3484 = vadd.xlane.f32.xlu0 %v3483
      %v3485 = vpop.xlane.xlu0 %3484
      %v3486 = vsel %vm3361, %v3359, 0.0
      %v3487 = vadd.f32 %v2647, %v3486
      %3488 = vadd.xlane.f32.xlu0 %v3487
      %v3489 = vpop.xlane.xlu0 %3488
      %v3490 = vmul.f32 %v3365, 0.0051020407
      %v3491 = vmul.f32 %v3369, 0.0051020407
      %v3492 = vmul.f32 %v3373, 0.0051020407
      %v3493 = vmul.f32 %v3377, 0.0051020407
      %v3494 = vmul.f32 %v3381, 0.0051020407
      %v3495 = vmul.f32 %v3385, 0.0051020407
      %v3496 = vmul.f32 %v3389, 0.0051020407
      %v3497 = vmul.f32 %v3393, 0.0051020407
      %v3498 = vmul.f32 %v3397, 0.0051020407
      %v3499 = vmul.f32 %v3401, 0.0051020407
      %v3500 = vmul.f32 %v3405, 0.0051020407
      %v3501 = vmul.f32 %v3409, 0.0051020407
      %v3502 = vmul.f32 %v3413, 0.0051020407
      %v3503 = vmul.f32 %v3417, 0.0051020407
      %v3504 = vmul.f32 %v3421, 0.0051020407
      %v3505 = vmul.f32 %v3425, 0.0051020407
      %v3506 = vmul.f32 %v3429, 0.0051020407
      %v3507 = vmul.f32 %v3433, 0.0051020407
      %v3508 = vmul.f32 %v3437, 0.0051020407
      %v3509 = vmul.f32 %v3441, 0.0051020407
      %v3510 = vmul.f32 %v3445, 0.0051020407
      %v3511 = vmul.f32 %v3449, 0.0051020407
      %v3512 = vmul.f32 %v3453, 0.0051020407
      %v3513 = vmul.f32 %v3457, 0.0051020407
      %v3514 = vmul.f32 %v3461, 0.0051020407
      %v3515 = vmul.f32 %v3465, 0.0051020407
      %v3516 = vmul.f32 %v3469, 0.0051020407
      %v3517 = vmul.f32 %v3473, 0.0051020407
      %v3518 = vmul.f32 %v3477, 0.0051020407
      %v3519 = vmul.f32 %v3481, 0.0051020407
      %v3520 = vmul.f32 %v3485, 0.0051020407
      %v3521 = vmul.f32 %v3489, 0.0051020407
      %v3522 = vmul.f32 %v2570, %v2570
      %v3523 = vmul.f32 %v3282, %v3282
      %v3524 = vmul.f32 %v2572, %v2572
      %v3525 = vmul.f32 %v3284, %v3284
      %v3526 = vmul.f32 %v2575, %v2575
      %v3527 = vmul.f32 %v3287, %v3287
      %v3528 = vmul.f32 %v2577, %v2577
      %v3529 = vmul.f32 %v3289, %v3289
      %v3530 = vmul.f32 %v2580, %v2580
      %v3531 = vmul.f32 %v3292, %v3292
      %v3532 = vmul.f32 %v2582, %v2582
      %v3533 = vmul.f32 %v3294, %v3294
      %v3534 = vmul.f32 %v2585, %v2585
      %v3535 = vmul.f32 %v3297, %v3297
      %v3536 = vmul.f32 %v2587, %v2587
      %v3537 = vmul.f32 %v3299, %v3299
      %v3538 = vmul.f32 %v2590, %v2590
      %v3539 = vmul.f32 %v3302, %v3302
      %v3540 = vmul.f32 %v2592, %v2592
      %v3541 = vmul.f32 %v3304, %v3304
      %v3542 = vmul.f32 %v2595, %v2595
      %v3543 = vmul.f32 %v3307, %v3307
      %v3544 = vmul.f32 %v2597, %v2597
      %v3545 = vmul.f32 %v3309, %v3309
      %v3546 = vmul.f32 %v2600, %v2600
      %v3547 = vmul.f32 %v3312, %v3312
      %v3548 = vmul.f32 %v2602, %v2602
      %v3549 = vmul.f32 %v3314, %v3314
      %v3550 = vmul.f32 %v2605, %v2605
      %v3551 = vmul.f32 %v3317, %v3317
      %v3552 = vmul.f32 %v2607, %v2607
      %v3553 = vmul.f32 %v3319, %v3319
      %v3554 = vmul.f32 %v2610, %v2610
      %v3555 = vmul.f32 %v3322, %v3322
      %v3556 = vmul.f32 %v2612, %v2612
      %v3557 = vmul.f32 %v3324, %v3324
      %v3558 = vmul.f32 %v2615, %v2615
      %v3559 = vmul.f32 %v3327, %v3327
      %v3560 = vmul.f32 %v2617, %v2617
      %v3561 = vmul.f32 %v3329, %v3329
      %v3562 = vmul.f32 %v2620, %v2620
      %v3563 = vmul.f32 %v3332, %v3332
      %v3564 = vmul.f32 %v2622, %v2622
      %v3565 = vmul.f32 %v3334, %v3334
      %v3566 = vmul.f32 %v2625, %v2625
      %v3567 = vmul.f32 %v3337, %v3337
      %v3568 = vmul.f32 %v2627, %v2627
      %v3569 = vmul.f32 %v3339, %v3339
      %v3570 = vmul.f32 %v2630, %v2630
      %v3571 = vmul.f32 %v3342, %v3342
      %v3572 = vmul.f32 %v2632, %v2632
      %v3573 = vmul.f32 %v3344, %v3344
      %v3574 = vmul.f32 %v2635, %v2635
      %v3575 = vmul.f32 %v3347, %v3347
      %v3576 = vmul.f32 %v2637, %v2637
      %v3577 = vmul.f32 %v3349, %v3349
      %v3578 = vmul.f32 %v2640, %v2640
      %v3579 = vmul.f32 %v3352, %v3352
      %v3580 = vmul.f32 %v2642, %v2642
      %v3581 = vmul.f32 %v3354, %v3354
      %v3582 = vmul.f32 %v2645, %v2645
      %v3583 = vmul.f32 %v3357, %v3357
      %v3584 = vmul.f32 %v2647, %v2647
      %v3585 = vmul.f32 %v3359, %v3359
      %v3586 = vsel %vm3361, %v3523, 0.0
      %v3587 = vadd.f32 %v3522, %v3586
      %3588 = vadd.xlane.f32.xlu0 %v3587
      %v3589 = vpop.xlane.xlu0 %3588
      %v3590 = vsel %vm3361, %v3525, 0.0
      %v3591 = vadd.f32 %v3524, %v3590
      %3592 = vadd.xlane.f32.xlu0 %v3591
      %v3593 = vpop.xlane.xlu0 %3592
      %v3594 = vsel %vm3361, %v3527, 0.0
      %v3595 = vadd.f32 %v3526, %v3594
      %3596 = vadd.xlane.f32.xlu0 %v3595
      %v3597 = vpop.xlane.xlu0 %3596
      %v3598 = vsel %vm3361, %v3529, 0.0
      %v3599 = vadd.f32 %v3528, %v3598
      %3600 = vadd.xlane.f32.xlu0 %v3599
      %v3601 = vpop.xlane.xlu0 %3600
      %v3602 = vsel %vm3361, %v3531, 0.0
      %v3603 = vadd.f32 %v3530, %v3602
      %3604 = vadd.xlane.f32.xlu0 %v3603
      %v3605 = vpop.xlane.xlu0 %3604
      %v3606 = vsel %vm3361, %v3533, 0.0
      %v3607 = vadd.f32 %v3532, %v3606
      %3608 = vadd.xlane.f32.xlu0 %v3607
      %v3609 = vpop.xlane.xlu0 %3608
      %v3610 = vsel %vm3361, %v3535, 0.0
      %v3611 = vadd.f32 %v3534, %v3610
      %3612 = vadd.xlane.f32.xlu0 %v3611
      %v3613 = vpop.xlane.xlu0 %3612
      %v3614 = vsel %vm3361, %v3537, 0.0
      %v3615 = vadd.f32 %v3536, %v3614
      %3616 = vadd.xlane.f32.xlu0 %v3615
      %v3617 = vpop.xlane.xlu0 %3616
      %v3618 = vsel %vm3361, %v3539, 0.0
      %v3619 = vadd.f32 %v3538, %v3618
      %3620 = vadd.xlane.f32.xlu0 %v3619
      %v3621 = vpop.xlane.xlu0 %3620
      %v3622 = vsel %vm3361, %v3541, 0.0
      %v3623 = vadd.f32 %v3540, %v3622
      %3624 = vadd.xlane.f32.xlu0 %v3623
      %v3625 = vpop.xlane.xlu0 %3624
      %v3626 = vsel %vm3361, %v3543, 0.0
      %v3627 = vadd.f32 %v3542, %v3626
      %3628 = vadd.xlane.f32.xlu0 %v3627
      %v3629 = vpop.xlane.xlu0 %3628
      %v3630 = vsel %vm3361, %v3545, 0.0
      %v3631 = vadd.f32 %v3544, %v3630
      %3632 = vadd.xlane.f32.xlu0 %v3631
      %v3633 = vpop.xlane.xlu0 %3632
      %v3634 = vsel %vm3361, %v3547, 0.0
      %v3635 = vadd.f32 %v3546, %v3634
      %3636 = vadd.xlane.f32.xlu0 %v3635
      %v3637 = vpop.xlane.xlu0 %3636
      %v3638 = vsel %vm3361, %v3549, 0.0
      %v3639 = vadd.f32 %v3548, %v3638
      %3640 = vadd.xlane.f32.xlu0 %v3639
      %v3641 = vpop.xlane.xlu0 %3640
      %v3642 = vsel %vm3361, %v3551, 0.0
      %v3643 = vadd.f32 %v3550, %v3642
      %3644 = vadd.xlane.f32.xlu0 %v3643
      %v3645 = vpop.xlane.xlu0 %3644
      %v3646 = vsel %vm3361, %v3553, 0.0
      %v3647 = vadd.f32 %v3552, %v3646
      %3648 = vadd.xlane.f32.xlu0 %v3647
      %v3649 = vpop.xlane.xlu0 %3648
      %v3650 = vsel %vm3361, %v3555, 0.0
      %v3651 = vadd.f32 %v3554, %v3650
      %3652 = vadd.xlane.f32.xlu0 %v3651
      %v3653 = vpop.xlane.xlu0 %3652
      %v3654 = vsel %vm3361, %v3557, 0.0
      %v3655 = vadd.f32 %v3556, %v3654
      %3656 = vadd.xlane.f32.xlu0 %v3655
      %v3657 = vpop.xlane.xlu0 %3656
      %v3658 = vsel %vm3361, %v3559, 0.0
      %v3659 = vadd.f32 %v3558, %v3658
      %3660 = vadd.xlane.f32.xlu0 %v3659
      %v3661 = vpop.xlane.xlu0 %3660
      %v3662 = vsel %vm3361, %v3561, 0.0
      %v3663 = vadd.f32 %v3560, %v3662
      %3664 = vadd.xlane.f32.xlu0 %v3663
      %v3665 = vpop.xlane.xlu0 %3664
      %v3666 = vsel %vm3361, %v3563, 0.0
      %v3667 = vadd.f32 %v3562, %v3666
      %3668 = vadd.xlane.f32.xlu0 %v3667
      %v3669 = vpop.xlane.xlu0 %3668
      %v3670 = vsel %vm3361, %v3565, 0.0
      %v3671 = vadd.f32 %v3564, %v3670
      %3672 = vadd.xlane.f32.xlu0 %v3671
      %v3673 = vpop.xlane.xlu0 %3672
      %v3674 = vsel %vm3361, %v3567, 0.0
      %v3675 = vadd.f32 %v3566, %v3674
      %3676 = vadd.xlane.f32.xlu0 %v3675
      %v3677 = vpop.xlane.xlu0 %3676
      %v3678 = vsel %vm3361, %v3569, 0.0
      %v3679 = vadd.f32 %v3568, %v3678
      %3680 = vadd.xlane.f32.xlu0 %v3679
      %v3681 = vpop.xlane.xlu0 %3680
      %v3682 = vsel %vm3361, %v3571, 0.0
      %v3683 = vadd.f32 %v3570, %v3682
      %3684 = vadd.xlane.f32.xlu0 %v3683
      %v3685 = vpop.xlane.xlu0 %3684
      %v3686 = vsel %vm3361, %v3573, 0.0
      %v3687 = vadd.f32 %v3572, %v3686
      %3688 = vadd.xlane.f32.xlu0 %v3687
      %v3689 = vpop.xlane.xlu0 %3688
      %v3690 = vsel %vm3361, %v3575, 0.0
      %v3691 = vadd.f32 %v3574, %v3690
      %3692 = vadd.xlane.f32.xlu0 %v3691
      %v3693 = vpop.xlane.xlu0 %3692
      %v3694 = vsel %vm3361, %v3577, 0.0
      %v3695 = vadd.f32 %v3576, %v3694
      %3696 = vadd.xlane.f32.xlu0 %v3695
      %v3697 = vpop.xlane.xlu0 %3696
      %v3698 = vsel %vm3361, %v3579, 0.0
      %v3699 = vadd.f32 %v3578, %v3698
      %3700 = vadd.xlane.f32.xlu0 %v3699
      %v3701 = vpop.xlane.xlu0 %3700
      %v3702 = vsel %vm3361, %v3581, 0.0
      %v3703 = vadd.f32 %v3580, %v3702
      %3704 = vadd.xlane.f32.xlu0 %v3703
      %v3705 = vpop.xlane.xlu0 %3704
      %v3706 = vsel %vm3361, %v3583, 0.0
      %v3707 = vadd.f32 %v3582, %v3706
      %3708 = vadd.xlane.f32.xlu0 %v3707
      %v3709 = vpop.xlane.xlu0 %3708
      %v3710 = vsel %vm3361, %v3585, 0.0
      %v3711 = vadd.f32 %v3584, %v3710
      %3712 = vadd.xlane.f32.xlu0 %v3711
      %v3713 = vpop.xlane.xlu0 %3712
      %v3714 = vmul.f32 %v3589, 0.0051020407
      %v3715 = vmul.f32 %v3593, 0.0051020407
      %v3716 = vmul.f32 %v3597, 0.0051020407
      %v3717 = vmul.f32 %v3601, 0.0051020407
      %v3718 = vmul.f32 %v3605, 0.0051020407
      %v3719 = vmul.f32 %v3609, 0.0051020407
      %v3720 = vmul.f32 %v3613, 0.0051020407
      %v3721 = vmul.f32 %v3617, 0.0051020407
      %v3722 = vmul.f32 %v3621, 0.0051020407
      %v3723 = vmul.f32 %v3625, 0.0051020407
      %v3724 = vmul.f32 %v3629, 0.0051020407
      %v3725 = vmul.f32 %v3633, 0.0051020407
      %v3726 = vmul.f32 %v3637, 0.0051020407
      %v3727 = vmul.f32 %v3641, 0.0051020407
      %v3728 = vmul.f32 %v3645, 0.0051020407
      %v3729 = vmul.f32 %v3649, 0.0051020407
      %v3730 = vmul.f32 %v3653, 0.0051020407
      %v3731 = vmul.f32 %v3657, 0.0051020407
      %v3732 = vmul.f32 %v3661, 0.0051020407
      %v3733 = vmul.f32 %v3665, 0.0051020407
      %v3734 = vmul.f32 %v3669, 0.0051020407
      %v3735 = vmul.f32 %v3673, 0.0051020407
      %v3736 = vmul.f32 %v3677, 0.0051020407
      %v3737 = vmul.f32 %v3681, 0.0051020407
      %v3738 = vmul.f32 %v3685, 0.0051020407
      %v3739 = vmul.f32 %v3689, 0.0051020407
      %v3740 = vmul.f32 %v3693, 0.0051020407
      %v3741 = vmul.f32 %v3697, 0.0051020407
      %v3742 = vmul.f32 %v3701, 0.0051020407
      %v3743 = vmul.f32 %v3705, 0.0051020407
      %v3744 = vmul.f32 %v3709, 0.0051020407
      %v3745 = vmul.f32 %v3713, 0.0051020407
      %v3746 = vmul.f32 %v3490, %v3490
      %v3747 = vmul.f32 %v3491, %v3491
      %v3748 = vmul.f32 %v3492, %v3492
      %v3749 = vmul.f32 %v3493, %v3493
      %v3750 = vmul.f32 %v3494, %v3494
      %v3751 = vmul.f32 %v3495, %v3495
      %v3752 = vmul.f32 %v3496, %v3496
      %v3753 = vmul.f32 %v3497, %v3497
      %v3754 = vmul.f32 %v3498, %v3498
      %v3755 = vmul.f32 %v3499, %v3499
      %v3756 = vmul.f32 %v3500, %v3500
      %v3757 = vmul.f32 %v3501, %v3501
      %v3758 = vmul.f32 %v3502, %v3502
      %v3759 = vmul.f32 %v3503, %v3503
      %v3760 = vmul.f32 %v3504, %v3504
      %v3761 = vmul.f32 %v3505, %v3505
      %v3762 = vmul.f32 %v3506, %v3506
      %v3763 = vmul.f32 %v3507, %v3507
      %v3764 = vmul.f32 %v3508, %v3508
      %v3765 = vmul.f32 %v3509, %v3509
      %v3766 = vmul.f32 %v3510, %v3510
      %v3767 = vmul.f32 %v3511, %v3511
      %v3768 = vmul.f32 %v3512, %v3512
      %v3769 = vmul.f32 %v3513, %v3513
      %v3770 = vmul.f32 %v3514, %v3514
      %v3771 = vmul.f32 %v3515, %v3515
      %v3772 = vmul.f32 %v3516, %v3516
      %v3773 = vmul.f32 %v3517, %v3517
      %v3774 = vmul.f32 %v3518, %v3518
      %v3775 = vmul.f32 %v3519, %v3519
      %v3776 = vmul.f32 %v3520, %v3520
      %v3777 = vmul.f32 %v3521, %v3521
      %v3778 = vsub.f32 %v3714, %v3746
      %v3779 = vsub.f32 %v3715, %v3747
      %v3780 = vsub.f32 %v3716, %v3748
      %v3781 = vsub.f32 %v3717, %v3749
      %v3782 = vsub.f32 %v3718, %v3750
      %v3783 = vsub.f32 %v3719, %v3751
      %v3784 = vsub.f32 %v3720, %v3752
      %v3785 = vsub.f32 %v3721, %v3753
      %v3786 = vsub.f32 %v3722, %v3754
      %v3787 = vsub.f32 %v3723, %v3755
      %v3788 = vsub.f32 %v3724, %v3756
      %v3789 = vsub.f32 %v3725, %v3757
      %v3790 = vsub.f32 %v3726, %v3758
      %v3791 = vsub.f32 %v3727, %v3759
      %v3792 = vsub.f32 %v3728, %v3760
      %v3793 = vsub.f32 %v3729, %v3761
      %v3794 = vsub.f32 %v3730, %v3762
      %v3795 = vsub.f32 %v3731, %v3763
      %v3796 = vsub.f32 %v3732, %v3764
      %v3797 = vsub.f32 %v3733, %v3765
      %v3798 = vsub.f32 %v3734, %v3766
      %v3799 = vsub.f32 %v3735, %v3767
      %v3800 = vsub.f32 %v3736, %v3768
      %v3801 = vsub.f32 %v3737, %v3769
      %v3802 = vsub.f32 %v3738, %v3770
      %v3803 = vsub.f32 %v3739, %v3771
      %v3804 = vsub.f32 %v3740, %v3772
      %v3805 = vsub.f32 %v3741, %v3773
      %v3806 = vsub.f32 %v3742, %v3774
      %v3807 = vsub.f32 %v3743, %v3775
      %v3808 = vsub.f32 %v3744, %v3776
      %v3809 = vsub.f32 %v3745, %v3777
      %v3810 = vld [vmem:[%s366] sm:$0xff]
      %v3811 = vld [vmem:[%s366 + $0x8] sm:$0xff]
      %v3812 = vld [vmem:[%s366 + $0x10] sm:$0xff]
      %v3813 = vld [vmem:[%s366 + $0x18] sm:$0xff]
      %v3814 = vld [vmem:[%s366 + $0x20] sm:$0xff]
      %v3815 = vld [vmem:[%s366 + $0x28] sm:$0xff]
      %v3816 = vld [vmem:[%s366 + $0x30] sm:$0xff]
      %v3817 = vld [vmem:[%s366 + $0x38] sm:$0xff]
      %v3818 = vld [vmem:[%s366 + $0x40] sm:$0xff]
      %v3819 = vld [vmem:[%s366 + $0x48] sm:$0xff]
      %v3820 = vld [vmem:[%s366 + $0x50] sm:$0xff]
      %v3821 = vld [vmem:[%s366 + $0x58] sm:$0xff]
      %v3822 = vld [vmem:[%s366 + $0x60] sm:$0xff]
      %v3823 = vld [vmem:[%s366 + $0x68] sm:$0xff]
      %v3824 = vld [vmem:[%s366 + $0x70] sm:$0xff]
      %v3825 = vld [vmem:[%s366 + $0x78] sm:$0xff]
      %v3826 = vld [vmem:[%s366 + $0x80] sm:$0xff]
      %v3827 = vld [vmem:[%s366 + $0x88] sm:$0xff]
      %v3828 = vld [vmem:[%s366 + $0x90] sm:$0xff]
      %v3829 = vld [vmem:[%s366 + $0x98] sm:$0xff]
      %v3830 = vld [vmem:[%s366 + $0xa0] sm:$0xff]
      %v3831 = vld [vmem:[%s366 + $0xa8] sm:$0xff]
      %v3832 = vld [vmem:[%s366 + $0xb0] sm:$0xff]
      %v3833 = vld [vmem:[%s366 + $0xb8] sm:$0xff]
      %v3834 = vld [vmem:[%s366 + $0xc0] sm:$0xff]
      %v3835 = vld [vmem:[%s366 + $0xc8] sm:$0xff]
      %v3836 = vld [vmem:[%s366 + $0xd0] sm:$0xff]
      %v3837 = vld [vmem:[%s366 + $0xd8] sm:$0xff]
      %v3838 = vld [vmem:[%s366 + $0xe0] sm:$0xff]
      %v3839 = vld [vmem:[%s366 + $0xe8] sm:$0xff]
      %v3840 = vld [vmem:[%s366 + $0xf0] sm:$0xff]
      %v3841 = vld [vmem:[%s366 + $0xf8] sm:$0xff]
      %v3842 = vadd.f32 %v3778, 1e-05
      %v3843 = vadd.f32 %v3779, 1e-05
      %v3844 = vadd.f32 %v3780, 1e-05
      %v3845 = vadd.f32 %v3781, 1e-05
      %v3846 = vadd.f32 %v3782, 1e-05
      %v3847 = vadd.f32 %v3783, 1e-05
      %v3848 = vadd.f32 %v3784, 1e-05
      %v3849 = vadd.f32 %v3785, 1e-05
      %v3850 = vadd.f32 %v3786, 1e-05
      %v3851 = vadd.f32 %v3787, 1e-05
      %v3852 = vadd.f32 %v3788, 1e-05
      %v3853 = vadd.f32 %v3789, 1e-05
      %v3854 = vadd.f32 %v3790, 1e-05
      %v3855 = vadd.f32 %v3791, 1e-05
      %v3856 = vadd.f32 %v3792, 1e-05
      %v3857 = vadd.f32 %v3793, 1e-05
      %v3858 = vadd.f32 %v3794, 1e-05
      %v3859 = vadd.f32 %v3795, 1e-05
      %v3860 = vadd.f32 %v3796, 1e-05
      %v3861 = vadd.f32 %v3797, 1e-05
      %v3862 = vadd.f32 %v3798, 1e-05
      %v3863 = vadd.f32 %v3799, 1e-05
      %v3864 = vadd.f32 %v3800, 1e-05
      %v3865 = vadd.f32 %v3801, 1e-05
      %v3866 = vadd.f32 %v3802, 1e-05
      %v3867 = vadd.f32 %v3803, 1e-05
      %v3868 = vadd.f32 %v3804, 1e-05
      %v3869 = vadd.f32 %v3805, 1e-05
      %v3870 = vadd.f32 %v3806, 1e-05
      %v3871 = vadd.f32 %v3807, 1e-05
      %v3872 = vadd.f32 %v3808, 1e-05
      %v3873 = vadd.f32 %v3809, 1e-05
      %v3874 = vrsqrt.pop %v3842
      %v3875 = vmul.f32 %v3874, %v3842
      %v3876 = vmul.f32 %v3875, %v3874
      %v3877 = vmul.f32 0.5, %v3876
      %v3878 = vsub.f32 1.5, %v3877
      %v3879 = vmul.f32 %v3874, %v3878
      %vm3880 = vweird.f32 %v3842
      %vm3881 = vweird.f32 %v3874
      %vm3882 = vmor %vm3880, %vm3881
      %v3883 = vsel %vm3882, %v3874, %v3879
      %v3884 = vrsqrt.pop %v3843
      %v3885 = vmul.f32 %v3884, %v3843
      %v3886 = vmul.f32 %v3885, %v3884
      %v3887 = vmul.f32 0.5, %v3886
      %v3888 = vsub.f32 1.5, %v3887
      %v3889 = vmul.f32 %v3884, %v3888
      %vm3890 = vweird.f32 %v3843
      %vm3891 = vweird.f32 %v3884
      %vm3892 = vmor %vm3890, %vm3891
      %v3893 = vsel %vm3892, %v3884, %v3889
      %v3894 = vrsqrt.pop %v3844
      %v3895 = vmul.f32 %v3894, %v3844
      %v3896 = vmul.f32 %v3895, %v3894
      %v3897 = vmul.f32 0.5, %v3896
      %v3898 = vsub.f32 1.5, %v3897
      %v3899 = vmul.f32 %v3894, %v3898
      %vm3900 = vweird.f32 %v3844
      %vm3901 = vweird.f32 %v3894
      %vm3902 = vmor %vm3900, %vm3901
      %v3903 = vsel %vm3902, %v3894, %v3899
      %v3904 = vrsqrt.pop %v3845
      %v3905 = vmul.f32 %v3904, %v3845
      %v3906 = vmul.f32 %v3905, %v3904
      %v3907 = vmul.f32 0.5, %v3906
      %v3908 = vsub.f32 1.5, %v3907
      %v3909 = vmul.f32 %v3904, %v3908
      %vm3910 = vweird.f32 %v3845
      %vm3911 = vweird.f32 %v3904
      %vm3912 = vmor %vm3910, %vm3911
      %v3913 = vsel %vm3912, %v3904, %v3909
      %v3914 = vrsqrt.pop %v3846
      %v3915 = vmul.f32 %v3914, %v3846
      %v3916 = vmul.f32 %v3915, %v3914
      %v3917 = vmul.f32 0.5, %v3916
      %v3918 = vsub.f32 1.5, %v3917
      %v3919 = vmul.f32 %v3914, %v3918
      %vm3920 = vweird.f32 %v3846
      %vm3921 = vweird.f32 %v3914
      %vm3922 = vmor %vm3920, %vm3921
      %v3923 = vsel %vm3922, %v3914, %v3919
      %v3924 = vrsqrt.pop %v3847
      %v3925 = vmul.f32 %v3924, %v3847
      %v3926 = vmul.f32 %v3925, %v3924
      %v3927 = vmul.f32 0.5, %v3926
      %v3928 = vsub.f32 1.5, %v3927
      %v3929 = vmul.f32 %v3924, %v3928
      %vm3930 = vweird.f32 %v3847
      %vm3931 = vweird.f32 %v3924
      %vm3932 = vmor %vm3930, %vm3931
      %v3933 = vsel %vm3932, %v3924, %v3929
      %v3934 = vrsqrt.pop %v3848
      %v3935 = vmul.f32 %v3934, %v3848
      %v3936 = vmul.f32 %v3935, %v3934
      %v3937 = vmul.f32 0.5, %v3936
      %v3938 = vsub.f32 1.5, %v3937
      %v3939 = vmul.f32 %v3934, %v3938
      %vm3940 = vweird.f32 %v3848
      %vm3941 = vweird.f32 %v3934
      %vm3942 = vmor %vm3940, %vm3941
      %v3943 = vsel %vm3942, %v3934, %v3939
      %v3944 = vrsqrt.pop %v3849
      %v3945 = vmul.f32 %v3944, %v3849
      %v3946 = vmul.f32 %v3945, %v3944
      %v3947 = vmul.f32 0.5, %v3946
      %v3948 = vsub.f32 1.5, %v3947
      %v3949 = vmul.f32 %v3944, %v3948
      %vm3950 = vweird.f32 %v3849
      %vm3951 = vweird.f32 %v3944
      %vm3952 = vmor %vm3950, %vm3951
      %v3953 = vsel %vm3952, %v3944, %v3949
      %v3954 = vrsqrt.pop %v3850
      %v3955 = vmul.f32 %v3954, %v3850
      %v3956 = vmul.f32 %v3955, %v3954
      %v3957 = vmul.f32 0.5, %v3956
      %v3958 = vsub.f32 1.5, %v3957
      %v3959 = vmul.f32 %v3954, %v3958
      %vm3960 = vweird.f32 %v3850
      %vm3961 = vweird.f32 %v3954
      %vm3962 = vmor %vm3960, %vm3961
      %v3963 = vsel %vm3962, %v3954, %v3959
      %v3964 = vrsqrt.pop %v3851
      %v3965 = vmul.f32 %v3964, %v3851
      %v3966 = vmul.f32 %v3965, %v3964
      %v3967 = vmul.f32 0.5, %v3966
      %v3968 = vsub.f32 1.5, %v3967
      %v3969 = vmul.f32 %v3964, %v3968
      %vm3970 = vweird.f32 %v3851
      %vm3971 = vweird.f32 %v3964
      %vm3972 = vmor %vm3970, %vm3971
      %v3973 = vsel %vm3972, %v3964, %v3969
      %v3974 = vrsqrt.pop %v3852
      %v3975 = vmul.f32 %v3974, %v3852
      %v3976 = vmul.f32 %v3975, %v3974
      %v3977 = vmul.f32 0.5, %v3976
      %v3978 = vsub.f32 1.5, %v3977
      %v3979 = vmul.f32 %v3974, %v3978
      %vm3980 = vweird.f32 %v3852
      %vm3981 = vweird.f32 %v3974
      %vm3982 = vmor %vm3980, %vm3981
      %v3983 = vsel %vm3982, %v3974, %v3979
      %v3984 = vrsqrt.pop %v3853
      %v3985 = vmul.f32 %v3984, %v3853
      %v3986 = vmul.f32 %v3985, %v3984
      %v3987 = vmul.f32 0.5, %v3986
      %v3988 = vsub.f32 1.5, %v3987
      %v3989 = vmul.f32 %v3984, %v3988
      %vm3990 = vweird.f32 %v3853
      %vm3991 = vweird.f32 %v3984
      %vm3992 = vmor %vm3990, %vm3991
      %v3993 = vsel %vm3992, %v3984, %v3989
      %v3994 = vrsqrt.pop %v3854
      %v3995 = vmul.f32 %v3994, %v3854
      %v3996 = vmul.f32 %v3995, %v3994
      %v3997 = vmul.f32 0.5, %v3996
      %v3998 = vsub.f32 1.5, %v3997
      %v3999 = vmul.f32 %v3994, %v3998
      %vm4000 = vweird.f32 %v3854
      %vm4001 = vweird.f32 %v3994
      %vm4002 = vmor %vm4000, %vm4001
      %v4003 = vsel %vm4002, %v3994, %v3999
      %v4004 = vrsqrt.pop %v3855
      %v4005 = vmul.f32 %v4004, %v3855
      %v4006 = vmul.f32 %v4005, %v4004
      %v4007 = vmul.f32 0.5, %v4006
      %v4008 = vsub.f32 1.5, %v4007
      %v4009 = vmul.f32 %v4004, %v4008
      %vm4010 = vweird.f32 %v3855
      %vm4011 = vweird.f32 %v4004
      %vm4012 = vmor %vm4010, %vm4011
      %v4013 = vsel %vm4012, %v4004, %v4009
      %v4014 = vrsqrt.pop %v3856
      %v4015 = vmul.f32 %v4014, %v3856
      %v4016 = vmul.f32 %v4015, %v4014
      %v4017 = vmul.f32 0.5, %v4016
      %v4018 = vsub.f32 1.5, %v4017
      %v4019 = vmul.f32 %v4014, %v4018
      %vm4020 = vweird.f32 %v3856
      %vm4021 = vweird.f32 %v4014
      %vm4022 = vmor %vm4020, %vm4021
      %v4023 = vsel %vm4022, %v4014, %v4019
      %v4024 = vrsqrt.pop %v3857
      %v4025 = vmul.f32 %v4024, %v3857
      %v4026 = vmul.f32 %v4025, %v4024
      %v4027 = vmul.f32 0.5, %v4026
      %v4028 = vsub.f32 1.5, %v4027
      %v4029 = vmul.f32 %v4024, %v4028
      %vm4030 = vweird.f32 %v3857
      %vm4031 = vweird.f32 %v4024
      %vm4032 = vmor %vm4030, %vm4031
      %v4033 = vsel %vm4032, %v4024, %v4029
      %v4034 = vrsqrt.pop %v3858
      %v4035 = vmul.f32 %v4034, %v3858
      %v4036 = vmul.f32 %v4035, %v4034
      %v4037 = vmul.f32 0.5, %v4036
      %v4038 = vsub.f32 1.5, %v4037
      %v4039 = vmul.f32 %v4034, %v4038
      %vm4040 = vweird.f32 %v3858
      %vm4041 = vweird.f32 %v4034
      %vm4042 = vmor %vm4040, %vm4041
      %v4043 = vsel %vm4042, %v4034, %v4039
      %v4044 = vrsqrt.pop %v3859
      %v4045 = vmul.f32 %v4044, %v3859
      %v4046 = vmul.f32 %v4045, %v4044
      %v4047 = vmul.f32 0.5, %v4046
      %v4048 = vsub.f32 1.5, %v4047
      %v4049 = vmul.f32 %v4044, %v4048
      %vm4050 = vweird.f32 %v3859
      %vm4051 = vweird.f32 %v4044
      %vm4052 = vmor %vm4050, %vm4051
      %v4053 = vsel %vm4052, %v4044, %v4049
      %v4054 = vrsqrt.pop %v3860
      %v4055 = vmul.f32 %v4054, %v3860
      %v4056 = vmul.f32 %v4055, %v4054
      %v4057 = vmul.f32 0.5, %v4056
      %v4058 = vsub.f32 1.5, %v4057
      %v4059 = vmul.f32 %v4054, %v4058
      %vm4060 = vweird.f32 %v3860
      %vm4061 = vweird.f32 %v4054
      %vm4062 = vmor %vm4060, %vm4061
      %v4063 = vsel %vm4062, %v4054, %v4059
      %v4064 = vrsqrt.pop %v3861
      %v4065 = vmul.f32 %v4064, %v3861
      %v4066 = vmul.f32 %v4065, %v4064
      %v4067 = vmul.f32 0.5, %v4066
      %v4068 = vsub.f32 1.5, %v4067
      %v4069 = vmul.f32 %v4064, %v4068
      %vm4070 = vweird.f32 %v3861
      %vm4071 = vweird.f32 %v4064
      %vm4072 = vmor %vm4070, %vm4071
      %v4073 = vsel %vm4072, %v4064, %v4069
      %v4074 = vrsqrt.pop %v3862
      %v4075 = vmul.f32 %v4074, %v3862
      %v4076 = vmul.f32 %v4075, %v4074
      %v4077 = vmul.f32 0.5, %v4076
      %v4078 = vsub.f32 1.5, %v4077
      %v4079 = vmul.f32 %v4074, %v4078
      %vm4080 = vweird.f32 %v3862
      %vm4081 = vweird.f32 %v4074
      %vm4082 = vmor %vm4080, %vm4081
      %v4083 = vsel %vm4082, %v4074, %v4079
      %v4084 = vrsqrt.pop %v3863
      %v4085 = vmul.f32 %v4084, %v3863
      %v4086 = vmul.f32 %v4085, %v4084
      %v4087 = vmul.f32 0.5, %v4086
      %v4088 = vsub.f32 1.5, %v4087
      %v4089 = vmul.f32 %v4084, %v4088
      %vm4090 = vweird.f32 %v3863
      %vm4091 = vweird.f32 %v4084
      %vm4092 = vmor %vm4090, %vm4091
      %v4093 = vsel %vm4092, %v4084, %v4089
      %v4094 = vrsqrt.pop %v3864
      %v4095 = vmul.f32 %v4094, %v3864
      %v4096 = vmul.f32 %v4095, %v4094
      %v4097 = vmul.f32 0.5, %v4096
      %v4098 = vsub.f32 1.5, %v4097
      %v4099 = vmul.f32 %v4094, %v4098
      %vm4100 = vweird.f32 %v3864
      %vm4101 = vweird.f32 %v4094
      %vm4102 = vmor %vm4100, %vm4101
      %v4103 = vsel %vm4102, %v4094, %v4099
      %v4104 = vrsqrt.pop %v3865
      %v4105 = vmul.f32 %v4104, %v3865
      %v4106 = vmul.f32 %v4105, %v4104
      %v4107 = vmul.f32 0.5, %v4106
      %v4108 = vsub.f32 1.5, %v4107
      %v4109 = vmul.f32 %v4104, %v4108
      %vm4110 = vweird.f32 %v3865
      %vm4111 = vweird.f32 %v4104
      %vm4112 = vmor %vm4110, %vm4111
      %v4113 = vsel %vm4112, %v4104, %v4109
      %v4114 = vrsqrt.pop %v3866
      %v4115 = vmul.f32 %v4114, %v3866
      %v4116 = vmul.f32 %v4115, %v4114
      %v4117 = vmul.f32 0.5, %v4116
      %v4118 = vsub.f32 1.5, %v4117
      %v4119 = vmul.f32 %v4114, %v4118
      %vm4120 = vweird.f32 %v3866
      %vm4121 = vweird.f32 %v4114
      %vm4122 = vmor %vm4120, %vm4121
      %v4123 = vsel %vm4122, %v4114, %v4119
      %v4124 = vrsqrt.pop %v3867
      %v4125 = vmul.f32 %v4124, %v3867
      %v4126 = vmul.f32 %v4125, %v4124
      %v4127 = vmul.f32 0.5, %v4126
      %v4128 = vsub.f32 1.5, %v4127
      %v4129 = vmul.f32 %v4124, %v4128
      %vm4130 = vweird.f32 %v3867
      %vm4131 = vweird.f32 %v4124
      %vm4132 = vmor %vm4130, %vm4131
      %v4133 = vsel %vm4132, %v4124, %v4129
      %v4134 = vrsqrt.pop %v3868
      %v4135 = vmul.f32 %v4134, %v3868
      %v4136 = vmul.f32 %v4135, %v4134
      %v4137 = vmul.f32 0.5, %v4136
      %v4138 = vsub.f32 1.5, %v4137
      %v4139 = vmul.f32 %v4134, %v4138
      %vm4140 = vweird.f32 %v3868
      %vm4141 = vweird.f32 %v4134
      %vm4142 = vmor %vm4140, %vm4141
      %v4143 = vsel %vm4142, %v4134, %v4139
      %v4144 = vrsqrt.pop %v3869
      %v4145 = vmul.f32 %v4144, %v3869
      %v4146 = vmul.f32 %v4145, %v4144
      %v4147 = vmul.f32 0.5, %v4146
      %v4148 = vsub.f32 1.5, %v4147
      %v4149 = vmul.f32 %v4144, %v4148
      %vm4150 = vweird.f32 %v3869
      %vm4151 = vweird.f32 %v4144
      %vm4152 = vmor %vm4150, %vm4151
      %v4153 = vsel %vm4152, %v4144, %v4149
      %v4154 = vrsqrt.pop %v3870
      %v4155 = vmul.f32 %v4154, %v3870
      %v4156 = vmul.f32 %v4155, %v4154
      %v4157 = vmul.f32 0.5, %v4156
      %v4158 = vsub.f32 1.5, %v4157
      %v4159 = vmul.f32 %v4154, %v4158
      %vm4160 = vweird.f32 %v3870
      %vm4161 = vweird.f32 %v4154
      %vm4162 = vmor %vm4160, %vm4161
      %v4163 = vsel %vm4162, %v4154, %v4159
      %v4164 = vrsqrt.pop %v3871
      %v4165 = vmul.f32 %v4164, %v3871
      %v4166 = vmul.f32 %v4165, %v4164
      %v4167 = vmul.f32 0.5, %v4166
      %v4168 = vsub.f32 1.5, %v4167
      %v4169 = vmul.f32 %v4164, %v4168
      %vm4170 = vweird.f32 %v3871
      %vm4171 = vweird.f32 %v4164
      %vm4172 = vmor %vm4170, %vm4171
      %v4173 = vsel %vm4172, %v4164, %v4169
      %v4174 = vrsqrt.pop %v3872
      %v4175 = vmul.f32 %v4174, %v3872
      %v4176 = vmul.f32 %v4175, %v4174
      %v4177 = vmul.f32 0.5, %v4176
      %v4178 = vsub.f32 1.5, %v4177
      %v4179 = vmul.f32 %v4174, %v4178
      %vm4180 = vweird.f32 %v3872
      %vm4181 = vweird.f32 %v4174
      %vm4182 = vmor %vm4180, %vm4181
      %v4183 = vsel %vm4182, %v4174, %v4179
      %v4184 = vrsqrt.pop %v3873
      %v4185 = vmul.f32 %v4184, %v3873
      %v4186 = vmul.f32 %v4185, %v4184
      %v4187 = vmul.f32 0.5, %v4186
      %v4188 = vsub.f32 1.5, %v4187
      %v4189 = vmul.f32 %v4184, %v4188
      %vm4190 = vweird.f32 %v3873
      %vm4191 = vweird.f32 %v4184
      %vm4192 = vmor %vm4190, %vm4191
      %v4193 = vsel %vm4192, %v4184, %v4189
      %v4194 = vmul.f32 %v3810, %v3883
      %v4195 = vmul.f32 %v3811, %v3893
      %v4196 = vmul.f32 %v3812, %v3903
      %v4197 = vmul.f32 %v3813, %v3913
      %v4198 = vmul.f32 %v3814, %v3923
      %v4199 = vmul.f32 %v3815, %v3933
      %v4200 = vmul.f32 %v3816, %v3943
      %v4201 = vmul.f32 %v3817, %v3953
      %v4202 = vmul.f32 %v3818, %v3963
      %v4203 = vmul.f32 %v3819, %v3973
      %v4204 = vmul.f32 %v3820, %v3983
      %v4205 = vmul.f32 %v3821, %v3993
      %v4206 = vmul.f32 %v3822, %v4003
      %v4207 = vmul.f32 %v3823, %v4013
      %v4208 = vmul.f32 %v3824, %v4023
      %v4209 = vmul.f32 %v3825, %v4033
      %v4210 = vmul.f32 %v3826, %v4043
      %v4211 = vmul.f32 %v3827, %v4053
      %v4212 = vmul.f32 %v3828, %v4063
      %v4213 = vmul.f32 %v3829, %v4073
      %v4214 = vmul.f32 %v3830, %v4083
      %v4215 = vmul.f32 %v3831, %v4093
      %v4216 = vmul.f32 %v3832, %v4103
      %v4217 = vmul.f32 %v3833, %v4113
      %v4218 = vmul.f32 %v3834, %v4123
      %v4219 = vmul.f32 %v3835, %v4133
      %v4220 = vmul.f32 %v3836, %v4143
      %v4221 = vmul.f32 %v3837, %v4153
      %v4222 = vmul.f32 %v3838, %v4163
      %v4223 = vmul.f32 %v3839, %v4173
      %v4224 = vmul.f32 %v3840, %v4183
      %v4225 = vmul.f32 %v3841, %v4193
      %4227 = vset.pattern.permute.xlu0 0
      %4228 = vperm.xlu0 %4227, %v4194
      %v4229 = vpop.permute.xlu0 %4228
      %4232 = vset.pattern.permute.xlu0 0
      %4233 = vperm.xlu0 %4232, %v4195
      %v4234 = vpop.permute.xlu0 %4233
      %4237 = vset.pattern.permute.xlu0 0
      %4238 = vperm.xlu0 %4237, %v4196
      %v4239 = vpop.permute.xlu0 %4238
      %4242 = vset.pattern.permute.xlu0 0
      %4243 = vperm.xlu0 %4242, %v4197
      %v4244 = vpop.permute.xlu0 %4243
      %4247 = vset.pattern.permute.xlu0 0
      %4248 = vperm.xlu0 %4247, %v4198
      %v4249 = vpop.permute.xlu0 %4248
      %4252 = vset.pattern.permute.xlu0 0
      %4253 = vperm.xlu0 %4252, %v4199
      %v4254 = vpop.permute.xlu0 %4253
      %4257 = vset.pattern.permute.xlu0 0
      %4258 = vperm.xlu0 %4257, %v4200
      %v4259 = vpop.permute.xlu0 %4258
      %4262 = vset.pattern.permute.xlu0 0
      %4263 = vperm.xlu0 %4262, %v4201
      %v4264 = vpop.permute.xlu0 %4263
      %4267 = vset.pattern.permute.xlu0 0
      %4268 = vperm.xlu0 %4267, %v4202
      %v4269 = vpop.permute.xlu0 %4268
      %4272 = vset.pattern.permute.xlu0 0
      %4273 = vperm.xlu0 %4272, %v4203
      %v4274 = vpop.permute.xlu0 %4273
      %4277 = vset.pattern.permute.xlu0 0
      %4278 = vperm.xlu0 %4277, %v4204
      %v4279 = vpop.permute.xlu0 %4278
      %4282 = vset.pattern.permute.xlu0 0
      %4283 = vperm.xlu0 %4282, %v4205
      %v4284 = vpop.permute.xlu0 %4283
      %4287 = vset.pattern.permute.xlu0 0
      %4288 = vperm.xlu0 %4287, %v4206
      %v4289 = vpop.permute.xlu0 %4288
      %4292 = vset.pattern.permute.xlu0 0
      %4293 = vperm.xlu0 %4292, %v4207
      %v4294 = vpop.permute.xlu0 %4293
      %4297 = vset.pattern.permute.xlu0 0
      %4298 = vperm.xlu0 %4297, %v4208
      %v4299 = vpop.permute.xlu0 %4298
      %4302 = vset.pattern.permute.xlu0 0
      %4303 = vperm.xlu0 %4302, %v4209
      %v4304 = vpop.permute.xlu0 %4303
      %4307 = vset.pattern.permute.xlu0 0
      %4308 = vperm.xlu0 %4307, %v4210
      %v4309 = vpop.permute.xlu0 %4308
      %4312 = vset.pattern.permute.xlu0 0
      %4313 = vperm.xlu0 %4312, %v4211
      %v4314 = vpop.permute.xlu0 %4313
      %4317 = vset.pattern.permute.xlu0 0
      %4318 = vperm.xlu0 %4317, %v4212
      %v4319 = vpop.permute.xlu0 %4318
      %4322 = vset.pattern.permute.xlu0 0
      %4323 = vperm.xlu0 %4322, %v4213
      %v4324 = vpop.permute.xlu0 %4323
      %4327 = vset.pattern.permute.xlu0 0
      %4328 = vperm.xlu0 %4327, %v4214
      %v4329 = vpop.permute.xlu0 %4328
      %4332 = vset.pattern.permute.xlu0 0
      %4333 = vperm.xlu0 %4332, %v4215
      %v4334 = vpop.permute.xlu0 %4333
      %4337 = vset.pattern.permute.xlu0 0
      %4338 = vperm.xlu0 %4337, %v4216
      %v4339 = vpop.permute.xlu0 %4338
      %4342 = vset.pattern.permute.xlu0 0
      %4343 = vperm.xlu0 %4342, %v4217
      %v4344 = vpop.permute.xlu0 %4343
      %4347 = vset.pattern.permute.xlu0 0
      %4348 = vperm.xlu0 %4347, %v4218
      %v4349 = vpop.permute.xlu0 %4348
      %4352 = vset.pattern.permute.xlu0 0
      %4353 = vperm.xlu0 %4352, %v4219
      %v4354 = vpop.permute.xlu0 %4353
      %4357 = vset.pattern.permute.xlu0 0
      %4358 = vperm.xlu0 %4357, %v4220
      %v4359 = vpop.permute.xlu0 %4358
      %4362 = vset.pattern.permute.xlu0 0
      %4363 = vperm.xlu0 %4362, %v4221
      %v4364 = vpop.permute.xlu0 %4363
      %4367 = vset.pattern.permute.xlu0 0
      %4368 = vperm.xlu0 %4367, %v4222
      %v4369 = vpop.permute.xlu0 %4368
      %4372 = vset.pattern.permute.xlu0 0
      %4373 = vperm.xlu0 %4372, %v4223
      %v4374 = vpop.permute.xlu0 %4373
      %4377 = vset.pattern.permute.xlu0 0
      %4378 = vperm.xlu0 %4377, %v4224
      %v4379 = vpop.permute.xlu0 %4378
      %4382 = vset.pattern.permute.xlu0 0
      %4383 = vperm.xlu0 %4382, %v4225
      %v4384 = vpop.permute.xlu0 %4383
      %v4386 = vmul.f32 %v2570, %v4229
      %v4387 = vmul.f32 %v3282, %v4229
      %v4388 = vmul.f32 %v2572, %v4234
      %v4389 = vmul.f32 %v3284, %v4234
      %v4390 = vmul.f32 %v2575, %v4239
      %v4391 = vmul.f32 %v3287, %v4239
      %v4392 = vmul.f32 %v2577, %v4244
      %v4393 = vmul.f32 %v3289, %v4244
      %v4394 = vmul.f32 %v2580, %v4249
      %v4395 = vmul.f32 %v3292, %v4249
      %v4396 = vmul.f32 %v2582, %v4254
      %v4397 = vmul.f32 %v3294, %v4254
      %v4398 = vmul.f32 %v2585, %v4259
      %v4399 = vmul.f32 %v3297, %v4259
      %v4400 = vmul.f32 %v2587, %v4264
      %v4401 = vmul.f32 %v3299, %v4264
      %v4402 = vmul.f32 %v2590, %v4269
      %v4403 = vmul.f32 %v3302, %v4269
      %v4404 = vmul.f32 %v2592, %v4274
      %v4405 = vmul.f32 %v3304, %v4274
      %v4406 = vmul.f32 %v2595, %v4279
      %v4407 = vmul.f32 %v3307, %v4279
      %v4408 = vmul.f32 %v2597, %v4284
      %v4409 = vmul.f32 %v3309, %v4284
      %v4410 = vmul.f32 %v2600, %v4289
      %v4411 = vmul.f32 %v3312, %v4289
      %v4412 = vmul.f32 %v2602, %v4294
      %v4413 = vmul.f32 %v3314, %v4294
      %v4414 = vmul.f32 %v2605, %v4299
      %v4415 = vmul.f32 %v3317, %v4299
      %v4416 = vmul.f32 %v2607, %v4304
      %v4417 = vmul.f32 %v3319, %v4304
      %v4418 = vmul.f32 %v2610, %v4309
      %v4419 = vmul.f32 %v3322, %v4309
      %v4420 = vmul.f32 %v2612, %v4314
      %v4421 = vmul.f32 %v3324, %v4314
      %v4422 = vmul.f32 %v2615, %v4319
      %v4423 = vmul.f32 %v3327, %v4319
      %v4424 = vmul.f32 %v2617, %v4324
      %v4425 = vmul.f32 %v3329, %v4324
      %v4426 = vmul.f32 %v2620, %v4329
      %v4427 = vmul.f32 %v3332, %v4329
      %v4428 = vmul.f32 %v2622, %v4334
      %v4429 = vmul.f32 %v3334, %v4334
      %v4430 = vmul.f32 %v2625, %v4339
      %v4431 = vmul.f32 %v3337, %v4339
      %v4432 = vmul.f32 %v2627, %v4344
      %v4433 = vmul.f32 %v3339, %v4344
      %v4434 = vmul.f32 %v2630, %v4349
      %v4435 = vmul.f32 %v3342, %v4349
      %v4436 = vmul.f32 %v2632, %v4354
      %v4437 = vmul.f32 %v3344, %v4354
      %v4438 = vmul.f32 %v2635, %v4359
      %v4439 = vmul.f32 %v3347, %v4359
      %v4440 = vmul.f32 %v2637, %v4364
      %v4441 = vmul.f32 %v3349, %v4364
      %v4442 = vmul.f32 %v2640, %v4369
      %v4443 = vmul.f32 %v3352, %v4369
      %v4444 = vmul.f32 %v2642, %v4374
      %v4445 = vmul.f32 %v3354, %v4374
      %v4446 = vmul.f32 %v2645, %v4379
      %v4447 = vmul.f32 %v3357, %v4379
      %v4448 = vmul.f32 %v2647, %v4384
      %v4449 = vmul.f32 %v3359, %v4384
      %v4450 = vld [vmem:[%s372] sm:$0xff]
      %v4451 = vld [vmem:[%s372 + $0x8] sm:$0xff]
      %v4452 = vld [vmem:[%s372 + $0x10] sm:$0xff]
      %v4453 = vld [vmem:[%s372 + $0x18] sm:$0xff]
      %v4454 = vld [vmem:[%s372 + $0x20] sm:$0xff]
      %v4455 = vld [vmem:[%s372 + $0x28] sm:$0xff]
      %v4456 = vld [vmem:[%s372 + $0x30] sm:$0xff]
      %v4457 = vld [vmem:[%s372 + $0x38] sm:$0xff]
      %v4458 = vld [vmem:[%s372 + $0x40] sm:$0xff]
      %v4459 = vld [vmem:[%s372 + $0x48] sm:$0xff]
      %v4460 = vld [vmem:[%s372 + $0x50] sm:$0xff]
      %v4461 = vld [vmem:[%s372 + $0x58] sm:$0xff]
      %v4462 = vld [vmem:[%s372 + $0x60] sm:$0xff]
      %v4463 = vld [vmem:[%s372 + $0x68] sm:$0xff]
      %v4464 = vld [vmem:[%s372 + $0x70] sm:$0xff]
      %v4465 = vld [vmem:[%s372 + $0x78] sm:$0xff]
      %v4466 = vld [vmem:[%s372 + $0x80] sm:$0xff]
      %v4467 = vld [vmem:[%s372 + $0x88] sm:$0xff]
      %v4468 = vld [vmem:[%s372 + $0x90] sm:$0xff]
      %v4469 = vld [vmem:[%s372 + $0x98] sm:$0xff]
      %v4470 = vld [vmem:[%s372 + $0xa0] sm:$0xff]
      %v4471 = vld [vmem:[%s372 + $0xa8] sm:$0xff]
      %v4472 = vld [vmem:[%s372 + $0xb0] sm:$0xff]
      %v4473 = vld [vmem:[%s372 + $0xb8] sm:$0xff]
      %v4474 = vld [vmem:[%s372 + $0xc0] sm:$0xff]
      %v4475 = vld [vmem:[%s372 + $0xc8] sm:$0xff]
      %v4476 = vld [vmem:[%s372 + $0xd0] sm:$0xff]
      %v4477 = vld [vmem:[%s372 + $0xd8] sm:$0xff]
      %v4478 = vld [vmem:[%s372 + $0xe0] sm:$0xff]
      %v4479 = vld [vmem:[%s372 + $0xe8] sm:$0xff]
      %v4480 = vld [vmem:[%s372 + $0xf0] sm:$0xff]
      %v4481 = vld [vmem:[%s372 + $0xf8] sm:$0xff]
      %v4482 = vmul.f32 %v3490, %v4194
      %v4483 = vmul.f32 %v3491, %v4195
      %v4484 = vmul.f32 %v3492, %v4196
      %v4485 = vmul.f32 %v3493, %v4197
      %v4486 = vmul.f32 %v3494, %v4198
      %v4487 = vmul.f32 %v3495, %v4199
      %v4488 = vmul.f32 %v3496, %v4200
      %v4489 = vmul.f32 %v3497, %v4201
      %v4490 = vmul.f32 %v3498, %v4202
      %v4491 = vmul.f32 %v3499, %v4203
      %v4492 = vmul.f32 %v3500, %v4204
      %v4493 = vmul.f32 %v3501, %v4205
      %v4494 = vmul.f32 %v3502, %v4206
      %v4495 = vmul.f32 %v3503, %v4207
      %v4496 = vmul.f32 %v3504, %v4208
      %v4497 = vmul.f32 %v3505, %v4209
      %v4498 = vmul.f32 %v3506, %v4210
      %v4499 = vmul.f32 %v3507, %v4211
      %v4500 = vmul.f32 %v3508, %v4212
      %v4501 = vmul.f32 %v3509, %v4213
      %v4502 = vmul.f32 %v3510, %v4214
      %v4503 = vmul.f32 %v3511, %v4215
      %v4504 = vmul.f32 %v3512, %v4216
      %v4505 = vmul.f32 %v3513, %v4217
      %v4506 = vmul.f32 %v3514, %v4218
      %v4507 = vmul.f32 %v3515, %v4219
      %v4508 = vmul.f32 %v3516, %v4220
      %v4509 = vmul.f32 %v3517, %v4221
      %v4510 = vmul.f32 %v3518, %v4222
      %v4511 = vmul.f32 %v3519, %v4223
      %v4512 = vmul.f32 %v3520, %v4224
      %v4513 = vmul.f32 %v3521, %v4225
      %v4514 = vsub.f32 %v4450, %v4482
      %v4515 = vsub.f32 %v4451, %v4483
      %v4516 = vsub.f32 %v4452, %v4484
      %v4517 = vsub.f32 %v4453, %v4485
      %v4518 = vsub.f32 %v4454, %v4486
      %v4519 = vsub.f32 %v4455, %v4487
      %v4520 = vsub.f32 %v4456, %v4488
      %v4521 = vsub.f32 %v4457, %v4489
      %v4522 = vsub.f32 %v4458, %v4490
      %v4523 = vsub.f32 %v4459, %v4491
      %v4524 = vsub.f32 %v4460, %v4492
      %v4525 = vsub.f32 %v4461, %v4493
      %v4526 = vsub.f32 %v4462, %v4494
      %v4527 = vsub.f32 %v4463, %v4495
      %v4528 = vsub.f32 %v4464, %v4496
      %v4529 = vsub.f32 %v4465, %v4497
      %v4530 = vsub.f32 %v4466, %v4498
      %v4531 = vsub.f32 %v4467, %v4499
      %v4532 = vsub.f32 %v4468, %v4500
      %v4533 = vsub.f32 %v4469, %v4501
      %v4534 = vsub.f32 %v4470, %v4502
      %v4535 = vsub.f32 %v4471, %v4503
      %v4536 = vsub.f32 %v4472, %v4504
      %v4537 = vsub.f32 %v4473, %v4505
      %v4538 = vsub.f32 %v4474, %v4506
      %v4539 = vsub.f32 %v4475, %v4507
      %v4540 = vsub.f32 %v4476, %v4508
      %v4541 = vsub.f32 %v4477, %v4509
      %v4542 = vsub.f32 %v4478, %v4510
      %v4543 = vsub.f32 %v4479, %v4511
      %v4544 = vsub.f32 %v4480, %v4512
      %v4545 = vsub.f32 %v4481, %v4513
      %4547 = vset.pattern.permute.xlu0 0
      %4548 = vperm.xlu0 %4547, %v4514
      %v4549 = vpop.permute.xlu0 %4548
      %4552 = vset.pattern.permute.xlu0 0
      %4553 = vperm.xlu0 %4552, %v4515
      %v4554 = vpop.permute.xlu0 %4553
      %4557 = vset.pattern.permute.xlu0 0
      %4558 = vperm.xlu0 %4557, %v4516
      %v4559 = vpop.permute.xlu0 %4558
      %4562 = vset.pattern.permute.xlu0 0
      %4563 = vperm.xlu0 %4562, %v4517
      %v4564 = vpop.permute.xlu0 %4563
      %4567 = vset.pattern.permute.xlu0 0
      %4568 = vperm.xlu0 %4567, %v4518
      %v4569 = vpop.permute.xlu0 %4568
      %4572 = vset.pattern.permute.xlu0 0
      %4573 = vperm.xlu0 %4572, %v4519
      %v4574 = vpop.permute.xlu0 %4573
      %4577 = vset.pattern.permute.xlu0 0
      %4578 = vperm.xlu0 %4577, %v4520
      %v4579 = vpop.permute.xlu0 %4578
      %4582 = vset.pattern.permute.xlu0 0
      %4583 = vperm.xlu0 %4582, %v4521
      %v4584 = vpop.permute.xlu0 %4583
      %4587 = vset.pattern.permute.xlu0 0
      %4588 = vperm.xlu0 %4587, %v4522
      %v4589 = vpop.permute.xlu0 %4588
      %4592 = vset.pattern.permute.xlu0 0
      %4593 = vperm.xlu0 %4592, %v4523
      %v4594 = vpop.permute.xlu0 %4593
      %4597 = vset.pattern.permute.xlu0 0
      %4598 = vperm.xlu0 %4597, %v4524
      %v4599 = vpop.permute.xlu0 %4598
      %4602 = vset.pattern.permute.xlu0 0
      %4603 = vperm.xlu0 %4602, %v4525
      %v4604 = vpop.permute.xlu0 %4603
      %4607 = vset.pattern.permute.xlu0 0
      %4608 = vperm.xlu0 %4607, %v4526
      %v4609 = vpop.permute.xlu0 %4608
      %4612 = vset.pattern.permute.xlu0 0
      %4613 = vperm.xlu0 %4612, %v4527
      %v4614 = vpop.permute.xlu0 %4613
      %4617 = vset.pattern.permute.xlu0 0
      %4618 = vperm.xlu0 %4617, %v4528
      %v4619 = vpop.permute.xlu0 %4618
      %4622 = vset.pattern.permute.xlu0 0
      %4623 = vperm.xlu0 %4622, %v4529
      %v4624 = vpop.permute.xlu0 %4623
      %4627 = vset.pattern.permute.xlu0 0
      %4628 = vperm.xlu0 %4627, %v4530
      %v4629 = vpop.permute.xlu0 %4628
      %4632 = vset.pattern.permute.xlu0 0
      %4633 = vperm.xlu0 %4632, %v4531
      %v4634 = vpop.permute.xlu0 %4633
      %4637 = vset.pattern.permute.xlu0 0
      %4638 = vperm.xlu0 %4637, %v4532
      %v4639 = vpop.permute.xlu0 %4638
      %4642 = vset.pattern.permute.xlu0 0
      %4643 = vperm.xlu0 %4642, %v4533
      %v4644 = vpop.permute.xlu0 %4643
      %4647 = vset.pattern.permute.xlu0 0
      %4648 = vperm.xlu0 %4647, %v4534
      %v4649 = vpop.permute.xlu0 %4648
      %4652 = vset.pattern.permute.xlu0 0
      %4653 = vperm.xlu0 %4652, %v4535
      %v4654 = vpop.permute.xlu0 %4653
      %4657 = vset.pattern.permute.xlu0 0
      %4658 = vperm.xlu0 %4657, %v4536
      %v4659 = vpop.permute.xlu0 %4658
      %4662 = vset.pattern.permute.xlu0 0
      %4663 = vperm.xlu0 %4662, %v4537
      %v4664 = vpop.permute.xlu0 %4663
      %4667 = vset.pattern.permute.xlu0 0
      %4668 = vperm.xlu0 %4667, %v4538
      %v4669 = vpop.permute.xlu0 %4668
      %4672 = vset.pattern.permute.xlu0 0
      %4673 = vperm.xlu0 %4672, %v4539
      %v4674 = vpop.permute.xlu0 %4673
      %4677 = vset.pattern.permute.xlu0 0
      %4678 = vperm.xlu0 %4677, %v4540
      %v4679 = vpop.permute.xlu0 %4678
      %4682 = vset.pattern.permute.xlu0 0
      %4683 = vperm.xlu0 %4682, %v4541
      %v4684 = vpop.permute.xlu0 %4683
      %4687 = vset.pattern.permute.xlu0 0
      %4688 = vperm.xlu0 %4687, %v4542
      %v4689 = vpop.permute.xlu0 %4688
      %4692 = vset.pattern.permute.xlu0 0
      %4693 = vperm.xlu0 %4692, %v4543
      %v4694 = vpop.permute.xlu0 %4693
      %4697 = vset.pattern.permute.xlu0 0
      %4698 = vperm.xlu0 %4697, %v4544
      %v4699 = vpop.permute.xlu0 %4698
      %4702 = vset.pattern.permute.xlu0 0
      %4703 = vperm.xlu0 %4702, %v4545
      %v4704 = vpop.permute.xlu0 %4703
      %v4706 = vadd.f32 %v4386, %v4549
      %v4707 = vadd.f32 %v4387, %v4549
      %v4708 = vadd.f32 %v4388, %v4554
      %v4709 = vadd.f32 %v4389, %v4554
      %v4710 = vadd.f32 %v4390, %v4559
      %v4711 = vadd.f32 %v4391, %v4559
      %v4712 = vadd.f32 %v4392, %v4564
      %v4713 = vadd.f32 %v4393, %v4564
      %v4714 = vadd.f32 %v4394, %v4569
      %v4715 = vadd.f32 %v4395, %v4569
      %v4716 = vadd.f32 %v4396, %v4574
      %v4717 = vadd.f32 %v4397, %v4574
      %v4718 = vadd.f32 %v4398, %v4579
      %v4719 = vadd.f32 %v4399, %v4579
      %v4720 = vadd.f32 %v4400, %v4584
      %v4721 = vadd.f32 %v4401, %v4584
      %v4722 = vadd.f32 %v4402, %v4589
      %v4723 = vadd.f32 %v4403, %v4589
      %v4724 = vadd.f32 %v4404, %v4594
      %v4725 = vadd.f32 %v4405, %v4594
      %v4726 = vadd.f32 %v4406, %v4599
      %v4727 = vadd.f32 %v4407, %v4599
      %v4728 = vadd.f32 %v4408, %v4604
      %v4729 = vadd.f32 %v4409, %v4604
      %v4730 = vadd.f32 %v4410, %v4609
      %v4731 = vadd.f32 %v4411, %v4609
      %v4732 = vadd.f32 %v4412, %v4614
      %v4733 = vadd.f32 %v4413, %v4614
      %v4734 = vadd.f32 %v4414, %v4619
      %v4735 = vadd.f32 %v4415, %v4619
      %v4736 = vadd.f32 %v4416, %v4624
      %v4737 = vadd.f32 %v4417, %v4624
      %v4738 = vadd.f32 %v4418, %v4629
      %v4739 = vadd.f32 %v4419, %v4629
      %v4740 = vadd.f32 %v4420, %v4634
      %v4741 = vadd.f32 %v4421, %v4634
      %v4742 = vadd.f32 %v4422, %v4639
      %v4743 = vadd.f32 %v4423, %v4639
      %v4744 = vadd.f32 %v4424, %v4644
      %v4745 = vadd.f32 %v4425, %v4644
      %v4746 = vadd.f32 %v4426, %v4649
      %v4747 = vadd.f32 %v4427, %v4649
      %v4748 = vadd.f32 %v4428, %v4654
      %v4749 = vadd.f32 %v4429, %v4654
      %v4750 = vadd.f32 %v4430, %v4659
      %v4751 = vadd.f32 %v4431, %v4659
      %v4752 = vadd.f32 %v4432, %v4664
      %v4753 = vadd.f32 %v4433, %v4664
      %v4754 = vadd.f32 %v4434, %v4669
      %v4755 = vadd.f32 %v4435, %v4669
      %v4756 = vadd.f32 %v4436, %v4674
      %v4757 = vadd.f32 %v4437, %v4674
      %v4758 = vadd.f32 %v4438, %v4679
      %v4759 = vadd.f32 %v4439, %v4679
      %v4760 = vadd.f32 %v4440, %v4684
      %v4761 = vadd.f32 %v4441, %v4684
      %v4762 = vadd.f32 %v4442, %v4689
      %v4763 = vadd.f32 %v4443, %v4689
      %v4764 = vadd.f32 %v4444, %v4694
      %v4765 = vadd.f32 %v4445, %v4694
      %v4766 = vadd.f32 %v4446, %v4699
      %v4767 = vadd.f32 %v4447, %v4699
      %v4768 = vadd.f32 %v4448, %v4704
      %v4769 = vadd.f32 %v4449, %v4704
      %v4770 = vmax.f32 %v4706, 0.0
      %v4771 = vmax.f32 %v4707, 0.0
      %v4772 = vmax.f32 %v4708, 0.0
      %v4773 = vmax.f32 %v4709, 0.0
      %v4774 = vmax.f32 %v4710, 0.0
      %v4775 = vmax.f32 %v4711, 0.0
      %v4776 = vmax.f32 %v4712, 0.0
      %v4777 = vmax.f32 %v4713, 0.0
      %v4778 = vmax.f32 %v4714, 0.0
      %v4779 = vmax.f32 %v4715, 0.0
      %v4780 = vmax.f32 %v4716, 0.0
      %v4781 = vmax.f32 %v4717, 0.0
      %v4782 = vmax.f32 %v4718, 0.0
      %v4783 = vmax.f32 %v4719, 0.0
      %v4784 = vmax.f32 %v4720, 0.0
      %v4785 = vmax.f32 %v4721, 0.0
      %v4786 = vmax.f32 %v4722, 0.0
      %v4787 = vmax.f32 %v4723, 0.0
      %v4788 = vmax.f32 %v4724, 0.0
      %v4789 = vmax.f32 %v4725, 0.0
      %v4790 = vmax.f32 %v4726, 0.0
      %v4791 = vmax.f32 %v4727, 0.0
      %v4792 = vmax.f32 %v4728, 0.0
      %v4793 = vmax.f32 %v4729, 0.0
      %v4794 = vmax.f32 %v4730, 0.0
      %v4795 = vmax.f32 %v4731, 0.0
      %v4796 = vmax.f32 %v4732, 0.0
      %v4797 = vmax.f32 %v4733, 0.0
      %v4798 = vmax.f32 %v4734, 0.0
      %v4799 = vmax.f32 %v4735, 0.0
      %v4800 = vmax.f32 %v4736, 0.0
      %v4801 = vmax.f32 %v4737, 0.0
      %v4802 = vmax.f32 %v4738, 0.0
      %v4803 = vmax.f32 %v4739, 0.0
      %v4804 = vmax.f32 %v4740, 0.0
      %v4805 = vmax.f32 %v4741, 0.0
      %v4806 = vmax.f32 %v4742, 0.0
      %v4807 = vmax.f32 %v4743, 0.0
      %v4808 = vmax.f32 %v4744, 0.0
      %v4809 = vmax.f32 %v4745, 0.0
      %v4810 = vmax.f32 %v4746, 0.0
      %v4811 = vmax.f32 %v4747, 0.0
      %v4812 = vmax.f32 %v4748, 0.0
      %v4813 = vmax.f32 %v4749, 0.0
      %v4814 = vmax.f32 %v4750, 0.0
      %v4815 = vmax.f32 %v4751, 0.0
      %v4816 = vmax.f32 %v4752, 0.0
      %v4817 = vmax.f32 %v4753, 0.0
      %v4818 = vmax.f32 %v4754, 0.0
      %v4819 = vmax.f32 %v4755, 0.0
      %v4820 = vmax.f32 %v4756, 0.0
      %v4821 = vmax.f32 %v4757, 0.0
      %v4822 = vmax.f32 %v4758, 0.0
      %v4823 = vmax.f32 %v4759, 0.0
      %v4824 = vmax.f32 %v4760, 0.0
      %v4825 = vmax.f32 %v4761, 0.0
      %v4826 = vmax.f32 %v4762, 0.0
      %v4827 = vmax.f32 %v4763, 0.0
      %v4828 = vmax.f32 %v4764, 0.0
      %v4829 = vmax.f32 %v4765, 0.0
      %v4830 = vmax.f32 %v4766, 0.0
      %v4831 = vmax.f32 %v4767, 0.0
      %v4832 = vmax.f32 %v4768, 0.0
      %v4833 = vmax.f32 %v4769, 0.0
      %4898 = vrot.lane.b32.xlu0 %v4770, 15
      %v4899 = vpop.permute.xlu0 %4898
      %4900 = vrot.lane.b32.xlu0 %v4771, 15
      %v4901 = vpop.permute.xlu0 %4900
      %4902 = vrot.lane.b32.xlu0 %v4772, 15
      %v4903 = vpop.permute.xlu0 %4902
      %4904 = vrot.lane.b32.xlu0 %v4773, 15
      %v4905 = vpop.permute.xlu0 %4904
      %4906 = vrot.lane.b32.xlu0 %v4774, 15
      %v4907 = vpop.permute.xlu0 %4906
      %4908 = vrot.lane.b32.xlu0 %v4775, 15
      %v4909 = vpop.permute.xlu0 %4908
      %4910 = vrot.lane.b32.xlu0 %v4776, 15
      %v4911 = vpop.permute.xlu0 %4910
      %4912 = vrot.lane.b32.xlu0 %v4777, 15
      %v4913 = vpop.permute.xlu0 %4912
      %4914 = vrot.lane.b32.xlu0 %v4778, 15
      %v4915 = vpop.permute.xlu0 %4914
      %4916 = vrot.lane.b32.xlu0 %v4779, 15
      %v4917 = vpop.permute.xlu0 %4916
      %4918 = vrot.lane.b32.xlu0 %v4780, 15
      %v4919 = vpop.permute.xlu0 %4918
      %4920 = vrot.lane.b32.xlu0 %v4781, 15
      %v4921 = vpop.permute.xlu0 %4920
      %4922 = vrot.lane.b32.xlu0 %v4782, 15
      %v4923 = vpop.permute.xlu0 %4922
      %4924 = vrot.lane.b32.xlu0 %v4783, 15
      %v4925 = vpop.permute.xlu0 %4924
      %4926 = vrot.lane.b32.xlu0 %v4784, 15
      %v4927 = vpop.permute.xlu0 %4926
      %4928 = vrot.lane.b32.xlu0 %v4785, 15
      %v4929 = vpop.permute.xlu0 %4928
      %4930 = vrot.lane.b32.xlu0 %v4786, 15
      %v4931 = vpop.permute.xlu0 %4930
      %4932 = vrot.lane.b32.xlu0 %v4787, 15
      %v4933 = vpop.permute.xlu0 %4932
      %4934 = vrot.lane.b32.xlu0 %v4788, 15
      %v4935 = vpop.permute.xlu0 %4934
      %4936 = vrot.lane.b32.xlu0 %v4789, 15
      %v4937 = vpop.permute.xlu0 %4936
      %4938 = vrot.lane.b32.xlu0 %v4790, 15
      %v4939 = vpop.permute.xlu0 %4938
      %4940 = vrot.lane.b32.xlu0 %v4791, 15
      %v4941 = vpop.permute.xlu0 %4940
      %4942 = vrot.lane.b32.xlu0 %v4792, 15
      %v4943 = vpop.permute.xlu0 %4942
      %4944 = vrot.lane.b32.xlu0 %v4793, 15
      %v4945 = vpop.permute.xlu0 %4944
      %4946 = vrot.lane.b32.xlu0 %v4794, 15
      %v4947 = vpop.permute.xlu0 %4946
      %4948 = vrot.lane.b32.xlu0 %v4795, 15
      %v4949 = vpop.permute.xlu0 %4948
      %4950 = vrot.lane.b32.xlu0 %v4796, 15
      %v4951 = vpop.permute.xlu0 %4950
      %4952 = vrot.lane.b32.xlu0 %v4797, 15
      %v4953 = vpop.permute.xlu0 %4952
      %4954 = vrot.lane.b32.xlu0 %v4798, 15
      %v4955 = vpop.permute.xlu0 %4954
      %4956 = vrot.lane.b32.xlu0 %v4799, 15
      %v4957 = vpop.permute.xlu0 %4956
      %4958 = vrot.lane.b32.xlu0 %v4800, 15
      %v4959 = vpop.permute.xlu0 %4958
      %4960 = vrot.lane.b32.xlu0 %v4801, 15
      %v4961 = vpop.permute.xlu0 %4960
      %4962 = vrot.lane.b32.xlu0 %v4802, 15
      %v4963 = vpop.permute.xlu0 %4962
      %4964 = vrot.lane.b32.xlu0 %v4803, 15
      %v4965 = vpop.permute.xlu0 %4964
      %4966 = vrot.lane.b32.xlu0 %v4804, 15
      %v4967 = vpop.permute.xlu0 %4966
      %4968 = vrot.lane.b32.xlu0 %v4805, 15
      %v4969 = vpop.permute.xlu0 %4968
      %4970 = vrot.lane.b32.xlu0 %v4806, 15
      %v4971 = vpop.permute.xlu0 %4970
      %4972 = vrot.lane.b32.xlu0 %v4807, 15
      %v4973 = vpop.permute.xlu0 %4972
      %4974 = vrot.lane.b32.xlu0 %v4808, 15
      %v4975 = vpop.permute.xlu0 %4974
      %4976 = vrot.lane.b32.xlu0 %v4809, 15
      %v4977 = vpop.permute.xlu0 %4976
      %4978 = vrot.lane.b32.xlu0 %v4810, 15
      %v4979 = vpop.permute.xlu0 %4978
      %4980 = vrot.lane.b32.xlu0 %v4811, 15
      %v4981 = vpop.permute.xlu0 %4980
      %4982 = vrot.lane.b32.xlu0 %v4812, 15
      %v4983 = vpop.permute.xlu0 %4982
      %4984 = vrot.lane.b32.xlu0 %v4813, 15
      %v4985 = vpop.permute.xlu0 %4984
      %4986 = vrot.lane.b32.xlu0 %v4814, 15
      %v4987 = vpop.permute.xlu0 %4986
      %4988 = vrot.lane.b32.xlu0 %v4815, 15
      %v4989 = vpop.permute.xlu0 %4988
      %4990 = vrot.lane.b32.xlu0 %v4816, 15
      %v4991 = vpop.permute.xlu0 %4990
      %4992 = vrot.lane.b32.xlu0 %v4817, 15
      %v4993 = vpop.permute.xlu0 %4992
      %4994 = vrot.lane.b32.xlu0 %v4818, 15
      %v4995 = vpop.permute.xlu0 %4994
      %4996 = vrot.lane.b32.xlu0 %v4819, 15
      %v4997 = vpop.permute.xlu0 %4996
      %4998 = vrot.lane.b32.xlu0 %v4820, 15
      %v4999 = vpop.permute.xlu0 %4998
      %5000 = vrot.lane.b32.xlu0 %v4821, 15
      %v5001 = vpop.permute.xlu0 %5000
      %5002 = vrot.lane.b32.xlu0 %v4822, 15
      %v5003 = vpop.permute.xlu0 %5002
      %5004 = vrot.lane.b32.xlu0 %v4823, 15
      %v5005 = vpop.permute.xlu0 %5004
      %5006 = vrot.lane.b32.xlu0 %v4824, 15
      %v5007 = vpop.permute.xlu0 %5006
      %5008 = vrot.lane.b32.xlu0 %v4825, 15
      %v5009 = vpop.permute.xlu0 %5008
      %5010 = vrot.lane.b32.xlu0 %v4826, 15
      %v5011 = vpop.permute.xlu0 %5010
      %5012 = vrot.lane.b32.xlu0 %v4827, 15
      %v5013 = vpop.permute.xlu0 %5012
      %5014 = vrot.lane.b32.xlu0 %v4828, 15
      %v5015 = vpop.permute.xlu0 %5014
      %5016 = vrot.lane.b32.xlu0 %v4829, 15
      %v5017 = vpop.permute.xlu0 %5016
      %5018 = vrot.lane.b32.xlu0 %v4830, 15
      %v5019 = vpop.permute.xlu0 %5018
      %5020 = vrot.lane.b32.xlu0 %v4831, 15
      %v5021 = vpop.permute.xlu0 %5020
      %5022 = vrot.lane.b32.xlu0 %v4832, 15
      %v5023 = vpop.permute.xlu0 %5022
      %5024 = vrot.lane.b32.xlu0 %v4833, 15
      %v5025 = vpop.permute.xlu0 %5024
      %vm5026 = vcmask 121856
      %v5027 = vsel %vm5026, %v4899, %v4901
      %v5028 = vsel %vm5026, %v4903, %v4905
      %v5029 = vsel %vm5026, %v4907, %v4909
      %v5030 = vsel %vm5026, %v4911, %v4913
      %v5031 = vsel %vm5026, %v4915, %v4917
      %v5032 = vsel %vm5026, %v4919, %v4921
      %v5033 = vsel %vm5026, %v4923, %v4925
      %v5034 = vsel %vm5026, %v4927, %v4929
      %v5035 = vsel %vm5026, %v4931, %v4933
      %v5036 = vsel %vm5026, %v4935, %v4937
      %v5037 = vsel %vm5026, %v4939, %v4941
      %v5038 = vsel %vm5026, %v4943, %v4945
      %v5039 = vsel %vm5026, %v4947, %v4949
      %v5040 = vsel %vm5026, %v4951, %v4953
      %v5041 = vsel %vm5026, %v4955, %v4957
      %v5042 = vsel %vm5026, %v4959, %v4961
      %v5043 = vsel %vm5026, %v4963, %v4965
      %v5044 = vsel %vm5026, %v4967, %v4969
      %v5045 = vsel %vm5026, %v4971, %v4973
      %v5046 = vsel %vm5026, %v4975, %v4977
      %v5047 = vsel %vm5026, %v4979, %v4981
      %v5048 = vsel %vm5026, %v4983, %v4985
      %v5049 = vsel %vm5026, %v4987, %v4989
      %v5050 = vsel %vm5026, %v4991, %v4993
      %v5051 = vsel %vm5026, %v4995, %v4997
      %v5052 = vsel %vm5026, %v4999, %v5001
      %v5053 = vsel %vm5026, %v5003, %v5005
      %v5054 = vsel %vm5026, %v5007, %v5009
      %v5055 = vsel %vm5026, %v5011, %v5013
      %v5056 = vsel %vm5026, %v5015, %v5017
      %v5057 = vsel %vm5026, %v5019, %v5021
      %v5058 = vsel %vm5026, %v5023, %v5025
      %v5123 = vsel %vm5026, 0.0, %v4899
      %v5124 = vsel %vm5026, 0.0, %v4903
      %v5125 = vsel %vm5026, 0.0, %v4907
      %v5126 = vsel %vm5026, 0.0, %v4911
      %v5127 = vsel %vm5026, 0.0, %v4915
      %v5128 = vsel %vm5026, 0.0, %v4919
      %v5129 = vsel %vm5026, 0.0, %v4923
      %v5130 = vsel %vm5026, 0.0, %v4927
      %v5131 = vsel %vm5026, 0.0, %v4931
      %v5132 = vsel %vm5026, 0.0, %v4935
      %v5133 = vsel %vm5026, 0.0, %v4939
      %v5134 = vsel %vm5026, 0.0, %v4943
      %v5135 = vsel %vm5026, 0.0, %v4947
      %v5136 = vsel %vm5026, 0.0, %v4951
      %v5137 = vsel %vm5026, 0.0, %v4955
      %v5138 = vsel %vm5026, 0.0, %v4959
      %v5139 = vsel %vm5026, 0.0, %v4963
      %v5140 = vsel %vm5026, 0.0, %v4967
      %v5141 = vsel %vm5026, 0.0, %v4971
      %v5142 = vsel %vm5026, 0.0, %v4975
      %v5143 = vsel %vm5026, 0.0, %v4979
      %v5144 = vsel %vm5026, 0.0, %v4983
      %v5145 = vsel %vm5026, 0.0, %v4987
      %v5146 = vsel %vm5026, 0.0, %v4991
      %v5147 = vsel %vm5026, 0.0, %v4995
      %v5148 = vsel %vm5026, 0.0, %v4999
      %v5149 = vsel %vm5026, 0.0, %v5003
      %v5150 = vsel %vm5026, 0.0, %v5007
      %v5151 = vsel %vm5026, 0.0, %v5011
      %v5152 = vsel %vm5026, 0.0, %v5015
      %v5153 = vsel %vm5026, 0.0, %v5019
      %v5154 = vsel %vm5026, 0.0, %v5023
      %vm5155 = vcmask 678912
      %v5156 = vsel %vm5155, %v5027, 0.0
      %v5157 = vsel %vm5155, %v5028, 0.0
      %v5158 = vsel %vm5155, %v5029, 0.0
      %v5159 = vsel %vm5155, %v5030, 0.0
      %v5160 = vsel %vm5155, %v5031, 0.0
      %v5161 = vsel %vm5155, %v5032, 0.0
      %v5162 = vsel %vm5155, %v5033, 0.0
      %v5163 = vsel %vm5155, %v5034, 0.0
      %v5164 = vsel %vm5155, %v5035, 0.0
      %v5165 = vsel %vm5155, %v5036, 0.0
      %v5166 = vsel %vm5155, %v5037, 0.0
      %v5167 = vsel %vm5155, %v5038, 0.0
      %v5168 = vsel %vm5155, %v5039, 0.0
      %v5169 = vsel %vm5155, %v5040, 0.0
      %v5170 = vsel %vm5155, %v5041, 0.0
      %v5171 = vsel %vm5155, %v5042, 0.0
      %v5172 = vsel %vm5155, %v5043, 0.0
      %v5173 = vsel %vm5155, %v5044, 0.0
      %v5174 = vsel %vm5155, %v5045, 0.0
      %v5175 = vsel %vm5155, %v5046, 0.0
      %v5176 = vsel %vm5155, %v5047, 0.0
      %v5177 = vsel %vm5155, %v5048, 0.0
      %v5178 = vsel %vm5155, %v5049, 0.0
      %v5179 = vsel %vm5155, %v5050, 0.0
      %v5180 = vsel %vm5155, %v5051, 0.0
      %v5181 = vsel %vm5155, %v5052, 0.0
      %v5182 = vsel %vm5155, %v5053, 0.0
      %v5183 = vsel %vm5155, %v5054, 0.0
      %v5184 = vsel %vm5155, %v5055, 0.0
      %v5185 = vsel %vm5155, %v5056, 0.0
      %v5186 = vsel %vm5155, %v5057, 0.0
      %v5187 = vsel %vm5155, %v5058, 0.0
      %v5188 = vlaneseq
      %v5189 = vand.u32 %v5188, 127
      %v5190 = vadd.s32 %v5189, 128
      %vm5191 = vcmp.lt.s32.totalorder %v5189, 0
      %v5192 = vsub.s32 0, %v5189
      %v5193 = vsel %vm5191, %v5192, %v5189
      %v5194 = vand.u32 %v5193, 65535
      %v5195 = vshrl.u32 %v5193, 16
      %v5197 = vmul.u32 %v5194, 9362
      %v5198 = vmul.u32 %v5194, 37449
      %v5199 = vmul.u32 %v5195, 9362
      %v5200 = vmul.u32 %v5195, 37449
      %v5201 = vshll.u32 %v5198, 16
      %v5202 = vshrl.u32 %v5198, 16
      %v5203 = vshll.u32 %v5199, 16
      %v5204 = vshrl.u32 %v5199, 16
      %vm5205 = vc.u32 %v5197, %v5201
      %v5206 = vsel %vm5205, 1, 0
      %v5207 = vadd.s32 %v5197, %v5201
      %v5208 = vadd.s32 %v5200, %v5206
      %vm5209 = vc.u32 %v5207, %v5203
      %v5210 = vsel %vm5209, 1, 0
      %v5211 = vadd.s32 %v5207, %v5203
      %v5212 = vadd.s32 %v5208, %v5210
      %v5213 = vadd.s32 %v5212, %v5202
      %v5214 = vadd.s32 %v5213, %v5204
      %vm5215 = vc.u32 %v5211, 2454267026
      %v5216 = vsel %vm5215, 1, 0
      %v5217 = vadd.s32 %v5214, %v5216
      %v5218 = vshrl.u32 %v5217, 3
      %v5219 = vmul.u32 %v5218, 14
      %v5220 = vsub.s32 %v5193, %v5219
      %v5221 = vsub.s32 0, %v5220
      %v5222 = vsel %vm5191, %v5221, %v5220
      %vm5223 = vcmp.lt.s32.totalorder %v5190, 0
      %v5224 = vsub.s32 0, %v5190
      %v5225 = vsel %vm5223, %v5224, %v5190
      %v5226 = vand.u32 %v5225, 65535
      %v5227 = vshrl.u32 %v5225, 16
      %v5229 = vmul.u32 %v5226, 9362
      %v5230 = vmul.u32 %v5226, 37449
      %v5231 = vmul.u32 %v5227, 9362
      %v5232 = vmul.u32 %v5227, 37449
      %v5233 = vshll.u32 %v5230, 16
      %v5234 = vshrl.u32 %v5230, 16
      %v5235 = vshll.u32 %v5231, 16
      %v5236 = vshrl.u32 %v5231, 16
      %vm5237 = vc.u32 %v5229, %v5233
      %v5238 = vsel %vm5237, 1, 0
      %v5239 = vadd.s32 %v5229, %v5233
      %v5240 = vadd.s32 %v5232, %v5238
      %vm5241 = vc.u32 %v5239, %v5235
      %v5242 = vsel %vm5241, 1, 0
      %v5243 = vadd.s32 %v5239, %v5235
      %v5244 = vadd.s32 %v5240, %v5242
      %v5245 = vadd.s32 %v5244, %v5234
      %v5246 = vadd.s32 %v5245, %v5236
      %vm5247 = vc.u32 %v5243, 2454267026
      %v5248 = vsel %vm5247, 1, 0
      %v5249 = vadd.s32 %v5246, %v5248
      %v5250 = vshrl.u32 %v5249, 3
      %v5251 = vmul.u32 %v5250, 14
      %v5252 = vsub.s32 %v5225, %v5251
      %v5253 = vsub.s32 0, %v5252
      %v5254 = vsel %vm5223, %v5253, %v5252
      %vm5255 = vcmp.ne.s32.totalorder %v5222, 0
      %vm5256 = vcmp.ne.s32.totalorder %v5254, 0
      %vm5257 = vcmp.lt.s32.totalorder %v5222, 0
      %vm5258 = vcmp.lt.s32.totalorder %v5254, 0
      %vm5259 = vmand %vm5257, %vm5255
      %vm5260 = vmand %vm5258, %vm5256
      %v5261 = vadd.s32 %v5222, 14
      %v5262 = vadd.s32 %v5254, 14
      %v5263 = vsel %vm5259, %v5261, %v5222
      %v5264 = vsel %vm5260, %v5262, %v5254
      %vm5265 = vcmp.ge.s32.totalorder %v5263, 1
      %vm5266 = vcmp.ge.s32.totalorder %v5264, 1
      %vm5267 = vcmp.lt.s32.totalorder %v5263, 13
      %vm5268 = vcmp.lt.s32.totalorder %v5264, 13
      %v5269 = vsel %vm5265, 1, 0
      %v5270 = vsel %vm5266, 1, 0
      %vm5271 = vcmp.eq.s32.totalorder %v5269, 1
      %vm5272 = vcmp.eq.s32.totalorder %v5270, 1
      %v5273 = vsel %vm5271, %v5123, 0.0
      %v5274 = vsel %vm5272, %v5156, 0.0
      %v5275 = vsel %vm5271, %v5124, 0.0
      %v5276 = vsel %vm5272, %v5157, 0.0
      %v5277 = vsel %vm5271, %v5125, 0.0
      %v5278 = vsel %vm5272, %v5158, 0.0
      %v5279 = vsel %vm5271, %v5126, 0.0
      %v5280 = vsel %vm5272, %v5159, 0.0
      %v5281 = vsel %vm5271, %v5127, 0.0
      %v5282 = vsel %vm5272, %v5160, 0.0
      %v5283 = vsel %vm5271, %v5128, 0.0
      %v5284 = vsel %vm5272, %v5161, 0.0
      %v5285 = vsel %vm5271, %v5129, 0.0
      %v5286 = vsel %vm5272, %v5162, 0.0
      %v5287 = vsel %vm5271, %v5130, 0.0
      %v5288 = vsel %vm5272, %v5163, 0.0
      %v5289 = vsel %vm5271, %v5131, 0.0
      %v5290 = vsel %vm5272, %v5164, 0.0
      %v5291 = vsel %vm5271, %v5132, 0.0
      %v5292 = vsel %vm5272, %v5165, 0.0
      %v5293 = vsel %vm5271, %v5133, 0.0
      %v5294 = vsel %vm5272, %v5166, 0.0
      %v5295 = vsel %vm5271, %v5134, 0.0
      %v5296 = vsel %vm5272, %v5167, 0.0
      %v5297 = vsel %vm5271, %v5135, 0.0
      %v5298 = vsel %vm5272, %v5168, 0.0
      %v5299 = vsel %vm5271, %v5136, 0.0
      %v5300 = vsel %vm5272, %v5169, 0.0
      %v5301 = vsel %vm5271, %v5137, 0.0
      %v5302 = vsel %vm5272, %v5170, 0.0
      %v5303 = vsel %vm5271, %v5138, 0.0
      %v5304 = vsel %vm5272, %v5171, 0.0
      %v5305 = vsel %vm5271, %v5139, 0.0
      %v5306 = vsel %vm5272, %v5172, 0.0
      %v5307 = vsel %vm5271, %v5140, 0.0
      %v5308 = vsel %vm5272, %v5173, 0.0
      %v5309 = vsel %vm5271, %v5141, 0.0
      %v5310 = vsel %vm5272, %v5174, 0.0
      %v5311 = vsel %vm5271, %v5142, 0.0
      %v5312 = vsel %vm5272, %v5175, 0.0
      %v5313 = vsel %vm5271, %v5143, 0.0
      %v5314 = vsel %vm5272, %v5176, 0.0
      %v5315 = vsel %vm5271, %v5144, 0.0
      %v5316 = vsel %vm5272, %v5177, 0.0
      %v5317 = vsel %vm5271, %v5145, 0.0
      %v5318 = vsel %vm5272, %v5178, 0.0
      %v5319 = vsel %vm5271, %v5146, 0.0
      %v5320 = vsel %vm5272, %v5179, 0.0
      %v5321 = vsel %vm5271, %v5147, 0.0
      %v5322 = vsel %vm5272, %v5180, 0.0
      %v5323 = vsel %vm5271, %v5148, 0.0
      %v5324 = vsel %vm5272, %v5181, 0.0
      %v5325 = vsel %vm5271, %v5149, 0.0
      %v5326 = vsel %vm5272, %v5182, 0.0
      %v5327 = vsel %vm5271, %v5150, 0.0
      %v5328 = vsel %vm5272, %v5183, 0.0
      %v5329 = vsel %vm5271, %v5151, 0.0
      %v5330 = vsel %vm5272, %v5184, 0.0
      %v5331 = vsel %vm5271, %v5152, 0.0
      %v5332 = vsel %vm5272, %v5185, 0.0
      %v5333 = vsel %vm5271, %v5153, 0.0
      %v5334 = vsel %vm5272, %v5186, 0.0
      %v5335 = vsel %vm5271, %v5154, 0.0
      %v5336 = vsel %vm5272, %v5187, 0.0
      %v5337 = vpack.c.bf16 %v5274, %v5273
      %v5338 = vpack.c.bf16 %v5276, %v5275
      %v5339 = vpack.c.bf16 %v5278, %v5277
      %v5340 = vpack.c.bf16 %v5280, %v5279
      %v5341 = vpack.c.bf16 %v5282, %v5281
      %v5342 = vpack.c.bf16 %v5284, %v5283
      %v5343 = vpack.c.bf16 %v5286, %v5285
      %v5344 = vpack.c.bf16 %v5288, %v5287
      %v5345 = vpack.c.bf16 %v5290, %v5289
      %v5346 = vpack.c.bf16 %v5292, %v5291
      %v5347 = vpack.c.bf16 %v5294, %v5293
      %v5348 = vpack.c.bf16 %v5296, %v5295
      %v5349 = vpack.c.bf16 %v5298, %v5297
      %v5350 = vpack.c.bf16 %v5300, %v5299
      %v5351 = vpack.c.bf16 %v5302, %v5301
      %v5352 = vpack.c.bf16 %v5304, %v5303
      %v5353 = vpack.c.bf16 %v5306, %v5305
      %v5354 = vpack.c.bf16 %v5308, %v5307
      %v5355 = vpack.c.bf16 %v5310, %v5309
      %v5356 = vpack.c.bf16 %v5312, %v5311
      %v5357 = vpack.c.bf16 %v5314, %v5313
      %v5358 = vpack.c.bf16 %v5316, %v5315
      %v5359 = vpack.c.bf16 %v5318, %v5317
      %v5360 = vpack.c.bf16 %v5320, %v5319
      %v5361 = vpack.c.bf16 %v5322, %v5321
      %v5362 = vpack.c.bf16 %v5324, %v5323
      %v5363 = vpack.c.bf16 %v5326, %v5325
      %v5364 = vpack.c.bf16 %v5328, %v5327
      %v5365 = vpack.c.bf16 %v5330, %v5329
      %v5366 = vpack.c.bf16 %v5332, %v5331
      %v5367 = vpack.c.bf16 %v5334, %v5333
      %v5368 = vpack.c.bf16 %v5336, %v5335
      %vm5369 = vcmask 1043456
      %vm5370 = vcmask 556036
      %vm5371 = vmor %vm5370, %vm5369
      %5372 = vst.msk [vmem:[#allocation2] sm:$0xff] %vm5371, %v5337
      %5373 = vst.msk [vmem:[#allocation2 + $0x8] sm:$0xff] %vm5371, %v5338
      %5374 = vst.msk [vmem:[#allocation2 + $0x90] sm:$0xff] %vm5371, %v5339
      %5375 = vst.msk [vmem:[#allocation2 + $0x98] sm:$0xff] %vm5371, %v5340
      %5376 = vst.msk [vmem:[#allocation2 + $0x120] sm:$0xff] %vm5371, %v5341
      %5377 = vst.msk [vmem:[#allocation2 + $0x128] sm:$0xff] %vm5371, %v5342
      %5378 = vst.msk [vmem:[#allocation2 + $0x1b0] sm:$0xff] %vm5371, %v5343
      %5379 = vst.msk [vmem:[#allocation2 + $0x1b8] sm:$0xff] %vm5371, %v5344
      %5380 = vst.msk [vmem:[#allocation2 + $0x240] sm:$0xff] %vm5371, %v5345
      %5381 = vst.msk [vmem:[#allocation2 + $0x248] sm:$0xff] %vm5371, %v5346
      %5382 = vst.msk [vmem:[#allocation2 + $0x2d0] sm:$0xff] %vm5371, %v5347
      %5383 = vst.msk [vmem:[#allocation2 + $0x2d8] sm:$0xff] %vm5371, %v5348
      %5384 = vst.msk [vmem:[#allocation2 + $0x360] sm:$0xff] %vm5371, %v5349
      %5385 = vst.msk [vmem:[#allocation2 + $0x368] sm:$0xff] %vm5371, %v5350
      %5386 = vst.msk [vmem:[#allocation2 + $0x3f0] sm:$0xff] %vm5371, %v5351
      %5387 = vst.msk [vmem:[#allocation2 + $0x3f8] sm:$0xff] %vm5371, %v5352
      %5388 = vst.msk [vmem:[#allocation2 + $0x480] sm:$0xff] %vm5371, %v5353
      %5389 = vst.msk [vmem:[#allocation2 + $0x488] sm:$0xff] %vm5371, %v5354
      %5390 = vst.msk [vmem:[#allocation2 + $0x510] sm:$0xff] %vm5371, %v5355
      %5391 = vst.msk [vmem:[#allocation2 + $0x518] sm:$0xff] %vm5371, %v5356
      %5392 = vst.msk [vmem:[#allocation2 + $0x5a0] sm:$0xff] %vm5371, %v5357
      %5393 = vst.msk [vmem:[#allocation2 + $0x5a8] sm:$0xff] %vm5371, %v5358
      %5394 = vst.msk [vmem:[#allocation2 + $0x630] sm:$0xff] %vm5371, %v5359
      %5395 = vst.msk [vmem:[#allocation2 + $0x638] sm:$0xff] %vm5371, %v5360
      %5396 = vst.msk [vmem:[#allocation2 + $0x6c0] sm:$0xff] %vm5371, %v5361
      %5397 = vst.msk [vmem:[#allocation2 + $0x6c8] sm:$0xff] %vm5371, %v5362
      %5398 = vst.msk [vmem:[#allocation2 + $0x750] sm:$0xff] %vm5371, %v5363
      %5399 = vst.msk [vmem:[#allocation2 + $0x758] sm:$0xff] %vm5371, %v5364
      %5400 = vst.msk [vmem:[#allocation2 + $0x7e0] sm:$0xff] %vm5371, %v5365
      %5401 = vst.msk [vmem:[#allocation2 + $0x7e8] sm:$0xff] %vm5371, %v5366
      %5402 = vst.msk [vmem:[#allocation2 + $0x870] sm:$0xff] %vm5371, %v5367
      %5403 = vst.msk [vmem:[#allocation2 + $0x878] sm:$0xff] %vm5371, %v5368
      %v5404 = vpack.c.bf16 %v5156, %v5123
      %v5405 = vpack.c.bf16 %v5157, %v5124
      %v5406 = vpack.c.bf16 %v5158, %v5125
      %v5407 = vpack.c.bf16 %v5159, %v5126
      %v5408 = vpack.c.bf16 %v5160, %v5127
      %v5409 = vpack.c.bf16 %v5161, %v5128
      %v5410 = vpack.c.bf16 %v5162, %v5129
      %v5411 = vpack.c.bf16 %v5163, %v5130
      %v5412 = vpack.c.bf16 %v5164, %v5131
      %v5413 = vpack.c.bf16 %v5165, %v5132
      %v5414 = vpack.c.bf16 %v5166, %v5133
      %v5415 = vpack.c.bf16 %v5167, %v5134
      %v5416 = vpack.c.bf16 %v5168, %v5135
      %v5417 = vpack.c.bf16 %v5169, %v5136
      %v5418 = vpack.c.bf16 %v5170, %v5137
      %v5419 = vpack.c.bf16 %v5171, %v5138
      %v5420 = vpack.c.bf16 %v5172, %v5139
      %v5421 = vpack.c.bf16 %v5173, %v5140
      %v5422 = vpack.c.bf16 %v5174, %v5141
      %v5423 = vpack.c.bf16 %v5175, %v5142
      %v5424 = vpack.c.bf16 %v5176, %v5143
      %v5425 = vpack.c.bf16 %v5177, %v5144
      %v5426 = vpack.c.bf16 %v5178, %v5145
      %v5427 = vpack.c.bf16 %v5179, %v5146
      %v5428 = vpack.c.bf16 %v5180, %v5147
      %v5429 = vpack.c.bf16 %v5181, %v5148
      %v5430 = vpack.c.bf16 %v5182, %v5149
      %v5431 = vpack.c.bf16 %v5183, %v5150
      %v5432 = vpack.c.bf16 %v5184, %v5151
      %v5433 = vpack.c.bf16 %v5185, %v5152
      %v5434 = vpack.c.bf16 %v5186, %v5153
      %v5435 = vpack.c.bf16 %v5187, %v5154
      %5468 = vrot.lane.b32.xlu0 %v5404, 127
      %v5469 = vpop.permute.xlu0 %5468
      %5470 = vrot.lane.b32.xlu0 %v5405, 127
      %v5471 = vpop.permute.xlu0 %5470
      %5472 = vrot.lane.b32.xlu0 %v5406, 127
      %v5473 = vpop.permute.xlu0 %5472
      %5474 = vrot.lane.b32.xlu0 %v5407, 127
      %v5475 = vpop.permute.xlu0 %5474
      %5476 = vrot.lane.b32.xlu0 %v5408, 127
      %v5477 = vpop.permute.xlu0 %5476
      %5478 = vrot.lane.b32.xlu0 %v5409, 127
      %v5479 = vpop.permute.xlu0 %5478
      %5480 = vrot.lane.b32.xlu0 %v5410, 127
      %v5481 = vpop.permute.xlu0 %5480
      %5482 = vrot.lane.b32.xlu0 %v5411, 127
      %v5483 = vpop.permute.xlu0 %5482
      %5484 = vrot.lane.b32.xlu0 %v5412, 127
      %v5485 = vpop.permute.xlu0 %5484
      %5486 = vrot.lane.b32.xlu0 %v5413, 127
      %v5487 = vpop.permute.xlu0 %5486
      %5488 = vrot.lane.b32.xlu0 %v5414, 127
      %v5489 = vpop.permute.xlu0 %5488
      %5490 = vrot.lane.b32.xlu0 %v5415, 127
      %v5491 = vpop.permute.xlu0 %5490
      %5492 = vrot.lane.b32.xlu0 %v5416, 127
      %v5493 = vpop.permute.xlu0 %5492
      %5494 = vrot.lane.b32.xlu0 %v5417, 127
      %v5495 = vpop.permute.xlu0 %5494
      %5496 = vrot.lane.b32.xlu0 %v5418, 127
      %v5497 = vpop.permute.xlu0 %5496
      %5498 = vrot.lane.b32.xlu0 %v5419, 127
      %v5499 = vpop.permute.xlu0 %5498
      %5500 = vrot.lane.b32.xlu0 %v5420, 127
      %v5501 = vpop.permute.xlu0 %5500
      %5502 = vrot.lane.b32.xlu0 %v5421, 127
      %v5503 = vpop.permute.xlu0 %5502
      %5504 = vrot.lane.b32.xlu0 %v5422, 127
      %v5505 = vpop.permute.xlu0 %5504
      %5506 = vrot.lane.b32.xlu0 %v5423, 127
      %v5507 = vpop.permute.xlu0 %5506
      %5508 = vrot.lane.b32.xlu0 %v5424, 127
      %v5509 = vpop.permute.xlu0 %5508
      %5510 = vrot.lane.b32.xlu0 %v5425, 127
      %v5511 = vpop.permute.xlu0 %5510
      %5512 = vrot.lane.b32.xlu0 %v5426, 127
      %v5513 = vpop.permute.xlu0 %5512
      %5514 = vrot.lane.b32.xlu0 %v5427, 127
      %v5515 = vpop.permute.xlu0 %5514
      %5516 = vrot.lane.b32.xlu0 %v5428, 127
      %v5517 = vpop.permute.xlu0 %5516
      %5518 = vrot.lane.b32.xlu0 %v5429, 127
      %v5519 = vpop.permute.xlu0 %5518
      %5520 = vrot.lane.b32.xlu0 %v5430, 127
      %v5521 = vpop.permute.xlu0 %5520
      %5522 = vrot.lane.b32.xlu0 %v5431, 127
      %v5523 = vpop.permute.xlu0 %5522
      %5524 = vrot.lane.b32.xlu0 %v5432, 127
      %v5525 = vpop.permute.xlu0 %5524
      %5526 = vrot.lane.b32.xlu0 %v5433, 127
      %v5527 = vpop.permute.xlu0 %5526
      %5528 = vrot.lane.b32.xlu0 %v5434, 127
      %v5529 = vpop.permute.xlu0 %5528
      %5530 = vrot.lane.b32.xlu0 %v5435, 127
      %v5531 = vpop.permute.xlu0 %5530
      %v5532 = vrot.slane %v5469, 4
      %v5533 = vrot.slane %v5471, 4
      %v5534 = vrot.slane %v5473, 4
      %v5535 = vrot.slane %v5475, 4
      %v5536 = vrot.slane %v5477, 4
      %v5537 = vrot.slane %v5479, 4
      %v5538 = vrot.slane %v5481, 4
      %v5539 = vrot.slane %v5483, 4
      %v5540 = vrot.slane %v5485, 4
      %v5541 = vrot.slane %v5487, 4
      %v5542 = vrot.slane %v5489, 4
      %v5543 = vrot.slane %v5491, 4
      %v5544 = vrot.slane %v5493, 4
      %v5545 = vrot.slane %v5495, 4
      %v5546 = vrot.slane %v5497, 4
      %v5547 = vrot.slane %v5499, 4
      %v5548 = vrot.slane %v5501, 4
      %v5549 = vrot.slane %v5503, 4
      %v5550 = vrot.slane %v5505, 4
      %v5551 = vrot.slane %v5507, 4
      %v5552 = vrot.slane %v5509, 4
      %v5553 = vrot.slane %v5511, 4
      %v5554 = vrot.slane %v5513, 4
      %v5555 = vrot.slane %v5515, 4
      %v5556 = vrot.slane %v5517, 4
      %v5557 = vrot.slane %v5519, 4
      %v5558 = vrot.slane %v5521, 4
      %v5559 = vrot.slane %v5523, 4
      %v5560 = vrot.slane %v5525, 4
      %v5561 = vrot.slane %v5527, 4
      %v5562 = vrot.slane %v5529, 4
      %v5563 = vrot.slane %v5531, 4
      %vm5564 = vcmask 1039360
      %v5565 = vsel %vm5564, %v5469, %v5532
      %v5566 = vsel %vm5564, %v5471, %v5533
      %v5567 = vsel %vm5564, %v5473, %v5534
      %v5568 = vsel %vm5564, %v5475, %v5535
      %v5569 = vsel %vm5564, %v5477, %v5536
      %v5570 = vsel %vm5564, %v5479, %v5537
      %v5571 = vsel %vm5564, %v5481, %v5538
      %v5572 = vsel %vm5564, %v5483, %v5539
      %v5573 = vsel %vm5564, %v5485, %v5540
      %v5574 = vsel %vm5564, %v5487, %v5541
      %v5575 = vsel %vm5564, %v5489, %v5542
      %v5576 = vsel %vm5564, %v5491, %v5543
      %v5577 = vsel %vm5564, %v5493, %v5544
      %v5578 = vsel %vm5564, %v5495, %v5545
      %v5579 = vsel %vm5564, %v5497, %v5546
      %v5580 = vsel %vm5564, %v5499, %v5547
      %v5581 = vsel %vm5564, %v5501, %v5548
      %v5582 = vsel %vm5564, %v5503, %v5549
      %v5583 = vsel %vm5564, %v5505, %v5550
      %v5584 = vsel %vm5564, %v5507, %v5551
      %v5585 = vsel %vm5564, %v5509, %v5552
      %v5586 = vsel %vm5564, %v5511, %v5553
      %v5587 = vsel %vm5564, %v5513, %v5554
      %v5588 = vsel %vm5564, %v5515, %v5555
      %v5589 = vsel %vm5564, %v5517, %v5556
      %v5590 = vsel %vm5564, %v5519, %v5557
      %v5591 = vsel %vm5564, %v5521, %v5558
      %v5592 = vsel %vm5564, %v5523, %v5559
      %v5593 = vsel %vm5564, %v5525, %v5560
      %v5594 = vsel %vm5564, %v5527, %v5561
      %v5595 = vsel %vm5564, %v5529, %v5562
      %v5596 = vsel %vm5564, %v5531, %v5563
      %5629 = vst.msk [vmem:[#allocation2 + $0x10] sm:$0xff] %vm5371, %v5565
      %5630 = vst.msk [vmem:[#allocation2 + $0x18] sm:$0xff] %vm5371, %v5566
      %5631 = vst.msk [vmem:[#allocation2 + $0xa0] sm:$0xff] %vm5371, %v5567
      %5632 = vst.msk [vmem:[#allocation2 + $0xa8] sm:$0xff] %vm5371, %v5568
      %5633 = vst.msk [vmem:[#allocation2 + $0x130] sm:$0xff] %vm5371, %v5569
      %5634 = vst.msk [vmem:[#allocation2 + $0x138] sm:$0xff] %vm5371, %v5570
      %5635 = vst.msk [vmem:[#allocation2 + $0x1c0] sm:$0xff] %vm5371, %v5571
      %5636 = vst.msk [vmem:[#allocation2 + $0x1c8] sm:$0xff] %vm5371, %v5572
      %5637 = vst.msk [vmem:[#allocation2 + $0x250] sm:$0xff] %vm5371, %v5573
      %5638 = vst.msk [vmem:[#allocation2 + $0x258] sm:$0xff] %vm5371, %v5574
      %5639 = vst.msk [vmem:[#allocation2 + $0x2e0] sm:$0xff] %vm5371, %v5575
      %5640 = vst.msk [vmem:[#allocation2 + $0x2e8] sm:$0xff] %vm5371, %v5576
      %5641 = vst.msk [vmem:[#allocation2 + $0x370] sm:$0xff] %vm5371, %v5577
      %5642 = vst.msk [vmem:[#allocation2 + $0x378] sm:$0xff] %vm5371, %v5578
      %5643 = vst.msk [vmem:[#allocation2 + $0x400] sm:$0xff] %vm5371, %v5579
      %5644 = vst.msk [vmem:[#allocation2 + $0x408] sm:$0xff] %vm5371, %v5580
      %5645 = vst.msk [vmem:[#allocation2 + $0x490] sm:$0xff] %vm5371, %v5581
      %5646 = vst.msk [vmem:[#allocation2 + $0x498] sm:$0xff] %vm5371, %v5582
      %5647 = vst.msk [vmem:[#allocation2 + $0x520] sm:$0xff] %vm5371, %v5583
      %5648 = vst.msk [vmem:[#allocation2 + $0x528] sm:$0xff] %vm5371, %v5584
      %5649 = vst.msk [vmem:[#allocation2 + $0x5b0] sm:$0xff] %vm5371, %v5585
      %5650 = vst.msk [vmem:[#allocation2 + $0x5b8] sm:$0xff] %vm5371, %v5586
      %5651 = vst.msk [vmem:[#allocation2 + $0x640] sm:$0xff] %vm5371, %v5587
      %5652 = vst.msk [vmem:[#allocation2 + $0x648] sm:$0xff] %vm5371, %v5588
      %5653 = vst.msk [vmem:[#allocation2 + $0x6d0] sm:$0xff] %vm5371, %v5589
      %5654 = vst.msk [vmem:[#allocation2 + $0x6d8] sm:$0xff] %vm5371, %v5590
      %5655 = vst.msk [vmem:[#allocation2 + $0x760] sm:$0xff] %vm5371, %v5591
      %5656 = vst.msk [vmem:[#allocation2 + $0x768] sm:$0xff] %vm5371, %v5592
      %5657 = vst.msk [vmem:[#allocation2 + $0x7f0] sm:$0xff] %vm5371, %v5593
      %5658 = vst.msk [vmem:[#allocation2 + $0x7f8] sm:$0xff] %vm5371, %v5594
      %5659 = vst.msk [vmem:[#allocation2 + $0x880] sm:$0xff] %vm5371, %v5595
      %5660 = vst.msk [vmem:[#allocation2 + $0x888] sm:$0xff] %vm5371, %v5596
      %v5661 = vsel %vm5267, 1, 0
      %v5662 = vsel %vm5268, 1, 0
      %vm5663 = vcmp.eq.s32.totalorder %v5661, 1
      %vm5664 = vcmp.eq.s32.totalorder %v5662, 1
      %5729 = vrot.lane.b32.xlu0 %v5123, 126
      %v5730 = vpop.permute.xlu0 %5729
      %5731 = vrot.lane.b32.xlu0 %v5156, 126
      %v5732 = vpop.permute.xlu0 %5731
      %5733 = vrot.lane.b32.xlu0 %v5124, 126
      %v5734 = vpop.permute.xlu0 %5733
      %5735 = vrot.lane.b32.xlu0 %v5157, 126
      %v5736 = vpop.permute.xlu0 %5735
      %5737 = vrot.lane.b32.xlu0 %v5125, 126
      %v5738 = vpop.permute.xlu0 %5737
      %5739 = vrot.lane.b32.xlu0 %v5158, 126
      %v5740 = vpop.permute.xlu0 %5739
      %5741 = vrot.lane.b32.xlu0 %v5126, 126
      %v5742 = vpop.permute.xlu0 %5741
      %5743 = vrot.lane.b32.xlu0 %v5159, 126
      %v5744 = vpop.permute.xlu0 %5743
      %5745 = vrot.lane.b32.xlu0 %v5127, 126
      %v5746 = vpop.permute.xlu0 %5745
      %5747 = vrot.lane.b32.xlu0 %v5160, 126
      %v5748 = vpop.permute.xlu0 %5747
      %5749 = vrot.lane.b32.xlu0 %v5128, 126
      %v5750 = vpop.permute.xlu0 %5749
      %5751 = vrot.lane.b32.xlu0 %v5161, 126
      %v5752 = vpop.permute.xlu0 %5751
      %5753 = vrot.lane.b32.xlu0 %v5129, 126
      %v5754 = vpop.permute.xlu0 %5753
      %5755 = vrot.lane.b32.xlu0 %v5162, 126
      %v5756 = vpop.permute.xlu0 %5755
      %5757 = vrot.lane.b32.xlu0 %v5130, 126
      %v5758 = vpop.permute.xlu0 %5757
      %5759 = vrot.lane.b32.xlu0 %v5163, 126
      %v5760 = vpop.permute.xlu0 %5759
      %5761 = vrot.lane.b32.xlu0 %v5131, 126
      %v5762 = vpop.permute.xlu0 %5761
      %5763 = vrot.lane.b32.xlu0 %v5164, 126
      %v5764 = vpop.permute.xlu0 %5763
      %5765 = vrot.lane.b32.xlu0 %v5132, 126
      %v5766 = vpop.permute.xlu0 %5765
      %5767 = vrot.lane.b32.xlu0 %v5165, 126
      %v5768 = vpop.permute.xlu0 %5767
      %5769 = vrot.lane.b32.xlu0 %v5133, 126
      %v5770 = vpop.permute.xlu0 %5769
      %5771 = vrot.lane.b32.xlu0 %v5166, 126
      %v5772 = vpop.permute.xlu0 %5771
      %5773 = vrot.lane.b32.xlu0 %v5134, 126
      %v5774 = vpop.permute.xlu0 %5773
      %5775 = vrot.lane.b32.xlu0 %v5167, 126
      %v5776 = vpop.permute.xlu0 %5775
      %5777 = vrot.lane.b32.xlu0 %v5135, 126
      %v5778 = vpop.permute.xlu0 %5777
      %5779 = vrot.lane.b32.xlu0 %v5168, 126
      %v5780 = vpop.permute.xlu0 %5779
      %5781 = vrot.lane.b32.xlu0 %v5136, 126
      %v5782 = vpop.permute.xlu0 %5781
      %5783 = vrot.lane.b32.xlu0 %v5169, 126
      %v5784 = vpop.permute.xlu0 %5783
      %5785 = vrot.lane.b32.xlu0 %v5137, 126
      %v5786 = vpop.permute.xlu0 %5785
      %5787 = vrot.lane.b32.xlu0 %v5170, 126
      %v5788 = vpop.permute.xlu0 %5787
      %5789 = vrot.lane.b32.xlu0 %v5138, 126
      %v5790 = vpop.permute.xlu0 %5789
      %5791 = vrot.lane.b32.xlu0 %v5171, 126
      %v5792 = vpop.permute.xlu0 %5791
      %5793 = vrot.lane.b32.xlu0 %v5139, 126
      %v5794 = vpop.permute.xlu0 %5793
      %5795 = vrot.lane.b32.xlu0 %v5172, 126
      %v5796 = vpop.permute.xlu0 %5795
      %5797 = vrot.lane.b32.xlu0 %v5140, 126
      %v5798 = vpop.permute.xlu0 %5797
      %5799 = vrot.lane.b32.xlu0 %v5173, 126
      %v5800 = vpop.permute.xlu0 %5799
      %5801 = vrot.lane.b32.xlu0 %v5141, 126
      %v5802 = vpop.permute.xlu0 %5801
      %5803 = vrot.lane.b32.xlu0 %v5174, 126
      %v5804 = vpop.permute.xlu0 %5803
      %5805 = vrot.lane.b32.xlu0 %v5142, 126
      %v5806 = vpop.permute.xlu0 %5805
      %5807 = vrot.lane.b32.xlu0 %v5175, 126
      %v5808 = vpop.permute.xlu0 %5807
      %5809 = vrot.lane.b32.xlu0 %v5143, 126
      %v5810 = vpop.permute.xlu0 %5809
      %5811 = vrot.lane.b32.xlu0 %v5176, 126
      %v5812 = vpop.permute.xlu0 %5811
      %5813 = vrot.lane.b32.xlu0 %v5144, 126
      %v5814 = vpop.permute.xlu0 %5813
      %5815 = vrot.lane.b32.xlu0 %v5177, 126
      %v5816 = vpop.permute.xlu0 %5815
      %5817 = vrot.lane.b32.xlu0 %v5145, 126
      %v5818 = vpop.permute.xlu0 %5817
      %5819 = vrot.lane.b32.xlu0 %v5178, 126
      %v5820 = vpop.permute.xlu0 %5819
      %5821 = vrot.lane.b32.xlu0 %v5146, 126
      %v5822 = vpop.permute.xlu0 %5821
      %5823 = vrot.lane.b32.xlu0 %v5179, 126
      %v5824 = vpop.permute.xlu0 %5823
      %5825 = vrot.lane.b32.xlu0 %v5147, 126
      %v5826 = vpop.permute.xlu0 %5825
      %5827 = vrot.lane.b32.xlu0 %v5180, 126
      %v5828 = vpop.permute.xlu0 %5827
      %5829 = vrot.lane.b32.xlu0 %v5148, 126
      %v5830 = vpop.permute.xlu0 %5829
      %5831 = vrot.lane.b32.xlu0 %v5181, 126
      %v5832 = vpop.permute.xlu0 %5831
      %5833 = vrot.lane.b32.xlu0 %v5149, 126
      %v5834 = vpop.permute.xlu0 %5833
      %5835 = vrot.lane.b32.xlu0 %v5182, 126
      %v5836 = vpop.permute.xlu0 %5835
      %5837 = vrot.lane.b32.xlu0 %v5150, 126
      %v5838 = vpop.permute.xlu0 %5837
      %5839 = vrot.lane.b32.xlu0 %v5183, 126
      %v5840 = vpop.permute.xlu0 %5839
      %5841 = vrot.lane.b32.xlu0 %v5151, 126
      %v5842 = vpop.permute.xlu0 %5841
      %5843 = vrot.lane.b32.xlu0 %v5184, 126
      %v5844 = vpop.permute.xlu0 %5843
      %5845 = vrot.lane.b32.xlu0 %v5152, 126
      %v5846 = vpop.permute.xlu0 %5845
      %5847 = vrot.lane.b32.xlu0 %v5185, 126
      %v5848 = vpop.permute.xlu0 %5847
      %5849 = vrot.lane.b32.xlu0 %v5153, 126
      %v5850 = vpop.permute.xlu0 %5849
      %5851 = vrot.lane.b32.xlu0 %v5186, 126
      %v5852 = vpop.permute.xlu0 %5851
      %5853 = vrot.lane.b32.xlu0 %v5154, 126
      %v5854 = vpop.permute.xlu0 %5853
      %5855 = vrot.lane.b32.xlu0 %v5187, 126
      %v5856 = vpop.permute.xlu0 %5855
      %vm5857 = vcmask 1031168
      %v5858 = vsel %vm5857, %v5730, %v5732
      %v5859 = vsel %vm5857, %v5734, %v5736
      %v5860 = vsel %vm5857, %v5738, %v5740
      %v5861 = vsel %vm5857, %v5742, %v5744
      %v5862 = vsel %vm5857, %v5746, %v5748
      %v5863 = vsel %vm5857, %v5750, %v5752
      %v5864 = vsel %vm5857, %v5754, %v5756
      %v5865 = vsel %vm5857, %v5758, %v5760
      %v5866 = vsel %vm5857, %v5762, %v5764
      %v5867 = vsel %vm5857, %v5766, %v5768
      %v5868 = vsel %vm5857, %v5770, %v5772
      %v5869 = vsel %vm5857, %v5774, %v5776
      %v5870 = vsel %vm5857, %v5778, %v5780
      %v5871 = vsel %vm5857, %v5782, %v5784
      %v5872 = vsel %vm5857, %v5786, %v5788
      %v5873 = vsel %vm5857, %v5790, %v5792
      %v5874 = vsel %vm5857, %v5794, %v5796
      %v5875 = vsel %vm5857, %v5798, %v5800
      %v5876 = vsel %vm5857, %v5802, %v5804
      %v5877 = vsel %vm5857, %v5806, %v5808
      %v5878 = vsel %vm5857, %v5810, %v5812
      %v5879 = vsel %vm5857, %v5814, %v5816
      %v5880 = vsel %vm5857, %v5818, %v5820
      %v5881 = vsel %vm5857, %v5822, %v5824
      %v5882 = vsel %vm5857, %v5826, %v5828
      %v5883 = vsel %vm5857, %v5830, %v5832
      %v5884 = vsel %vm5857, %v5834, %v5836
      %v5885 = vsel %vm5857, %v5838, %v5840
      %v5886 = vsel %vm5857, %v5842, %v5844
      %v5887 = vsel %vm5857, %v5846, %v5848
      %v5888 = vsel %vm5857, %v5850, %v5852
      %v5889 = vsel %vm5857, %v5854, %v5856
      %v5954 = vsel %vm5663, %v5858, 0.0
      %v5955 = vsel %vm5664, %v5732, 0.0
      %v5956 = vsel %vm5663, %v5859, 0.0
      %v5957 = vsel %vm5664, %v5736, 0.0
      %v5958 = vsel %vm5663, %v5860, 0.0
      %v5959 = vsel %vm5664, %v5740, 0.0
      %v5960 = vsel %vm5663, %v5861, 0.0
      %v5961 = vsel %vm5664, %v5744, 0.0
      %v5962 = vsel %vm5663, %v5862, 0.0
      %v5963 = vsel %vm5664, %v5748, 0.0
      %v5964 = vsel %vm5663, %v5863, 0.0
      %v5965 = vsel %vm5664, %v5752, 0.0
      %v5966 = vsel %vm5663, %v5864, 0.0
      %v5967 = vsel %vm5664, %v5756, 0.0
      %v5968 = vsel %vm5663, %v5865, 0.0
      %v5969 = vsel %vm5664, %v5760, 0.0
      %v5970 = vsel %vm5663, %v5866, 0.0
      %v5971 = vsel %vm5664, %v5764, 0.0
      %v5972 = vsel %vm5663, %v5867, 0.0
      %v5973 = vsel %vm5664, %v5768, 0.0
      %v5974 = vsel %vm5663, %v5868, 0.0
      %v5975 = vsel %vm5664, %v5772, 0.0
      %v5976 = vsel %vm5663, %v5869, 0.0
      %v5977 = vsel %vm5664, %v5776, 0.0
      %v5978 = vsel %vm5663, %v5870, 0.0
      %v5979 = vsel %vm5664, %v5780, 0.0
      %v5980 = vsel %vm5663, %v5871, 0.0
      %v5981 = vsel %vm5664, %v5784, 0.0
      %v5982 = vsel %vm5663, %v5872, 0.0
      %v5983 = vsel %vm5664, %v5788, 0.0
      %v5984 = vsel %vm5663, %v5873, 0.0
      %v5985 = vsel %vm5664, %v5792, 0.0
      %v5986 = vsel %vm5663, %v5874, 0.0
      %v5987 = vsel %vm5664, %v5796, 0.0
      %v5988 = vsel %vm5663, %v5875, 0.0
      %v5989 = vsel %vm5664, %v5800, 0.0
      %v5990 = vsel %vm5663, %v5876, 0.0
      %v5991 = vsel %vm5664, %v5804, 0.0
      %v5992 = vsel %vm5663, %v5877, 0.0
      %v5993 = vsel %vm5664, %v5808, 0.0
      %v5994 = vsel %vm5663, %v5878, 0.0
      %v5995 = vsel %vm5664, %v5812, 0.0
      %v5996 = vsel %vm5663, %v5879, 0.0
      %v5997 = vsel %vm5664, %v5816, 0.0
      %v5998 = vsel %vm5663, %v5880, 0.0
      %v5999 = vsel %vm5664, %v5820, 0.0
      %v6000 = vsel %vm5663, %v5881, 0.0
      %v6001 = vsel %vm5664, %v5824, 0.0
      %v6002 = vsel %vm5663, %v5882, 0.0
      %v6003 = vsel %vm5664, %v5828, 0.0
      %v6004 = vsel %vm5663, %v5883, 0.0
      %v6005 = vsel %vm5664, %v5832, 0.0
      %v6006 = vsel %vm5663, %v5884, 0.0
      %v6007 = vsel %vm5664, %v5836, 0.0
      %v6008 = vsel %vm5663, %v5885, 0.0
      %v6009 = vsel %vm5664, %v5840, 0.0
      %v6010 = vsel %vm5663, %v5886, 0.0
      %v6011 = vsel %vm5664, %v5844, 0.0
      %v6012 = vsel %vm5663, %v5887, 0.0
      %v6013 = vsel %vm5664, %v5848, 0.0
      %v6014 = vsel %vm5663, %v5888, 0.0
      %v6015 = vsel %vm5664, %v5852, 0.0
      %v6016 = vsel %vm5663, %v5889, 0.0
      %v6017 = vsel %vm5664, %v5856, 0.0
      %v6018 = vpack.c.bf16 %v5955, %v5954
      %v6019 = vpack.c.bf16 %v5957, %v5956
      %v6020 = vpack.c.bf16 %v5959, %v5958
      %v6021 = vpack.c.bf16 %v5961, %v5960
      %v6022 = vpack.c.bf16 %v5963, %v5962
      %v6023 = vpack.c.bf16 %v5965, %v5964
      %v6024 = vpack.c.bf16 %v5967, %v5966
      %v6025 = vpack.c.bf16 %v5969, %v5968
      %v6026 = vpack.c.bf16 %v5971, %v5970
      %v6027 = vpack.c.bf16 %v5973, %v5972
      %v6028 = vpack.c.bf16 %v5975, %v5974
      %v6029 = vpack.c.bf16 %v5977, %v5976
      %v6030 = vpack.c.bf16 %v5979, %v5978
      %v6031 = vpack.c.bf16 %v5981, %v5980
      %v6032 = vpack.c.bf16 %v5983, %v5982
      %v6033 = vpack.c.bf16 %v5985, %v5984
      %v6034 = vpack.c.bf16 %v5987, %v5986
      %v6035 = vpack.c.bf16 %v5989, %v5988
      %v6036 = vpack.c.bf16 %v5991, %v5990
      %v6037 = vpack.c.bf16 %v5993, %v5992
      %v6038 = vpack.c.bf16 %v5995, %v5994
      %v6039 = vpack.c.bf16 %v5997, %v5996
      %v6040 = vpack.c.bf16 %v5999, %v5998
      %v6041 = vpack.c.bf16 %v6001, %v6000
      %v6042 = vpack.c.bf16 %v6003, %v6002
      %v6043 = vpack.c.bf16 %v6005, %v6004
      %v6044 = vpack.c.bf16 %v6007, %v6006
      %v6045 = vpack.c.bf16 %v6009, %v6008
      %v6046 = vpack.c.bf16 %v6011, %v6010
      %v6047 = vpack.c.bf16 %v6013, %v6012
      %v6048 = vpack.c.bf16 %v6015, %v6014
      %v6049 = vpack.c.bf16 %v6017, %v6016
      %6050 = vst.msk [vmem:[#allocation2 + $0x20] sm:$0xff] %vm5371, %v6018
      %6051 = vst.msk [vmem:[#allocation2 + $0x28] sm:$0xff] %vm5371, %v6019
      %6052 = vst.msk [vmem:[#allocation2 + $0xb0] sm:$0xff] %vm5371, %v6020
      %6053 = vst.msk [vmem:[#allocation2 + $0xb8] sm:$0xff] %vm5371, %v6021
      %6054 = vst.msk [vmem:[#allocation2 + $0x140] sm:$0xff] %vm5371, %v6022
      %6055 = vst.msk [vmem:[#allocation2 + $0x148] sm:$0xff] %vm5371, %v6023
      %6056 = vst.msk [vmem:[#allocation2 + $0x1d0] sm:$0xff] %vm5371, %v6024
      %6057 = vst.msk [vmem:[#allocation2 + $0x1d8] sm:$0xff] %vm5371, %v6025
      %6058 = vst.msk [vmem:[#allocation2 + $0x260] sm:$0xff] %vm5371, %v6026
      %6059 = vst.msk [vmem:[#allocation2 + $0x268] sm:$0xff] %vm5371, %v6027
      %6060 = vst.msk [vmem:[#allocation2 + $0x2f0] sm:$0xff] %vm5371, %v6028
      %6061 = vst.msk [vmem:[#allocation2 + $0x2f8] sm:$0xff] %vm5371, %v6029
      %6062 = vst.msk [vmem:[#allocation2 + $0x380] sm:$0xff] %vm5371, %v6030
      %6063 = vst.msk [vmem:[#allocation2 + $0x388] sm:$0xff] %vm5371, %v6031
      %6064 = vst.msk [vmem:[#allocation2 + $0x410] sm:$0xff] %vm5371, %v6032
      %6065 = vst.msk [vmem:[#allocation2 + $0x418] sm:$0xff] %vm5371, %v6033
      %6066 = vst.msk [vmem:[#allocation2 + $0x4a0] sm:$0xff] %vm5371, %v6034
      %6067 = vst.msk [vmem:[#allocation2 + $0x4a8] sm:$0xff] %vm5371, %v6035
      %6068 = vst.msk [vmem:[#allocation2 + $0x530] sm:$0xff] %vm5371, %v6036
      %6069 = vst.msk [vmem:[#allocation2 + $0x538] sm:$0xff] %vm5371, %v6037
      %6070 = vst.msk [vmem:[#allocation2 + $0x5c0] sm:$0xff] %vm5371, %v6038
      %6071 = vst.msk [vmem:[#allocation2 + $0x5c8] sm:$0xff] %vm5371, %v6039
      %6072 = vst.msk [vmem:[#allocation2 + $0x650] sm:$0xff] %vm5371, %v6040
      %6073 = vst.msk [vmem:[#allocation2 + $0x658] sm:$0xff] %vm5371, %v6041
      %6074 = vst.msk [vmem:[#allocation2 + $0x6e0] sm:$0xff] %vm5371, %v6042
      %6075 = vst.msk [vmem:[#allocation2 + $0x6e8] sm:$0xff] %vm5371, %v6043
      %6076 = vst.msk [vmem:[#allocation2 + $0x770] sm:$0xff] %vm5371, %v6044
      %6077 = vst.msk [vmem:[#allocation2 + $0x778] sm:$0xff] %vm5371, %v6045
      %6078 = vst.msk [vmem:[#allocation2 + $0x800] sm:$0xff] %vm5371, %v6046
      %6079 = vst.msk [vmem:[#allocation2 + $0x808] sm:$0xff] %vm5371, %v6047
      %6080 = vst.msk [vmem:[#allocation2 + $0x890] sm:$0xff] %vm5371, %v6048
      %6081 = vst.msk [vmem:[#allocation2 + $0x898] sm:$0xff] %vm5371, %v6049
      %6082 = vrot.lane.b32.xlu0 %v5123, 114
      %v6083 = vpop.permute.xlu0 %6082
      %6084 = vrot.lane.b32.xlu0 %v5156, 114
      %v6085 = vpop.permute.xlu0 %6084
      %6086 = vrot.lane.b32.xlu0 %v5124, 114
      %v6087 = vpop.permute.xlu0 %6086
      %6088 = vrot.lane.b32.xlu0 %v5157, 114
      %v6089 = vpop.permute.xlu0 %6088
      %6090 = vrot.lane.b32.xlu0 %v5125, 114
      %v6091 = vpop.permute.xlu0 %6090
      %6092 = vrot.lane.b32.xlu0 %v5158, 114
      %v6093 = vpop.permute.xlu0 %6092
      %6094 = vrot.lane.b32.xlu0 %v5126, 114
      %v6095 = vpop.permute.xlu0 %6094
      %6096 = vrot.lane.b32.xlu0 %v5159, 114
      %v6097 = vpop.permute.xlu0 %6096
      %6098 = vrot.lane.b32.xlu0 %v5127, 114
      %v6099 = vpop.permute.xlu0 %6098
      %6100 = vrot.lane.b32.xlu0 %v5160, 114
      %v6101 = vpop.permute.xlu0 %6100
      %6102 = vrot.lane.b32.xlu0 %v5128, 114
      %v6103 = vpop.permute.xlu0 %6102
      %6104 = vrot.lane.b32.xlu0 %v5161, 114
      %v6105 = vpop.permute.xlu0 %6104
      %6106 = vrot.lane.b32.xlu0 %v5129, 114
      %v6107 = vpop.permute.xlu0 %6106
      %6108 = vrot.lane.b32.xlu0 %v5162, 114
      %v6109 = vpop.permute.xlu0 %6108
      %6110 = vrot.lane.b32.xlu0 %v5130, 114
      %v6111 = vpop.permute.xlu0 %6110
      %6112 = vrot.lane.b32.xlu0 %v5163, 114
      %v6113 = vpop.permute.xlu0 %6112
      %6114 = vrot.lane.b32.xlu0 %v5131, 114
      %v6115 = vpop.permute.xlu0 %6114
      %6116 = vrot.lane.b32.xlu0 %v5164, 114
      %v6117 = vpop.permute.xlu0 %6116
      %6118 = vrot.lane.b32.xlu0 %v5132, 114
      %v6119 = vpop.permute.xlu0 %6118
      %6120 = vrot.lane.b32.xlu0 %v5165, 114
      %v6121 = vpop.permute.xlu0 %6120
      %6122 = vrot.lane.b32.xlu0 %v5133, 114
      %v6123 = vpop.permute.xlu0 %6122
      %6124 = vrot.lane.b32.xlu0 %v5166, 114
      %v6125 = vpop.permute.xlu0 %6124
      %6126 = vrot.lane.b32.xlu0 %v5134, 114
      %v6127 = vpop.permute.xlu0 %6126
      %6128 = vrot.lane.b32.xlu0 %v5167, 114
      %v6129 = vpop.permute.xlu0 %6128
      %6130 = vrot.lane.b32.xlu0 %v5135, 114
      %v6131 = vpop.permute.xlu0 %6130
      %6132 = vrot.lane.b32.xlu0 %v5168, 114
      %v6133 = vpop.permute.xlu0 %6132
      %6134 = vrot.lane.b32.xlu0 %v5136, 114
      %v6135 = vpop.permute.xlu0 %6134
      %6136 = vrot.lane.b32.xlu0 %v5169, 114
      %v6137 = vpop.permute.xlu0 %6136
      %6138 = vrot.lane.b32.xlu0 %v5137, 114
      %v6139 = vpop.permute.xlu0 %6138
      %6140 = vrot.lane.b32.xlu0 %v5170, 114
      %v6141 = vpop.permute.xlu0 %6140
      %6142 = vrot.lane.b32.xlu0 %v5138, 114
      %v6143 = vpop.permute.xlu0 %6142
      %6144 = vrot.lane.b32.xlu0 %v5171, 114
      %v6145 = vpop.permute.xlu0 %6144
      %6146 = vrot.lane.b32.xlu0 %v5139, 114
      %v6147 = vpop.permute.xlu0 %6146
      %6148 = vrot.lane.b32.xlu0 %v5172, 114
      %v6149 = vpop.permute.xlu0 %6148
      %6150 = vrot.lane.b32.xlu0 %v5140, 114
      %v6151 = vpop.permute.xlu0 %6150
      %6152 = vrot.lane.b32.xlu0 %v5173, 114
      %v6153 = vpop.permute.xlu0 %6152
      %6154 = vrot.lane.b32.xlu0 %v5141, 114
      %v6155 = vpop.permute.xlu0 %6154
      %6156 = vrot.lane.b32.xlu0 %v5174, 114
      %v6157 = vpop.permute.xlu0 %6156
      %6158 = vrot.lane.b32.xlu0 %v5142, 114
      %v6159 = vpop.permute.xlu0 %6158
      %6160 = vrot.lane.b32.xlu0 %v5175, 114
      %v6161 = vpop.permute.xlu0 %6160
      %6162 = vrot.lane.b32.xlu0 %v5143, 114
      %v6163 = vpop.permute.xlu0 %6162
      %6164 = vrot.lane.b32.xlu0 %v5176, 114
      %v6165 = vpop.permute.xlu0 %6164
      %6166 = vrot.lane.b32.xlu0 %v5144, 114
      %v6167 = vpop.permute.xlu0 %6166
      %6168 = vrot.lane.b32.xlu0 %v5177, 114
      %v6169 = vpop.permute.xlu0 %6168
      %6170 = vrot.lane.b32.xlu0 %v5145, 114
      %v6171 = vpop.permute.xlu0 %6170
      %6172 = vrot.lane.b32.xlu0 %v5178, 114
      %v6173 = vpop.permute.xlu0 %6172
      %6174 = vrot.lane.b32.xlu0 %v5146, 114
      %v6175 = vpop.permute.xlu0 %6174
      %6176 = vrot.lane.b32.xlu0 %v5179, 114
      %v6177 = vpop.permute.xlu0 %6176
      %6178 = vrot.lane.b32.xlu0 %v5147, 114
      %v6179 = vpop.permute.xlu0 %6178
      %6180 = vrot.lane.b32.xlu0 %v5180, 114
      %v6181 = vpop.permute.xlu0 %6180
      %6182 = vrot.lane.b32.xlu0 %v5148, 114
      %v6183 = vpop.permute.xlu0 %6182
      %6184 = vrot.lane.b32.xlu0 %v5181, 114
      %v6185 = vpop.permute.xlu0 %6184
      %6186 = vrot.lane.b32.xlu0 %v5149, 114
      %v6187 = vpop.permute.xlu0 %6186
      %6188 = vrot.lane.b32.xlu0 %v5182, 114
      %v6189 = vpop.permute.xlu0 %6188
      %6190 = vrot.lane.b32.xlu0 %v5150, 114
      %v6191 = vpop.permute.xlu0 %6190
      %6192 = vrot.lane.b32.xlu0 %v5183, 114
      %v6193 = vpop.permute.xlu0 %6192
      %6194 = vrot.lane.b32.xlu0 %v5151, 114
      %v6195 = vpop.permute.xlu0 %6194
      %6196 = vrot.lane.b32.xlu0 %v5184, 114
      %v6197 = vpop.permute.xlu0 %6196
      %6198 = vrot.lane.b32.xlu0 %v5152, 114
      %v6199 = vpop.permute.xlu0 %6198
      %6200 = vrot.lane.b32.xlu0 %v5185, 114
      %v6201 = vpop.permute.xlu0 %6200
      %6202 = vrot.lane.b32.xlu0 %v5153, 114
      %v6203 = vpop.permute.xlu0 %6202
      %6204 = vrot.lane.b32.xlu0 %v5186, 114
      %v6205 = vpop.permute.xlu0 %6204
      %6206 = vrot.lane.b32.xlu0 %v5154, 114
      %v6207 = vpop.permute.xlu0 %6206
      %6208 = vrot.lane.b32.xlu0 %v5187, 114
      %v6209 = vpop.permute.xlu0 %6208
      %vm6210 = vcmask 932864
      %v6211 = vsel %vm6210, %v6083, %v6085
      %v6212 = vsel %vm6210, %v6087, %v6089
      %v6213 = vsel %vm6210, %v6091, %v6093
      %v6214 = vsel %vm6210, %v6095, %v6097
      %v6215 = vsel %vm6210, %v6099, %v6101
      %v6216 = vsel %vm6210, %v6103, %v6105
      %v6217 = vsel %vm6210, %v6107, %v6109
      %v6218 = vsel %vm6210, %v6111, %v6113
      %v6219 = vsel %vm6210, %v6115, %v6117
      %v6220 = vsel %vm6210, %v6119, %v6121
      %v6221 = vsel %vm6210, %v6123, %v6125
      %v6222 = vsel %vm6210, %v6127, %v6129
      %v6223 = vsel %vm6210, %v6131, %v6133
      %v6224 = vsel %vm6210, %v6135, %v6137
      %v6225 = vsel %vm6210, %v6139, %v6141
      %v6226 = vsel %vm6210, %v6143, %v6145
      %v6227 = vsel %vm6210, %v6147, %v6149
      %v6228 = vsel %vm6210, %v6151, %v6153
      %v6229 = vsel %vm6210, %v6155, %v6157
      %v6230 = vsel %vm6210, %v6159, %v6161
      %v6231 = vsel %vm6210, %v6163, %v6165
      %v6232 = vsel %vm6210, %v6167, %v6169
      %v6233 = vsel %vm6210, %v6171, %v6173
      %v6234 = vsel %vm6210, %v6175, %v6177
      %v6235 = vsel %vm6210, %v6179, %v6181
      %v6236 = vsel %vm6210, %v6183, %v6185
      %v6237 = vsel %vm6210, %v6187, %v6189
      %v6238 = vsel %vm6210, %v6191, %v6193
      %v6239 = vsel %vm6210, %v6195, %v6197
      %v6240 = vsel %vm6210, %v6199, %v6201
      %v6241 = vsel %vm6210, %v6203, %v6205
      %v6242 = vsel %vm6210, %v6207, %v6209
      %v6307 = vsel %vm5271, %v6211, 0.0
      %v6308 = vsel %vm5272, %v6085, 0.0
      %v6309 = vsel %vm5271, %v6212, 0.0
      %v6310 = vsel %vm5272, %v6089, 0.0
      %v6311 = vsel %vm5271, %v6213, 0.0
      %v6312 = vsel %vm5272, %v6093, 0.0
      %v6313 = vsel %vm5271, %v6214, 0.0
      %v6314 = vsel %vm5272, %v6097, 0.0
      %v6315 = vsel %vm5271, %v6215, 0.0
      %v6316 = vsel %vm5272, %v6101, 0.0
      %v6317 = vsel %vm5271, %v6216, 0.0
      %v6318 = vsel %vm5272, %v6105, 0.0
      %v6319 = vsel %vm5271, %v6217, 0.0
      %v6320 = vsel %vm5272, %v6109, 0.0
      %v6321 = vsel %vm5271, %v6218, 0.0
      %v6322 = vsel %vm5272, %v6113, 0.0
      %v6323 = vsel %vm5271, %v6219, 0.0
      %v6324 = vsel %vm5272, %v6117, 0.0
      %v6325 = vsel %vm5271, %v6220, 0.0
      %v6326 = vsel %vm5272, %v6121, 0.0
      %v6327 = vsel %vm5271, %v6221, 0.0
      %v6328 = vsel %vm5272, %v6125, 0.0
      %v6329 = vsel %vm5271, %v6222, 0.0
      %v6330 = vsel %vm5272, %v6129, 0.0
      %v6331 = vsel %vm5271, %v6223, 0.0
      %v6332 = vsel %vm5272, %v6133, 0.0
      %v6333 = vsel %vm5271, %v6224, 0.0
      %v6334 = vsel %vm5272, %v6137, 0.0
      %v6335 = vsel %vm5271, %v6225, 0.0
      %v6336 = vsel %vm5272, %v6141, 0.0
      %v6337 = vsel %vm5271, %v6226, 0.0
      %v6338 = vsel %vm5272, %v6145, 0.0
      %v6339 = vsel %vm5271, %v6227, 0.0
      %v6340 = vsel %vm5272, %v6149, 0.0
      %v6341 = vsel %vm5271, %v6228, 0.0
      %v6342 = vsel %vm5272, %v6153, 0.0
      %v6343 = vsel %vm5271, %v6229, 0.0
      %v6344 = vsel %vm5272, %v6157, 0.0
      %v6345 = vsel %vm5271, %v6230, 0.0
      %v6346 = vsel %vm5272, %v6161, 0.0
      %v6347 = vsel %vm5271, %v6231, 0.0
      %v6348 = vsel %vm5272, %v6165, 0.0
      %v6349 = vsel %vm5271, %v6232, 0.0
      %v6350 = vsel %vm5272, %v6169, 0.0
      %v6351 = vsel %vm5271, %v6233, 0.0
      %v6352 = vsel %vm5272, %v6173, 0.0
      %v6353 = vsel %vm5271, %v6234, 0.0
      %v6354 = vsel %vm5272, %v6177, 0.0
      %v6355 = vsel %vm5271, %v6235, 0.0
      %v6356 = vsel %vm5272, %v6181, 0.0
      %v6357 = vsel %vm5271, %v6236, 0.0
      %v6358 = vsel %vm5272, %v6185, 0.0
      %v6359 = vsel %vm5271, %v6237, 0.0
      %v6360 = vsel %vm5272, %v6189, 0.0
      %v6361 = vsel %vm5271, %v6238, 0.0
      %v6362 = vsel %vm5272, %v6193, 0.0
      %v6363 = vsel %vm5271, %v6239, 0.0
      %v6364 = vsel %vm5272, %v6197, 0.0
      %v6365 = vsel %vm5271, %v6240, 0.0
      %v6366 = vsel %vm5272, %v6201, 0.0
      %v6367 = vsel %vm5271, %v6241, 0.0
      %v6368 = vsel %vm5272, %v6205, 0.0
      %v6369 = vsel %vm5271, %v6242, 0.0
      %v6370 = vsel %vm5272, %v6209, 0.0
      %v6371 = vpack.c.bf16 %v6308, %v6307
      %v6372 = vpack.c.bf16 %v6310, %v6309
      %v6373 = vpack.c.bf16 %v6312, %v6311
      %v6374 = vpack.c.bf16 %v6314, %v6313
      %v6375 = vpack.c.bf16 %v6316, %v6315
      %v6376 = vpack.c.bf16 %v6318, %v6317
      %v6377 = vpack.c.bf16 %v6320, %v6319
      %v6378 = vpack.c.bf16 %v6322, %v6321
      %v6379 = vpack.c.bf16 %v6324, %v6323
      %v6380 = vpack.c.bf16 %v6326, %v6325
      %v6381 = vpack.c.bf16 %v6328, %v6327
      %v6382 = vpack.c.bf16 %v6330, %v6329
      %v6383 = vpack.c.bf16 %v6332, %v6331
      %v6384 = vpack.c.bf16 %v6334, %v6333
      %v6385 = vpack.c.bf16 %v6336, %v6335
      %v6386 = vpack.c.bf16 %v6338, %v6337
      %v6387 = vpack.c.bf16 %v6340, %v6339
      %v6388 = vpack.c.bf16 %v6342, %v6341
      %v6389 = vpack.c.bf16 %v6344, %v6343
      %v6390 = vpack.c.bf16 %v6346, %v6345
      %v6391 = vpack.c.bf16 %v6348, %v6347
      %v6392 = vpack.c.bf16 %v6350, %v6349
      %v6393 = vpack.c.bf16 %v6352, %v6351
      %v6394 = vpack.c.bf16 %v6354, %v6353
      %v6395 = vpack.c.bf16 %v6356, %v6355
      %v6396 = vpack.c.bf16 %v6358, %v6357
      %v6397 = vpack.c.bf16 %v6360, %v6359
      %v6398 = vpack.c.bf16 %v6362, %v6361
      %v6399 = vpack.c.bf16 %v6364, %v6363
      %v6400 = vpack.c.bf16 %v6366, %v6365
      %v6401 = vpack.c.bf16 %v6368, %v6367
      %v6402 = vpack.c.bf16 %v6370, %v6369
      %6403 = vst.msk [vmem:[#allocation2 + $0x30] sm:$0xff] %vm5371, %v6371
      %6404 = vst.msk [vmem:[#allocation2 + $0x38] sm:$0xff] %vm5371, %v6372
      %6405 = vst.msk [vmem:[#allocation2 + $0xc0] sm:$0xff] %vm5371, %v6373
      %6406 = vst.msk [vmem:[#allocation2 + $0xc8] sm:$0xff] %vm5371, %v6374
      %6407 = vst.msk [vmem:[#allocation2 + $0x150] sm:$0xff] %vm5371, %v6375
      %6408 = vst.msk [vmem:[#allocation2 + $0x158] sm:$0xff] %vm5371, %v6376
      %6409 = vst.msk [vmem:[#allocation2 + $0x1e0] sm:$0xff] %vm5371, %v6377
      %6410 = vst.msk [vmem:[#allocation2 + $0x1e8] sm:$0xff] %vm5371, %v6378
      %6411 = vst.msk [vmem:[#allocation2 + $0x270] sm:$0xff] %vm5371, %v6379
      %6412 = vst.msk [vmem:[#allocation2 + $0x278] sm:$0xff] %vm5371, %v6380
      %6413 = vst.msk [vmem:[#allocation2 + $0x300] sm:$0xff] %vm5371, %v6381
      %6414 = vst.msk [vmem:[#allocation2 + $0x308] sm:$0xff] %vm5371, %v6382
      %6415 = vst.msk [vmem:[#allocation2 + $0x390] sm:$0xff] %vm5371, %v6383
      %6416 = vst.msk [vmem:[#allocation2 + $0x398] sm:$0xff] %vm5371, %v6384
      %6417 = vst.msk [vmem:[#allocation2 + $0x420] sm:$0xff] %vm5371, %v6385
      %6418 = vst.msk [vmem:[#allocation2 + $0x428] sm:$0xff] %vm5371, %v6386
      %6419 = vst.msk [vmem:[#allocation2 + $0x4b0] sm:$0xff] %vm5371, %v6387
      %6420 = vst.msk [vmem:[#allocation2 + $0x4b8] sm:$0xff] %vm5371, %v6388
      %6421 = vst.msk [vmem:[#allocation2 + $0x540] sm:$0xff] %vm5371, %v6389
      %6422 = vst.msk [vmem:[#allocation2 + $0x548] sm:$0xff] %vm5371, %v6390
      %6423 = vst.msk [vmem:[#allocation2 + $0x5d0] sm:$0xff] %vm5371, %v6391
      %6424 = vst.msk [vmem:[#allocation2 + $0x5d8] sm:$0xff] %vm5371, %v6392
      %6425 = vst.msk [vmem:[#allocation2 + $0x660] sm:$0xff] %vm5371, %v6393
      %6426 = vst.msk [vmem:[#allocation2 + $0x668] sm:$0xff] %vm5371, %v6394
      %6427 = vst.msk [vmem:[#allocation2 + $0x6f0] sm:$0xff] %vm5371, %v6395
      %6428 = vst.msk [vmem:[#allocation2 + $0x6f8] sm:$0xff] %vm5371, %v6396
      %6429 = vst.msk [vmem:[#allocation2 + $0x780] sm:$0xff] %vm5371, %v6397
      %6430 = vst.msk [vmem:[#allocation2 + $0x788] sm:$0xff] %vm5371, %v6398
      %6431 = vst.msk [vmem:[#allocation2 + $0x810] sm:$0xff] %vm5371, %v6399
      %6432 = vst.msk [vmem:[#allocation2 + $0x818] sm:$0xff] %vm5371, %v6400
      %6433 = vst.msk [vmem:[#allocation2 + $0x8a0] sm:$0xff] %vm5371, %v6401
      %6434 = vst.msk [vmem:[#allocation2 + $0x8a8] sm:$0xff] %vm5371, %v6402
      %6435 = vrot.lane.b32.xlu0 %v5404, 113
      %v6436 = vpop.permute.xlu0 %6435
      %6437 = vrot.lane.b32.xlu0 %v5405, 113
      %v6438 = vpop.permute.xlu0 %6437
      %6439 = vrot.lane.b32.xlu0 %v5406, 113
      %v6440 = vpop.permute.xlu0 %6439
      %6441 = vrot.lane.b32.xlu0 %v5407, 113
      %v6442 = vpop.permute.xlu0 %6441
      %6443 = vrot.lane.b32.xlu0 %v5408, 113
      %v6444 = vpop.permute.xlu0 %6443
      %6445 = vrot.lane.b32.xlu0 %v5409, 113
      %v6446 = vpop.permute.xlu0 %6445
      %6447 = vrot.lane.b32.xlu0 %v5410, 113
      %v6448 = vpop.permute.xlu0 %6447
      %6449 = vrot.lane.b32.xlu0 %v5411, 113
      %v6450 = vpop.permute.xlu0 %6449
      %6451 = vrot.lane.b32.xlu0 %v5412, 113
      %v6452 = vpop.permute.xlu0 %6451
      %6453 = vrot.lane.b32.xlu0 %v5413, 113
      %v6454 = vpop.permute.xlu0 %6453
      %6455 = vrot.lane.b32.xlu0 %v5414, 113
      %v6456 = vpop.permute.xlu0 %6455
      %6457 = vrot.lane.b32.xlu0 %v5415, 113
      %v6458 = vpop.permute.xlu0 %6457
      %6459 = vrot.lane.b32.xlu0 %v5416, 113
      %v6460 = vpop.permute.xlu0 %6459
      %6461 = vrot.lane.b32.xlu0 %v5417, 113
      %v6462 = vpop.permute.xlu0 %6461
      %6463 = vrot.lane.b32.xlu0 %v5418, 113
      %v6464 = vpop.permute.xlu0 %6463
      %6465 = vrot.lane.b32.xlu0 %v5419, 113
      %v6466 = vpop.permute.xlu0 %6465
      %6467 = vrot.lane.b32.xlu0 %v5420, 113
      %v6468 = vpop.permute.xlu0 %6467
      %6469 = vrot.lane.b32.xlu0 %v5421, 113
      %v6470 = vpop.permute.xlu0 %6469
      %6471 = vrot.lane.b32.xlu0 %v5422, 113
      %v6472 = vpop.permute.xlu0 %6471
      %6473 = vrot.lane.b32.xlu0 %v5423, 113
      %v6474 = vpop.permute.xlu0 %6473
      %6475 = vrot.lane.b32.xlu0 %v5424, 113
      %v6476 = vpop.permute.xlu0 %6475
      %6477 = vrot.lane.b32.xlu0 %v5425, 113
      %v6478 = vpop.permute.xlu0 %6477
      %6479 = vrot.lane.b32.xlu0 %v5426, 113
      %v6480 = vpop.permute.xlu0 %6479
      %6481 = vrot.lane.b32.xlu0 %v5427, 113
      %v6482 = vpop.permute.xlu0 %6481
      %6483 = vrot.lane.b32.xlu0 %v5428, 113
      %v6484 = vpop.permute.xlu0 %6483
      %6485 = vrot.lane.b32.xlu0 %v5429, 113
      %v6486 = vpop.permute.xlu0 %6485
      %6487 = vrot.lane.b32.xlu0 %v5430, 113
      %v6488 = vpop.permute.xlu0 %6487
      %6489 = vrot.lane.b32.xlu0 %v5431, 113
      %v6490 = vpop.permute.xlu0 %6489
      %6491 = vrot.lane.b32.xlu0 %v5432, 113
      %v6492 = vpop.permute.xlu0 %6491
      %6493 = vrot.lane.b32.xlu0 %v5433, 113
      %v6494 = vpop.permute.xlu0 %6493
      %6495 = vrot.lane.b32.xlu0 %v5434, 113
      %v6496 = vpop.permute.xlu0 %6495
      %6497 = vrot.lane.b32.xlu0 %v5435, 113
      %v6498 = vpop.permute.xlu0 %6497
      %v6499 = vrot.slane %v6436, 4
      %v6500 = vrot.slane %v6438, 4
      %v6501 = vrot.slane %v6440, 4
      %v6502 = vrot.slane %v6442, 4
      %v6503 = vrot.slane %v6444, 4
      %v6504 = vrot.slane %v6446, 4
      %v6505 = vrot.slane %v6448, 4
      %v6506 = vrot.slane %v6450, 4
      %v6507 = vrot.slane %v6452, 4
      %v6508 = vrot.slane %v6454, 4
      %v6509 = vrot.slane %v6456, 4
      %v6510 = vrot.slane %v6458, 4
      %v6511 = vrot.slane %v6460, 4
      %v6512 = vrot.slane %v6462, 4
      %v6513 = vrot.slane %v6464, 4
      %v6514 = vrot.slane %v6466, 4
      %v6515 = vrot.slane %v6468, 4
      %v6516 = vrot.slane %v6470, 4
      %v6517 = vrot.slane %v6472, 4
      %v6518 = vrot.slane %v6474, 4
      %v6519 = vrot.slane %v6476, 4
      %v6520 = vrot.slane %v6478, 4
      %v6521 = vrot.slane %v6480, 4
      %v6522 = vrot.slane %v6482, 4
      %v6523 = vrot.slane %v6484, 4
      %v6524 = vrot.slane %v6486, 4
      %v6525 = vrot.slane %v6488, 4
      %v6526 = vrot.slane %v6490, 4
      %v6527 = vrot.slane %v6492, 4
      %v6528 = vrot.slane %v6494, 4
      %v6529 = vrot.slane %v6496, 4
      %v6530 = vrot.slane %v6498, 4
      %vm6531 = vcmask 924672
      %v6532 = vsel %vm6531, %v6436, %v6499
      %v6533 = vsel %vm6531, %v6438, %v6500
      %v6534 = vsel %vm6531, %v6440, %v6501
      %v6535 = vsel %vm6531, %v6442, %v6502
      %v6536 = vsel %vm6531, %v6444, %v6503
      %v6537 = vsel %vm6531, %v6446, %v6504
      %v6538 = vsel %vm6531, %v6448, %v6505
      %v6539 = vsel %vm6531, %v6450, %v6506
      %v6540 = vsel %vm6531, %v6452, %v6507
      %v6541 = vsel %vm6531, %v6454, %v6508
      %v6542 = vsel %vm6531, %v6456, %v6509
      %v6543 = vsel %vm6531, %v6458, %v6510
      %v6544 = vsel %vm6531, %v6460, %v6511
      %v6545 = vsel %vm6531, %v6462, %v6512
      %v6546 = vsel %vm6531, %v6464, %v6513
      %v6547 = vsel %vm6531, %v6466, %v6514
      %v6548 = vsel %vm6531, %v6468, %v6515
      %v6549 = vsel %vm6531, %v6470, %v6516
      %v6550 = vsel %vm6531, %v6472, %v6517
      %v6551 = vsel %vm6531, %v6474, %v6518
      %v6552 = vsel %vm6531, %v6476, %v6519
      %v6553 = vsel %vm6531, %v6478, %v6520
      %v6554 = vsel %vm6531, %v6480, %v6521
      %v6555 = vsel %vm6531, %v6482, %v6522
      %v6556 = vsel %vm6531, %v6484, %v6523
      %v6557 = vsel %vm6531, %v6486, %v6524
      %v6558 = vsel %vm6531, %v6488, %v6525
      %v6559 = vsel %vm6531, %v6490, %v6526
      %v6560 = vsel %vm6531, %v6492, %v6527
      %v6561 = vsel %vm6531, %v6494, %v6528
      %v6562 = vsel %vm6531, %v6496, %v6529
      %v6563 = vsel %vm6531, %v6498, %v6530
      %6596 = vst.msk [vmem:[#allocation2 + $0x40] sm:$0xff] %vm5371, %v6532
      %6597 = vst.msk [vmem:[#allocation2 + $0x48] sm:$0xff] %vm5371, %v6533
      %6598 = vst.msk [vmem:[#allocation2 + $0xd0] sm:$0xff] %vm5371, %v6534
      %6599 = vst.msk [vmem:[#allocation2 + $0xd8] sm:$0xff] %vm5371, %v6535
      %6600 = vst.msk [vmem:[#allocation2 + $0x160] sm:$0xff] %vm5371, %v6536
      %6601 = vst.msk [vmem:[#allocation2 + $0x168] sm:$0xff] %vm5371, %v6537
      %6602 = vst.msk [vmem:[#allocation2 + $0x1f0] sm:$0xff] %vm5371, %v6538
      %6603 = vst.msk [vmem:[#allocation2 + $0x1f8] sm:$0xff] %vm5371, %v6539
      %6604 = vst.msk [vmem:[#allocation2 + $0x280] sm:$0xff] %vm5371, %v6540
      %6605 = vst.msk [vmem:[#allocation2 + $0x288] sm:$0xff] %vm5371, %v6541
      %6606 = vst.msk [vmem:[#allocation2 + $0x310] sm:$0xff] %vm5371, %v6542
      %6607 = vst.msk [vmem:[#allocation2 + $0x318] sm:$0xff] %vm5371, %v6543
      %6608 = vst.msk [vmem:[#allocation2 + $0x3a0] sm:$0xff] %vm5371, %v6544
      %6609 = vst.msk [vmem:[#allocation2 + $0x3a8] sm:$0xff] %vm5371, %v6545
      %6610 = vst.msk [vmem:[#allocation2 + $0x430] sm:$0xff] %vm5371, %v6546
      %6611 = vst.msk [vmem:[#allocation2 + $0x438] sm:$0xff] %vm5371, %v6547
      %6612 = vst.msk [vmem:[#allocation2 + $0x4c0] sm:$0xff] %vm5371, %v6548
      %6613 = vst.msk [vmem:[#allocation2 + $0x4c8] sm:$0xff] %vm5371, %v6549
      %6614 = vst.msk [vmem:[#allocation2 + $0x550] sm:$0xff] %vm5371, %v6550
      %6615 = vst.msk [vmem:[#allocation2 + $0x558] sm:$0xff] %vm5371, %v6551
      %6616 = vst.msk [vmem:[#allocation2 + $0x5e0] sm:$0xff] %vm5371, %v6552
      %6617 = vst.msk [vmem:[#allocation2 + $0x5e8] sm:$0xff] %vm5371, %v6553
      %6618 = vst.msk [vmem:[#allocation2 + $0x670] sm:$0xff] %vm5371, %v6554
      %6619 = vst.msk [vmem:[#allocation2 + $0x678] sm:$0xff] %vm5371, %v6555
      %6620 = vst.msk [vmem:[#allocation2 + $0x700] sm:$0xff] %vm5371, %v6556
      %6621 = vst.msk [vmem:[#allocation2 + $0x708] sm:$0xff] %vm5371, %v6557
      %6622 = vst.msk [vmem:[#allocation2 + $0x790] sm:$0xff] %vm5371, %v6558
      %6623 = vst.msk [vmem:[#allocation2 + $0x798] sm:$0xff] %vm5371, %v6559
      %6624 = vst.msk [vmem:[#allocation2 + $0x820] sm:$0xff] %vm5371, %v6560
      %6625 = vst.msk [vmem:[#allocation2 + $0x828] sm:$0xff] %vm5371, %v6561
      %6626 = vst.msk [vmem:[#allocation2 + $0x8b0] sm:$0xff] %vm5371, %v6562
      %6627 = vst.msk [vmem:[#allocation2 + $0x8b8] sm:$0xff] %vm5371, %v6563
      %6628 = vrot.lane.b32.xlu0 %v5123, 112
      %v6629 = vpop.permute.xlu0 %6628
      %6630 = vrot.lane.b32.xlu0 %v5156, 112
      %v6631 = vpop.permute.xlu0 %6630
      %6632 = vrot.lane.b32.xlu0 %v5124, 112
      %v6633 = vpop.permute.xlu0 %6632
      %6634 = vrot.lane.b32.xlu0 %v5157, 112
      %v6635 = vpop.permute.xlu0 %6634
      %6636 = vrot.lane.b32.xlu0 %v5125, 112
      %v6637 = vpop.permute.xlu0 %6636
      %6638 = vrot.lane.b32.xlu0 %v5158, 112
      %v6639 = vpop.permute.xlu0 %6638
      %6640 = vrot.lane.b32.xlu0 %v5126, 112
      %v6641 = vpop.permute.xlu0 %6640
      %6642 = vrot.lane.b32.xlu0 %v5159, 112
      %v6643 = vpop.permute.xlu0 %6642
      %6644 = vrot.lane.b32.xlu0 %v5127, 112
      %v6645 = vpop.permute.xlu0 %6644
      %6646 = vrot.lane.b32.xlu0 %v5160, 112
      %v6647 = vpop.permute.xlu0 %6646
      %6648 = vrot.lane.b32.xlu0 %v5128, 112
      %v6649 = vpop.permute.xlu0 %6648
      %6650 = vrot.lane.b32.xlu0 %v5161, 112
      %v6651 = vpop.permute.xlu0 %6650
      %6652 = vrot.lane.b32.xlu0 %v5129, 112
      %v6653 = vpop.permute.xlu0 %6652
      %6654 = vrot.lane.b32.xlu0 %v5162, 112
      %v6655 = vpop.permute.xlu0 %6654
      %6656 = vrot.lane.b32.xlu0 %v5130, 112
      %v6657 = vpop.permute.xlu0 %6656
      %6658 = vrot.lane.b32.xlu0 %v5163, 112
      %v6659 = vpop.permute.xlu0 %6658
      %6660 = vrot.lane.b32.xlu0 %v5131, 112
      %v6661 = vpop.permute.xlu0 %6660
      %6662 = vrot.lane.b32.xlu0 %v5164, 112
      %v6663 = vpop.permute.xlu0 %6662
      %6664 = vrot.lane.b32.xlu0 %v5132, 112
      %v6665 = vpop.permute.xlu0 %6664
      %6666 = vrot.lane.b32.xlu0 %v5165, 112
      %v6667 = vpop.permute.xlu0 %6666
      %6668 = vrot.lane.b32.xlu0 %v5133, 112
      %v6669 = vpop.permute.xlu0 %6668
      %6670 = vrot.lane.b32.xlu0 %v5166, 112
      %v6671 = vpop.permute.xlu0 %6670
      %6672 = vrot.lane.b32.xlu0 %v5134, 112
      %v6673 = vpop.permute.xlu0 %6672
      %6674 = vrot.lane.b32.xlu0 %v5167, 112
      %v6675 = vpop.permute.xlu0 %6674
      %6676 = vrot.lane.b32.xlu0 %v5135, 112
      %v6677 = vpop.permute.xlu0 %6676
      %6678 = vrot.lane.b32.xlu0 %v5168, 112
      %v6679 = vpop.permute.xlu0 %6678
      %6680 = vrot.lane.b32.xlu0 %v5136, 112
      %v6681 = vpop.permute.xlu0 %6680
      %6682 = vrot.lane.b32.xlu0 %v5169, 112
      %v6683 = vpop.permute.xlu0 %6682
      %6684 = vrot.lane.b32.xlu0 %v5137, 112
      %v6685 = vpop.permute.xlu0 %6684
      %6686 = vrot.lane.b32.xlu0 %v5170, 112
      %v6687 = vpop.permute.xlu0 %6686
      %6688 = vrot.lane.b32.xlu0 %v5138, 112
      %v6689 = vpop.permute.xlu0 %6688
      %6690 = vrot.lane.b32.xlu0 %v5171, 112
      %v6691 = vpop.permute.xlu0 %6690
      %6692 = vrot.lane.b32.xlu0 %v5139, 112
      %v6693 = vpop.permute.xlu0 %6692
      %6694 = vrot.lane.b32.xlu0 %v5172, 112
      %v6695 = vpop.permute.xlu0 %6694
      %6696 = vrot.lane.b32.xlu0 %v5140, 112
      %v6697 = vpop.permute.xlu0 %6696
      %6698 = vrot.lane.b32.xlu0 %v5173, 112
      %v6699 = vpop.permute.xlu0 %6698
      %6700 = vrot.lane.b32.xlu0 %v5141, 112
      %v6701 = vpop.permute.xlu0 %6700
      %6702 = vrot.lane.b32.xlu0 %v5174, 112
      %v6703 = vpop.permute.xlu0 %6702
      %6704 = vrot.lane.b32.xlu0 %v5142, 112
      %v6705 = vpop.permute.xlu0 %6704
      %6706 = vrot.lane.b32.xlu0 %v5175, 112
      %v6707 = vpop.permute.xlu0 %6706
      %6708 = vrot.lane.b32.xlu0 %v5143, 112
      %v6709 = vpop.permute.xlu0 %6708
      %6710 = vrot.lane.b32.xlu0 %v5176, 112
      %v6711 = vpop.permute.xlu0 %6710
      %6712 = vrot.lane.b32.xlu0 %v5144, 112
      %v6713 = vpop.permute.xlu0 %6712
      %6714 = vrot.lane.b32.xlu0 %v5177, 112
      %v6715 = vpop.permute.xlu0 %6714
      %6716 = vrot.lane.b32.xlu0 %v5145, 112
      %v6717 = vpop.permute.xlu0 %6716
      %6718 = vrot.lane.b32.xlu0 %v5178, 112
      %v6719 = vpop.permute.xlu0 %6718
      %6720 = vrot.lane.b32.xlu0 %v5146, 112
      %v6721 = vpop.permute.xlu0 %6720
      %6722 = vrot.lane.b32.xlu0 %v5179, 112
      %v6723 = vpop.permute.xlu0 %6722
      %6724 = vrot.lane.b32.xlu0 %v5147, 112
      %v6725 = vpop.permute.xlu0 %6724
      %6726 = vrot.lane.b32.xlu0 %v5180, 112
      %v6727 = vpop.permute.xlu0 %6726
      %6728 = vrot.lane.b32.xlu0 %v5148, 112
      %v6729 = vpop.permute.xlu0 %6728
      %6730 = vrot.lane.b32.xlu0 %v5181, 112
      %v6731 = vpop.permute.xlu0 %6730
      %6732 = vrot.lane.b32.xlu0 %v5149, 112
      %v6733 = vpop.permute.xlu0 %6732
      %6734 = vrot.lane.b32.xlu0 %v5182, 112
      %v6735 = vpop.permute.xlu0 %6734
      %6736 = vrot.lane.b32.xlu0 %v5150, 112
      %v6737 = vpop.permute.xlu0 %6736
      %6738 = vrot.lane.b32.xlu0 %v5183, 112
      %v6739 = vpop.permute.xlu0 %6738
      %6740 = vrot.lane.b32.xlu0 %v5151, 112
      %v6741 = vpop.permute.xlu0 %6740
      %6742 = vrot.lane.b32.xlu0 %v5184, 112
      %v6743 = vpop.permute.xlu0 %6742
      %6744 = vrot.lane.b32.xlu0 %v5152, 112
      %v6745 = vpop.permute.xlu0 %6744
      %6746 = vrot.lane.b32.xlu0 %v5185, 112
      %v6747 = vpop.permute.xlu0 %6746
      %6748 = vrot.lane.b32.xlu0 %v5153, 112
      %v6749 = vpop.permute.xlu0 %6748
      %6750 = vrot.lane.b32.xlu0 %v5186, 112
      %v6751 = vpop.permute.xlu0 %6750
      %6752 = vrot.lane.b32.xlu0 %v5154, 112
      %v6753 = vpop.permute.xlu0 %6752
      %6754 = vrot.lane.b32.xlu0 %v5187, 112
      %v6755 = vpop.permute.xlu0 %6754
      %vm6756 = vcmask 916480
      %v6757 = vsel %vm6756, %v6629, %v6631
      %v6758 = vsel %vm6756, %v6633, %v6635
      %v6759 = vsel %vm6756, %v6637, %v6639
      %v6760 = vsel %vm6756, %v6641, %v6643
      %v6761 = vsel %vm6756, %v6645, %v6647
      %v6762 = vsel %vm6756, %v6649, %v6651
      %v6763 = vsel %vm6756, %v6653, %v6655
      %v6764 = vsel %vm6756, %v6657, %v6659
      %v6765 = vsel %vm6756, %v6661, %v6663
      %v6766 = vsel %vm6756, %v6665, %v6667
      %v6767 = vsel %vm6756, %v6669, %v6671
      %v6768 = vsel %vm6756, %v6673, %v6675
      %v6769 = vsel %vm6756, %v6677, %v6679
      %v6770 = vsel %vm6756, %v6681, %v6683
      %v6771 = vsel %vm6756, %v6685, %v6687
      %v6772 = vsel %vm6756, %v6689, %v6691
      %v6773 = vsel %vm6756, %v6693, %v6695
      %v6774 = vsel %vm6756, %v6697, %v6699
      %v6775 = vsel %vm6756, %v6701, %v6703
      %v6776 = vsel %vm6756, %v6705, %v6707
      %v6777 = vsel %vm6756, %v6709, %v6711
      %v6778 = vsel %vm6756, %v6713, %v6715
      %v6779 = vsel %vm6756, %v6717, %v6719
      %v6780 = vsel %vm6756, %v6721, %v6723
      %v6781 = vsel %vm6756, %v6725, %v6727
      %v6782 = vsel %vm6756, %v6729, %v6731
      %v6783 = vsel %vm6756, %v6733, %v6735
      %v6784 = vsel %vm6756, %v6737, %v6739
      %v6785 = vsel %vm6756, %v6741, %v6743
      %v6786 = vsel %vm6756, %v6745, %v6747
      %v6787 = vsel %vm6756, %v6749, %v6751
      %v6788 = vsel %vm6756, %v6753, %v6755
      %v6853 = vsel %vm5663, %v6757, 0.0
      %v6854 = vsel %vm5664, %v6631, 0.0
      %v6855 = vsel %vm5663, %v6758, 0.0
      %v6856 = vsel %vm5664, %v6635, 0.0
      %v6857 = vsel %vm5663, %v6759, 0.0
      %v6858 = vsel %vm5664, %v6639, 0.0
      %v6859 = vsel %vm5663, %v6760, 0.0
      %v6860 = vsel %vm5664, %v6643, 0.0
      %v6861 = vsel %vm5663, %v6761, 0.0
      %v6862 = vsel %vm5664, %v6647, 0.0
      %v6863 = vsel %vm5663, %v6762, 0.0
      %v6864 = vsel %vm5664, %v6651, 0.0
      %v6865 = vsel %vm5663, %v6763, 0.0
      %v6866 = vsel %vm5664, %v6655, 0.0
      %v6867 = vsel %vm5663, %v6764, 0.0
      %v6868 = vsel %vm5664, %v6659, 0.0
      %v6869 = vsel %vm5663, %v6765, 0.0
      %v6870 = vsel %vm5664, %v6663, 0.0
      %v6871 = vsel %vm5663, %v6766, 0.0
      %v6872 = vsel %vm5664, %v6667, 0.0
      %v6873 = vsel %vm5663, %v6767, 0.0
      %v6874 = vsel %vm5664, %v6671, 0.0
      %v6875 = vsel %vm5663, %v6768, 0.0
      %v6876 = vsel %vm5664, %v6675, 0.0
      %v6877 = vsel %vm5663, %v6769, 0.0
      %v6878 = vsel %vm5664, %v6679, 0.0
      %v6879 = vsel %vm5663, %v6770, 0.0
      %v6880 = vsel %vm5664, %v6683, 0.0
      %v6881 = vsel %vm5663, %v6771, 0.0
      %v6882 = vsel %vm5664, %v6687, 0.0
      %v6883 = vsel %vm5663, %v6772, 0.0
      %v6884 = vsel %vm5664, %v6691, 0.0
      %v6885 = vsel %vm5663, %v6773, 0.0
      %v6886 = vsel %vm5664, %v6695, 0.0
      %v6887 = vsel %vm5663, %v6774, 0.0
      %v6888 = vsel %vm5664, %v6699, 0.0
      %v6889 = vsel %vm5663, %v6775, 0.0
      %v6890 = vsel %vm5664, %v6703, 0.0
      %v6891 = vsel %vm5663, %v6776, 0.0
      %v6892 = vsel %vm5664, %v6707, 0.0
      %v6893 = vsel %vm5663, %v6777, 0.0
      %v6894 = vsel %vm5664, %v6711, 0.0
      %v6895 = vsel %vm5663, %v6778, 0.0
      %v6896 = vsel %vm5664, %v6715, 0.0
      %v6897 = vsel %vm5663, %v6779, 0.0
      %v6898 = vsel %vm5664, %v6719, 0.0
      %v6899 = vsel %vm5663, %v6780, 0.0
      %v6900 = vsel %vm5664, %v6723, 0.0
      %v6901 = vsel %vm5663, %v6781, 0.0
      %v6902 = vsel %vm5664, %v6727, 0.0
      %v6903 = vsel %vm5663, %v6782, 0.0
      %v6904 = vsel %vm5664, %v6731, 0.0
      %v6905 = vsel %vm5663, %v6783, 0.0
      %v6906 = vsel %vm5664, %v6735, 0.0
      %v6907 = vsel %vm5663, %v6784, 0.0
      %v6908 = vsel %vm5664, %v6739, 0.0
      %v6909 = vsel %vm5663, %v6785, 0.0
      %v6910 = vsel %vm5664, %v6743, 0.0
      %v6911 = vsel %vm5663, %v6786, 0.0
      %v6912 = vsel %vm5664, %v6747, 0.0
      %v6913 = vsel %vm5663, %v6787, 0.0
      %v6914 = vsel %vm5664, %v6751, 0.0
      %v6915 = vsel %vm5663, %v6788, 0.0
      %v6916 = vsel %vm5664, %v6755, 0.0
      %v6917 = vpack.c.bf16 %v6854, %v6853
      %v6918 = vpack.c.bf16 %v6856, %v6855
      %v6919 = vpack.c.bf16 %v6858, %v6857
      %v6920 = vpack.c.bf16 %v6860, %v6859
      %v6921 = vpack.c.bf16 %v6862, %v6861
      %v6922 = vpack.c.bf16 %v6864, %v6863
      %v6923 = vpack.c.bf16 %v6866, %v6865
      %v6924 = vpack.c.bf16 %v6868, %v6867
      %v6925 = vpack.c.bf16 %v6870, %v6869
      %v6926 = vpack.c.bf16 %v6872, %v6871
      %v6927 = vpack.c.bf16 %v6874, %v6873
      %v6928 = vpack.c.bf16 %v6876, %v6875
      %v6929 = vpack.c.bf16 %v6878, %v6877
      %v6930 = vpack.c.bf16 %v6880, %v6879
      %v6931 = vpack.c.bf16 %v6882, %v6881
      %v6932 = vpack.c.bf16 %v6884, %v6883
      %v6933 = vpack.c.bf16 %v6886, %v6885
      %v6934 = vpack.c.bf16 %v6888, %v6887
      %v6935 = vpack.c.bf16 %v6890, %v6889
      %v6936 = vpack.c.bf16 %v6892, %v6891
      %v6937 = vpack.c.bf16 %v6894, %v6893
      %v6938 = vpack.c.bf16 %v6896, %v6895
      %v6939 = vpack.c.bf16 %v6898, %v6897
      %v6940 = vpack.c.bf16 %v6900, %v6899
      %v6941 = vpack.c.bf16 %v6902, %v6901
      %v6942 = vpack.c.bf16 %v6904, %v6903
      %v6943 = vpack.c.bf16 %v6906, %v6905
      %v6944 = vpack.c.bf16 %v6908, %v6907
      %v6945 = vpack.c.bf16 %v6910, %v6909
      %v6946 = vpack.c.bf16 %v6912, %v6911
      %v6947 = vpack.c.bf16 %v6914, %v6913
      %v6948 = vpack.c.bf16 %v6916, %v6915
      %6949 = vst.msk [vmem:[#allocation2 + $0x50] sm:$0xff] %vm5371, %v6917
      %6950 = vst.msk [vmem:[#allocation2 + $0x58] sm:$0xff] %vm5371, %v6918
      %6951 = vst.msk [vmem:[#allocation2 + $0xe0] sm:$0xff] %vm5371, %v6919
      %6952 = vst.msk [vmem:[#allocation2 + $0xe8] sm:$0xff] %vm5371, %v6920
      %6953 = vst.msk [vmem:[#allocation2 + $0x170] sm:$0xff] %vm5371, %v6921
      %6954 = vst.msk [vmem:[#allocation2 + $0x178] sm:$0xff] %vm5371, %v6922
      %6955 = vst.msk [vmem:[#allocation2 + $0x200] sm:$0xff] %vm5371, %v6923
      %6956 = vst.msk [vmem:[#allocation2 + $0x208] sm:$0xff] %vm5371, %v6924
      %6957 = vst.msk [vmem:[#allocation2 + $0x290] sm:$0xff] %vm5371, %v6925
      %6958 = vst.msk [vmem:[#allocation2 + $0x298] sm:$0xff] %vm5371, %v6926
      %6959 = vst.msk [vmem:[#allocation2 + $0x320] sm:$0xff] %vm5371, %v6927
      %6960 = vst.msk [vmem:[#allocation2 + $0x328] sm:$0xff] %vm5371, %v6928
      %6961 = vst.msk [vmem:[#allocation2 + $0x3b0] sm:$0xff] %vm5371, %v6929
      %6962 = vst.msk [vmem:[#allocation2 + $0x3b8] sm:$0xff] %vm5371, %v6930
      %6963 = vst.msk [vmem:[#allocation2 + $0x440] sm:$0xff] %vm5371, %v6931
      %6964 = vst.msk [vmem:[#allocation2 + $0x448] sm:$0xff] %vm5371, %v6932
      %6965 = vst.msk [vmem:[#allocation2 + $0x4d0] sm:$0xff] %vm5371, %v6933
      %6966 = vst.msk [vmem:[#allocation2 + $0x4d8] sm:$0xff] %vm5371, %v6934
      %6967 = vst.msk [vmem:[#allocation2 + $0x560] sm:$0xff] %vm5371, %v6935
      %6968 = vst.msk [vmem:[#allocation2 + $0x568] sm:$0xff] %vm5371, %v6936
      %6969 = vst.msk [vmem:[#allocation2 + $0x5f0] sm:$0xff] %vm5371, %v6937
      %6970 = vst.msk [vmem:[#allocation2 + $0x5f8] sm:$0xff] %vm5371, %v6938
      %6971 = vst.msk [vmem:[#allocation2 + $0x680] sm:$0xff] %vm5371, %v6939
      %6972 = vst.msk [vmem:[#allocation2 + $0x688] sm:$0xff] %vm5371, %v6940
      %6973 = vst.msk [vmem:[#allocation2 + $0x710] sm:$0xff] %vm5371, %v6941
      %6974 = vst.msk [vmem:[#allocation2 + $0x718] sm:$0xff] %vm5371, %v6942
      %6975 = vst.msk [vmem:[#allocation2 + $0x7a0] sm:$0xff] %vm5371, %v6943
      %6976 = vst.msk [vmem:[#allocation2 + $0x7a8] sm:$0xff] %vm5371, %v6944
      %6977 = vst.msk [vmem:[#allocation2 + $0x830] sm:$0xff] %vm5371, %v6945
      %6978 = vst.msk [vmem:[#allocation2 + $0x838] sm:$0xff] %vm5371, %v6946
      %6979 = vst.msk [vmem:[#allocation2 + $0x8c0] sm:$0xff] %vm5371, %v6947
      %6980 = vst.msk [vmem:[#allocation2 + $0x8c8] sm:$0xff] %vm5371, %v6948
      %6981 = vrot.lane.b32.xlu0 %v5123, 100
      %v6982 = vpop.permute.xlu0 %6981
      %6983 = vrot.lane.b32.xlu0 %v5156, 100
      %v6984 = vpop.permute.xlu0 %6983
      %6985 = vrot.lane.b32.xlu0 %v5124, 100
      %v6986 = vpop.permute.xlu0 %6985
      %6987 = vrot.lane.b32.xlu0 %v5157, 100
      %v6988 = vpop.permute.xlu0 %6987
      %6989 = vrot.lane.b32.xlu0 %v5125, 100
      %v6990 = vpop.permute.xlu0 %6989
      %6991 = vrot.lane.b32.xlu0 %v5158, 100
      %v6992 = vpop.permute.xlu0 %6991
      %6993 = vrot.lane.b32.xlu0 %v5126, 100
      %v6994 = vpop.permute.xlu0 %6993
      %6995 = vrot.lane.b32.xlu0 %v5159, 100
      %v6996 = vpop.permute.xlu0 %6995
      %6997 = vrot.lane.b32.xlu0 %v5127, 100
      %v6998 = vpop.permute.xlu0 %6997
      %6999 = vrot.lane.b32.xlu0 %v5160, 100
      %v7000 = vpop.permute.xlu0 %6999
      %7001 = vrot.lane.b32.xlu0 %v5128, 100
      %v7002 = vpop.permute.xlu0 %7001
      %7003 = vrot.lane.b32.xlu0 %v5161, 100
      %v7004 = vpop.permute.xlu0 %7003
      %7005 = vrot.lane.b32.xlu0 %v5129, 100
      %v7006 = vpop.permute.xlu0 %7005
      %7007 = vrot.lane.b32.xlu0 %v5162, 100
      %v7008 = vpop.permute.xlu0 %7007
      %7009 = vrot.lane.b32.xlu0 %v5130, 100
      %v7010 = vpop.permute.xlu0 %7009
      %7011 = vrot.lane.b32.xlu0 %v5163, 100
      %v7012 = vpop.permute.xlu0 %7011
      %7013 = vrot.lane.b32.xlu0 %v5131, 100
      %v7014 = vpop.permute.xlu0 %7013
      %7015 = vrot.lane.b32.xlu0 %v5164, 100
      %v7016 = vpop.permute.xlu0 %7015
      %7017 = vrot.lane.b32.xlu0 %v5132, 100
      %v7018 = vpop.permute.xlu0 %7017
      %7019 = vrot.lane.b32.xlu0 %v5165, 100
      %v7020 = vpop.permute.xlu0 %7019
      %7021 = vrot.lane.b32.xlu0 %v5133, 100
      %v7022 = vpop.permute.xlu0 %7021
      %7023 = vrot.lane.b32.xlu0 %v5166, 100
      %v7024 = vpop.permute.xlu0 %7023
      %7025 = vrot.lane.b32.xlu0 %v5134, 100
      %v7026 = vpop.permute.xlu0 %7025
      %7027 = vrot.lane.b32.xlu0 %v5167, 100
      %v7028 = vpop.permute.xlu0 %7027
      %7029 = vrot.lane.b32.xlu0 %v5135, 100
      %v7030 = vpop.permute.xlu0 %7029
      %7031 = vrot.lane.b32.xlu0 %v5168, 100
      %v7032 = vpop.permute.xlu0 %7031
      %7033 = vrot.lane.b32.xlu0 %v5136, 100
      %v7034 = vpop.permute.xlu0 %7033
      %7035 = vrot.lane.b32.xlu0 %v5169, 100
      %v7036 = vpop.permute.xlu0 %7035
      %7037 = vrot.lane.b32.xlu0 %v5137, 100
      %v7038 = vpop.permute.xlu0 %7037
      %7039 = vrot.lane.b32.xlu0 %v5170, 100
      %v7040 = vpop.permute.xlu0 %7039
      %7041 = vrot.lane.b32.xlu0 %v5138, 100
      %v7042 = vpop.permute.xlu0 %7041
      %7043 = vrot.lane.b32.xlu0 %v5171, 100
      %v7044 = vpop.permute.xlu0 %7043
      %7045 = vrot.lane.b32.xlu0 %v5139, 100
      %v7046 = vpop.permute.xlu0 %7045
      %7047 = vrot.lane.b32.xlu0 %v5172, 100
      %v7048 = vpop.permute.xlu0 %7047
      %7049 = vrot.lane.b32.xlu0 %v5140, 100
      %v7050 = vpop.permute.xlu0 %7049
      %7051 = vrot.lane.b32.xlu0 %v5173, 100
      %v7052 = vpop.permute.xlu0 %7051
      %7053 = vrot.lane.b32.xlu0 %v5141, 100
      %v7054 = vpop.permute.xlu0 %7053
      %7055 = vrot.lane.b32.xlu0 %v5174, 100
      %v7056 = vpop.permute.xlu0 %7055
      %7057 = vrot.lane.b32.xlu0 %v5142, 100
      %v7058 = vpop.permute.xlu0 %7057
      %7059 = vrot.lane.b32.xlu0 %v5175, 100
      %v7060 = vpop.permute.xlu0 %7059
      %7061 = vrot.lane.b32.xlu0 %v5143, 100
      %v7062 = vpop.permute.xlu0 %7061
      %7063 = vrot.lane.b32.xlu0 %v5176, 100
      %v7064 = vpop.permute.xlu0 %7063
      %7065 = vrot.lane.b32.xlu0 %v5144, 100
      %v7066 = vpop.permute.xlu0 %7065
      %7067 = vrot.lane.b32.xlu0 %v5177, 100
      %v7068 = vpop.permute.xlu0 %7067
      %7069 = vrot.lane.b32.xlu0 %v5145, 100
      %v7070 = vpop.permute.xlu0 %7069
      %7071 = vrot.lane.b32.xlu0 %v5178, 100
      %v7072 = vpop.permute.xlu0 %7071
      %7073 = vrot.lane.b32.xlu0 %v5146, 100
      %v7074 = vpop.permute.xlu0 %7073
      %7075 = vrot.lane.b32.xlu0 %v5179, 100
      %v7076 = vpop.permute.xlu0 %7075
      %7077 = vrot.lane.b32.xlu0 %v5147, 100
      %v7078 = vpop.permute.xlu0 %7077
      %7079 = vrot.lane.b32.xlu0 %v5180, 100
      %v7080 = vpop.permute.xlu0 %7079
      %7081 = vrot.lane.b32.xlu0 %v5148, 100
      %v7082 = vpop.permute.xlu0 %7081
      %7083 = vrot.lane.b32.xlu0 %v5181, 100
      %v7084 = vpop.permute.xlu0 %7083
      %7085 = vrot.lane.b32.xlu0 %v5149, 100
      %v7086 = vpop.permute.xlu0 %7085
      %7087 = vrot.lane.b32.xlu0 %v5182, 100
      %v7088 = vpop.permute.xlu0 %7087
      %7089 = vrot.lane.b32.xlu0 %v5150, 100
      %v7090 = vpop.permute.xlu0 %7089
      %7091 = vrot.lane.b32.xlu0 %v5183, 100
      %v7092 = vpop.permute.xlu0 %7091
      %7093 = vrot.lane.b32.xlu0 %v5151, 100
      %v7094 = vpop.permute.xlu0 %7093
      %7095 = vrot.lane.b32.xlu0 %v5184, 100
      %v7096 = vpop.permute.xlu0 %7095
      %7097 = vrot.lane.b32.xlu0 %v5152, 100
      %v7098 = vpop.permute.xlu0 %7097
      %7099 = vrot.lane.b32.xlu0 %v5185, 100
      %v7100 = vpop.permute.xlu0 %7099
      %7101 = vrot.lane.b32.xlu0 %v5153, 100
      %v7102 = vpop.permute.xlu0 %7101
      %7103 = vrot.lane.b32.xlu0 %v5186, 100
      %v7104 = vpop.permute.xlu0 %7103
      %7105 = vrot.lane.b32.xlu0 %v5154, 100
      %v7106 = vpop.permute.xlu0 %7105
      %7107 = vrot.lane.b32.xlu0 %v5187, 100
      %v7108 = vpop.permute.xlu0 %7107
      %vm7109 = vcmask 818176
      %v7110 = vsel %vm7109, %v6982, %v6984
      %v7111 = vsel %vm7109, %v6986, %v6988
      %v7112 = vsel %vm7109, %v6990, %v6992
      %v7113 = vsel %vm7109, %v6994, %v6996
      %v7114 = vsel %vm7109, %v6998, %v7000
      %v7115 = vsel %vm7109, %v7002, %v7004
      %v7116 = vsel %vm7109, %v7006, %v7008
      %v7117 = vsel %vm7109, %v7010, %v7012
      %v7118 = vsel %vm7109, %v7014, %v7016
      %v7119 = vsel %vm7109, %v7018, %v7020
      %v7120 = vsel %vm7109, %v7022, %v7024
      %v7121 = vsel %vm7109, %v7026, %v7028
      %v7122 = vsel %vm7109, %v7030, %v7032
      %v7123 = vsel %vm7109, %v7034, %v7036
      %v7124 = vsel %vm7109, %v7038, %v7040
      %v7125 = vsel %vm7109, %v7042, %v7044
      %v7126 = vsel %vm7109, %v7046, %v7048
      %v7127 = vsel %vm7109, %v7050, %v7052
      %v7128 = vsel %vm7109, %v7054, %v7056
      %v7129 = vsel %vm7109, %v7058, %v7060
      %v7130 = vsel %vm7109, %v7062, %v7064
      %v7131 = vsel %vm7109, %v7066, %v7068
      %v7132 = vsel %vm7109, %v7070, %v7072
      %v7133 = vsel %vm7109, %v7074, %v7076
      %v7134 = vsel %vm7109, %v7078, %v7080
      %v7135 = vsel %vm7109, %v7082, %v7084
      %v7136 = vsel %vm7109, %v7086, %v7088
      %v7137 = vsel %vm7109, %v7090, %v7092
      %v7138 = vsel %vm7109, %v7094, %v7096
      %v7139 = vsel %vm7109, %v7098, %v7100
      %v7140 = vsel %vm7109, %v7102, %v7104
      %v7141 = vsel %vm7109, %v7106, %v7108
      %v7206 = vsel %vm5271, %v7110, 0.0
      %v7207 = vsel %vm5272, %v6984, 0.0
      %v7208 = vsel %vm5271, %v7111, 0.0
      %v7209 = vsel %vm5272, %v6988, 0.0
      %v7210 = vsel %vm5271, %v7112, 0.0
      %v7211 = vsel %vm5272, %v6992, 0.0
      %v7212 = vsel %vm5271, %v7113, 0.0
      %v7213 = vsel %vm5272, %v6996, 0.0
      %v7214 = vsel %vm5271, %v7114, 0.0
      %v7215 = vsel %vm5272, %v7000, 0.0
      %v7216 = vsel %vm5271, %v7115, 0.0
      %v7217 = vsel %vm5272, %v7004, 0.0
      %v7218 = vsel %vm5271, %v7116, 0.0
      %v7219 = vsel %vm5272, %v7008, 0.0
      %v7220 = vsel %vm5271, %v7117, 0.0
      %v7221 = vsel %vm5272, %v7012, 0.0
      %v7222 = vsel %vm5271, %v7118, 0.0
      %v7223 = vsel %vm5272, %v7016, 0.0
      %v7224 = vsel %vm5271, %v7119, 0.0
      %v7225 = vsel %vm5272, %v7020, 0.0
      %v7226 = vsel %vm5271, %v7120, 0.0
      %v7227 = vsel %vm5272, %v7024, 0.0
      %v7228 = vsel %vm5271, %v7121, 0.0
      %v7229 = vsel %vm5272, %v7028, 0.0
      %v7230 = vsel %vm5271, %v7122, 0.0
      %v7231 = vsel %vm5272, %v7032, 0.0
      %v7232 = vsel %vm5271, %v7123, 0.0
      %v7233 = vsel %vm5272, %v7036, 0.0
      %v7234 = vsel %vm5271, %v7124, 0.0
      %v7235 = vsel %vm5272, %v7040, 0.0
      %v7236 = vsel %vm5271, %v7125, 0.0
      %v7237 = vsel %vm5272, %v7044, 0.0
      %v7238 = vsel %vm5271, %v7126, 0.0
      %v7239 = vsel %vm5272, %v7048, 0.0
      %v7240 = vsel %vm5271, %v7127, 0.0
      %v7241 = vsel %vm5272, %v7052, 0.0
      %v7242 = vsel %vm5271, %v7128, 0.0
      %v7243 = vsel %vm5272, %v7056, 0.0
      %v7244 = vsel %vm5271, %v7129, 0.0
      %v7245 = vsel %vm5272, %v7060, 0.0
      %v7246 = vsel %vm5271, %v7130, 0.0
      %v7247 = vsel %vm5272, %v7064, 0.0
      %v7248 = vsel %vm5271, %v7131, 0.0
      %v7249 = vsel %vm5272, %v7068, 0.0
      %v7250 = vsel %vm5271, %v7132, 0.0
      %v7251 = vsel %vm5272, %v7072, 0.0
      %v7252 = vsel %vm5271, %v7133, 0.0
      %v7253 = vsel %vm5272, %v7076, 0.0
      %v7254 = vsel %vm5271, %v7134, 0.0
      %v7255 = vsel %vm5272, %v7080, 0.0
      %v7256 = vsel %vm5271, %v7135, 0.0
      %v7257 = vsel %vm5272, %v7084, 0.0
      %v7258 = vsel %vm5271, %v7136, 0.0
      %v7259 = vsel %vm5272, %v7088, 0.0
      %v7260 = vsel %vm5271, %v7137, 0.0
      %v7261 = vsel %vm5272, %v7092, 0.0
      %v7262 = vsel %vm5271, %v7138, 0.0
      %v7263 = vsel %vm5272, %v7096, 0.0
      %v7264 = vsel %vm5271, %v7139, 0.0
      %v7265 = vsel %vm5272, %v7100, 0.0
      %v7266 = vsel %vm5271, %v7140, 0.0
      %v7267 = vsel %vm5272, %v7104, 0.0
      %v7268 = vsel %vm5271, %v7141, 0.0
      %v7269 = vsel %vm5272, %v7108, 0.0
      %v7270 = vpack.c.bf16 %v7207, %v7206
      %v7271 = vpack.c.bf16 %v7209, %v7208
      %v7272 = vpack.c.bf16 %v7211, %v7210
      %v7273 = vpack.c.bf16 %v7213, %v7212
      %v7274 = vpack.c.bf16 %v7215, %v7214
      %v7275 = vpack.c.bf16 %v7217, %v7216
      %v7276 = vpack.c.bf16 %v7219, %v7218
      %v7277 = vpack.c.bf16 %v7221, %v7220
      %v7278 = vpack.c.bf16 %v7223, %v7222
      %v7279 = vpack.c.bf16 %v7225, %v7224
      %v7280 = vpack.c.bf16 %v7227, %v7226
      %v7281 = vpack.c.bf16 %v7229, %v7228
      %v7282 = vpack.c.bf16 %v7231, %v7230
      %v7283 = vpack.c.bf16 %v7233, %v7232
      %v7284 = vpack.c.bf16 %v7235, %v7234
      %v7285 = vpack.c.bf16 %v7237, %v7236
      %v7286 = vpack.c.bf16 %v7239, %v7238
      %v7287 = vpack.c.bf16 %v7241, %v7240
      %v7288 = vpack.c.bf16 %v7243, %v7242
      %v7289 = vpack.c.bf16 %v7245, %v7244
      %v7290 = vpack.c.bf16 %v7247, %v7246
      %v7291 = vpack.c.bf16 %v7249, %v7248
      %v7292 = vpack.c.bf16 %v7251, %v7250
      %v7293 = vpack.c.bf16 %v7253, %v7252
      %v7294 = vpack.c.bf16 %v7255, %v7254
      %v7295 = vpack.c.bf16 %v7257, %v7256
      %v7296 = vpack.c.bf16 %v7259, %v7258
      %v7297 = vpack.c.bf16 %v7261, %v7260
      %v7298 = vpack.c.bf16 %v7263, %v7262
      %v7299 = vpack.c.bf16 %v7265, %v7264
      %v7300 = vpack.c.bf16 %v7267, %v7266
      %v7301 = vpack.c.bf16 %v7269, %v7268
      %7302 = vst.msk [vmem:[#allocation2 + $0x60] sm:$0xff] %vm5371, %v7270
      %7303 = vst.msk [vmem:[#allocation2 + $0x68] sm:$0xff] %vm5371, %v7271
      %7304 = vst.msk [vmem:[#allocation2 + $0xf0] sm:$0xff] %vm5371, %v7272
      %7305 = vst.msk [vmem:[#allocation2 + $0xf8] sm:$0xff] %vm5371, %v7273
      %7306 = vst.msk [vmem:[#allocation2 + $0x180] sm:$0xff] %vm5371, %v7274
      %7307 = vst.msk [vmem:[#allocation2 + $0x188] sm:$0xff] %vm5371, %v7275
      %7308 = vst.msk [vmem:[#allocation2 + $0x210] sm:$0xff] %vm5371, %v7276
      %7309 = vst.msk [vmem:[#allocation2 + $0x218] sm:$0xff] %vm5371, %v7277
      %7310 = vst.msk [vmem:[#allocation2 + $0x2a0] sm:$0xff] %vm5371, %v7278
      %7311 = vst.msk [vmem:[#allocation2 + $0x2a8] sm:$0xff] %vm5371, %v7279
      %7312 = vst.msk [vmem:[#allocation2 + $0x330] sm:$0xff] %vm5371, %v7280
      %7313 = vst.msk [vmem:[#allocation2 + $0x338] sm:$0xff] %vm5371, %v7281
      %7314 = vst.msk [vmem:[#allocation2 + $0x3c0] sm:$0xff] %vm5371, %v7282
      %7315 = vst.msk [vmem:[#allocation2 + $0x3c8] sm:$0xff] %vm5371, %v7283
      %7316 = vst.msk [vmem:[#allocation2 + $0x450] sm:$0xff] %vm5371, %v7284
      %7317 = vst.msk [vmem:[#allocation2 + $0x458] sm:$0xff] %vm5371, %v7285
      %7318 = vst.msk [vmem:[#allocation2 + $0x4e0] sm:$0xff] %vm5371, %v7286
      %7319 = vst.msk [vmem:[#allocation2 + $0x4e8] sm:$0xff] %vm5371, %v7287
      %7320 = vst.msk [vmem:[#allocation2 + $0x570] sm:$0xff] %vm5371, %v7288
      %7321 = vst.msk [vmem:[#allocation2 + $0x578] sm:$0xff] %vm5371, %v7289
      %7322 = vst.msk [vmem:[#allocation2 + $0x600] sm:$0xff] %vm5371, %v7290
      %7323 = vst.msk [vmem:[#allocation2 + $0x608] sm:$0xff] %vm5371, %v7291
      %7324 = vst.msk [vmem:[#allocation2 + $0x690] sm:$0xff] %vm5371, %v7292
      %7325 = vst.msk [vmem:[#allocation2 + $0x698] sm:$0xff] %vm5371, %v7293
      %7326 = vst.msk [vmem:[#allocation2 + $0x720] sm:$0xff] %vm5371, %v7294
      %7327 = vst.msk [vmem:[#allocation2 + $0x728] sm:$0xff] %vm5371, %v7295
      %7328 = vst.msk [vmem:[#allocation2 + $0x7b0] sm:$0xff] %vm5371, %v7296
      %7329 = vst.msk [vmem:[#allocation2 + $0x7b8] sm:$0xff] %vm5371, %v7297
      %7330 = vst.msk [vmem:[#allocation2 + $0x840] sm:$0xff] %vm5371, %v7298
      %7331 = vst.msk [vmem:[#allocation2 + $0x848] sm:$0xff] %vm5371, %v7299
      %7332 = vst.msk [vmem:[#allocation2 + $0x8d0] sm:$0xff] %vm5371, %v7300
      %7333 = vst.msk [vmem:[#allocation2 + $0x8d8] sm:$0xff] %vm5371, %v7301
      %7334 = vrot.lane.b32.xlu0 %v5404, 99
      %v7335 = vpop.permute.xlu0 %7334
      %7336 = vrot.lane.b32.xlu0 %v5405, 99
      %v7337 = vpop.permute.xlu0 %7336
      %7338 = vrot.lane.b32.xlu0 %v5406, 99
      %v7339 = vpop.permute.xlu0 %7338
      %7340 = vrot.lane.b32.xlu0 %v5407, 99
      %v7341 = vpop.permute.xlu0 %7340
      %7342 = vrot.lane.b32.xlu0 %v5408, 99
      %v7343 = vpop.permute.xlu0 %7342
      %7344 = vrot.lane.b32.xlu0 %v5409, 99
      %v7345 = vpop.permute.xlu0 %7344
      %7346 = vrot.lane.b32.xlu0 %v5410, 99
      %v7347 = vpop.permute.xlu0 %7346
      %7348 = vrot.lane.b32.xlu0 %v5411, 99
      %v7349 = vpop.permute.xlu0 %7348
      %7350 = vrot.lane.b32.xlu0 %v5412, 99
      %v7351 = vpop.permute.xlu0 %7350
      %7352 = vrot.lane.b32.xlu0 %v5413, 99
      %v7353 = vpop.permute.xlu0 %7352
      %7354 = vrot.lane.b32.xlu0 %v5414, 99
      %v7355 = vpop.permute.xlu0 %7354
      %7356 = vrot.lane.b32.xlu0 %v5415, 99
      %v7357 = vpop.permute.xlu0 %7356
      %7358 = vrot.lane.b32.xlu0 %v5416, 99
      %v7359 = vpop.permute.xlu0 %7358
      %7360 = vrot.lane.b32.xlu0 %v5417, 99
      %v7361 = vpop.permute.xlu0 %7360
      %7362 = vrot.lane.b32.xlu0 %v5418, 99
      %v7363 = vpop.permute.xlu0 %7362
      %7364 = vrot.lane.b32.xlu0 %v5419, 99
      %v7365 = vpop.permute.xlu0 %7364
      %7366 = vrot.lane.b32.xlu0 %v5420, 99
      %v7367 = vpop.permute.xlu0 %7366
      %7368 = vrot.lane.b32.xlu0 %v5421, 99
      %v7369 = vpop.permute.xlu0 %7368
      %7370 = vrot.lane.b32.xlu0 %v5422, 99
      %v7371 = vpop.permute.xlu0 %7370
      %7372 = vrot.lane.b32.xlu0 %v5423, 99
      %v7373 = vpop.permute.xlu0 %7372
      %7374 = vrot.lane.b32.xlu0 %v5424, 99
      %v7375 = vpop.permute.xlu0 %7374
      %7376 = vrot.lane.b32.xlu0 %v5425, 99
      %v7377 = vpop.permute.xlu0 %7376
      %7378 = vrot.lane.b32.xlu0 %v5426, 99
      %v7379 = vpop.permute.xlu0 %7378
      %7380 = vrot.lane.b32.xlu0 %v5427, 99
      %v7381 = vpop.permute.xlu0 %7380
      %7382 = vrot.lane.b32.xlu0 %v5428, 99
      %v7383 = vpop.permute.xlu0 %7382
      %7384 = vrot.lane.b32.xlu0 %v5429, 99
      %v7385 = vpop.permute.xlu0 %7384
      %7386 = vrot.lane.b32.xlu0 %v5430, 99
      %v7387 = vpop.permute.xlu0 %7386
      %7388 = vrot.lane.b32.xlu0 %v5431, 99
      %v7389 = vpop.permute.xlu0 %7388
      %7390 = vrot.lane.b32.xlu0 %v5432, 99
      %v7391 = vpop.permute.xlu0 %7390
      %7392 = vrot.lane.b32.xlu0 %v5433, 99
      %v7393 = vpop.permute.xlu0 %7392
      %7394 = vrot.lane.b32.xlu0 %v5434, 99
      %v7395 = vpop.permute.xlu0 %7394
      %7396 = vrot.lane.b32.xlu0 %v5435, 99
      %v7397 = vpop.permute.xlu0 %7396
      %v7398 = vrot.slane %v7335, 4
      %v7399 = vrot.slane %v7337, 4
      %v7400 = vrot.slane %v7339, 4
      %v7401 = vrot.slane %v7341, 4
      %v7402 = vrot.slane %v7343, 4
      %v7403 = vrot.slane %v7345, 4
      %v7404 = vrot.slane %v7347, 4
      %v7405 = vrot.slane %v7349, 4
      %v7406 = vrot.slane %v7351, 4
      %v7407 = vrot.slane %v7353, 4
      %v7408 = vrot.slane %v7355, 4
      %v7409 = vrot.slane %v7357, 4
      %v7410 = vrot.slane %v7359, 4
      %v7411 = vrot.slane %v7361, 4
      %v7412 = vrot.slane %v7363, 4
      %v7413 = vrot.slane %v7365, 4
      %v7414 = vrot.slane %v7367, 4
      %v7415 = vrot.slane %v7369, 4
      %v7416 = vrot.slane %v7371, 4
      %v7417 = vrot.slane %v7373, 4
      %v7418 = vrot.slane %v7375, 4
      %v7419 = vrot.slane %v7377, 4
      %v7420 = vrot.slane %v7379, 4
      %v7421 = vrot.slane %v7381, 4
      %v7422 = vrot.slane %v7383, 4
      %v7423 = vrot.slane %v7385, 4
      %v7424 = vrot.slane %v7387, 4
      %v7425 = vrot.slane %v7389, 4
      %v7426 = vrot.slane %v7391, 4
      %v7427 = vrot.slane %v7393, 4
      %v7428 = vrot.slane %v7395, 4
      %v7429 = vrot.slane %v7397, 4
      %vm7430 = vcmask 809984
      %v7431 = vsel %vm7430, %v7335, %v7398
      %v7432 = vsel %vm7430, %v7337, %v7399
      %v7433 = vsel %vm7430, %v7339, %v7400
      %v7434 = vsel %vm7430, %v7341, %v7401
      %v7435 = vsel %vm7430, %v7343, %v7402
      %v7436 = vsel %vm7430, %v7345, %v7403
      %v7437 = vsel %vm7430, %v7347, %v7404
      %v7438 = vsel %vm7430, %v7349, %v7405
      %v7439 = vsel %vm7430, %v7351, %v7406
      %v7440 = vsel %vm7430, %v7353, %v7407
      %v7441 = vsel %vm7430, %v7355, %v7408
      %v7442 = vsel %vm7430, %v7357, %v7409
      %v7443 = vsel %vm7430, %v7359, %v7410
      %v7444 = vsel %vm7430, %v7361, %v7411
      %v7445 = vsel %vm7430, %v7363, %v7412
      %v7446 = vsel %vm7430, %v7365, %v7413
      %v7447 = vsel %vm7430, %v7367, %v7414
      %v7448 = vsel %vm7430, %v7369, %v7415
      %v7449 = vsel %vm7430, %v7371, %v7416
      %v7450 = vsel %vm7430, %v7373, %v7417
      %v7451 = vsel %vm7430, %v7375, %v7418
      %v7452 = vsel %vm7430, %v7377, %v7419
      %v7453 = vsel %vm7430, %v7379, %v7420
      %v7454 = vsel %vm7430, %v7381, %v7421
      %v7455 = vsel %vm7430, %v7383, %v7422
      %v7456 = vsel %vm7430, %v7385, %v7423
      %v7457 = vsel %vm7430, %v7387, %v7424
      %v7458 = vsel %vm7430, %v7389, %v7425
      %v7459 = vsel %vm7430, %v7391, %v7426
      %v7460 = vsel %vm7430, %v7393, %v7427
      %v7461 = vsel %vm7430, %v7395, %v7428
      %v7462 = vsel %vm7430, %v7397, %v7429
      %7495 = vst.msk [vmem:[#allocation2 + $0x70] sm:$0xff] %vm5371, %v7431
      %7496 = vst.msk [vmem:[#allocation2 + $0x78] sm:$0xff] %vm5371, %v7432
      %7497 = vst.msk [vmem:[#allocation2 + $0x100] sm:$0xff] %vm5371, %v7433
      %7498 = vst.msk [vmem:[#allocation2 + $0x108] sm:$0xff] %vm5371, %v7434
      %7499 = vst.msk [vmem:[#allocation2 + $0x190] sm:$0xff] %vm5371, %v7435
      %7500 = vst.msk [vmem:[#allocation2 + $0x198] sm:$0xff] %vm5371, %v7436
      %7501 = vst.msk [vmem:[#allocation2 + $0x220] sm:$0xff] %vm5371, %v7437
      %7502 = vst.msk [vmem:[#allocation2 + $0x228] sm:$0xff] %vm5371, %v7438
      %7503 = vst.msk [vmem:[#allocation2 + $0x2b0] sm:$0xff] %vm5371, %v7439
      %7504 = vst.msk [vmem:[#allocation2 + $0x2b8] sm:$0xff] %vm5371, %v7440
      %7505 = vst.msk [vmem:[#allocation2 + $0x340] sm:$0xff] %vm5371, %v7441
      %7506 = vst.msk [vmem:[#allocation2 + $0x348] sm:$0xff] %vm5371, %v7442
      %7507 = vst.msk [vmem:[#allocation2 + $0x3d0] sm:$0xff] %vm5371, %v7443
      %7508 = vst.msk [vmem:[#allocation2 + $0x3d8] sm:$0xff] %vm5371, %v7444
      %7509 = vst.msk [vmem:[#allocation2 + $0x460] sm:$0xff] %vm5371, %v7445
      %7510 = vst.msk [vmem:[#allocation2 + $0x468] sm:$0xff] %vm5371, %v7446
      %7511 = vst.msk [vmem:[#allocation2 + $0x4f0] sm:$0xff] %vm5371, %v7447
      %7512 = vst.msk [vmem:[#allocation2 + $0x4f8] sm:$0xff] %vm5371, %v7448
      %7513 = vst.msk [vmem:[#allocation2 + $0x580] sm:$0xff] %vm5371, %v7449
      %7514 = vst.msk [vmem:[#allocation2 + $0x588] sm:$0xff] %vm5371, %v7450
      %7515 = vst.msk [vmem:[#allocation2 + $0x610] sm:$0xff] %vm5371, %v7451
      %7516 = vst.msk [vmem:[#allocation2 + $0x618] sm:$0xff] %vm5371, %v7452
      %7517 = vst.msk [vmem:[#allocation2 + $0x6a0] sm:$0xff] %vm5371, %v7453
      %7518 = vst.msk [vmem:[#allocation2 + $0x6a8] sm:$0xff] %vm5371, %v7454
      %7519 = vst.msk [vmem:[#allocation2 + $0x730] sm:$0xff] %vm5371, %v7455
      %7520 = vst.msk [vmem:[#allocation2 + $0x738] sm:$0xff] %vm5371, %v7456
      %7521 = vst.msk [vmem:[#allocation2 + $0x7c0] sm:$0xff] %vm5371, %v7457
      %7522 = vst.msk [vmem:[#allocation2 + $0x7c8] sm:$0xff] %vm5371, %v7458
      %7523 = vst.msk [vmem:[#allocation2 + $0x850] sm:$0xff] %vm5371, %v7459
      %7524 = vst.msk [vmem:[#allocation2 + $0x858] sm:$0xff] %vm5371, %v7460
      %7525 = vst.msk [vmem:[#allocation2 + $0x8e0] sm:$0xff] %vm5371, %v7461
      %7526 = vst.msk [vmem:[#allocation2 + $0x8e8] sm:$0xff] %vm5371, %v7462
      %7527 = vrot.lane.b32.xlu0 %v5123, 98
      %v7528 = vpop.permute.xlu0 %7527
      %7529 = vrot.lane.b32.xlu0 %v5156, 98
      %v7530 = vpop.permute.xlu0 %7529
      %7531 = vrot.lane.b32.xlu0 %v5124, 98
      %v7532 = vpop.permute.xlu0 %7531
      %7533 = vrot.lane.b32.xlu0 %v5157, 98
      %v7534 = vpop.permute.xlu0 %7533
      %7535 = vrot.lane.b32.xlu0 %v5125, 98
      %v7536 = vpop.permute.xlu0 %7535
      %7537 = vrot.lane.b32.xlu0 %v5158, 98
      %v7538 = vpop.permute.xlu0 %7537
      %7539 = vrot.lane.b32.xlu0 %v5126, 98
      %v7540 = vpop.permute.xlu0 %7539
      %7541 = vrot.lane.b32.xlu0 %v5159, 98
      %v7542 = vpop.permute.xlu0 %7541
      %7543 = vrot.lane.b32.xlu0 %v5127, 98
      %v7544 = vpop.permute.xlu0 %7543
      %7545 = vrot.lane.b32.xlu0 %v5160, 98
      %v7546 = vpop.permute.xlu0 %7545
      %7547 = vrot.lane.b32.xlu0 %v5128, 98
      %v7548 = vpop.permute.xlu0 %7547
      %7549 = vrot.lane.b32.xlu0 %v5161, 98
      %v7550 = vpop.permute.xlu0 %7549
      %7551 = vrot.lane.b32.xlu0 %v5129, 98
      %v7552 = vpop.permute.xlu0 %7551
      %7553 = vrot.lane.b32.xlu0 %v5162, 98
      %v7554 = vpop.permute.xlu0 %7553
      %7555 = vrot.lane.b32.xlu0 %v5130, 98
      %v7556 = vpop.permute.xlu0 %7555
      %7557 = vrot.lane.b32.xlu0 %v5163, 98
      %v7558 = vpop.permute.xlu0 %7557
      %7559 = vrot.lane.b32.xlu0 %v5131, 98
      %v7560 = vpop.permute.xlu0 %7559
      %7561 = vrot.lane.b32.xlu0 %v5164, 98
      %v7562 = vpop.permute.xlu0 %7561
      %7563 = vrot.lane.b32.xlu0 %v5132, 98
      %v7564 = vpop.permute.xlu0 %7563
      %7565 = vrot.lane.b32.xlu0 %v5165, 98
      %v7566 = vpop.permute.xlu0 %7565
      %7567 = vrot.lane.b32.xlu0 %v5133, 98
      %v7568 = vpop.permute.xlu0 %7567
      %7569 = vrot.lane.b32.xlu0 %v5166, 98
      %v7570 = vpop.permute.xlu0 %7569
      %7571 = vrot.lane.b32.xlu0 %v5134, 98
      %v7572 = vpop.permute.xlu0 %7571
      %7573 = vrot.lane.b32.xlu0 %v5167, 98
      %v7574 = vpop.permute.xlu0 %7573
      %7575 = vrot.lane.b32.xlu0 %v5135, 98
      %v7576 = vpop.permute.xlu0 %7575
      %7577 = vrot.lane.b32.xlu0 %v5168, 98
      %v7578 = vpop.permute.xlu0 %7577
      %7579 = vrot.lane.b32.xlu0 %v5136, 98
      %v7580 = vpop.permute.xlu0 %7579
      %7581 = vrot.lane.b32.xlu0 %v5169, 98
      %v7582 = vpop.permute.xlu0 %7581
      %7583 = vrot.lane.b32.xlu0 %v5137, 98
      %v7584 = vpop.permute.xlu0 %7583
      %7585 = vrot.lane.b32.xlu0 %v5170, 98
      %v7586 = vpop.permute.xlu0 %7585
      %7587 = vrot.lane.b32.xlu0 %v5138, 98
      %v7588 = vpop.permute.xlu0 %7587
      %7589 = vrot.lane.b32.xlu0 %v5171, 98
      %v7590 = vpop.permute.xlu0 %7589
      %7591 = vrot.lane.b32.xlu0 %v5139, 98
      %v7592 = vpop.permute.xlu0 %7591
      %7593 = vrot.lane.b32.xlu0 %v5172, 98
      %v7594 = vpop.permute.xlu0 %7593
      %7595 = vrot.lane.b32.xlu0 %v5140, 98
      %v7596 = vpop.permute.xlu0 %7595
      %7597 = vrot.lane.b32.xlu0 %v5173, 98
      %v7598 = vpop.permute.xlu0 %7597
      %7599 = vrot.lane.b32.xlu0 %v5141, 98
      %v7600 = vpop.permute.xlu0 %7599
      %7601 = vrot.lane.b32.xlu0 %v5174, 98
      %v7602 = vpop.permute.xlu0 %7601
      %7603 = vrot.lane.b32.xlu0 %v5142, 98
      %v7604 = vpop.permute.xlu0 %7603
      %7605 = vrot.lane.b32.xlu0 %v5175, 98
      %v7606 = vpop.permute.xlu0 %7605
      %7607 = vrot.lane.b32.xlu0 %v5143, 98
      %v7608 = vpop.permute.xlu0 %7607
      %7609 = vrot.lane.b32.xlu0 %v5176, 98
      %v7610 = vpop.permute.xlu0 %7609
      %7611 = vrot.lane.b32.xlu0 %v5144, 98
      %v7612 = vpop.permute.xlu0 %7611
      %7613 = vrot.lane.b32.xlu0 %v5177, 98
      %v7614 = vpop.permute.xlu0 %7613
      %7615 = vrot.lane.b32.xlu0 %v5145, 98
      %v7616 = vpop.permute.xlu0 %7615
      %7617 = vrot.lane.b32.xlu0 %v5178, 98
      %v7618 = vpop.permute.xlu0 %7617
      %7619 = vrot.lane.b32.xlu0 %v5146, 98
      %v7620 = vpop.permute.xlu0 %7619
      %7621 = vrot.lane.b32.xlu0 %v5179, 98
      %v7622 = vpop.permute.xlu0 %7621
      %7623 = vrot.lane.b32.xlu0 %v5147, 98
      %v7624 = vpop.permute.xlu0 %7623
      %7625 = vrot.lane.b32.xlu0 %v5180, 98
      %v7626 = vpop.permute.xlu0 %7625
      %7627 = vrot.lane.b32.xlu0 %v5148, 98
      %v7628 = vpop.permute.xlu0 %7627
      %7629 = vrot.lane.b32.xlu0 %v5181, 98
      %v7630 = vpop.permute.xlu0 %7629
      %7631 = vrot.lane.b32.xlu0 %v5149, 98
      %v7632 = vpop.permute.xlu0 %7631
      %7633 = vrot.lane.b32.xlu0 %v5182, 98
      %v7634 = vpop.permute.xlu0 %7633
      %7635 = vrot.lane.b32.xlu0 %v5150, 98
      %v7636 = vpop.permute.xlu0 %7635
      %7637 = vrot.lane.b32.xlu0 %v5183, 98
      %v7638 = vpop.permute.xlu0 %7637
      %7639 = vrot.lane.b32.xlu0 %v5151, 98
      %v7640 = vpop.permute.xlu0 %7639
      %7641 = vrot.lane.b32.xlu0 %v5184, 98
      %v7642 = vpop.permute.xlu0 %7641
      %7643 = vrot.lane.b32.xlu0 %v5152, 98
      %v7644 = vpop.permute.xlu0 %7643
      %7645 = vrot.lane.b32.xlu0 %v5185, 98
      %v7646 = vpop.permute.xlu0 %7645
      %7647 = vrot.lane.b32.xlu0 %v5153, 98
      %v7648 = vpop.permute.xlu0 %7647
      %7649 = vrot.lane.b32.xlu0 %v5186, 98
      %v7650 = vpop.permute.xlu0 %7649
      %7651 = vrot.lane.b32.xlu0 %v5154, 98
      %v7652 = vpop.permute.xlu0 %7651
      %7653 = vrot.lane.b32.xlu0 %v5187, 98
      %v7654 = vpop.permute.xlu0 %7653
      %vm7655 = vcmask 801792
      %v7656 = vsel %vm7655, %v7528, %v7530
      %v7657 = vsel %vm7655, %v7532, %v7534
      %v7658 = vsel %vm7655, %v7536, %v7538
      %v7659 = vsel %vm7655, %v7540, %v7542
      %v7660 = vsel %vm7655, %v7544, %v7546
      %v7661 = vsel %vm7655, %v7548, %v7550
      %v7662 = vsel %vm7655, %v7552, %v7554
      %v7663 = vsel %vm7655, %v7556, %v7558
      %v7664 = vsel %vm7655, %v7560, %v7562
      %v7665 = vsel %vm7655, %v7564, %v7566
      %v7666 = vsel %vm7655, %v7568, %v7570
      %v7667 = vsel %vm7655, %v7572, %v7574
      %v7668 = vsel %vm7655, %v7576, %v7578
      %v7669 = vsel %vm7655, %v7580, %v7582
      %v7670 = vsel %vm7655, %v7584, %v7586
      %v7671 = vsel %vm7655, %v7588, %v7590
      %v7672 = vsel %vm7655, %v7592, %v7594
      %v7673 = vsel %vm7655, %v7596, %v7598
      %v7674 = vsel %vm7655, %v7600, %v7602
      %v7675 = vsel %vm7655, %v7604, %v7606
      %v7676 = vsel %vm7655, %v7608, %v7610
      %v7677 = vsel %vm7655, %v7612, %v7614
      %v7678 = vsel %vm7655, %v7616, %v7618
      %v7679 = vsel %vm7655, %v7620, %v7622
      %v7680 = vsel %vm7655, %v7624, %v7626
      %v7681 = vsel %vm7655, %v7628, %v7630
      %v7682 = vsel %vm7655, %v7632, %v7634
      %v7683 = vsel %vm7655, %v7636, %v7638
      %v7684 = vsel %vm7655, %v7640, %v7642
      %v7685 = vsel %vm7655, %v7644, %v7646
      %v7686 = vsel %vm7655, %v7648, %v7650
      %v7687 = vsel %vm7655, %v7652, %v7654
      %v7752 = vsel %vm5663, %v7656, 0.0
      %v7753 = vsel %vm5664, %v7530, 0.0
      %v7754 = vsel %vm5663, %v7657, 0.0
      %v7755 = vsel %vm5664, %v7534, 0.0
      %v7756 = vsel %vm5663, %v7658, 0.0
      %v7757 = vsel %vm5664, %v7538, 0.0
      %v7758 = vsel %vm5663, %v7659, 0.0
      %v7759 = vsel %vm5664, %v7542, 0.0
      %v7760 = vsel %vm5663, %v7660, 0.0
      %v7761 = vsel %vm5664, %v7546, 0.0
      %v7762 = vsel %vm5663, %v7661, 0.0
      %v7763 = vsel %vm5664, %v7550, 0.0
      %v7764 = vsel %vm5663, %v7662, 0.0
      %v7765 = vsel %vm5664, %v7554, 0.0
      %v7766 = vsel %vm5663, %v7663, 0.0
      %v7767 = vsel %vm5664, %v7558, 0.0
      %v7768 = vsel %vm5663, %v7664, 0.0
      %v7769 = vsel %vm5664, %v7562, 0.0
      %v7770 = vsel %vm5663, %v7665, 0.0
      %v7771 = vsel %vm5664, %v7566, 0.0
      %v7772 = vsel %vm5663, %v7666, 0.0
      %v7773 = vsel %vm5664, %v7570, 0.0
      %v7774 = vsel %vm5663, %v7667, 0.0
      %v7775 = vsel %vm5664, %v7574, 0.0
      %v7776 = vsel %vm5663, %v7668, 0.0
      %v7777 = vsel %vm5664, %v7578, 0.0
      %v7778 = vsel %vm5663, %v7669, 0.0
      %v7779 = vsel %vm5664, %v7582, 0.0
      %v7780 = vsel %vm5663, %v7670, 0.0
      %v7781 = vsel %vm5664, %v7586, 0.0
      %v7782 = vsel %vm5663, %v7671, 0.0
      %v7783 = vsel %vm5664, %v7590, 0.0
      %v7784 = vsel %vm5663, %v7672, 0.0
      %v7785 = vsel %vm5664, %v7594, 0.0
      %v7786 = vsel %vm5663, %v7673, 0.0
      %v7787 = vsel %vm5664, %v7598, 0.0
      %v7788 = vsel %vm5663, %v7674, 0.0
      %v7789 = vsel %vm5664, %v7602, 0.0
      %v7790 = vsel %vm5663, %v7675, 0.0
      %v7791 = vsel %vm5664, %v7606, 0.0
      %v7792 = vsel %vm5663, %v7676, 0.0
      %v7793 = vsel %vm5664, %v7610, 0.0
      %v7794 = vsel %vm5663, %v7677, 0.0
      %v7795 = vsel %vm5664, %v7614, 0.0
      %v7796 = vsel %vm5663, %v7678, 0.0
      %v7797 = vsel %vm5664, %v7618, 0.0
      %v7798 = vsel %vm5663, %v7679, 0.0
      %v7799 = vsel %vm5664, %v7622, 0.0
      %v7800 = vsel %vm5663, %v7680, 0.0
      %v7801 = vsel %vm5664, %v7626, 0.0
      %v7802 = vsel %vm5663, %v7681, 0.0
      %v7803 = vsel %vm5664, %v7630, 0.0
      %v7804 = vsel %vm5663, %v7682, 0.0
      %v7805 = vsel %vm5664, %v7634, 0.0
      %v7806 = vsel %vm5663, %v7683, 0.0
      %v7807 = vsel %vm5664, %v7638, 0.0
      %v7808 = vsel %vm5663, %v7684, 0.0
      %v7809 = vsel %vm5664, %v7642, 0.0
      %v7810 = vsel %vm5663, %v7685, 0.0
      %v7811 = vsel %vm5664, %v7646, 0.0
      %v7812 = vsel %vm5663, %v7686, 0.0
      %v7813 = vsel %vm5664, %v7650, 0.0
      %v7814 = vsel %vm5663, %v7687, 0.0
      %v7815 = vsel %vm5664, %v7654, 0.0
      %v7816 = vpack.c.bf16 %v7753, %v7752
      %v7817 = vpack.c.bf16 %v7755, %v7754
      %v7818 = vpack.c.bf16 %v7757, %v7756
      %v7819 = vpack.c.bf16 %v7759, %v7758
      %v7820 = vpack.c.bf16 %v7761, %v7760
      %v7821 = vpack.c.bf16 %v7763, %v7762
      %v7822 = vpack.c.bf16 %v7765, %v7764
      %v7823 = vpack.c.bf16 %v7767, %v7766
      %v7824 = vpack.c.bf16 %v7769, %v7768
      %v7825 = vpack.c.bf16 %v7771, %v7770
      %v7826 = vpack.c.bf16 %v7773, %v7772
      %v7827 = vpack.c.bf16 %v7775, %v7774
      %v7828 = vpack.c.bf16 %v7777, %v7776
      %v7829 = vpack.c.bf16 %v7779, %v7778
      %v7830 = vpack.c.bf16 %v7781, %v7780
      %v7831 = vpack.c.bf16 %v7783, %v7782
      %v7832 = vpack.c.bf16 %v7785, %v7784
      %v7833 = vpack.c.bf16 %v7787, %v7786
      %v7834 = vpack.c.bf16 %v7789, %v7788
      %v7835 = vpack.c.bf16 %v7791, %v7790
      %v7836 = vpack.c.bf16 %v7793, %v7792
      %v7837 = vpack.c.bf16 %v7795, %v7794
      %v7838 = vpack.c.bf16 %v7797, %v7796
      %v7839 = vpack.c.bf16 %v7799, %v7798
      %v7840 = vpack.c.bf16 %v7801, %v7800
      %v7841 = vpack.c.bf16 %v7803, %v7802
      %v7842 = vpack.c.bf16 %v7805, %v7804
      %v7843 = vpack.c.bf16 %v7807, %v7806
      %v7844 = vpack.c.bf16 %v7809, %v7808
      %v7845 = vpack.c.bf16 %v7811, %v7810
      %v7846 = vpack.c.bf16 %v7813, %v7812
      %v7847 = vpack.c.bf16 %v7815, %v7814
      %7848 = vst.msk [vmem:[#allocation2 + $0x80] sm:$0xff] %vm5371, %v7816
      %7849 = vst.msk [vmem:[#allocation2 + $0x88] sm:$0xff] %vm5371, %v7817
      %7850 = vst.msk [vmem:[#allocation2 + $0x110] sm:$0xff] %vm5371, %v7818
      %7851 = vst.msk [vmem:[#allocation2 + $0x118] sm:$0xff] %vm5371, %v7819
      %7852 = vst.msk [vmem:[#allocation2 + $0x1a0] sm:$0xff] %vm5371, %v7820
      %7853 = vst.msk [vmem:[#allocation2 + $0x1a8] sm:$0xff] %vm5371, %v7821
      %7854 = vst.msk [vmem:[#allocation2 + $0x230] sm:$0xff] %vm5371, %v7822
      %7855 = vst.msk [vmem:[#allocation2 + $0x238] sm:$0xff] %vm5371, %v7823
      %7856 = vst.msk [vmem:[#allocation2 + $0x2c0] sm:$0xff] %vm5371, %v7824
      %7857 = vst.msk [vmem:[#allocation2 + $0x2c8] sm:$0xff] %vm5371, %v7825
      %7858 = vst.msk [vmem:[#allocation2 + $0x350] sm:$0xff] %vm5371, %v7826
      %7859 = vst.msk [vmem:[#allocation2 + $0x358] sm:$0xff] %vm5371, %v7827
      %7860 = vst.msk [vmem:[#allocation2 + $0x3e0] sm:$0xff] %vm5371, %v7828
      %7861 = vst.msk [vmem:[#allocation2 + $0x3e8] sm:$0xff] %vm5371, %v7829
      %7862 = vst.msk [vmem:[#allocation2 + $0x470] sm:$0xff] %vm5371, %v7830
      %7863 = vst.msk [vmem:[#allocation2 + $0x478] sm:$0xff] %vm5371, %v7831
      %7864 = vst.msk [vmem:[#allocation2 + $0x500] sm:$0xff] %vm5371, %v7832
      %7865 = vst.msk [vmem:[#allocation2 + $0x508] sm:$0xff] %vm5371, %v7833
      %7866 = vst.msk [vmem:[#allocation2 + $0x590] sm:$0xff] %vm5371, %v7834
      %7867 = vst.msk [vmem:[#allocation2 + $0x598] sm:$0xff] %vm5371, %v7835
      %7868 = vst.msk [vmem:[#allocation2 + $0x620] sm:$0xff] %vm5371, %v7836
      %7869 = vst.msk [vmem:[#allocation2 + $0x628] sm:$0xff] %vm5371, %v7837
      %7870 = vst.msk [vmem:[#allocation2 + $0x6b0] sm:$0xff] %vm5371, %v7838
      %7871 = vst.msk [vmem:[#allocation2 + $0x6b8] sm:$0xff] %vm5371, %v7839
      %7872 = vst.msk [vmem:[#allocation2 + $0x740] sm:$0xff] %vm5371, %v7840
      %7873 = vst.msk [vmem:[#allocation2 + $0x748] sm:$0xff] %vm5371, %v7841
      %7874 = vst.msk [vmem:[#allocation2 + $0x7d0] sm:$0xff] %vm5371, %v7842
      %7875 = vst.msk [vmem:[#allocation2 + $0x7d8] sm:$0xff] %vm5371, %v7843
      %7876 = vst.msk [vmem:[#allocation2 + $0x860] sm:$0xff] %vm5371, %v7844
      %7877 = vst.msk [vmem:[#allocation2 + $0x868] sm:$0xff] %vm5371, %v7845
      %7878 = vst.msk [vmem:[#allocation2 + $0x8f0] sm:$0xff] %vm5371, %v7846
      %7879 = vst.msk [vmem:[#allocation2 + $0x8f8] sm:$0xff] %vm5371, %v7847
      %v7880 = vld [vmem:[%s379] sm:$0xff]
      %v7881 = vld [vmem:[%s379 + $0x8] sm:$0xff]
      %v7882 = vld [vmem:[%s379 + $0x10] sm:$0xff]
      %v7883 = vld [vmem:[%s379 + $0x18] sm:$0xff]
      %v7884 = vld [vmem:[%s379 + $0x20] sm:$0xff]
      %v7885 = vld [vmem:[%s379 + $0x28] sm:$0xff]
      %v7886 = vld [vmem:[%s379 + $0x30] sm:$0xff]
      %v7887 = vld [vmem:[%s379 + $0x38] sm:$0xff]
      %v7888 = vld [vmem:[%s379 + $0x40] sm:$0xff]
      %v7889 = vld [vmem:[%s379 + $0x48] sm:$0xff]
      %v7890 = vld [vmem:[%s379 + $0x50] sm:$0xff]
      %v7891 = vld [vmem:[%s379 + $0x58] sm:$0xff]
      %v7892 = vld [vmem:[%s379 + $0x60] sm:$0xff]
      %v7893 = vld [vmem:[%s379 + $0x68] sm:$0xff]
      %v7894 = vld [vmem:[%s379 + $0x70] sm:$0xff]
      %v7895 = vld [vmem:[%s379 + $0x78] sm:$0xff]
      %v7896 = vld [vmem:[%s379 + $0x80] sm:$0xff]
      %v7897 = vld [vmem:[%s379 + $0x88] sm:$0xff]
      %v7898 = vld [vmem:[%s379 + $0x90] sm:$0xff]
      %v7899 = vld [vmem:[%s379 + $0x98] sm:$0xff]
      %v7900 = vld [vmem:[%s379 + $0xa0] sm:$0xff]
      %v7901 = vld [vmem:[%s379 + $0xa8] sm:$0xff]
      %v7902 = vld [vmem:[%s379 + $0xb0] sm:$0xff]
      %v7903 = vld [vmem:[%s379 + $0xb8] sm:$0xff]
      %v7904 = vld [vmem:[%s379 + $0xc0] sm:$0xff]
      %v7905 = vld [vmem:[%s379 + $0xc8] sm:$0xff]
      %v7906 = vld [vmem:[%s379 + $0xd0] sm:$0xff]
      %v7907 = vld [vmem:[%s379 + $0xd8] sm:$0xff]
      %v7908 = vld [vmem:[%s379 + $0xe0] sm:$0xff]
      %v7909 = vld [vmem:[%s379 + $0xe8] sm:$0xff]
      %v7910 = vld [vmem:[%s379 + $0xf0] sm:$0xff]
      %v7911 = vld [vmem:[%s379 + $0xf8] sm:$0xff]
      %v7912 = vld [vmem:[#allocation2] sm:$0xff]
      %v7913 = vld [vmem:[#allocation2 + $0x8] sm:$0xff]
      %v7914 = vld [vmem:[#allocation2 + $0x10] sm:$0xff]
      %v7915 = vld [vmem:[#allocation2 + $0x18] sm:$0xff]
      %v7916 = vld [vmem:[#allocation2 + $0x20] sm:$0xff]
      %v7917 = vld [vmem:[#allocation2 + $0x28] sm:$0xff]
      %v7918 = vld [vmem:[#allocation2 + $0x30] sm:$0xff]
      %v7919 = vld [vmem:[#allocation2 + $0x38] sm:$0xff]
      %v7920 = vld [vmem:[#allocation2 + $0x40] sm:$0xff]
      %v7921 = vld [vmem:[#allocation2 + $0x48] sm:$0xff]
      %v7922 = vld [vmem:[#allocation2 + $0x50] sm:$0xff]
      %v7923 = vld [vmem:[#allocation2 + $0x58] sm:$0xff]
      %v7924 = vld [vmem:[#allocation2 + $0x60] sm:$0xff]
      %v7925 = vld [vmem:[#allocation2 + $0x68] sm:$0xff]
      %v7926 = vld [vmem:[#allocation2 + $0x70] sm:$0xff]
      %v7927 = vld [vmem:[#allocation2 + $0x78] sm:$0xff]
      %v7928 = vld [vmem:[#allocation2 + $0x80] sm:$0xff]
      %v7929 = vld [vmem:[#allocation2 + $0x88] sm:$0xff]
      %v7930 = vld [vmem:[#allocation2 + $0x90] sm:$0xff]
      %v7931 = vld [vmem:[#allocation2 + $0x98] sm:$0xff]
      %v7932 = vld [vmem:[#allocation2 + $0xa0] sm:$0xff]
      %v7933 = vld [vmem:[#allocation2 + $0xa8] sm:$0xff]
      %v7934 = vld [vmem:[#allocation2 + $0xb0] sm:$0xff]
      %v7935 = vld [vmem:[#allocation2 + $0xb8] sm:$0xff]
      %v7936 = vld [vmem:[#allocation2 + $0xc0] sm:$0xff]
      %v7937 = vld [vmem:[#allocation2 + $0xc8] sm:$0xff]
      %v7938 = vld [vmem:[#allocation2 + $0xd0] sm:$0xff]
      %v7939 = vld [vmem:[#allocation2 + $0xd8] sm:$0xff]
      %v7940 = vld [vmem:[#allocation2 + $0xe0] sm:$0xff]
      %v7941 = vld [vmem:[#allocation2 + $0xe8] sm:$0xff]
      %v7942 = vld [vmem:[#allocation2 + $0xf0] sm:$0xff]
      %v7943 = vld [vmem:[#allocation2 + $0xf8] sm:$0xff]
      %v7944 = vld [vmem:[#allocation2 + $0x100] sm:$0xff]
      %v7945 = vld [vmem:[#allocation2 + $0x108] sm:$0xff]
      %v7946 = vld [vmem:[#allocation2 + $0x110] sm:$0xff]
      %v7947 = vld [vmem:[#allocation2 + $0x118] sm:$0xff]
      %v7948 = vld [vmem:[#allocation2 + $0x120] sm:$0xff]
      %v7949 = vld [vmem:[#allocation2 + $0x128] sm:$0xff]
      %v7950 = vld [vmem:[#allocation2 + $0x130] sm:$0xff]
      %v7951 = vld [vmem:[#allocation2 + $0x138] sm:$0xff]
      %v7952 = vld [vmem:[#allocation2 + $0x140] sm:$0xff]
      %v7953 = vld [vmem:[#allocation2 + $0x148] sm:$0xff]
      %v7954 = vld [vmem:[#allocation2 + $0x150] sm:$0xff]
      %v7955 = vld [vmem:[#allocation2 + $0x158] sm:$0xff]
      %v7956 = vld [vmem:[#allocation2 + $0x160] sm:$0xff]
      %v7957 = vld [vmem:[#allocation2 + $0x168] sm:$0xff]
      %v7958 = vld [vmem:[#allocation2 + $0x170] sm:$0xff]
      %v7959 = vld [vmem:[#allocation2 + $0x178] sm:$0xff]
      %v7960 = vld [vmem:[#allocation2 + $0x180] sm:$0xff]
      %v7961 = vld [vmem:[#allocation2 + $0x188] sm:$0xff]
      %v7962 = vld [vmem:[#allocation2 + $0x190] sm:$0xff]
      %v7963 = vld [vmem:[#allocation2 + $0x198] sm:$0xff]
      %v7964 = vld [vmem:[#allocation2 + $0x1a0] sm:$0xff]
      %v7965 = vld [vmem:[#allocation2 + $0x1a8] sm:$0xff]
      %v7966 = vld [vmem:[#allocation2 + $0x1b0] sm:$0xff]
      %v7967 = vld [vmem:[#allocation2 + $0x1b8] sm:$0xff]
      %v7968 = vld [vmem:[#allocation2 + $0x1c0] sm:$0xff]
      %v7969 = vld [vmem:[#allocation2 + $0x1c8] sm:$0xff]
      %v7970 = vld [vmem:[#allocation2 + $0x1d0] sm:$0xff]
      %v7971 = vld [vmem:[#allocation2 + $0x1d8] sm:$0xff]
      %v7972 = vld [vmem:[#allocation2 + $0x1e0] sm:$0xff]
      %v7973 = vld [vmem:[#allocation2 + $0x1e8] sm:$0xff]
      %v7974 = vld [vmem:[#allocation2 + $0x1f0] sm:$0xff]
      %v7975 = vld [vmem:[#allocation2 + $0x1f8] sm:$0xff]
      %v7976 = vld [vmem:[#allocation2 + $0x200] sm:$0xff]
      %v7977 = vld [vmem:[#allocation2 + $0x208] sm:$0xff]
      %v7978 = vld [vmem:[#allocation2 + $0x210] sm:$0xff]
      %v7979 = vld [vmem:[#allocation2 + $0x218] sm:$0xff]
      %v7980 = vld [vmem:[#allocation2 + $0x220] sm:$0xff]
      %v7981 = vld [vmem:[#allocation2 + $0x228] sm:$0xff]
      %v7982 = vld [vmem:[#allocation2 + $0x230] sm:$0xff]
      %v7983 = vld [vmem:[#allocation2 + $0x238] sm:$0xff]
      %v7984 = vld [vmem:[#allocation2 + $0x240] sm:$0xff]
      %v7985 = vld [vmem:[#allocation2 + $0x248] sm:$0xff]
      %v7986 = vld [vmem:[#allocation2 + $0x250] sm:$0xff]
      %v7987 = vld [vmem:[#allocation2 + $0x258] sm:$0xff]
      %v7988 = vld [vmem:[#allocation2 + $0x260] sm:$0xff]
      %v7989 = vld [vmem:[#allocation2 + $0x268] sm:$0xff]
      %v7990 = vld [vmem:[#allocation2 + $0x270] sm:$0xff]
      %v7991 = vld [vmem:[#allocation2 + $0x278] sm:$0xff]
      %v7992 = vld [vmem:[#allocation2 + $0x280] sm:$0xff]
      %v7993 = vld [vmem:[#allocation2 + $0x288] sm:$0xff]
      %v7994 = vld [vmem:[#allocation2 + $0x290] sm:$0xff]
      %v7995 = vld [vmem:[#allocation2 + $0x298] sm:$0xff]
      %v7996 = vld [vmem:[#allocation2 + $0x2a0] sm:$0xff]
      %v7997 = vld [vmem:[#allocation2 + $0x2a8] sm:$0xff]
      %v7998 = vld [vmem:[#allocation2 + $0x2b0] sm:$0xff]
      %v7999 = vld [vmem:[#allocation2 + $0x2b8] sm:$0xff]
      %v8000 = vld [vmem:[#allocation2 + $0x2c0] sm:$0xff]
      %v8001 = vld [vmem:[#allocation2 + $0x2c8] sm:$0xff]
      %v8002 = vld [vmem:[#allocation2 + $0x2d0] sm:$0xff]
      %v8003 = vld [vmem:[#allocation2 + $0x2d8] sm:$0xff]
      %v8004 = vld [vmem:[#allocation2 + $0x2e0] sm:$0xff]
      %v8005 = vld [vmem:[#allocation2 + $0x2e8] sm:$0xff]
      %v8006 = vld [vmem:[#allocation2 + $0x2f0] sm:$0xff]
      %v8007 = vld [vmem:[#allocation2 + $0x2f8] sm:$0xff]
      %v8008 = vld [vmem:[#allocation2 + $0x300] sm:$0xff]
      %v8009 = vld [vmem:[#allocation2 + $0x308] sm:$0xff]
      %v8010 = vld [vmem:[#allocation2 + $0x310] sm:$0xff]
      %v8011 = vld [vmem:[#allocation2 + $0x318] sm:$0xff]
      %v8012 = vld [vmem:[#allocation2 + $0x320] sm:$0xff]
      %v8013 = vld [vmem:[#allocation2 + $0x328] sm:$0xff]
      %v8014 = vld [vmem:[#allocation2 + $0x330] sm:$0xff]
      %v8015 = vld [vmem:[#allocation2 + $0x338] sm:$0xff]
      %v8016 = vld [vmem:[#allocation2 + $0x340] sm:$0xff]
      %v8017 = vld [vmem:[#allocation2 + $0x348] sm:$0xff]
      %v8018 = vld [vmem:[#allocation2 + $0x350] sm:$0xff]
      %v8019 = vld [vmem:[#allocation2 + $0x358] sm:$0xff]
      %v8020 = vld [vmem:[#allocation2 + $0x360] sm:$0xff]
      %v8021 = vld [vmem:[#allocation2 + $0x368] sm:$0xff]
      %v8022 = vld [vmem:[#allocation2 + $0x370] sm:$0xff]
      %v8023 = vld [vmem:[#allocation2 + $0x378] sm:$0xff]
      %v8024 = vld [vmem:[#allocation2 + $0x380] sm:$0xff]
      %v8025 = vld [vmem:[#allocation2 + $0x388] sm:$0xff]
      %v8026 = vld [vmem:[#allocation2 + $0x390] sm:$0xff]
      %v8027 = vld [vmem:[#allocation2 + $0x398] sm:$0xff]
      %v8028 = vld [vmem:[#allocation2 + $0x3a0] sm:$0xff]
      %v8029 = vld [vmem:[#allocation2 + $0x3a8] sm:$0xff]
      %v8030 = vld [vmem:[#allocation2 + $0x3b0] sm:$0xff]
      %v8031 = vld [vmem:[#allocation2 + $0x3b8] sm:$0xff]
      %v8032 = vld [vmem:[#allocation2 + $0x3c0] sm:$0xff]
      %v8033 = vld [vmem:[#allocation2 + $0x3c8] sm:$0xff]
      %v8034 = vld [vmem:[#allocation2 + $0x3d0] sm:$0xff]
      %v8035 = vld [vmem:[#allocation2 + $0x3d8] sm:$0xff]
      %v8036 = vld [vmem:[#allocation2 + $0x3e0] sm:$0xff]
      %v8037 = vld [vmem:[#allocation2 + $0x3e8] sm:$0xff]
      %v8038 = vld [vmem:[#allocation2 + $0x3f0] sm:$0xff]
      %v8039 = vld [vmem:[#allocation2 + $0x3f8] sm:$0xff]
      %v8040 = vld [vmem:[#allocation2 + $0x400] sm:$0xff]
      %v8041 = vld [vmem:[#allocation2 + $0x408] sm:$0xff]
      %v8042 = vld [vmem:[#allocation2 + $0x410] sm:$0xff]
      %v8043 = vld [vmem:[#allocation2 + $0x418] sm:$0xff]
      %v8044 = vld [vmem:[#allocation2 + $0x420] sm:$0xff]
      %v8045 = vld [vmem:[#allocation2 + $0x428] sm:$0xff]
      %v8046 = vld [vmem:[#allocation2 + $0x430] sm:$0xff]
      %v8047 = vld [vmem:[#allocation2 + $0x438] sm:$0xff]
      %v8048 = vld [vmem:[#allocation2 + $0x440] sm:$0xff]
      %v8049 = vld [vmem:[#allocation2 + $0x448] sm:$0xff]
      %v8050 = vld [vmem:[#allocation2 + $0x450] sm:$0xff]
      %v8051 = vld [vmem:[#allocation2 + $0x458] sm:$0xff]
      %v8052 = vld [vmem:[#allocation2 + $0x460] sm:$0xff]
      %v8053 = vld [vmem:[#allocation2 + $0x468] sm:$0xff]
      %v8054 = vld [vmem:[#allocation2 + $0x470] sm:$0xff]
      %v8055 = vld [vmem:[#allocation2 + $0x478] sm:$0xff]
      %v8056 = vld [vmem:[#allocation2 + $0x480] sm:$0xff]
      %v8057 = vld [vmem:[#allocation2 + $0x488] sm:$0xff]
      %v8058 = vld [vmem:[#allocation2 + $0x490] sm:$0xff]
      %v8059 = vld [vmem:[#allocation2 + $0x498] sm:$0xff]
      %v8060 = vld [vmem:[#allocation2 + $0x4a0] sm:$0xff]
      %v8061 = vld [vmem:[#allocation2 + $0x4a8] sm:$0xff]
      %v8062 = vld [vmem:[#allocation2 + $0x4b0] sm:$0xff]
      %v8063 = vld [vmem:[#allocation2 + $0x4b8] sm:$0xff]
      %v8064 = vld [vmem:[#allocation2 + $0x4c0] sm:$0xff]
      %v8065 = vld [vmem:[#allocation2 + $0x4c8] sm:$0xff]
      %v8066 = vld [vmem:[#allocation2 + $0x4d0] sm:$0xff]
      %v8067 = vld [vmem:[#allocation2 + $0x4d8] sm:$0xff]
      %v8068 = vld [vmem:[#allocation2 + $0x4e0] sm:$0xff]
      %v8069 = vld [vmem:[#allocation2 + $0x4e8] sm:$0xff]
      %v8070 = vld [vmem:[#allocation2 + $0x4f0] sm:$0xff]
      %v8071 = vld [vmem:[#allocation2 + $0x4f8] sm:$0xff]
      %v8072 = vld [vmem:[#allocation2 + $0x500] sm:$0xff]
      %v8073 = vld [vmem:[#allocation2 + $0x508] sm:$0xff]
      %v8074 = vld [vmem:[#allocation2 + $0x510] sm:$0xff]
      %v8075 = vld [vmem:[#allocation2 + $0x518] sm:$0xff]
      %v8076 = vld [vmem:[#allocation2 + $0x520] sm:$0xff]
      %v8077 = vld [vmem:[#allocation2 + $0x528] sm:$0xff]
      %v8078 = vld [vmem:[#allocation2 + $0x530] sm:$0xff]
      %v8079 = vld [vmem:[#allocation2 + $0x538] sm:$0xff]
      %v8080 = vld [vmem:[#allocation2 + $0x540] sm:$0xff]
      %v8081 = vld [vmem:[#allocation2 + $0x548] sm:$0xff]
      %v8082 = vld [vmem:[#allocation2 + $0x550] sm:$0xff]
      %v8083 = vld [vmem:[#allocation2 + $0x558] sm:$0xff]
      %v8084 = vld [vmem:[#allocation2 + $0x560] sm:$0xff]
      %v8085 = vld [vmem:[#allocation2 + $0x568] sm:$0xff]
      %v8086 = vld [vmem:[#allocation2 + $0x570] sm:$0xff]
      %v8087 = vld [vmem:[#allocation2 + $0x578] sm:$0xff]
      %v8088 = vld [vmem:[#allocation2 + $0x580] sm:$0xff]
      %v8089 = vld [vmem:[#allocation2 + $0x588] sm:$0xff]
      %v8090 = vld [vmem:[#allocation2 + $0x590] sm:$0xff]
      %v8091 = vld [vmem:[#allocation2 + $0x598] sm:$0xff]
      %v8092 = vld [vmem:[#allocation2 + $0x5a0] sm:$0xff]
      %v8093 = vld [vmem:[#allocation2 + $0x5a8] sm:$0xff]
      %v8094 = vld [vmem:[#allocation2 + $0x5b0] sm:$0xff]
      %v8095 = vld [vmem:[#allocation2 + $0x5b8] sm:$0xff]
      %v8096 = vld [vmem:[#allocation2 + $0x5c0] sm:$0xff]
      %v8097 = vld [vmem:[#allocation2 + $0x5c8] sm:$0xff]
      %v8098 = vld [vmem:[#allocation2 + $0x5d0] sm:$0xff]
      %v8099 = vld [vmem:[#allocation2 + $0x5d8] sm:$0xff]
      %v8100 = vld [vmem:[#allocation2 + $0x5e0] sm:$0xff]
      %v8101 = vld [vmem:[#allocation2 + $0x5e8] sm:$0xff]
      %v8102 = vld [vmem:[#allocation2 + $0x5f0] sm:$0xff]
      %v8103 = vld [vmem:[#allocation2 + $0x5f8] sm:$0xff]
      %v8104 = vld [vmem:[#allocation2 + $0x600] sm:$0xff]
      %v8105 = vld [vmem:[#allocation2 + $0x608] sm:$0xff]
      %v8106 = vld [vmem:[#allocation2 + $0x610] sm:$0xff]
      %v8107 = vld [vmem:[#allocation2 + $0x618] sm:$0xff]
      %v8108 = vld [vmem:[#allocation2 + $0x620] sm:$0xff]
      %v8109 = vld [vmem:[#allocation2 + $0x628] sm:$0xff]
      %v8110 = vld [vmem:[#allocation2 + $0x630] sm:$0xff]
      %v8111 = vld [vmem:[#allocation2 + $0x638] sm:$0xff]
      %v8112 = vld [vmem:[#allocation2 + $0x640] sm:$0xff]
      %v8113 = vld [vmem:[#allocation2 + $0x648] sm:$0xff]
      %v8114 = vld [vmem:[#allocation2 + $0x650] sm:$0xff]
      %v8115 = vld [vmem:[#allocation2 + $0x658] sm:$0xff]
      %v8116 = vld [vmem:[#allocation2 + $0x660] sm:$0xff]
      %v8117 = vld [vmem:[#allocation2 + $0x668] sm:$0xff]
      %v8118 = vld [vmem:[#allocation2 + $0x670] sm:$0xff]
      %v8119 = vld [vmem:[#allocation2 + $0x678] sm:$0xff]
      %v8120 = vld [vmem:[#allocation2 + $0x680] sm:$0xff]
      %v8121 = vld [vmem:[#allocation2 + $0x688] sm:$0xff]
      %v8122 = vld [vmem:[#allocation2 + $0x690] sm:$0xff]
      %v8123 = vld [vmem:[#allocation2 + $0x698] sm:$0xff]
      %v8124 = vld [vmem:[#allocation2 + $0x6a0] sm:$0xff]
      %v8125 = vld [vmem:[#allocation2 + $0x6a8] sm:$0xff]
      %v8126 = vld [vmem:[#allocation2 + $0x6b0] sm:$0xff]
      %v8127 = vld [vmem:[#allocation2 + $0x6b8] sm:$0xff]
      %v8128 = vld [vmem:[#allocation2 + $0x6c0] sm:$0xff]
      %v8129 = vld [vmem:[#allocation2 + $0x6c8] sm:$0xff]
      %v8130 = vld [vmem:[#allocation2 + $0x6d0] sm:$0xff]
      %v8131 = vld [vmem:[#allocation2 + $0x6d8] sm:$0xff]
      %v8132 = vld [vmem:[#allocation2 + $0x6e0] sm:$0xff]
      %v8133 = vld [vmem:[#allocation2 + $0x6e8] sm:$0xff]
      %v8134 = vld [vmem:[#allocation2 + $0x6f0] sm:$0xff]
      %v8135 = vld [vmem:[#allocation2 + $0x6f8] sm:$0xff]
      %v8136 = vld [vmem:[#allocation2 + $0x700] sm:$0xff]
      %v8137 = vld [vmem:[#allocation2 + $0x708] sm:$0xff]
      %v8138 = vld [vmem:[#allocation2 + $0x710] sm:$0xff]
      %v8139 = vld [vmem:[#allocation2 + $0x718] sm:$0xff]
      %v8140 = vld [vmem:[#allocation2 + $0x720] sm:$0xff]
      %v8141 = vld [vmem:[#allocation2 + $0x728] sm:$0xff]
      %v8142 = vld [vmem:[#allocation2 + $0x730] sm:$0xff]
      %v8143 = vld [vmem:[#allocation2 + $0x738] sm:$0xff]
      %v8144 = vld [vmem:[#allocation2 + $0x740] sm:$0xff]
      %v8145 = vld [vmem:[#allocation2 + $0x748] sm:$0xff]
      %v8146 = vld [vmem:[#allocation2 + $0x750] sm:$0xff]
      %v8147 = vld [vmem:[#allocation2 + $0x758] sm:$0xff]
      %v8148 = vld [vmem:[#allocation2 + $0x760] sm:$0xff]
      %v8149 = vld [vmem:[#allocation2 + $0x768] sm:$0xff]
      %v8150 = vld [vmem:[#allocation2 + $0x770] sm:$0xff]
      %v8151 = vld [vmem:[#allocation2 + $0x778] sm:$0xff]
      %v8152 = vld [vmem:[#allocation2 + $0x780] sm:$0xff]
      %v8153 = vld [vmem:[#allocation2 + $0x788] sm:$0xff]
      %v8154 = vld [vmem:[#allocation2 + $0x790] sm:$0xff]
      %v8155 = vld [vmem:[#allocation2 + $0x798] sm:$0xff]
      %v8156 = vld [vmem:[#allocation2 + $0x7a0] sm:$0xff]
      %v8157 = vld [vmem:[#allocation2 + $0x7a8] sm:$0xff]
      %v8158 = vld [vmem:[#allocation2 + $0x7b0] sm:$0xff]
      %v8159 = vld [vmem:[#allocation2 + $0x7b8] sm:$0xff]
      %v8160 = vld [vmem:[#allocation2 + $0x7c0] sm:$0xff]
      %v8161 = vld [vmem:[#allocation2 + $0x7c8] sm:$0xff]
      %v8162 = vld [vmem:[#allocation2 + $0x7d0] sm:$0xff]
      %v8163 = vld [vmem:[#allocation2 + $0x7d8] sm:$0xff]
      %v8164 = vld [vmem:[#allocation2 + $0x7e0] sm:$0xff]
      %v8165 = vld [vmem:[#allocation2 + $0x7e8] sm:$0xff]
      %v8166 = vld [vmem:[#allocation2 + $0x7f0] sm:$0xff]
      %v8167 = vld [vmem:[#allocation2 + $0x7f8] sm:$0xff]
      %v8168 = vld [vmem:[#allocation2 + $0x800] sm:$0xff]
      %v8169 = vld [vmem:[#allocation2 + $0x808] sm:$0xff]
      %v8170 = vld [vmem:[#allocation2 + $0x810] sm:$0xff]
      %v8171 = vld [vmem:[#allocation2 + $0x818] sm:$0xff]
      %v8172 = vld [vmem:[#allocation2 + $0x820] sm:$0xff]
      %v8173 = vld [vmem:[#allocation2 + $0x828] sm:$0xff]
      %v8174 = vld [vmem:[#allocation2 + $0x830] sm:$0xff]
      %v8175 = vld [vmem:[#allocation2 + $0x838] sm:$0xff]
      %v8176 = vld [vmem:[#allocation2 + $0x840] sm:$0xff]
      %v8177 = vld [vmem:[#allocation2 + $0x848] sm:$0xff]
      %v8178 = vld [vmem:[#allocation2 + $0x850] sm:$0xff]
      %v8179 = vld [vmem:[#allocation2 + $0x858] sm:$0xff]
      %v8180 = vld [vmem:[#allocation2 + $0x860] sm:$0xff]
      %v8181 = vld [vmem:[#allocation2 + $0x868] sm:$0xff]
      %v8182 = vld [vmem:[#allocation2 + $0x870] sm:$0xff]
      %v8183 = vld [vmem:[#allocation2 + $0x878] sm:$0xff]
      %v8184 = vld [vmem:[#allocation2 + $0x880] sm:$0xff]
      %v8185 = vld [vmem:[#allocation2 + $0x888] sm:$0xff]
      %v8186 = vld [vmem:[#allocation2 + $0x890] sm:$0xff]
      %v8187 = vld [vmem:[#allocation2 + $0x898] sm:$0xff]
      %v8188 = vld [vmem:[#allocation2 + $0x8a0] sm:$0xff]
      %v8189 = vld [vmem:[#allocation2 + $0x8a8] sm:$0xff]
      %v8190 = vld [vmem:[#allocation2 + $0x8b0] sm:$0xff]
      %v8191 = vld [vmem:[#allocation2 + $0x8b8] sm:$0xff]
      %v8192 = vld [vmem:[#allocation2 + $0x8c0] sm:$0xff]
      %v8193 = vld [vmem:[#allocation2 + $0x8c8] sm:$0xff]
      %v8194 = vld [vmem:[#allocation2 + $0x8d0] sm:$0xff]
      %v8195 = vld [vmem:[#allocation2 + $0x8d8] sm:$0xff]
      %v8196 = vld [vmem:[#allocation2 + $0x8e0] sm:$0xff]
      %v8197 = vld [vmem:[#allocation2 + $0x8e8] sm:$0xff]
      %v8198 = vld [vmem:[#allocation2 + $0x8f0] sm:$0xff]
      %v8199 = vld [vmem:[#allocation2 + $0x8f8] sm:$0xff]
      %v8202 = vunpack.c.l.b16 %v7880
      %v8203 = vunpack.c.h.b16 %v7880
      %v8204 = vunpack.c.l.b16 %v7881
      %v8205 = vunpack.c.h.b16 %v7881
      %v8206 = vpack.c.b16 %v8204, %v8202
      %v8207 = vpack.c.b16 %v8205, %v8203
      %v8227 = vunpack.c.l.b16 %v7912
      %v8228 = vunpack.c.h.b16 %v7912
      %v8229 = vunpack.c.l.b16 %v7913
      %v8230 = vunpack.c.h.b16 %v7913
      %v8231 = vunpack.c.l.b16 %v7914
      %v8232 = vunpack.c.h.b16 %v7914
      %v8233 = vunpack.c.l.b16 %v7915
      %v8234 = vunpack.c.h.b16 %v7915
      %v8235 = vunpack.c.l.b16 %v7916
      %v8236 = vunpack.c.h.b16 %v7916
      %v8237 = vunpack.c.l.b16 %v7917
      %v8238 = vunpack.c.h.b16 %v7917
      %v8239 = vunpack.c.l.b16 %v7918
      %v8240 = vunpack.c.h.b16 %v7918
      %v8241 = vunpack.c.l.b16 %v7919
      %v8242 = vunpack.c.h.b16 %v7919
      %v8243 = vunpack.c.l.b16 %v7920
      %v8244 = vunpack.c.h.b16 %v7920
      %v8245 = vunpack.c.l.b16 %v7921
      %v8246 = vunpack.c.h.b16 %v7921
      %v8247 = vunpack.c.l.b16 %v7922
      %v8248 = vunpack.c.h.b16 %v7922
      %v8249 = vunpack.c.l.b16 %v7923
      %v8250 = vunpack.c.h.b16 %v7923
      %v8251 = vunpack.c.l.b16 %v7924
      %v8252 = vunpack.c.h.b16 %v7924
      %v8253 = vunpack.c.l.b16 %v7925
      %v8254 = vunpack.c.h.b16 %v7925
      %v8255 = vunpack.c.l.b16 %v7926
      %v8256 = vunpack.c.h.b16 %v7926
      %v8257 = vunpack.c.l.b16 %v7927
      %v8258 = vunpack.c.h.b16 %v7927
      %v8259 = vunpack.c.l.b16 %v7928
      %v8260 = vunpack.c.h.b16 %v7928
      %v8261 = vunpack.c.l.b16 %v7929
      %v8262 = vunpack.c.h.b16 %v7929
      %v8263 = vpack.c.b16 %v8229, %v8227
      %v8264 = vpack.c.b16 %v8230, %v8228
      %v8265 = vpack.c.b16 %v8233, %v8231
      %v8266 = vpack.c.b16 %v8234, %v8232
      %v8267 = vpack.c.b16 %v8237, %v8235
      %v8268 = vpack.c.b16 %v8238, %v8236
      %v8269 = vpack.c.b16 %v8241, %v8239
      %v8270 = vpack.c.b16 %v8242, %v8240
      %v8271 = vpack.c.b16 %v8245, %v8243
      %v8272 = vpack.c.b16 %v8246, %v8244
      %v8273 = vpack.c.b16 %v8249, %v8247
      %v8274 = vpack.c.b16 %v8250, %v8248
      %v8275 = vpack.c.b16 %v8253, %v8251
      %v8276 = vpack.c.b16 %v8254, %v8252
      %v8277 = vpack.c.b16 %v8257, %v8255
      %v8278 = vpack.c.b16 %v8258, %v8256
      %v8279 = vpack.c.b16 %v8261, %v8259
      %v8280 = vpack.c.b16 %v8262, %v8260
      %vm8299 = vcmask 130048
      %v8301 = vsel %vm8299, %v8207, 0
      %8303 = vmatpush.bf16.msra.mxu0 %v8277
      %8304 = vmatpush.bf16.msra.mxu0 %v8275
      %8305 = vmatpush.bf16.msra.mxu0 %v8273
      %8306 = vmatpush.bf16.msra.mxu0 %v8271
      %8307 = vmatpush.bf16.msra.mxu0 %v8269
      %8308 = vmatpush.bf16.msra.mxu0 %v8267
      %8309 = vmatpush.bf16.msra.mxu0 %v8265
      %8310 = vmatpush.bf16.msra.mxu0 %v8263
      %8311 = vmatmul.bf16.gmra.mxu0 %v8206
      %v8312 = vpop.f32.mrf.mxu0
      %v8313 = vadd.f32 0.0, %v8312
      %v8314 = vpop.f32.mrf.mxu0
      %v8315 = vadd.f32 0.0, %v8314
      %8316 = vdwg.mxu0
      %8317 = vmatpush.bf16.msra.mxu0 0
      %8318 = vmatpush.bf16.msra.mxu0 0
      %8319 = vmatpush.bf16.msra.mxu0 0
      %8320 = vmatpush.bf16.msra.mxu0 0
      %8321 = vmatpush.bf16.msra.mxu0 0
      %8322 = vmatpush.bf16.msra.mxu0 0
      %8323 = vmatpush.bf16.msra.mxu0 0
      %8324 = vmatpush.bf16.msra.mxu0 %v8279
      %8325 = vmatmul.bf16.gmra.mxu0 %v8301
      %v8326 = vpop.f32.mrf.mxu0
      %v8327 = vadd.f32 %v8313, %v8326
      %v8328 = vpop.f32.mrf.mxu0
      %v8329 = vadd.f32 %v8315, %v8328
      %8330 = vdwg.mxu0
      %8331 = vmatpush.bf16.msra.mxu0 %v8278
      %8332 = vmatpush.bf16.msra.mxu0 %v8276
      %8333 = vmatpush.bf16.msra.mxu0 %v8274
      %8334 = vmatpush.bf16.msra.mxu0 %v8272
      %8335 = vmatpush.bf16.msra.mxu0 %v8270
      %8336 = vmatpush.bf16.msra.mxu0 %v8268
      %8337 = vmatpush.bf16.msra.mxu0 %v8266
      %8338 = vmatpush.bf16.msra.mxu0 %v8264
      %8339 = vmatmul.bf16.gmra.mxu0 %v8206
      %v8340 = vpop.f32.mrf.mxu0
      %v8341 = vadd.f32 0.0, %v8340
      %v8342 = vpop.f32.mrf.mxu0
      %v8343 = vadd.f32 0.0, %v8342
      %8344 = vdwg.mxu0
      %8345 = vmatpush.bf16.msra.mxu0 0
      %8346 = vmatpush.bf16.msra.mxu0 0
      %8347 = vmatpush.bf16.msra.mxu0 0
      %8348 = vmatpush.bf16.msra.mxu0 0
      %8349 = vmatpush.bf16.msra.mxu0 0
      %8350 = vmatpush.bf16.msra.mxu0 0
      %8351 = vmatpush.bf16.msra.mxu0 0
      %8352 = vmatpush.bf16.msra.mxu0 %v8280
      %8353 = vmatmul.bf16.gmra.mxu0 %v8301
      %v8354 = vpop.f32.mrf.mxu0
      %v8355 = vadd.f32 %v8341, %v8354
      %v8356 = vpop.f32.mrf.mxu0
      %v8357 = vadd.f32 %v8343, %v8356
      %8358 = vdwg.mxu0
      %v8361 = vunpack.c.l.b16 %v7882
      %v8362 = vunpack.c.h.b16 %v7882
      %v8363 = vunpack.c.l.b16 %v7883
      %v8364 = vunpack.c.h.b16 %v7883
      %v8365 = vpack.c.b16 %v8363, %v8361
      %v8366 = vpack.c.b16 %v8364, %v8362
      %v8386 = vunpack.c.l.b16 %v7930
      %v8387 = vunpack.c.h.b16 %v7930
      %v8388 = vunpack.c.l.b16 %v7931
      %v8389 = vunpack.c.h.b16 %v7931
      %v8390 = vunpack.c.l.b16 %v7932
      %v8391 = vunpack.c.h.b16 %v7932
      %v8392 = vunpack.c.l.b16 %v7933
      %v8393 = vunpack.c.h.b16 %v7933
      %v8394 = vunpack.c.l.b16 %v7934
      %v8395 = vunpack.c.h.b16 %v7934
      %v8396 = vunpack.c.l.b16 %v7935
      %v8397 = vunpack.c.h.b16 %v7935
      %v8398 = vunpack.c.l.b16 %v7936
      %v8399 = vunpack.c.h.b16 %v7936
      %v8400 = vunpack.c.l.b16 %v7937
      %v8401 = vunpack.c.h.b16 %v7937
      %v8402 = vunpack.c.l.b16 %v7938
      %v8403 = vunpack.c.h.b16 %v7938
      %v8404 = vunpack.c.l.b16 %v7939
      %v8405 = vunpack.c.h.b16 %v7939
      %v8406 = vunpack.c.l.b16 %v7940
      %v8407 = vunpack.c.h.b16 %v7940
      %v8408 = vunpack.c.l.b16 %v7941
      %v8409 = vunpack.c.h.b16 %v7941
      %v8410 = vunpack.c.l.b16 %v7942
      %v8411 = vunpack.c.h.b16 %v7942
      %v8412 = vunpack.c.l.b16 %v7943
      %v8413 = vunpack.c.h.b16 %v7943
      %v8414 = vunpack.c.l.b16 %v7944
      %v8415 = vunpack.c.h.b16 %v7944
      %v8416 = vunpack.c.l.b16 %v7945
      %v8417 = vunpack.c.h.b16 %v7945
      %v8418 = vunpack.c.l.b16 %v7946
      %v8419 = vunpack.c.h.b16 %v7946
      %v8420 = vunpack.c.l.b16 %v7947
      %v8421 = vunpack.c.h.b16 %v7947
      %v8422 = vpack.c.b16 %v8388, %v8386
      %v8423 = vpack.c.b16 %v8389, %v8387
      %v8424 = vpack.c.b16 %v8392, %v8390
      %v8425 = vpack.c.b16 %v8393, %v8391
      %v8426 = vpack.c.b16 %v8396, %v8394
      %v8427 = vpack.c.b16 %v8397, %v8395
      %v8428 = vpack.c.b16 %v8400, %v8398
      %v8429 = vpack.c.b16 %v8401, %v8399
      %v8430 = vpack.c.b16 %v8404, %v8402
      %v8431 = vpack.c.b16 %v8405, %v8403
      %v8432 = vpack.c.b16 %v8408, %v8406
      %v8433 = vpack.c.b16 %v8409, %v8407
      %v8434 = vpack.c.b16 %v8412, %v8410
      %v8435 = vpack.c.b16 %v8413, %v8411
      %v8436 = vpack.c.b16 %v8416, %v8414
      %v8437 = vpack.c.b16 %v8417, %v8415
      %v8438 = vpack.c.b16 %v8420, %v8418
      %v8439 = vpack.c.b16 %v8421, %v8419
      %v8459 = vsel %vm8299, %v8366, 0
      %8461 = vmatpush.bf16.msra.mxu0 %v8436
      %8462 = vmatpush.bf16.msra.mxu0 %v8434
      %8463 = vmatpush.bf16.msra.mxu0 %v8432
      %8464 = vmatpush.bf16.msra.mxu0 %v8430
      %8465 = vmatpush.bf16.msra.mxu0 %v8428
      %8466 = vmatpush.bf16.msra.mxu0 %v8426
      %8467 = vmatpush.bf16.msra.mxu0 %v8424
      %8468 = vmatpush.bf16.msra.mxu0 %v8422
      %8469 = vmatmul.bf16.gmra.mxu0 %v8365
      %v8470 = vpop.f32.mrf.mxu0
      %v8471 = vadd.f32 0.0, %v8470
      %v8472 = vpop.f32.mrf.mxu0
      %v8473 = vadd.f32 0.0, %v8472
      %8474 = vdwg.mxu0
      %8475 = vmatpush.bf16.msra.mxu0 0
      %8476 = vmatpush.bf16.msra.mxu0 0
      %8477 = vmatpush.bf16.msra.mxu0 0
      %8478 = vmatpush.bf16.msra.mxu0 0
      %8479 = vmatpush.bf16.msra.mxu0 0
      %8480 = vmatpush.bf16.msra.mxu0 0
      %8481 = vmatpush.bf16.msra.mxu0 0
      %8482 = vmatpush.bf16.msra.mxu0 %v8438
      %8483 = vmatmul.bf16.gmra.mxu0 %v8459
      %v8484 = vpop.f32.mrf.mxu0
      %v8485 = vadd.f32 %v8471, %v8484
      %v8486 = vpop.f32.mrf.mxu0
      %v8487 = vadd.f32 %v8473, %v8486
      %8488 = vdwg.mxu0
      %8489 = vmatpush.bf16.msra.mxu0 %v8437
      %8490 = vmatpush.bf16.msra.mxu0 %v8435
      %8491 = vmatpush.bf16.msra.mxu0 %v8433
      %8492 = vmatpush.bf16.msra.mxu0 %v8431
      %8493 = vmatpush.bf16.msra.mxu0 %v8429
      %8494 = vmatpush.bf16.msra.mxu0 %v8427
      %8495 = vmatpush.bf16.msra.mxu0 %v8425
      %8496 = vmatpush.bf16.msra.mxu0 %v8423
      %8497 = vmatmul.bf16.gmra.mxu0 %v8365
      %v8498 = vpop.f32.mrf.mxu0
      %v8499 = vadd.f32 0.0, %v8498
      %v8500 = vpop.f32.mrf.mxu0
      %v8501 = vadd.f32 0.0, %v8500
      %8502 = vdwg.mxu0
      %8503 = vmatpush.bf16.msra.mxu0 0
      %8504 = vmatpush.bf16.msra.mxu0 0
      %8505 = vmatpush.bf16.msra.mxu0 0
      %8506 = vmatpush.bf16.msra.mxu0 0
      %8507 = vmatpush.bf16.msra.mxu0 0
      %8508 = vmatpush.bf16.msra.mxu0 0
      %8509 = vmatpush.bf16.msra.mxu0 0
      %8510 = vmatpush.bf16.msra.mxu0 %v8439
      %8511 = vmatmul.bf16.gmra.mxu0 %v8459
      %v8512 = vpop.f32.mrf.mxu0
      %v8513 = vadd.f32 %v8499, %v8512
      %v8514 = vpop.f32.mrf.mxu0
      %v8515 = vadd.f32 %v8501, %v8514
      %8516 = vdwg.mxu0
      %v8519 = vunpack.c.l.b16 %v7884
      %v8520 = vunpack.c.h.b16 %v7884
      %v8521 = vunpack.c.l.b16 %v7885
      %v8522 = vunpack.c.h.b16 %v7885
      %v8523 = vpack.c.b16 %v8521, %v8519
      %v8524 = vpack.c.b16 %v8522, %v8520
      %v8544 = vunpack.c.l.b16 %v7948
      %v8545 = vunpack.c.h.b16 %v7948
      %v8546 = vunpack.c.l.b16 %v7949
      %v8547 = vunpack.c.h.b16 %v7949
      %v8548 = vunpack.c.l.b16 %v7950
      %v8549 = vunpack.c.h.b16 %v7950
      %v8550 = vunpack.c.l.b16 %v7951
      %v8551 = vunpack.c.h.b16 %v7951
      %v8552 = vunpack.c.l.b16 %v7952
      %v8553 = vunpack.c.h.b16 %v7952
      %v8554 = vunpack.c.l.b16 %v7953
      %v8555 = vunpack.c.h.b16 %v7953
      %v8556 = vunpack.c.l.b16 %v7954
      %v8557 = vunpack.c.h.b16 %v7954
      %v8558 = vunpack.c.l.b16 %v7955
      %v8559 = vunpack.c.h.b16 %v7955
      %v8560 = vunpack.c.l.b16 %v7956
      %v8561 = vunpack.c.h.b16 %v7956
      %v8562 = vunpack.c.l.b16 %v7957
      %v8563 = vunpack.c.h.b16 %v7957
      %v8564 = vunpack.c.l.b16 %v7958
      %v8565 = vunpack.c.h.b16 %v7958
      %v8566 = vunpack.c.l.b16 %v7959
      %v8567 = vunpack.c.h.b16 %v7959
      %v8568 = vunpack.c.l.b16 %v7960
      %v8569 = vunpack.c.h.b16 %v7960
      %v8570 = vunpack.c.l.b16 %v7961
      %v8571 = vunpack.c.h.b16 %v7961
      %v8572 = vunpack.c.l.b16 %v7962
      %v8573 = vunpack.c.h.b16 %v7962
      %v8574 = vunpack.c.l.b16 %v7963
      %v8575 = vunpack.c.h.b16 %v7963
      %v8576 = vunpack.c.l.b16 %v7964
      %v8577 = vunpack.c.h.b16 %v7964
      %v8578 = vunpack.c.l.b16 %v7965
      %v8579 = vunpack.c.h.b16 %v7965
      %v8580 = vpack.c.b16 %v8546, %v8544
      %v8581 = vpack.c.b16 %v8547, %v8545
      %v8582 = vpack.c.b16 %v8550, %v8548
      %v8583 = vpack.c.b16 %v8551, %v8549
      %v8584 = vpack.c.b16 %v8554, %v8552
      %v8585 = vpack.c.b16 %v8555, %v8553
      %v8586 = vpack.c.b16 %v8558, %v8556
      %v8587 = vpack.c.b16 %v8559, %v8557
      %v8588 = vpack.c.b16 %v8562, %v8560
      %v8589 = vpack.c.b16 %v8563, %v8561
      %v8590 = vpack.c.b16 %v8566, %v8564
      %v8591 = vpack.c.b16 %v8567, %v8565
      %v8592 = vpack.c.b16 %v8570, %v8568
      %v8593 = vpack.c.b16 %v8571, %v8569
      %v8594 = vpack.c.b16 %v8574, %v8572
      %v8595 = vpack.c.b16 %v8575, %v8573
      %v8596 = vpack.c.b16 %v8578, %v8576
      %v8597 = vpack.c.b16 %v8579, %v8577
      %v8617 = vsel %vm8299, %v8524, 0
      %8619 = vmatpush.bf16.msra.mxu0 %v8594
      %8620 = vmatpush.bf16.msra.mxu0 %v8592
      %8621 = vmatpush.bf16.msra.mxu0 %v8590
      %8622 = vmatpush.bf16.msra.mxu0 %v8588
      %8623 = vmatpush.bf16.msra.mxu0 %v8586
      %8624 = vmatpush.bf16.msra.mxu0 %v8584
      %8625 = vmatpush.bf16.msra.mxu0 %v8582
      %8626 = vmatpush.bf16.msra.mxu0 %v8580
      %8627 = vmatmul.bf16.gmra.mxu0 %v8523
      %v8628 = vpop.f32.mrf.mxu0
      %v8629 = vadd.f32 0.0, %v8628
      %v8630 = vpop.f32.mrf.mxu0
      %v8631 = vadd.f32 0.0, %v8630
      %8632 = vdwg.mxu0
      %8633 = vmatpush.bf16.msra.mxu0 0
      %8634 = vmatpush.bf16.msra.mxu0 0
      %8635 = vmatpush.bf16.msra.mxu0 0
      %8636 = vmatpush.bf16.msra.mxu0 0
      %8637 = vmatpush.bf16.msra.mxu0 0
      %8638 = vmatpush.bf16.msra.mxu0 0
      %8639 = vmatpush.bf16.msra.mxu0 0
      %8640 = vmatpush.bf16.msra.mxu0 %v8596
      %8641 = vmatmul.bf16.gmra.mxu0 %v8617
      %v8642 = vpop.f32.mrf.mxu0
      %v8643 = vadd.f32 %v8629, %v8642
      %v8644 = vpop.f32.mrf.mxu0
      %v8645 = vadd.f32 %v8631, %v8644
      %8646 = vdwg.mxu0
      %8647 = vmatpush.bf16.msra.mxu0 %v8595
      %8648 = vmatpush.bf16.msra.mxu0 %v8593
      %8649 = vmatpush.bf16.msra.mxu0 %v8591
      %8650 = vmatpush.bf16.msra.mxu0 %v8589
      %8651 = vmatpush.bf16.msra.mxu0 %v8587
      %8652 = vmatpush.bf16.msra.mxu0 %v8585
      %8653 = vmatpush.bf16.msra.mxu0 %v8583
      %8654 = vmatpush.bf16.msra.mxu0 %v8581
      %8655 = vmatmul.bf16.gmra.mxu0 %v8523
      %v8656 = vpop.f32.mrf.mxu0
      %v8657 = vadd.f32 0.0, %v8656
      %v8658 = vpop.f32.mrf.mxu0
      %v8659 = vadd.f32 0.0, %v8658
      %8660 = vdwg.mxu0
      %8661 = vmatpush.bf16.msra.mxu0 0
      %8662 = vmatpush.bf16.msra.mxu0 0
      %8663 = vmatpush.bf16.msra.mxu0 0
      %8664 = vmatpush.bf16.msra.mxu0 0
      %8665 = vmatpush.bf16.msra.mxu0 0
      %8666 = vmatpush.bf16.msra.mxu0 0
      %8667 = vmatpush.bf16.msra.mxu0 0
      %8668 = vmatpush.bf16.msra.mxu0 %v8597
      %8669 = vmatmul.bf16.gmra.mxu0 %v8617
      %v8670 = vpop.f32.mrf.mxu0
      %v8671 = vadd.f32 %v8657, %v8670
      %v8672 = vpop.f32.mrf.mxu0
      %v8673 = vadd.f32 %v8659, %v8672
      %8674 = vdwg.mxu0
      %v8677 = vunpack.c.l.b16 %v7886
      %v8678 = vunpack.c.h.b16 %v7886
      %v8679 = vunpack.c.l.b16 %v7887
      %v8680 = vunpack.c.h.b16 %v7887
      %v8681 = vpack.c.b16 %v8679, %v8677
      %v8682 = vpack.c.b16 %v8680, %v8678
      %v8702 = vunpack.c.l.b16 %v7966
      %v8703 = vunpack.c.h.b16 %v7966
      %v8704 = vunpack.c.l.b16 %v7967
      %v8705 = vunpack.c.h.b16 %v7967
      %v8706 = vunpack.c.l.b16 %v7968
      %v8707 = vunpack.c.h.b16 %v7968
      %v8708 = vunpack.c.l.b16 %v7969
      %v8709 = vunpack.c.h.b16 %v7969
      %v8710 = vunpack.c.l.b16 %v7970
      %v8711 = vunpack.c.h.b16 %v7970
      %v8712 = vunpack.c.l.b16 %v7971
      %v8713 = vunpack.c.h.b16 %v7971
      %v8714 = vunpack.c.l.b16 %v7972
      %v8715 = vunpack.c.h.b16 %v7972
      %v8716 = vunpack.c.l.b16 %v7973
      %v8717 = vunpack.c.h.b16 %v7973
      %v8718 = vunpack.c.l.b16 %v7974
      %v8719 = vunpack.c.h.b16 %v7974
      %v8720 = vunpack.c.l.b16 %v7975
      %v8721 = vunpack.c.h.b16 %v7975
      %v8722 = vunpack.c.l.b16 %v7976
      %v8723 = vunpack.c.h.b16 %v7976
      %v8724 = vunpack.c.l.b16 %v7977
      %v8725 = vunpack.c.h.b16 %v7977
      %v8726 = vunpack.c.l.b16 %v7978
      %v8727 = vunpack.c.h.b16 %v7978
      %v8728 = vunpack.c.l.b16 %v7979
      %v8729 = vunpack.c.h.b16 %v7979
      %v8730 = vunpack.c.l.b16 %v7980
      %v8731 = vunpack.c.h.b16 %v7980
      %v8732 = vunpack.c.l.b16 %v7981
      %v8733 = vunpack.c.h.b16 %v7981
      %v8734 = vunpack.c.l.b16 %v7982
      %v8735 = vunpack.c.h.b16 %v7982
      %v8736 = vunpack.c.l.b16 %v7983
      %v8737 = vunpack.c.h.b16 %v7983
      %v8738 = vpack.c.b16 %v8704, %v8702
      %v8739 = vpack.c.b16 %v8705, %v8703
      %v8740 = vpack.c.b16 %v8708, %v8706
      %v8741 = vpack.c.b16 %v8709, %v8707
      %v8742 = vpack.c.b16 %v8712, %v8710
      %v8743 = vpack.c.b16 %v8713, %v8711
      %v8744 = vpack.c.b16 %v8716, %v8714
      %v8745 = vpack.c.b16 %v8717, %v8715
      %v8746 = vpack.c.b16 %v8720, %v8718
      %v8747 = vpack.c.b16 %v8721, %v8719
      %v8748 = vpack.c.b16 %v8724, %v8722
      %v8749 = vpack.c.b16 %v8725, %v8723
      %v8750 = vpack.c.b16 %v8728, %v8726
      %v8751 = vpack.c.b16 %v8729, %v8727
      %v8752 = vpack.c.b16 %v8732, %v8730
      %v8753 = vpack.c.b16 %v8733, %v8731
      %v8754 = vpack.c.b16 %v8736, %v8734
      %v8755 = vpack.c.b16 %v8737, %v8735
      %v8775 = vsel %vm8299, %v8682, 0
      %8777 = vmatpush.bf16.msra.mxu0 %v8752
      %8778 = vmatpush.bf16.msra.mxu0 %v8750
      %8779 = vmatpush.bf16.msra.mxu0 %v8748
      %8780 = vmatpush.bf16.msra.mxu0 %v8746
      %8781 = vmatpush.bf16.msra.mxu0 %v8744
      %8782 = vmatpush.bf16.msra.mxu0 %v8742
      %8783 = vmatpush.bf16.msra.mxu0 %v8740
      %8784 = vmatpush.bf16.msra.mxu0 %v8738
      %8785 = vmatmul.bf16.gmra.mxu0 %v8681
      %v8786 = vpop.f32.mrf.mxu0
      %v8787 = vadd.f32 0.0, %v8786
      %v8788 = vpop.f32.mrf.mxu0
      %v8789 = vadd.f32 0.0, %v8788
      %8790 = vdwg.mxu0
      %8791 = vmatpush.bf16.msra.mxu0 0
      %8792 = vmatpush.bf16.msra.mxu0 0
      %8793 = vmatpush.bf16.msra.mxu0 0
      %8794 = vmatpush.bf16.msra.mxu0 0
      %8795 = vmatpush.bf16.msra.mxu0 0
      %8796 = vmatpush.bf16.msra.mxu0 0
      %8797 = vmatpush.bf16.msra.mxu0 0
      %8798 = vmatpush.bf16.msra.mxu0 %v8754
      %8799 = vmatmul.bf16.gmra.mxu0 %v8775
      %v8800 = vpop.f32.mrf.mxu0
      %v8801 = vadd.f32 %v8787, %v8800
      %v8802 = vpop.f32.mrf.mxu0
      %v8803 = vadd.f32 %v8789, %v8802
      %8804 = vdwg.mxu0
      %8805 = vmatpush.bf16.msra.mxu0 %v8753
      %8806 = vmatpush.bf16.msra.mxu0 %v8751
      %8807 = vmatpush.bf16.msra.mxu0 %v8749
      %8808 = vmatpush.bf16.msra.mxu0 %v8747
      %8809 = vmatpush.bf16.msra.mxu0 %v8745
      %8810 = vmatpush.bf16.msra.mxu0 %v8743
      %8811 = vmatpush.bf16.msra.mxu0 %v8741
      %8812 = vmatpush.bf16.msra.mxu0 %v8739
      %8813 = vmatmul.bf16.gmra.mxu0 %v8681
      %v8814 = vpop.f32.mrf.mxu0
      %v8815 = vadd.f32 0.0, %v8814
      %v8816 = vpop.f32.mrf.mxu0
      %v8817 = vadd.f32 0.0, %v8816
      %8818 = vdwg.mxu0
      %8819 = vmatpush.bf16.msra.mxu0 0
      %8820 = vmatpush.bf16.msra.mxu0 0
      %8821 = vmatpush.bf16.msra.mxu0 0
      %8822 = vmatpush.bf16.msra.mxu0 0
      %8823 = vmatpush.bf16.msra.mxu0 0
      %8824 = vmatpush.bf16.msra.mxu0 0
      %8825 = vmatpush.bf16.msra.mxu0 0
      %8826 = vmatpush.bf16.msra.mxu0 %v8755
      %8827 = vmatmul.bf16.gmra.mxu0 %v8775
      %v8828 = vpop.f32.mrf.mxu0
      %v8829 = vadd.f32 %v8815, %v8828
      %v8830 = vpop.f32.mrf.mxu0
      %v8831 = vadd.f32 %v8817, %v8830
      %8832 = vdwg.mxu0
      %v8835 = vunpack.c.l.b16 %v7888
      %v8836 = vunpack.c.h.b16 %v7888
      %v8837 = vunpack.c.l.b16 %v7889
      %v8838 = vunpack.c.h.b16 %v7889
      %v8839 = vpack.c.b16 %v8837, %v8835
      %v8840 = vpack.c.b16 %v8838, %v8836
      %v8860 = vunpack.c.l.b16 %v7984
      %v8861 = vunpack.c.h.b16 %v7984
      %v8862 = vunpack.c.l.b16 %v7985
      %v8863 = vunpack.c.h.b16 %v7985
      %v8864 = vunpack.c.l.b16 %v7986
      %v8865 = vunpack.c.h.b16 %v7986
      %v8866 = vunpack.c.l.b16 %v7987
      %v8867 = vunpack.c.h.b16 %v7987
      %v8868 = vunpack.c.l.b16 %v7988
      %v8869 = vunpack.c.h.b16 %v7988
      %v8870 = vunpack.c.l.b16 %v7989
      %v8871 = vunpack.c.h.b16 %v7989
      %v8872 = vunpack.c.l.b16 %v7990
      %v8873 = vunpack.c.h.b16 %v7990
      %v8874 = vunpack.c.l.b16 %v7991
      %v8875 = vunpack.c.h.b16 %v7991
      %v8876 = vunpack.c.l.b16 %v7992
      %v8877 = vunpack.c.h.b16 %v7992
      %v8878 = vunpack.c.l.b16 %v7993
      %v8879 = vunpack.c.h.b16 %v7993
      %v8880 = vunpack.c.l.b16 %v7994
      %v8881 = vunpack.c.h.b16 %v7994
      %v8882 = vunpack.c.l.b16 %v7995
      %v8883 = vunpack.c.h.b16 %v7995
      %v8884 = vunpack.c.l.b16 %v7996
      %v8885 = vunpack.c.h.b16 %v7996
      %v8886 = vunpack.c.l.b16 %v7997
      %v8887 = vunpack.c.h.b16 %v7997
      %v8888 = vunpack.c.l.b16 %v7998
      %v8889 = vunpack.c.h.b16 %v7998
      %v8890 = vunpack.c.l.b16 %v7999
      %v8891 = vunpack.c.h.b16 %v7999
      %v8892 = vunpack.c.l.b16 %v8000
      %v8893 = vunpack.c.h.b16 %v8000
      %v8894 = vunpack.c.l.b16 %v8001
      %v8895 = vunpack.c.h.b16 %v8001
      %v8896 = vpack.c.b16 %v8862, %v8860
      %v8897 = vpack.c.b16 %v8863, %v8861
      %v8898 = vpack.c.b16 %v8866, %v8864
      %v8899 = vpack.c.b16 %v8867, %v8865
      %v8900 = vpack.c.b16 %v8870, %v8868
      %v8901 = vpack.c.b16 %v8871, %v8869
      %v8902 = vpack.c.b16 %v8874, %v8872
      %v8903 = vpack.c.b16 %v8875, %v8873
      %v8904 = vpack.c.b16 %v8878, %v8876
      %v8905 = vpack.c.b16 %v8879, %v8877
      %v8906 = vpack.c.b16 %v8882, %v8880
      %v8907 = vpack.c.b16 %v8883, %v8881
      %v8908 = vpack.c.b16 %v8886, %v8884
      %v8909 = vpack.c.b16 %v8887, %v8885
      %v8910 = vpack.c.b16 %v8890, %v8888
      %v8911 = vpack.c.b16 %v8891, %v8889
      %v8912 = vpack.c.b16 %v8894, %v8892
      %v8913 = vpack.c.b16 %v8895, %v8893
      %v8933 = vsel %vm8299, %v8840, 0
      %8935 = vmatpush.bf16.msra.mxu0 %v8910
      %8936 = vmatpush.bf16.msra.mxu0 %v8908
      %8937 = vmatpush.bf16.msra.mxu0 %v8906
      %8938 = vmatpush.bf16.msra.mxu0 %v8904
      %8939 = vmatpush.bf16.msra.mxu0 %v8902
      %8940 = vmatpush.bf16.msra.mxu0 %v8900
      %8941 = vmatpush.bf16.msra.mxu0 %v8898
      %8942 = vmatpush.bf16.msra.mxu0 %v8896
      %8943 = vmatmul.bf16.gmra.mxu0 %v8839
      %v8944 = vpop.f32.mrf.mxu0
      %v8945 = vadd.f32 0.0, %v8944
      %v8946 = vpop.f32.mrf.mxu0
      %v8947 = vadd.f32 0.0, %v8946
      %8948 = vdwg.mxu0
      %8949 = vmatpush.bf16.msra.mxu0 0
      %8950 = vmatpush.bf16.msra.mxu0 0
      %8951 = vmatpush.bf16.msra.mxu0 0
      %8952 = vmatpush.bf16.msra.mxu0 0
      %8953 = vmatpush.bf16.msra.mxu0 0
      %8954 = vmatpush.bf16.msra.mxu0 0
      %8955 = vmatpush.bf16.msra.mxu0 0
      %8956 = vmatpush.bf16.msra.mxu0 %v8912
      %8957 = vmatmul.bf16.gmra.mxu0 %v8933
      %v8958 = vpop.f32.mrf.mxu0
      %v8959 = vadd.f32 %v8945, %v8958
      %v8960 = vpop.f32.mrf.mxu0
      %v8961 = vadd.f32 %v8947, %v8960
      %8962 = vdwg.mxu0
      %8963 = vmatpush.bf16.msra.mxu0 %v8911
      %8964 = vmatpush.bf16.msra.mxu0 %v8909
      %8965 = vmatpush.bf16.msra.mxu0 %v8907
      %8966 = vmatpush.bf16.msra.mxu0 %v8905
      %8967 = vmatpush.bf16.msra.mxu0 %v8903
      %8968 = vmatpush.bf16.msra.mxu0 %v8901
      %8969 = vmatpush.bf16.msra.mxu0 %v8899
      %8970 = vmatpush.bf16.msra.mxu0 %v8897
      %8971 = vmatmul.bf16.gmra.mxu0 %v8839
      %v8972 = vpop.f32.mrf.mxu0
      %v8973 = vadd.f32 0.0, %v8972
      %v8974 = vpop.f32.mrf.mxu0
      %v8975 = vadd.f32 0.0, %v8974
      %8976 = vdwg.mxu0
      %8977 = vmatpush.bf16.msra.mxu0 0
      %8978 = vmatpush.bf16.msra.mxu0 0
      %8979 = vmatpush.bf16.msra.mxu0 0
      %8980 = vmatpush.bf16.msra.mxu0 0
      %8981 = vmatpush.bf16.msra.mxu0 0
      %8982 = vmatpush.bf16.msra.mxu0 0
      %8983 = vmatpush.bf16.msra.mxu0 0
      %8984 = vmatpush.bf16.msra.mxu0 %v8913
      %8985 = vmatmul.bf16.gmra.mxu0 %v8933
      %v8986 = vpop.f32.mrf.mxu0
      %v8987 = vadd.f32 %v8973, %v8986
      %v8988 = vpop.f32.mrf.mxu0
      %v8989 = vadd.f32 %v8975, %v8988
      %8990 = vdwg.mxu0
      %v8993 = vunpack.c.l.b16 %v7890
      %v8994 = vunpack.c.h.b16 %v7890
      %v8995 = vunpack.c.l.b16 %v7891
      %v8996 = vunpack.c.h.b16 %v7891
      %v8997 = vpack.c.b16 %v8995, %v8993
      %v8998 = vpack.c.b16 %v8996, %v8994
      %v9018 = vunpack.c.l.b16 %v8002
      %v9019 = vunpack.c.h.b16 %v8002
      %v9020 = vunpack.c.l.b16 %v8003
      %v9021 = vunpack.c.h.b16 %v8003
      %v9022 = vunpack.c.l.b16 %v8004
      %v9023 = vunpack.c.h.b16 %v8004
      %v9024 = vunpack.c.l.b16 %v8005
      %v9025 = vunpack.c.h.b16 %v8005
      %v9026 = vunpack.c.l.b16 %v8006
      %v9027 = vunpack.c.h.b16 %v8006
      %v9028 = vunpack.c.l.b16 %v8007
      %v9029 = vunpack.c.h.b16 %v8007
      %v9030 = vunpack.c.l.b16 %v8008
      %v9031 = vunpack.c.h.b16 %v8008
      %v9032 = vunpack.c.l.b16 %v8009
      %v9033 = vunpack.c.h.b16 %v8009
      %v9034 = vunpack.c.l.b16 %v8010
      %v9035 = vunpack.c.h.b16 %v8010
      %v9036 = vunpack.c.l.b16 %v8011
      %v9037 = vunpack.c.h.b16 %v8011
      %v9038 = vunpack.c.l.b16 %v8012
      %v9039 = vunpack.c.h.b16 %v8012
      %v9040 = vunpack.c.l.b16 %v8013
      %v9041 = vunpack.c.h.b16 %v8013
      %v9042 = vunpack.c.l.b16 %v8014
      %v9043 = vunpack.c.h.b16 %v8014
      %v9044 = vunpack.c.l.b16 %v8015
      %v9045 = vunpack.c.h.b16 %v8015
      %v9046 = vunpack.c.l.b16 %v8016
      %v9047 = vunpack.c.h.b16 %v8016
      %v9048 = vunpack.c.l.b16 %v8017
      %v9049 = vunpack.c.h.b16 %v8017
      %v9050 = vunpack.c.l.b16 %v8018
      %v9051 = vunpack.c.h.b16 %v8018
      %v9052 = vunpack.c.l.b16 %v8019
      %v9053 = vunpack.c.h.b16 %v8019
      %v9054 = vpack.c.b16 %v9020, %v9018
      %v9055 = vpack.c.b16 %v9021, %v9019
      %v9056 = vpack.c.b16 %v9024, %v9022
      %v9057 = vpack.c.b16 %v9025, %v9023
      %v9058 = vpack.c.b16 %v9028, %v9026
      %v9059 = vpack.c.b16 %v9029, %v9027
      %v9060 = vpack.c.b16 %v9032, %v9030
      %v9061 = vpack.c.b16 %v9033, %v9031
      %v9062 = vpack.c.b16 %v9036, %v9034
      %v9063 = vpack.c.b16 %v9037, %v9035
      %v9064 = vpack.c.b16 %v9040, %v9038
      %v9065 = vpack.c.b16 %v9041, %v9039
      %v9066 = vpack.c.b16 %v9044, %v9042
      %v9067 = vpack.c.b16 %v9045, %v9043
      %v9068 = vpack.c.b16 %v9048, %v9046
      %v9069 = vpack.c.b16 %v9049, %v9047
      %v9070 = vpack.c.b16 %v9052, %v9050
      %v9071 = vpack.c.b16 %v9053, %v9051
      %v9091 = vsel %vm8299, %v8998, 0
      %9093 = vmatpush.bf16.msra.mxu0 %v9068
      %9094 = vmatpush.bf16.msra.mxu0 %v9066
      %9095 = vmatpush.bf16.msra.mxu0 %v9064
      %9096 = vmatpush.bf16.msra.mxu0 %v9062
      %9097 = vmatpush.bf16.msra.mxu0 %v9060
      %9098 = vmatpush.bf16.msra.mxu0 %v9058
      %9099 = vmatpush.bf16.msra.mxu0 %v9056
      %9100 = vmatpush.bf16.msra.mxu0 %v9054
      %9101 = vmatmul.bf16.gmra.mxu0 %v8997
      %v9102 = vpop.f32.mrf.mxu0
      %v9103 = vadd.f32 0.0, %v9102
      %v9104 = vpop.f32.mrf.mxu0
      %v9105 = vadd.f32 0.0, %v9104
      %9106 = vdwg.mxu0
      %9107 = vmatpush.bf16.msra.mxu0 0
      %9108 = vmatpush.bf16.msra.mxu0 0
      %9109 = vmatpush.bf16.msra.mxu0 0
      %9110 = vmatpush.bf16.msra.mxu0 0
      %9111 = vmatpush.bf16.msra.mxu0 0
      %9112 = vmatpush.bf16.msra.mxu0 0
      %9113 = vmatpush.bf16.msra.mxu0 0
      %9114 = vmatpush.bf16.msra.mxu0 %v9070
      %9115 = vmatmul.bf16.gmra.mxu0 %v9091
      %v9116 = vpop.f32.mrf.mxu0
      %v9117 = vadd.f32 %v9103, %v9116
      %v9118 = vpop.f32.mrf.mxu0
      %v9119 = vadd.f32 %v9105, %v9118
      %9120 = vdwg.mxu0
      %9121 = vmatpush.bf16.msra.mxu0 %v9069
      %9122 = vmatpush.bf16.msra.mxu0 %v9067
      %9123 = vmatpush.bf16.msra.mxu0 %v9065
      %9124 = vmatpush.bf16.msra.mxu0 %v9063
      %9125 = vmatpush.bf16.msra.mxu0 %v9061
      %9126 = vmatpush.bf16.msra.mxu0 %v9059
      %9127 = vmatpush.bf16.msra.mxu0 %v9057
      %9128 = vmatpush.bf16.msra.mxu0 %v9055
      %9129 = vmatmul.bf16.gmra.mxu0 %v8997
      %v9130 = vpop.f32.mrf.mxu0
      %v9131 = vadd.f32 0.0, %v9130
      %v9132 = vpop.f32.mrf.mxu0
      %v9133 = vadd.f32 0.0, %v9132
      %9134 = vdwg.mxu0
      %9135 = vmatpush.bf16.msra.mxu0 0
      %9136 = vmatpush.bf16.msra.mxu0 0
      %9137 = vmatpush.bf16.msra.mxu0 0
      %9138 = vmatpush.bf16.msra.mxu0 0
      %9139 = vmatpush.bf16.msra.mxu0 0
      %9140 = vmatpush.bf16.msra.mxu0 0
      %9141 = vmatpush.bf16.msra.mxu0 0
      %9142 = vmatpush.bf16.msra.mxu0 %v9071
      %9143 = vmatmul.bf16.gmra.mxu0 %v9091
      %v9144 = vpop.f32.mrf.mxu0
      %v9145 = vadd.f32 %v9131, %v9144
      %v9146 = vpop.f32.mrf.mxu0
      %v9147 = vadd.f32 %v9133, %v9146
      %9148 = vdwg.mxu0
      %v9151 = vunpack.c.l.b16 %v7892
      %v9152 = vunpack.c.h.b16 %v7892
      %v9153 = vunpack.c.l.b16 %v7893
      %v9154 = vunpack.c.h.b16 %v7893
      %v9155 = vpack.c.b16 %v9153, %v9151
      %v9156 = vpack.c.b16 %v9154, %v9152
      %v9176 = vunpack.c.l.b16 %v8020
      %v9177 = vunpack.c.h.b16 %v8020
      %v9178 = vunpack.c.l.b16 %v8021
      %v9179 = vunpack.c.h.b16 %v8021
      %v9180 = vunpack.c.l.b16 %v8022
      %v9181 = vunpack.c.h.b16 %v8022
      %v9182 = vunpack.c.l.b16 %v8023
      %v9183 = vunpack.c.h.b16 %v8023
      %v9184 = vunpack.c.l.b16 %v8024
      %v9185 = vunpack.c.h.b16 %v8024
      %v9186 = vunpack.c.l.b16 %v8025
      %v9187 = vunpack.c.h.b16 %v8025
      %v9188 = vunpack.c.l.b16 %v8026
      %v9189 = vunpack.c.h.b16 %v8026
      %v9190 = vunpack.c.l.b16 %v8027
      %v9191 = vunpack.c.h.b16 %v8027
      %v9192 = vunpack.c.l.b16 %v8028
      %v9193 = vunpack.c.h.b16 %v8028
      %v9194 = vunpack.c.l.b16 %v8029
      %v9195 = vunpack.c.h.b16 %v8029
      %v9196 = vunpack.c.l.b16 %v8030
      %v9197 = vunpack.c.h.b16 %v8030
      %v9198 = vunpack.c.l.b16 %v8031
      %v9199 = vunpack.c.h.b16 %v8031
      %v9200 = vunpack.c.l.b16 %v8032
      %v9201 = vunpack.c.h.b16 %v8032
      %v9202 = vunpack.c.l.b16 %v8033
      %v9203 = vunpack.c.h.b16 %v8033
      %v9204 = vunpack.c.l.b16 %v8034
      %v9205 = vunpack.c.h.b16 %v8034
      %v9206 = vunpack.c.l.b16 %v8035
      %v9207 = vunpack.c.h.b16 %v8035
      %v9208 = vunpack.c.l.b16 %v8036
      %v9209 = vunpack.c.h.b16 %v8036
      %v9210 = vunpack.c.l.b16 %v8037
      %v9211 = vunpack.c.h.b16 %v8037
      %v9212 = vpack.c.b16 %v9178, %v9176
      %v9213 = vpack.c.b16 %v9179, %v9177
      %v9214 = vpack.c.b16 %v9182, %v9180
      %v9215 = vpack.c.b16 %v9183, %v9181
      %v9216 = vpack.c.b16 %v9186, %v9184
      %v9217 = vpack.c.b16 %v9187, %v9185
      %v9218 = vpack.c.b16 %v9190, %v9188
      %v9219 = vpack.c.b16 %v9191, %v9189
      %v9220 = vpack.c.b16 %v9194, %v9192
      %v9221 = vpack.c.b16 %v9195, %v9193
      %v9222 = vpack.c.b16 %v9198, %v9196
      %v9223 = vpack.c.b16 %v9199, %v9197
      %v9224 = vpack.c.b16 %v9202, %v9200
      %v9225 = vpack.c.b16 %v9203, %v9201
      %v9226 = vpack.c.b16 %v9206, %v9204
      %v9227 = vpack.c.b16 %v9207, %v9205
      %v9228 = vpack.c.b16 %v9210, %v9208
      %v9229 = vpack.c.b16 %v9211, %v9209
      %v9249 = vsel %vm8299, %v9156, 0
      %9251 = vmatpush.bf16.msra.mxu0 %v9226
      %9252 = vmatpush.bf16.msra.mxu0 %v9224
      %9253 = vmatpush.bf16.msra.mxu0 %v9222
      %9254 = vmatpush.bf16.msra.mxu0 %v9220
      %9255 = vmatpush.bf16.msra.mxu0 %v9218
      %9256 = vmatpush.bf16.msra.mxu0 %v9216
      %9257 = vmatpush.bf16.msra.mxu0 %v9214
      %9258 = vmatpush.bf16.msra.mxu0 %v9212
      %9259 = vmatmul.bf16.gmra.mxu0 %v9155
      %v9260 = vpop.f32.mrf.mxu0
      %v9261 = vadd.f32 0.0, %v9260
      %v9262 = vpop.f32.mrf.mxu0
      %v9263 = vadd.f32 0.0, %v9262
      %9264 = vdwg.mxu0
      %9265 = vmatpush.bf16.msra.mxu0 0
      %9266 = vmatpush.bf16.msra.mxu0 0
      %9267 = vmatpush.bf16.msra.mxu0 0
      %9268 = vmatpush.bf16.msra.mxu0 0
      %9269 = vmatpush.bf16.msra.mxu0 0
      %9270 = vmatpush.bf16.msra.mxu0 0
      %9271 = vmatpush.bf16.msra.mxu0 0
      %9272 = vmatpush.bf16.msra.mxu0 %v9228
      %9273 = vmatmul.bf16.gmra.mxu0 %v9249
      %v9274 = vpop.f32.mrf.mxu0
      %v9275 = vadd.f32 %v9261, %v9274
      %v9276 = vpop.f32.mrf.mxu0
      %v9277 = vadd.f32 %v9263, %v9276
      %9278 = vdwg.mxu0
      %9279 = vmatpush.bf16.msra.mxu0 %v9227
      %9280 = vmatpush.bf16.msra.mxu0 %v9225
      %9281 = vmatpush.bf16.msra.mxu0 %v9223
      %9282 = vmatpush.bf16.msra.mxu0 %v9221
      %9283 = vmatpush.bf16.msra.mxu0 %v9219
      %9284 = vmatpush.bf16.msra.mxu0 %v9217
      %9285 = vmatpush.bf16.msra.mxu0 %v9215
      %9286 = vmatpush.bf16.msra.mxu0 %v9213
      %9287 = vmatmul.bf16.gmra.mxu0 %v9155
      %v9288 = vpop.f32.mrf.mxu0
      %v9289 = vadd.f32 0.0, %v9288
      %v9290 = vpop.f32.mrf.mxu0
      %v9291 = vadd.f32 0.0, %v9290
      %9292 = vdwg.mxu0
      %9293 = vmatpush.bf16.msra.mxu0 0
      %9294 = vmatpush.bf16.msra.mxu0 0
      %9295 = vmatpush.bf16.msra.mxu0 0
      %9296 = vmatpush.bf16.msra.mxu0 0
      %9297 = vmatpush.bf16.msra.mxu0 0
      %9298 = vmatpush.bf16.msra.mxu0 0
      %9299 = vmatpush.bf16.msra.mxu0 0
      %9300 = vmatpush.bf16.msra.mxu0 %v9229
      %9301 = vmatmul.bf16.gmra.mxu0 %v9249
      %v9302 = vpop.f32.mrf.mxu0
      %v9303 = vadd.f32 %v9289, %v9302
      %v9304 = vpop.f32.mrf.mxu0
      %v9305 = vadd.f32 %v9291, %v9304
      %9306 = vdwg.mxu0
      %v9309 = vunpack.c.l.b16 %v7894
      %v9310 = vunpack.c.h.b16 %v7894
      %v9311 = vunpack.c.l.b16 %v7895
      %v9312 = vunpack.c.h.b16 %v7895
      %v9313 = vpack.c.b16 %v9311, %v9309
      %v9314 = vpack.c.b16 %v9312, %v9310
      %v9334 = vunpack.c.l.b16 %v8038
      %v9335 = vunpack.c.h.b16 %v8038
      %v9336 = vunpack.c.l.b16 %v8039
      %v9337 = vunpack.c.h.b16 %v8039
      %v9338 = vunpack.c.l.b16 %v8040
      %v9339 = vunpack.c.h.b16 %v8040
      %v9340 = vunpack.c.l.b16 %v8041
      %v9341 = vunpack.c.h.b16 %v8041
      %v9342 = vunpack.c.l.b16 %v8042
      %v9343 = vunpack.c.h.b16 %v8042
      %v9344 = vunpack.c.l.b16 %v8043
      %v9345 = vunpack.c.h.b16 %v8043
      %v9346 = vunpack.c.l.b16 %v8044
      %v9347 = vunpack.c.h.b16 %v8044
      %v9348 = vunpack.c.l.b16 %v8045
      %v9349 = vunpack.c.h.b16 %v8045
      %v9350 = vunpack.c.l.b16 %v8046
      %v9351 = vunpack.c.h.b16 %v8046
      %v9352 = vunpack.c.l.b16 %v8047
      %v9353 = vunpack.c.h.b16 %v8047
      %v9354 = vunpack.c.l.b16 %v8048
      %v9355 = vunpack.c.h.b16 %v8048
      %v9356 = vunpack.c.l.b16 %v8049
      %v9357 = vunpack.c.h.b16 %v8049
      %v9358 = vunpack.c.l.b16 %v8050
      %v9359 = vunpack.c.h.b16 %v8050
      %v9360 = vunpack.c.l.b16 %v8051
      %v9361 = vunpack.c.h.b16 %v8051
      %v9362 = vunpack.c.l.b16 %v8052
      %v9363 = vunpack.c.h.b16 %v8052
      %v9364 = vunpack.c.l.b16 %v8053
      %v9365 = vunpack.c.h.b16 %v8053
      %v9366 = vunpack.c.l.b16 %v8054
      %v9367 = vunpack.c.h.b16 %v8054
      %v9368 = vunpack.c.l.b16 %v8055
      %v9369 = vunpack.c.h.b16 %v8055
      %v9370 = vpack.c.b16 %v9336, %v9334
      %v9371 = vpack.c.b16 %v9337, %v9335
      %v9372 = vpack.c.b16 %v9340, %v9338
      %v9373 = vpack.c.b16 %v9341, %v9339
      %v9374 = vpack.c.b16 %v9344, %v9342
      %v9375 = vpack.c.b16 %v9345, %v9343
      %v9376 = vpack.c.b16 %v9348, %v9346
      %v9377 = vpack.c.b16 %v9349, %v9347
      %v9378 = vpack.c.b16 %v9352, %v9350
      %v9379 = vpack.c.b16 %v9353, %v9351
      %v9380 = vpack.c.b16 %v9356, %v9354
      %v9381 = vpack.c.b16 %v9357, %v9355
      %v9382 = vpack.c.b16 %v9360, %v9358
      %v9383 = vpack.c.b16 %v9361, %v9359
      %v9384 = vpack.c.b16 %v9364, %v9362
      %v9385 = vpack.c.b16 %v9365, %v9363
      %v9386 = vpack.c.b16 %v9368, %v9366
      %v9387 = vpack.c.b16 %v9369, %v9367
      %v9407 = vsel %vm8299, %v9314, 0
      %9409 = vmatpush.bf16.msra.mxu0 %v9384
      %9410 = vmatpush.bf16.msra.mxu0 %v9382
      %9411 = vmatpush.bf16.msra.mxu0 %v9380
      %9412 = vmatpush.bf16.msra.mxu0 %v9378
      %9413 = vmatpush.bf16.msra.mxu0 %v9376
      %9414 = vmatpush.bf16.msra.mxu0 %v9374
      %9415 = vmatpush.bf16.msra.mxu0 %v9372
      %9416 = vmatpush.bf16.msra.mxu0 %v9370
      %9417 = vmatmul.bf16.gmra.mxu0 %v9313
      %v9418 = vpop.f32.mrf.mxu0
      %v9419 = vadd.f32 0.0, %v9418
      %v9420 = vpop.f32.mrf.mxu0
      %v9421 = vadd.f32 0.0, %v9420
      %9422 = vdwg.mxu0
      %9423 = vmatpush.bf16.msra.mxu0 0
      %9424 = vmatpush.bf16.msra.mxu0 0
      %9425 = vmatpush.bf16.msra.mxu0 0
      %9426 = vmatpush.bf16.msra.mxu0 0
      %9427 = vmatpush.bf16.msra.mxu0 0
      %9428 = vmatpush.bf16.msra.mxu0 0
      %9429 = vmatpush.bf16.msra.mxu0 0
      %9430 = vmatpush.bf16.msra.mxu0 %v9386
      %9431 = vmatmul.bf16.gmra.mxu0 %v9407
      %v9432 = vpop.f32.mrf.mxu0
      %v9433 = vadd.f32 %v9419, %v9432
      %v9434 = vpop.f32.mrf.mxu0
      %v9435 = vadd.f32 %v9421, %v9434
      %9436 = vdwg.mxu0
      %9437 = vmatpush.bf16.msra.mxu0 %v9385
      %9438 = vmatpush.bf16.msra.mxu0 %v9383
      %9439 = vmatpush.bf16.msra.mxu0 %v9381
      %9440 = vmatpush.bf16.msra.mxu0 %v9379
      %9441 = vmatpush.bf16.msra.mxu0 %v9377
      %9442 = vmatpush.bf16.msra.mxu0 %v9375
      %9443 = vmatpush.bf16.msra.mxu0 %v9373
      %9444 = vmatpush.bf16.msra.mxu0 %v9371
      %9445 = vmatmul.bf16.gmra.mxu0 %v9313
      %v9446 = vpop.f32.mrf.mxu0
      %v9447 = vadd.f32 0.0, %v9446
      %v9448 = vpop.f32.mrf.mxu0
      %v9449 = vadd.f32 0.0, %v9448
      %9450 = vdwg.mxu0
      %9451 = vmatpush.bf16.msra.mxu0 0
      %9452 = vmatpush.bf16.msra.mxu0 0
      %9453 = vmatpush.bf16.msra.mxu0 0
      %9454 = vmatpush.bf16.msra.mxu0 0
      %9455 = vmatpush.bf16.msra.mxu0 0
      %9456 = vmatpush.bf16.msra.mxu0 0
      %9457 = vmatpush.bf16.msra.mxu0 0
      %9458 = vmatpush.bf16.msra.mxu0 %v9387
      %9459 = vmatmul.bf16.gmra.mxu0 %v9407
      %v9460 = vpop.f32.mrf.mxu0
      %v9461 = vadd.f32 %v9447, %v9460
      %v9462 = vpop.f32.mrf.mxu0
      %v9463 = vadd.f32 %v9449, %v9462
      %9464 = vdwg.mxu0
      %v9467 = vunpack.c.l.b16 %v7896
      %v9468 = vunpack.c.h.b16 %v7896
      %v9469 = vunpack.c.l.b16 %v7897
      %v9470 = vunpack.c.h.b16 %v7897
      %v9471 = vpack.c.b16 %v9469, %v9467
      %v9472 = vpack.c.b16 %v9470, %v9468
      %v9492 = vunpack.c.l.b16 %v8056
      %v9493 = vunpack.c.h.b16 %v8056
      %v9494 = vunpack.c.l.b16 %v8057
      %v9495 = vunpack.c.h.b16 %v8057
      %v9496 = vunpack.c.l.b16 %v8058
      %v9497 = vunpack.c.h.b16 %v8058
      %v9498 = vunpack.c.l.b16 %v8059
      %v9499 = vunpack.c.h.b16 %v8059
      %v9500 = vunpack.c.l.b16 %v8060
      %v9501 = vunpack.c.h.b16 %v8060
      %v9502 = vunpack.c.l.b16 %v8061
      %v9503 = vunpack.c.h.b16 %v8061
      %v9504 = vunpack.c.l.b16 %v8062
      %v9505 = vunpack.c.h.b16 %v8062
      %v9506 = vunpack.c.l.b16 %v8063
      %v9507 = vunpack.c.h.b16 %v8063
      %v9508 = vunpack.c.l.b16 %v8064
      %v9509 = vunpack.c.h.b16 %v8064
      %v9510 = vunpack.c.l.b16 %v8065
      %v9511 = vunpack.c.h.b16 %v8065
      %v9512 = vunpack.c.l.b16 %v8066
      %v9513 = vunpack.c.h.b16 %v8066
      %v9514 = vunpack.c.l.b16 %v8067
      %v9515 = vunpack.c.h.b16 %v8067
      %v9516 = vunpack.c.l.b16 %v8068
      %v9517 = vunpack.c.h.b16 %v8068
      %v9518 = vunpack.c.l.b16 %v8069
      %v9519 = vunpack.c.h.b16 %v8069
      %v9520 = vunpack.c.l.b16 %v8070
      %v9521 = vunpack.c.h.b16 %v8070
      %v9522 = vunpack.c.l.b16 %v8071
      %v9523 = vunpack.c.h.b16 %v8071
      %v9524 = vunpack.c.l.b16 %v8072
      %v9525 = vunpack.c.h.b16 %v8072
      %v9526 = vunpack.c.l.b16 %v8073
      %v9527 = vunpack.c.h.b16 %v8073
      %v9528 = vpack.c.b16 %v9494, %v9492
      %v9529 = vpack.c.b16 %v9495, %v9493
      %v9530 = vpack.c.b16 %v9498, %v9496
      %v9531 = vpack.c.b16 %v9499, %v9497
      %v9532 = vpack.c.b16 %v9502, %v9500
      %v9533 = vpack.c.b16 %v9503, %v9501
      %v9534 = vpack.c.b16 %v9506, %v9504
      %v9535 = vpack.c.b16 %v9507, %v9505
      %v9536 = vpack.c.b16 %v9510, %v9508
      %v9537 = vpack.c.b16 %v9511, %v9509
      %v9538 = vpack.c.b16 %v9514, %v9512
      %v9539 = vpack.c.b16 %v9515, %v9513
      %v9540 = vpack.c.b16 %v9518, %v9516
      %v9541 = vpack.c.b16 %v9519, %v9517
      %v9542 = vpack.c.b16 %v9522, %v9520
      %v9543 = vpack.c.b16 %v9523, %v9521
      %v9544 = vpack.c.b16 %v9526, %v9524
      %v9545 = vpack.c.b16 %v9527, %v9525
      %v9565 = vsel %vm8299, %v9472, 0
      %9567 = vmatpush.bf16.msra.mxu0 %v9542
      %9568 = vmatpush.bf16.msra.mxu0 %v9540
      %9569 = vmatpush.bf16.msra.mxu0 %v9538
      %9570 = vmatpush.bf16.msra.mxu0 %v9536
      %9571 = vmatpush.bf16.msra.mxu0 %v9534
      %9572 = vmatpush.bf16.msra.mxu0 %v9532
      %9573 = vmatpush.bf16.msra.mxu0 %v9530
      %9574 = vmatpush.bf16.msra.mxu0 %v9528
      %9575 = vmatmul.bf16.gmra.mxu0 %v9471
      %v9576 = vpop.f32.mrf.mxu0
      %v9577 = vadd.f32 0.0, %v9576
      %v9578 = vpop.f32.mrf.mxu0
      %v9579 = vadd.f32 0.0, %v9578
      %9580 = vdwg.mxu0
      %9581 = vmatpush.bf16.msra.mxu0 0
      %9582 = vmatpush.bf16.msra.mxu0 0
      %9583 = vmatpush.bf16.msra.mxu0 0
      %9584 = vmatpush.bf16.msra.mxu0 0
      %9585 = vmatpush.bf16.msra.mxu0 0
      %9586 = vmatpush.bf16.msra.mxu0 0
      %9587 = vmatpush.bf16.msra.mxu0 0
      %9588 = vmatpush.bf16.msra.mxu0 %v9544
      %9589 = vmatmul.bf16.gmra.mxu0 %v9565
      %v9590 = vpop.f32.mrf.mxu0
      %v9591 = vadd.f32 %v9577, %v9590
      %v9592 = vpop.f32.mrf.mxu0
      %v9593 = vadd.f32 %v9579, %v9592
      %9594 = vdwg.mxu0
      %9595 = vmatpush.bf16.msra.mxu0 %v9543
      %9596 = vmatpush.bf16.msra.mxu0 %v9541
      %9597 = vmatpush.bf16.msra.mxu0 %v9539
      %9598 = vmatpush.bf16.msra.mxu0 %v9537
      %9599 = vmatpush.bf16.msra.mxu0 %v9535
      %9600 = vmatpush.bf16.msra.mxu0 %v9533
      %9601 = vmatpush.bf16.msra.mxu0 %v9531
      %9602 = vmatpush.bf16.msra.mxu0 %v9529
      %9603 = vmatmul.bf16.gmra.mxu0 %v9471
      %v9604 = vpop.f32.mrf.mxu0
      %v9605 = vadd.f32 0.0, %v9604
      %v9606 = vpop.f32.mrf.mxu0
      %v9607 = vadd.f32 0.0, %v9606
      %9608 = vdwg.mxu0
      %9609 = vmatpush.bf16.msra.mxu0 0
      %9610 = vmatpush.bf16.msra.mxu0 0
      %9611 = vmatpush.bf16.msra.mxu0 0
      %9612 = vmatpush.bf16.msra.mxu0 0
      %9613 = vmatpush.bf16.msra.mxu0 0
      %9614 = vmatpush.bf16.msra.mxu0 0
      %9615 = vmatpush.bf16.msra.mxu0 0
      %9616 = vmatpush.bf16.msra.mxu0 %v9545
      %9617 = vmatmul.bf16.gmra.mxu0 %v9565
      %v9618 = vpop.f32.mrf.mxu0
      %v9619 = vadd.f32 %v9605, %v9618
      %v9620 = vpop.f32.mrf.mxu0
      %v9621 = vadd.f32 %v9607, %v9620
      %9622 = vdwg.mxu0
      %v9625 = vunpack.c.l.b16 %v7898
      %v9626 = vunpack.c.h.b16 %v7898
      %v9627 = vunpack.c.l.b16 %v7899
      %v9628 = vunpack.c.h.b16 %v7899
      %v9629 = vpack.c.b16 %v9627, %v9625
      %v9630 = vpack.c.b16 %v9628, %v9626
      %v9650 = vunpack.c.l.b16 %v8074
      %v9651 = vunpack.c.h.b16 %v8074
      %v9652 = vunpack.c.l.b16 %v8075
      %v9653 = vunpack.c.h.b16 %v8075
      %v9654 = vunpack.c.l.b16 %v8076
      %v9655 = vunpack.c.h.b16 %v8076
      %v9656 = vunpack.c.l.b16 %v8077
      %v9657 = vunpack.c.h.b16 %v8077
      %v9658 = vunpack.c.l.b16 %v8078
      %v9659 = vunpack.c.h.b16 %v8078
      %v9660 = vunpack.c.l.b16 %v8079
      %v9661 = vunpack.c.h.b16 %v8079
      %v9662 = vunpack.c.l.b16 %v8080
      %v9663 = vunpack.c.h.b16 %v8080
      %v9664 = vunpack.c.l.b16 %v8081
      %v9665 = vunpack.c.h.b16 %v8081
      %v9666 = vunpack.c.l.b16 %v8082
      %v9667 = vunpack.c.h.b16 %v8082
      %v9668 = vunpack.c.l.b16 %v8083
      %v9669 = vunpack.c.h.b16 %v8083
      %v9670 = vunpack.c.l.b16 %v8084
      %v9671 = vunpack.c.h.b16 %v8084
      %v9672 = vunpack.c.l.b16 %v8085
      %v9673 = vunpack.c.h.b16 %v8085
      %v9674 = vunpack.c.l.b16 %v8086
      %v9675 = vunpack.c.h.b16 %v8086
      %v9676 = vunpack.c.l.b16 %v8087
      %v9677 = vunpack.c.h.b16 %v8087
      %v9678 = vunpack.c.l.b16 %v8088
      %v9679 = vunpack.c.h.b16 %v8088
      %v9680 = vunpack.c.l.b16 %v8089
      %v9681 = vunpack.c.h.b16 %v8089
      %v9682 = vunpack.c.l.b16 %v8090
      %v9683 = vunpack.c.h.b16 %v8090
      %v9684 = vunpack.c.l.b16 %v8091
      %v9685 = vunpack.c.h.b16 %v8091
      %v9686 = vpack.c.b16 %v9652, %v9650
      %v9687 = vpack.c.b16 %v9653, %v9651
      %v9688 = vpack.c.b16 %v9656, %v9654
      %v9689 = vpack.c.b16 %v9657, %v9655
      %v9690 = vpack.c.b16 %v9660, %v9658
      %v9691 = vpack.c.b16 %v9661, %v9659
      %v9692 = vpack.c.b16 %v9664, %v9662
      %v9693 = vpack.c.b16 %v9665, %v9663
      %v9694 = vpack.c.b16 %v9668, %v9666
      %v9695 = vpack.c.b16 %v9669, %v9667
      %v9696 = vpack.c.b16 %v9672, %v9670
      %v9697 = vpack.c.b16 %v9673, %v9671
      %v9698 = vpack.c.b16 %v9676, %v9674
      %v9699 = vpack.c.b16 %v9677, %v9675
      %v9700 = vpack.c.b16 %v9680, %v9678
      %v9701 = vpack.c.b16 %v9681, %v9679
      %v9702 = vpack.c.b16 %v9684, %v9682
      %v9703 = vpack.c.b16 %v9685, %v9683
      %v9723 = vsel %vm8299, %v9630, 0
      %9725 = vmatpush.bf16.msra.mxu0 %v9700
      %9726 = vmatpush.bf16.msra.mxu0 %v9698
      %9727 = vmatpush.bf16.msra.mxu0 %v9696
      %9728 = vmatpush.bf16.msra.mxu0 %v9694
      %9729 = vmatpush.bf16.msra.mxu0 %v9692
      %9730 = vmatpush.bf16.msra.mxu0 %v9690
      %9731 = vmatpush.bf16.msra.mxu0 %v9688
      %9732 = vmatpush.bf16.msra.mxu0 %v9686
      %9733 = vmatmul.bf16.gmra.mxu0 %v9629
      %v9734 = vpop.f32.mrf.mxu0
      %v9735 = vadd.f32 0.0, %v9734
      %v9736 = vpop.f32.mrf.mxu0
      %v9737 = vadd.f32 0.0, %v9736
      %9738 = vdwg.mxu0
      %9739 = vmatpush.bf16.msra.mxu0 0
      %9740 = vmatpush.bf16.msra.mxu0 0
      %9741 = vmatpush.bf16.msra.mxu0 0
      %9742 = vmatpush.bf16.msra.mxu0 0
      %9743 = vmatpush.bf16.msra.mxu0 0
      %9744 = vmatpush.bf16.msra.mxu0 0
      %9745 = vmatpush.bf16.msra.mxu0 0
      %9746 = vmatpush.bf16.msra.mxu0 %v9702
      %9747 = vmatmul.bf16.gmra.mxu0 %v9723
      %v9748 = vpop.f32.mrf.mxu0
      %v9749 = vadd.f32 %v9735, %v9748
      %v9750 = vpop.f32.mrf.mxu0
      %v9751 = vadd.f32 %v9737, %v9750
      %9752 = vdwg.mxu0
      %9753 = vmatpush.bf16.msra.mxu0 %v9701
      %9754 = vmatpush.bf16.msra.mxu0 %v9699
      %9755 = vmatpush.bf16.msra.mxu0 %v9697
      %9756 = vmatpush.bf16.msra.mxu0 %v9695
      %9757 = vmatpush.bf16.msra.mxu0 %v9693
      %9758 = vmatpush.bf16.msra.mxu0 %v9691
      %9759 = vmatpush.bf16.msra.mxu0 %v9689
      %9760 = vmatpush.bf16.msra.mxu0 %v9687
      %9761 = vmatmul.bf16.gmra.mxu0 %v9629
      %v9762 = vpop.f32.mrf.mxu0
      %v9763 = vadd.f32 0.0, %v9762
      %v9764 = vpop.f32.mrf.mxu0
      %v9765 = vadd.f32 0.0, %v9764
      %9766 = vdwg.mxu0
      %9767 = vmatpush.bf16.msra.mxu0 0
      %9768 = vmatpush.bf16.msra.mxu0 0
      %9769 = vmatpush.bf16.msra.mxu0 0
      %9770 = vmatpush.bf16.msra.mxu0 0
      %9771 = vmatpush.bf16.msra.mxu0 0
      %9772 = vmatpush.bf16.msra.mxu0 0
      %9773 = vmatpush.bf16.msra.mxu0 0
      %9774 = vmatpush.bf16.msra.mxu0 %v9703
      %9775 = vmatmul.bf16.gmra.mxu0 %v9723
      %v9776 = vpop.f32.mrf.mxu0
      %v9777 = vadd.f32 %v9763, %v9776
      %v9778 = vpop.f32.mrf.mxu0
      %v9779 = vadd.f32 %v9765, %v9778
      %9780 = vdwg.mxu0
      %v9783 = vunpack.c.l.b16 %v7900
      %v9784 = vunpack.c.h.b16 %v7900
      %v9785 = vunpack.c.l.b16 %v7901
      %v9786 = vunpack.c.h.b16 %v7901
      %v9787 = vpack.c.b16 %v9785, %v9783
      %v9788 = vpack.c.b16 %v9786, %v9784
      %v9808 = vunpack.c.l.b16 %v8092
      %v9809 = vunpack.c.h.b16 %v8092
      %v9810 = vunpack.c.l.b16 %v8093
      %v9811 = vunpack.c.h.b16 %v8093
      %v9812 = vunpack.c.l.b16 %v8094
      %v9813 = vunpack.c.h.b16 %v8094
      %v9814 = vunpack.c.l.b16 %v8095
      %v9815 = vunpack.c.h.b16 %v8095
      %v9816 = vunpack.c.l.b16 %v8096
      %v9817 = vunpack.c.h.b16 %v8096
      %v9818 = vunpack.c.l.b16 %v8097
      %v9819 = vunpack.c.h.b16 %v8097
      %v9820 = vunpack.c.l.b16 %v8098
      %v9821 = vunpack.c.h.b16 %v8098
      %v9822 = vunpack.c.l.b16 %v8099
      %v9823 = vunpack.c.h.b16 %v8099
      %v9824 = vunpack.c.l.b16 %v8100
      %v9825 = vunpack.c.h.b16 %v8100
      %v9826 = vunpack.c.l.b16 %v8101
      %v9827 = vunpack.c.h.b16 %v8101
      %v9828 = vunpack.c.l.b16 %v8102
      %v9829 = vunpack.c.h.b16 %v8102
      %v9830 = vunpack.c.l.b16 %v8103
      %v9831 = vunpack.c.h.b16 %v8103
      %v9832 = vunpack.c.l.b16 %v8104
      %v9833 = vunpack.c.h.b16 %v8104
      %v9834 = vunpack.c.l.b16 %v8105
      %v9835 = vunpack.c.h.b16 %v8105
      %v9836 = vunpack.c.l.b16 %v8106
      %v9837 = vunpack.c.h.b16 %v8106
      %v9838 = vunpack.c.l.b16 %v8107
      %v9839 = vunpack.c.h.b16 %v8107
      %v9840 = vunpack.c.l.b16 %v8108
      %v9841 = vunpack.c.h.b16 %v8108
      %v9842 = vunpack.c.l.b16 %v8109
      %v9843 = vunpack.c.h.b16 %v8109
      %v9844 = vpack.c.b16 %v9810, %v9808
      %v9845 = vpack.c.b16 %v9811, %v9809
      %v9846 = vpack.c.b16 %v9814, %v9812
      %v9847 = vpack.c.b16 %v9815, %v9813
      %v9848 = vpack.c.b16 %v9818, %v9816
      %v9849 = vpack.c.b16 %v9819, %v9817
      %v9850 = vpack.c.b16 %v9822, %v9820
      %v9851 = vpack.c.b16 %v9823, %v9821
      %v9852 = vpack.c.b16 %v9826, %v9824
      %v9853 = vpack.c.b16 %v9827, %v9825
      %v9854 = vpack.c.b16 %v9830, %v9828
      %v9855 = vpack.c.b16 %v9831, %v9829
      %v9856 = vpack.c.b16 %v9834, %v9832
      %v9857 = vpack.c.b16 %v9835, %v9833
      %v9858 = vpack.c.b16 %v9838, %v9836
      %v9859 = vpack.c.b16 %v9839, %v9837
      %v9860 = vpack.c.b16 %v9842, %v9840
      %v9861 = vpack.c.b16 %v9843, %v9841
      %v9881 = vsel %vm8299, %v9788, 0
      %9883 = vmatpush.bf16.msra.mxu0 %v9858
      %9884 = vmatpush.bf16.msra.mxu0 %v9856
      %9885 = vmatpush.bf16.msra.mxu0 %v9854
      %9886 = vmatpush.bf16.msra.mxu0 %v9852
      %9887 = vmatpush.bf16.msra.mxu0 %v9850
      %9888 = vmatpush.bf16.msra.mxu0 %v9848
      %9889 = vmatpush.bf16.msra.mxu0 %v9846
      %9890 = vmatpush.bf16.msra.mxu0 %v9844
      %9891 = vmatmul.bf16.gmra.mxu0 %v9787
      %v9892 = vpop.f32.mrf.mxu0
      %v9893 = vadd.f32 0.0, %v9892
      %v9894 = vpop.f32.mrf.mxu0
      %v9895 = vadd.f32 0.0, %v9894
      %9896 = vdwg.mxu0
      %9897 = vmatpush.bf16.msra.mxu0 0
      %9898 = vmatpush.bf16.msra.mxu0 0
      %9899 = vmatpush.bf16.msra.mxu0 0
      %9900 = vmatpush.bf16.msra.mxu0 0
      %9901 = vmatpush.bf16.msra.mxu0 0
      %9902 = vmatpush.bf16.msra.mxu0 0
      %9903 = vmatpush.bf16.msra.mxu0 0
      %9904 = vmatpush.bf16.msra.mxu0 %v9860
      %9905 = vmatmul.bf16.gmra.mxu0 %v9881
      %v9906 = vpop.f32.mrf.mxu0
      %v9907 = vadd.f32 %v9893, %v9906
      %v9908 = vpop.f32.mrf.mxu0
      %v9909 = vadd.f32 %v9895, %v9908
      %9910 = vdwg.mxu0
      %9911 = vmatpush.bf16.msra.mxu0 %v9859
      %9912 = vmatpush.bf16.msra.mxu0 %v9857
      %9913 = vmatpush.bf16.msra.mxu0 %v9855
      %9914 = vmatpush.bf16.msra.mxu0 %v9853
      %9915 = vmatpush.bf16.msra.mxu0 %v9851
      %9916 = vmatpush.bf16.msra.mxu0 %v9849
      %9917 = vmatpush.bf16.msra.mxu0 %v9847
      %9918 = vmatpush.bf16.msra.mxu0 %v9845
      %9919 = vmatmul.bf16.gmra.mxu0 %v9787
      %v9920 = vpop.f32.mrf.mxu0
      %v9921 = vadd.f32 0.0, %v9920
      %v9922 = vpop.f32.mrf.mxu0
      %v9923 = vadd.f32 0.0, %v9922
      %9924 = vdwg.mxu0
      %9925 = vmatpush.bf16.msra.mxu0 0
      %9926 = vmatpush.bf16.msra.mxu0 0
      %9927 = vmatpush.bf16.msra.mxu0 0
      %9928 = vmatpush.bf16.msra.mxu0 0
      %9929 = vmatpush.bf16.msra.mxu0 0
      %9930 = vmatpush.bf16.msra.mxu0 0
      %9931 = vmatpush.bf16.msra.mxu0 0
      %9932 = vmatpush.bf16.msra.mxu0 %v9861
      %9933 = vmatmul.bf16.gmra.mxu0 %v9881
      %v9934 = vpop.f32.mrf.mxu0
      %v9935 = vadd.f32 %v9921, %v9934
      %v9936 = vpop.f32.mrf.mxu0
      %v9937 = vadd.f32 %v9923, %v9936
      %9938 = vdwg.mxu0
      %v9941 = vunpack.c.l.b16 %v7902
      %v9942 = vunpack.c.h.b16 %v7902
      %v9943 = vunpack.c.l.b16 %v7903
      %v9944 = vunpack.c.h.b16 %v7903
      %v9945 = vpack.c.b16 %v9943, %v9941
      %v9946 = vpack.c.b16 %v9944, %v9942
      %v9966 = vunpack.c.l.b16 %v8110
      %v9967 = vunpack.c.h.b16 %v8110
      %v9968 = vunpack.c.l.b16 %v8111
      %v9969 = vunpack.c.h.b16 %v8111
      %v9970 = vunpack.c.l.b16 %v8112
      %v9971 = vunpack.c.h.b16 %v8112
      %v9972 = vunpack.c.l.b16 %v8113
      %v9973 = vunpack.c.h.b16 %v8113
      %v9974 = vunpack.c.l.b16 %v8114
      %v9975 = vunpack.c.h.b16 %v8114
      %v9976 = vunpack.c.l.b16 %v8115
      %v9977 = vunpack.c.h.b16 %v8115
      %v9978 = vunpack.c.l.b16 %v8116
      %v9979 = vunpack.c.h.b16 %v8116
      %v9980 = vunpack.c.l.b16 %v8117
      %v9981 = vunpack.c.h.b16 %v8117
      %v9982 = vunpack.c.l.b16 %v8118
      %v9983 = vunpack.c.h.b16 %v8118
      %v9984 = vunpack.c.l.b16 %v8119
      %v9985 = vunpack.c.h.b16 %v8119
      %v9986 = vunpack.c.l.b16 %v8120
      %v9987 = vunpack.c.h.b16 %v8120
      %v9988 = vunpack.c.l.b16 %v8121
      %v9989 = vunpack.c.h.b16 %v8121
      %v9990 = vunpack.c.l.b16 %v8122
      %v9991 = vunpack.c.h.b16 %v8122
      %v9992 = vunpack.c.l.b16 %v8123
      %v9993 = vunpack.c.h.b16 %v8123
      %v9994 = vunpack.c.l.b16 %v8124
      %v9995 = vunpack.c.h.b16 %v8124
      %v9996 = vunpack.c.l.b16 %v8125
      %v9997 = vunpack.c.h.b16 %v8125
      %v9998 = vunpack.c.l.b16 %v8126
      %v9999 = vunpack.c.h.b16 %v8126
      %v10000 = vunpack.c.l.b16 %v8127
      %v10001 = vunpack.c.h.b16 %v8127
      %v10002 = vpack.c.b16 %v9968, %v9966
      %v10003 = vpack.c.b16 %v9969, %v9967
      %v10004 = vpack.c.b16 %v9972, %v9970
      %v10005 = vpack.c.b16 %v9973, %v9971
      %v10006 = vpack.c.b16 %v9976, %v9974
      %v10007 = vpack.c.b16 %v9977, %v9975
      %v10008 = vpack.c.b16 %v9980, %v9978
      %v10009 = vpack.c.b16 %v9981, %v9979
      %v10010 = vpack.c.b16 %v9984, %v9982
      %v10011 = vpack.c.b16 %v9985, %v9983
      %v10012 = vpack.c.b16 %v9988, %v9986
      %v10013 = vpack.c.b16 %v9989, %v9987
      %v10014 = vpack.c.b16 %v9992, %v9990
      %v10015 = vpack.c.b16 %v9993, %v9991
      %v10016 = vpack.c.b16 %v9996, %v9994
      %v10017 = vpack.c.b16 %v9997, %v9995
      %v10018 = vpack.c.b16 %v10000, %v9998
      %v10019 = vpack.c.b16 %v10001, %v9999
      %v10039 = vsel %vm8299, %v9946, 0
      %10041 = vmatpush.bf16.msra.mxu0 %v10016
      %10042 = vmatpush.bf16.msra.mxu0 %v10014
      %10043 = vmatpush.bf16.msra.mxu0 %v10012
      %10044 = vmatpush.bf16.msra.mxu0 %v10010
      %10045 = vmatpush.bf16.msra.mxu0 %v10008
      %10046 = vmatpush.bf16.msra.mxu0 %v10006
      %10047 = vmatpush.bf16.msra.mxu0 %v10004
      %10048 = vmatpush.bf16.msra.mxu0 %v10002
      %10049 = vmatmul.bf16.gmra.mxu0 %v9945
      %v10050 = vpop.f32.mrf.mxu0
      %v10051 = vadd.f32 0.0, %v10050
      %v10052 = vpop.f32.mrf.mxu0
      %v10053 = vadd.f32 0.0, %v10052
      %10054 = vdwg.mxu0
      %10055 = vmatpush.bf16.msra.mxu0 0
      %10056 = vmatpush.bf16.msra.mxu0 0
      %10057 = vmatpush.bf16.msra.mxu0 0
      %10058 = vmatpush.bf16.msra.mxu0 0
      %10059 = vmatpush.bf16.msra.mxu0 0
      %10060 = vmatpush.bf16.msra.mxu0 0
      %10061 = vmatpush.bf16.msra.mxu0 0
      %10062 = vmatpush.bf16.msra.mxu0 %v10018
      %10063 = vmatmul.bf16.gmra.mxu0 %v10039
      %v10064 = vpop.f32.mrf.mxu0
      %v10065 = vadd.f32 %v10051, %v10064
      %v10066 = vpop.f32.mrf.mxu0
      %v10067 = vadd.f32 %v10053, %v10066
      %10068 = vdwg.mxu0
      %10069 = vmatpush.bf16.msra.mxu0 %v10017
      %10070 = vmatpush.bf16.msra.mxu0 %v10015
      %10071 = vmatpush.bf16.msra.mxu0 %v10013
      %10072 = vmatpush.bf16.msra.mxu0 %v10011
      %10073 = vmatpush.bf16.msra.mxu0 %v10009
      %10074 = vmatpush.bf16.msra.mxu0 %v10007
      %10075 = vmatpush.bf16.msra.mxu0 %v10005
      %10076 = vmatpush.bf16.msra.mxu0 %v10003
      %10077 = vmatmul.bf16.gmra.mxu0 %v9945
      %v10078 = vpop.f32.mrf.mxu0
      %v10079 = vadd.f32 0.0, %v10078
      %v10080 = vpop.f32.mrf.mxu0
      %v10081 = vadd.f32 0.0, %v10080
      %10082 = vdwg.mxu0
      %10083 = vmatpush.bf16.msra.mxu0 0
      %10084 = vmatpush.bf16.msra.mxu0 0
      %10085 = vmatpush.bf16.msra.mxu0 0
      %10086 = vmatpush.bf16.msra.mxu0 0
      %10087 = vmatpush.bf16.msra.mxu0 0
      %10088 = vmatpush.bf16.msra.mxu0 0
      %10089 = vmatpush.bf16.msra.mxu0 0
      %10090 = vmatpush.bf16.msra.mxu0 %v10019
      %10091 = vmatmul.bf16.gmra.mxu0 %v10039
      %v10092 = vpop.f32.mrf.mxu0
      %v10093 = vadd.f32 %v10079, %v10092
      %v10094 = vpop.f32.mrf.mxu0
      %v10095 = vadd.f32 %v10081, %v10094
      %10096 = vdwg.mxu0
      %v10099 = vunpack.c.l.b16 %v7904
      %v10100 = vunpack.c.h.b16 %v7904
      %v10101 = vunpack.c.l.b16 %v7905
      %v10102 = vunpack.c.h.b16 %v7905
      %v10103 = vpack.c.b16 %v10101, %v10099
      %v10104 = vpack.c.b16 %v10102, %v10100
      %v10124 = vunpack.c.l.b16 %v8128
      %v10125 = vunpack.c.h.b16 %v8128
      %v10126 = vunpack.c.l.b16 %v8129
      %v10127 = vunpack.c.h.b16 %v8129
      %v10128 = vunpack.c.l.b16 %v8130
      %v10129 = vunpack.c.h.b16 %v8130
      %v10130 = vunpack.c.l.b16 %v8131
      %v10131 = vunpack.c.h.b16 %v8131
      %v10132 = vunpack.c.l.b16 %v8132
      %v10133 = vunpack.c.h.b16 %v8132
      %v10134 = vunpack.c.l.b16 %v8133
      %v10135 = vunpack.c.h.b16 %v8133
      %v10136 = vunpack.c.l.b16 %v8134
      %v10137 = vunpack.c.h.b16 %v8134
      %v10138 = vunpack.c.l.b16 %v8135
      %v10139 = vunpack.c.h.b16 %v8135
      %v10140 = vunpack.c.l.b16 %v8136
      %v10141 = vunpack.c.h.b16 %v8136
      %v10142 = vunpack.c.l.b16 %v8137
      %v10143 = vunpack.c.h.b16 %v8137
      %v10144 = vunpack.c.l.b16 %v8138
      %v10145 = vunpack.c.h.b16 %v8138
      %v10146 = vunpack.c.l.b16 %v8139
      %v10147 = vunpack.c.h.b16 %v8139
      %v10148 = vunpack.c.l.b16 %v8140
      %v10149 = vunpack.c.h.b16 %v8140
      %v10150 = vunpack.c.l.b16 %v8141
      %v10151 = vunpack.c.h.b16 %v8141
      %v10152 = vunpack.c.l.b16 %v8142
      %v10153 = vunpack.c.h.b16 %v8142
      %v10154 = vunpack.c.l.b16 %v8143
      %v10155 = vunpack.c.h.b16 %v8143
      %v10156 = vunpack.c.l.b16 %v8144
      %v10157 = vunpack.c.h.b16 %v8144
      %v10158 = vunpack.c.l.b16 %v8145
      %v10159 = vunpack.c.h.b16 %v8145
      %v10160 = vpack.c.b16 %v10126, %v10124
      %v10161 = vpack.c.b16 %v10127, %v10125
      %v10162 = vpack.c.b16 %v10130, %v10128
      %v10163 = vpack.c.b16 %v10131, %v10129
      %v10164 = vpack.c.b16 %v10134, %v10132
      %v10165 = vpack.c.b16 %v10135, %v10133
      %v10166 = vpack.c.b16 %v10138, %v10136
      %v10167 = vpack.c.b16 %v10139, %v10137
      %v10168 = vpack.c.b16 %v10142, %v10140
      %v10169 = vpack.c.b16 %v10143, %v10141
      %v10170 = vpack.c.b16 %v10146, %v10144
      %v10171 = vpack.c.b16 %v10147, %v10145
      %v10172 = vpack.c.b16 %v10150, %v10148
      %v10173 = vpack.c.b16 %v10151, %v10149
      %v10174 = vpack.c.b16 %v10154, %v10152
      %v10175 = vpack.c.b16 %v10155, %v10153
      %v10176 = vpack.c.b16 %v10158, %v10156
      %v10177 = vpack.c.b16 %v10159, %v10157
      %v10197 = vsel %vm8299, %v10104, 0
      %10199 = vmatpush.bf16.msra.mxu0 %v10174
      %10200 = vmatpush.bf16.msra.mxu0 %v10172
      %10201 = vmatpush.bf16.msra.mxu0 %v10170
      %10202 = vmatpush.bf16.msra.mxu0 %v10168
      %10203 = vmatpush.bf16.msra.mxu0 %v10166
      %10204 = vmatpush.bf16.msra.mxu0 %v10164
      %10205 = vmatpush.bf16.msra.mxu0 %v10162
      %10206 = vmatpush.bf16.msra.mxu0 %v10160
      %10207 = vmatmul.bf16.gmra.mxu0 %v10103
      %v10208 = vpop.f32.mrf.mxu0
      %v10209 = vadd.f32 0.0, %v10208
      %v10210 = vpop.f32.mrf.mxu0
      %v10211 = vadd.f32 0.0, %v10210
      %10212 = vdwg.mxu0
      %10213 = vmatpush.bf16.msra.mxu0 0
      %10214 = vmatpush.bf16.msra.mxu0 0
      %10215 = vmatpush.bf16.msra.mxu0 0
      %10216 = vmatpush.bf16.msra.mxu0 0
      %10217 = vmatpush.bf16.msra.mxu0 0
      %10218 = vmatpush.bf16.msra.mxu0 0
      %10219 = vmatpush.bf16.msra.mxu0 0
      %10220 = vmatpush.bf16.msra.mxu0 %v10176
      %10221 = vmatmul.bf16.gmra.mxu0 %v10197
      %v10222 = vpop.f32.mrf.mxu0
      %v10223 = vadd.f32 %v10209, %v10222
      %v10224 = vpop.f32.mrf.mxu0
      %v10225 = vadd.f32 %v10211, %v10224
      %10226 = vdwg.mxu0
      %10227 = vmatpush.bf16.msra.mxu0 %v10175
      %10228 = vmatpush.bf16.msra.mxu0 %v10173
      %10229 = vmatpush.bf16.msra.mxu0 %v10171
      %10230 = vmatpush.bf16.msra.mxu0 %v10169
      %10231 = vmatpush.bf16.msra.mxu0 %v10167
      %10232 = vmatpush.bf16.msra.mxu0 %v10165
      %10233 = vmatpush.bf16.msra.mxu0 %v10163
      %10234 = vmatpush.bf16.msra.mxu0 %v10161
      %10235 = vmatmul.bf16.gmra.mxu0 %v10103
      %v10236 = vpop.f32.mrf.mxu0
      %v10237 = vadd.f32 0.0, %v10236
      %v10238 = vpop.f32.mrf.mxu0
      %v10239 = vadd.f32 0.0, %v10238
      %10240 = vdwg.mxu0
      %10241 = vmatpush.bf16.msra.mxu0 0
      %10242 = vmatpush.bf16.msra.mxu0 0
      %10243 = vmatpush.bf16.msra.mxu0 0
      %10244 = vmatpush.bf16.msra.mxu0 0
      %10245 = vmatpush.bf16.msra.mxu0 0
      %10246 = vmatpush.bf16.msra.mxu0 0
      %10247 = vmatpush.bf16.msra.mxu0 0
      %10248 = vmatpush.bf16.msra.mxu0 %v10177
      %10249 = vmatmul.bf16.gmra.mxu0 %v10197
      %v10250 = vpop.f32.mrf.mxu0
      %v10251 = vadd.f32 %v10237, %v10250
      %v10252 = vpop.f32.mrf.mxu0
      %v10253 = vadd.f32 %v10239, %v10252
      %10254 = vdwg.mxu0
      %v10257 = vunpack.c.l.b16 %v7906
      %v10258 = vunpack.c.h.b16 %v7906
      %v10259 = vunpack.c.l.b16 %v7907
      %v10260 = vunpack.c.h.b16 %v7907
      %v10261 = vpack.c.b16 %v10259, %v10257
      %v10262 = vpack.c.b16 %v10260, %v10258
      %v10282 = vunpack.c.l.b16 %v8146
      %v10283 = vunpack.c.h.b16 %v8146
      %v10284 = vunpack.c.l.b16 %v8147
      %v10285 = vunpack.c.h.b16 %v8147
      %v10286 = vunpack.c.l.b16 %v8148
      %v10287 = vunpack.c.h.b16 %v8148
      %v10288 = vunpack.c.l.b16 %v8149
      %v10289 = vunpack.c.h.b16 %v8149
      %v10290 = vunpack.c.l.b16 %v8150
      %v10291 = vunpack.c.h.b16 %v8150
      %v10292 = vunpack.c.l.b16 %v8151
      %v10293 = vunpack.c.h.b16 %v8151
      %v10294 = vunpack.c.l.b16 %v8152
      %v10295 = vunpack.c.h.b16 %v8152
      %v10296 = vunpack.c.l.b16 %v8153
      %v10297 = vunpack.c.h.b16 %v8153
      %v10298 = vunpack.c.l.b16 %v8154
      %v10299 = vunpack.c.h.b16 %v8154
      %v10300 = vunpack.c.l.b16 %v8155
      %v10301 = vunpack.c.h.b16 %v8155
      %v10302 = vunpack.c.l.b16 %v8156
      %v10303 = vunpack.c.h.b16 %v8156
      %v10304 = vunpack.c.l.b16 %v8157
      %v10305 = vunpack.c.h.b16 %v8157
      %v10306 = vunpack.c.l.b16 %v8158
      %v10307 = vunpack.c.h.b16 %v8158
      %v10308 = vunpack.c.l.b16 %v8159
      %v10309 = vunpack.c.h.b16 %v8159
      %v10310 = vunpack.c.l.b16 %v8160
      %v10311 = vunpack.c.h.b16 %v8160
      %v10312 = vunpack.c.l.b16 %v8161
      %v10313 = vunpack.c.h.b16 %v8161
      %v10314 = vunpack.c.l.b16 %v8162
      %v10315 = vunpack.c.h.b16 %v8162
      %v10316 = vunpack.c.l.b16 %v8163
      %v10317 = vunpack.c.h.b16 %v8163
      %v10318 = vpack.c.b16 %v10284, %v10282
      %v10319 = vpack.c.b16 %v10285, %v10283
      %v10320 = vpack.c.b16 %v10288, %v10286
      %v10321 = vpack.c.b16 %v10289, %v10287
      %v10322 = vpack.c.b16 %v10292, %v10290
      %v10323 = vpack.c.b16 %v10293, %v10291
      %v10324 = vpack.c.b16 %v10296, %v10294
      %v10325 = vpack.c.b16 %v10297, %v10295
      %v10326 = vpack.c.b16 %v10300, %v10298
      %v10327 = vpack.c.b16 %v10301, %v10299
      %v10328 = vpack.c.b16 %v10304, %v10302
      %v10329 = vpack.c.b16 %v10305, %v10303
      %v10330 = vpack.c.b16 %v10308, %v10306
      %v10331 = vpack.c.b16 %v10309, %v10307
      %v10332 = vpack.c.b16 %v10312, %v10310
      %v10333 = vpack.c.b16 %v10313, %v10311
      %v10334 = vpack.c.b16 %v10316, %v10314
      %v10335 = vpack.c.b16 %v10317, %v10315
      %v10355 = vsel %vm8299, %v10262, 0
      %10357 = vmatpush.bf16.msra.mxu0 %v10332
      %10358 = vmatpush.bf16.msra.mxu0 %v10330
      %10359 = vmatpush.bf16.msra.mxu0 %v10328
      %10360 = vmatpush.bf16.msra.mxu0 %v10326
      %10361 = vmatpush.bf16.msra.mxu0 %v10324
      %10362 = vmatpush.bf16.msra.mxu0 %v10322
      %10363 = vmatpush.bf16.msra.mxu0 %v10320
      %10364 = vmatpush.bf16.msra.mxu0 %v10318
      %10365 = vmatmul.bf16.gmra.mxu0 %v10261
      %v10366 = vpop.f32.mrf.mxu0
      %v10367 = vadd.f32 0.0, %v10366
      %v10368 = vpop.f32.mrf.mxu0
      %v10369 = vadd.f32 0.0, %v10368
      %10370 = vdwg.mxu0
      %10371 = vmatpush.bf16.msra.mxu0 0
      %10372 = vmatpush.bf16.msra.mxu0 0
      %10373 = vmatpush.bf16.msra.mxu0 0
      %10374 = vmatpush.bf16.msra.mxu0 0
      %10375 = vmatpush.bf16.msra.mxu0 0
      %10376 = vmatpush.bf16.msra.mxu0 0
      %10377 = vmatpush.bf16.msra.mxu0 0
      %10378 = vmatpush.bf16.msra.mxu0 %v10334
      %10379 = vmatmul.bf16.gmra.mxu0 %v10355
      %v10380 = vpop.f32.mrf.mxu0
      %v10381 = vadd.f32 %v10367, %v10380
      %v10382 = vpop.f32.mrf.mxu0
      %v10383 = vadd.f32 %v10369, %v10382
      %10384 = vdwg.mxu0
      %10385 = vmatpush.bf16.msra.mxu0 %v10333
      %10386 = vmatpush.bf16.msra.mxu0 %v10331
      %10387 = vmatpush.bf16.msra.mxu0 %v10329
      %10388 = vmatpush.bf16.msra.mxu0 %v10327
      %10389 = vmatpush.bf16.msra.mxu0 %v10325
      %10390 = vmatpush.bf16.msra.mxu0 %v10323
      %10391 = vmatpush.bf16.msra.mxu0 %v10321
      %10392 = vmatpush.bf16.msra.mxu0 %v10319
      %10393 = vmatmul.bf16.gmra.mxu0 %v10261
      %v10394 = vpop.f32.mrf.mxu0
      %v10395 = vadd.f32 0.0, %v10394
      %v10396 = vpop.f32.mrf.mxu0
      %v10397 = vadd.f32 0.0, %v10396
      %10398 = vdwg.mxu0
      %10399 = vmatpush.bf16.msra.mxu0 0
      %10400 = vmatpush.bf16.msra.mxu0 0
      %10401 = vmatpush.bf16.msra.mxu0 0
      %10402 = vmatpush.bf16.msra.mxu0 0
      %10403 = vmatpush.bf16.msra.mxu0 0
      %10404 = vmatpush.bf16.msra.mxu0 0
      %10405 = vmatpush.bf16.msra.mxu0 0
      %10406 = vmatpush.bf16.msra.mxu0 %v10335
      %10407 = vmatmul.bf16.gmra.mxu0 %v10355
      %v10408 = vpop.f32.mrf.mxu0
      %v10409 = vadd.f32 %v10395, %v10408
      %v10410 = vpop.f32.mrf.mxu0
      %v10411 = vadd.f32 %v10397, %v10410
      %10412 = vdwg.mxu0
      %v10415 = vunpack.c.l.b16 %v7908
      %v10416 = vunpack.c.h.b16 %v7908
      %v10417 = vunpack.c.l.b16 %v7909
      %v10418 = vunpack.c.h.b16 %v7909
      %v10419 = vpack.c.b16 %v10417, %v10415
      %v10420 = vpack.c.b16 %v10418, %v10416
      %v10440 = vunpack.c.l.b16 %v8164
      %v10441 = vunpack.c.h.b16 %v8164
      %v10442 = vunpack.c.l.b16 %v8165
      %v10443 = vunpack.c.h.b16 %v8165
      %v10444 = vunpack.c.l.b16 %v8166
      %v10445 = vunpack.c.h.b16 %v8166
      %v10446 = vunpack.c.l.b16 %v8167
      %v10447 = vunpack.c.h.b16 %v8167
      %v10448 = vunpack.c.l.b16 %v8168
      %v10449 = vunpack.c.h.b16 %v8168
      %v10450 = vunpack.c.l.b16 %v8169
      %v10451 = vunpack.c.h.b16 %v8169
      %v10452 = vunpack.c.l.b16 %v8170
      %v10453 = vunpack.c.h.b16 %v8170
      %v10454 = vunpack.c.l.b16 %v8171
      %v10455 = vunpack.c.h.b16 %v8171
      %v10456 = vunpack.c.l.b16 %v8172
      %v10457 = vunpack.c.h.b16 %v8172
      %v10458 = vunpack.c.l.b16 %v8173
      %v10459 = vunpack.c.h.b16 %v8173
      %v10460 = vunpack.c.l.b16 %v8174
      %v10461 = vunpack.c.h.b16 %v8174
      %v10462 = vunpack.c.l.b16 %v8175
      %v10463 = vunpack.c.h.b16 %v8175
      %v10464 = vunpack.c.l.b16 %v8176
      %v10465 = vunpack.c.h.b16 %v8176
      %v10466 = vunpack.c.l.b16 %v8177
      %v10467 = vunpack.c.h.b16 %v8177
      %v10468 = vunpack.c.l.b16 %v8178
      %v10469 = vunpack.c.h.b16 %v8178
      %v10470 = vunpack.c.l.b16 %v8179
      %v10471 = vunpack.c.h.b16 %v8179
      %v10472 = vunpack.c.l.b16 %v8180
      %v10473 = vunpack.c.h.b16 %v8180
      %v10474 = vunpack.c.l.b16 %v8181
      %v10475 = vunpack.c.h.b16 %v8181
      %v10476 = vpack.c.b16 %v10442, %v10440
      %v10477 = vpack.c.b16 %v10443, %v10441
      %v10478 = vpack.c.b16 %v10446, %v10444
      %v10479 = vpack.c.b16 %v10447, %v10445
      %v10480 = vpack.c.b16 %v10450, %v10448
      %v10481 = vpack.c.b16 %v10451, %v10449
      %v10482 = vpack.c.b16 %v10454, %v10452
      %v10483 = vpack.c.b16 %v10455, %v10453
      %v10484 = vpack.c.b16 %v10458, %v10456
      %v10485 = vpack.c.b16 %v10459, %v10457
      %v10486 = vpack.c.b16 %v10462, %v10460
      %v10487 = vpack.c.b16 %v10463, %v10461
      %v10488 = vpack.c.b16 %v10466, %v10464
      %v10489 = vpack.c.b16 %v10467, %v10465
      %v10490 = vpack.c.b16 %v10470, %v10468
      %v10491 = vpack.c.b16 %v10471, %v10469
      %v10492 = vpack.c.b16 %v10474, %v10472
      %v10493 = vpack.c.b16 %v10475, %v10473
      %v10513 = vsel %vm8299, %v10420, 0
      %10515 = vmatpush.bf16.msra.mxu0 %v10490
      %10516 = vmatpush.bf16.msra.mxu0 %v10488
      %10517 = vmatpush.bf16.msra.mxu0 %v10486
      %10518 = vmatpush.bf16.msra.mxu0 %v10484
      %10519 = vmatpush.bf16.msra.mxu0 %v10482
      %10520 = vmatpush.bf16.msra.mxu0 %v10480
      %10521 = vmatpush.bf16.msra.mxu0 %v10478
      %10522 = vmatpush.bf16.msra.mxu0 %v10476
      %10523 = vmatmul.bf16.gmra.mxu0 %v10419
      %v10524 = vpop.f32.mrf.mxu0
      %v10525 = vadd.f32 0.0, %v10524
      %v10526 = vpop.f32.mrf.mxu0
      %v10527 = vadd.f32 0.0, %v10526
      %10528 = vdwg.mxu0
      %10529 = vmatpush.bf16.msra.mxu0 0
      %10530 = vmatpush.bf16.msra.mxu0 0
      %10531 = vmatpush.bf16.msra.mxu0 0
      %10532 = vmatpush.bf16.msra.mxu0 0
      %10533 = vmatpush.bf16.msra.mxu0 0
      %10534 = vmatpush.bf16.msra.mxu0 0
      %10535 = vmatpush.bf16.msra.mxu0 0
      %10536 = vmatpush.bf16.msra.mxu0 %v10492
      %10537 = vmatmul.bf16.gmra.mxu0 %v10513
      %v10538 = vpop.f32.mrf.mxu0
      %v10539 = vadd.f32 %v10525, %v10538
      %v10540 = vpop.f32.mrf.mxu0
      %v10541 = vadd.f32 %v10527, %v10540
      %10542 = vdwg.mxu0
      %10543 = vmatpush.bf16.msra.mxu0 %v10491
      %10544 = vmatpush.bf16.msra.mxu0 %v10489
      %10545 = vmatpush.bf16.msra.mxu0 %v10487
      %10546 = vmatpush.bf16.msra.mxu0 %v10485
      %10547 = vmatpush.bf16.msra.mxu0 %v10483
      %10548 = vmatpush.bf16.msra.mxu0 %v10481
      %10549 = vmatpush.bf16.msra.mxu0 %v10479
      %10550 = vmatpush.bf16.msra.mxu0 %v10477
      %10551 = vmatmul.bf16.gmra.mxu0 %v10419
      %v10552 = vpop.f32.mrf.mxu0
      %v10553 = vadd.f32 0.0, %v10552
      %v10554 = vpop.f32.mrf.mxu0
      %v10555 = vadd.f32 0.0, %v10554
      %10556 = vdwg.mxu0
      %10557 = vmatpush.bf16.msra.mxu0 0
      %10558 = vmatpush.bf16.msra.mxu0 0
      %10559 = vmatpush.bf16.msra.mxu0 0
      %10560 = vmatpush.bf16.msra.mxu0 0
      %10561 = vmatpush.bf16.msra.mxu0 0
      %10562 = vmatpush.bf16.msra.mxu0 0
      %10563 = vmatpush.bf16.msra.mxu0 0
      %10564 = vmatpush.bf16.msra.mxu0 %v10493
      %10565 = vmatmul.bf16.gmra.mxu0 %v10513
      %v10566 = vpop.f32.mrf.mxu0
      %v10567 = vadd.f32 %v10553, %v10566
      %v10568 = vpop.f32.mrf.mxu0
      %v10569 = vadd.f32 %v10555, %v10568
      %10570 = vdwg.mxu0
      %v10573 = vunpack.c.l.b16 %v7910
      %v10574 = vunpack.c.h.b16 %v7910
      %v10575 = vunpack.c.l.b16 %v7911
      %v10576 = vunpack.c.h.b16 %v7911
      %v10577 = vpack.c.b16 %v10575, %v10573
      %v10578 = vpack.c.b16 %v10576, %v10574
      %v10598 = vunpack.c.l.b16 %v8182
      %v10599 = vunpack.c.h.b16 %v8182
      %v10600 = vunpack.c.l.b16 %v8183
      %v10601 = vunpack.c.h.b16 %v8183
      %v10602 = vunpack.c.l.b16 %v8184
      %v10603 = vunpack.c.h.b16 %v8184
      %v10604 = vunpack.c.l.b16 %v8185
      %v10605 = vunpack.c.h.b16 %v8185
      %v10606 = vunpack.c.l.b16 %v8186
      %v10607 = vunpack.c.h.b16 %v8186
      %v10608 = vunpack.c.l.b16 %v8187
      %v10609 = vunpack.c.h.b16 %v8187
      %v10610 = vunpack.c.l.b16 %v8188
      %v10611 = vunpack.c.h.b16 %v8188
      %v10612 = vunpack.c.l.b16 %v8189
      %v10613 = vunpack.c.h.b16 %v8189
      %v10614 = vunpack.c.l.b16 %v8190
      %v10615 = vunpack.c.h.b16 %v8190
      %v10616 = vunpack.c.l.b16 %v8191
      %v10617 = vunpack.c.h.b16 %v8191
      %v10618 = vunpack.c.l.b16 %v8192
      %v10619 = vunpack.c.h.b16 %v8192
      %v10620 = vunpack.c.l.b16 %v8193
      %v10621 = vunpack.c.h.b16 %v8193
      %v10622 = vunpack.c.l.b16 %v8194
      %v10623 = vunpack.c.h.b16 %v8194
      %v10624 = vunpack.c.l.b16 %v8195
      %v10625 = vunpack.c.h.b16 %v8195
      %v10626 = vunpack.c.l.b16 %v8196
      %v10627 = vunpack.c.h.b16 %v8196
      %v10628 = vunpack.c.l.b16 %v8197
      %v10629 = vunpack.c.h.b16 %v8197
      %v10630 = vunpack.c.l.b16 %v8198
      %v10631 = vunpack.c.h.b16 %v8198
      %v10632 = vunpack.c.l.b16 %v8199
      %v10633 = vunpack.c.h.b16 %v8199
      %v10634 = vpack.c.b16 %v10600, %v10598
      %v10635 = vpack.c.b16 %v10601, %v10599
      %v10636 = vpack.c.b16 %v10604, %v10602
      %v10637 = vpack.c.b16 %v10605, %v10603
      %v10638 = vpack.c.b16 %v10608, %v10606
      %v10639 = vpack.c.b16 %v10609, %v10607
      %v10640 = vpack.c.b16 %v10612, %v10610
      %v10641 = vpack.c.b16 %v10613, %v10611
      %v10642 = vpack.c.b16 %v10616, %v10614
      %v10643 = vpack.c.b16 %v10617, %v10615
      %v10644 = vpack.c.b16 %v10620, %v10618
      %v10645 = vpack.c.b16 %v10621, %v10619
      %v10646 = vpack.c.b16 %v10624, %v10622
      %v10647 = vpack.c.b16 %v10625, %v10623
      %v10648 = vpack.c.b16 %v10628, %v10626
      %v10649 = vpack.c.b16 %v10629, %v10627
      %v10650 = vpack.c.b16 %v10632, %v10630
      %v10651 = vpack.c.b16 %v10633, %v10631
      %v10671 = vsel %vm8299, %v10578, 0
      %10673 = vmatpush.bf16.msra.mxu0 %v10648
      %10674 = vmatpush.bf16.msra.mxu0 %v10646
      %10675 = vmatpush.bf16.msra.mxu0 %v10644
      %10676 = vmatpush.bf16.msra.mxu0 %v10642
      %10677 = vmatpush.bf16.msra.mxu0 %v10640
      %10678 = vmatpush.bf16.msra.mxu0 %v10638
      %10679 = vmatpush.bf16.msra.mxu0 %v10636
      %10680 = vmatpush.bf16.msra.mxu0 %v10634
      %10681 = vmatmul.bf16.gmra.mxu0 %v10577
      %v10682 = vpop.f32.mrf.mxu0
      %v10683 = vadd.f32 0.0, %v10682
      %v10684 = vpop.f32.mrf.mxu0
      %v10685 = vadd.f32 0.0, %v10684
      %10686 = vdwg.mxu0
      %10687 = vmatpush.bf16.msra.mxu0 0
      %10688 = vmatpush.bf16.msra.mxu0 0
      %10689 = vmatpush.bf16.msra.mxu0 0
      %10690 = vmatpush.bf16.msra.mxu0 0
      %10691 = vmatpush.bf16.msra.mxu0 0
      %10692 = vmatpush.bf16.msra.mxu0 0
      %10693 = vmatpush.bf16.msra.mxu0 0
      %10694 = vmatpush.bf16.msra.mxu0 %v10650
      %10695 = vmatmul.bf16.gmra.mxu0 %v10671
      %v10696 = vpop.f32.mrf.mxu0
      %v10697 = vadd.f32 %v10683, %v10696
      %v10698 = vpop.f32.mrf.mxu0
      %v10699 = vadd.f32 %v10685, %v10698
      %10700 = vdwg.mxu0
      %10701 = vmatpush.bf16.msra.mxu0 %v10649
      %10702 = vmatpush.bf16.msra.mxu0 %v10647
      %10703 = vmatpush.bf16.msra.mxu0 %v10645
      %10704 = vmatpush.bf16.msra.mxu0 %v10643
      %10705 = vmatpush.bf16.msra.mxu0 %v10641
      %10706 = vmatpush.bf16.msra.mxu0 %v10639
      %10707 = vmatpush.bf16.msra.mxu0 %v10637
      %10708 = vmatpush.bf16.msra.mxu0 %v10635
      %10709 = vmatmul.bf16.gmra.mxu0 %v10577
      %v10710 = vpop.f32.mrf.mxu0
      %v10711 = vadd.f32 0.0, %v10710
      %v10712 = vpop.f32.mrf.mxu0
      %v10713 = vadd.f32 0.0, %v10712
      %10714 = vdwg.mxu0
      %10715 = vmatpush.bf16.msra.mxu0 0
      %10716 = vmatpush.bf16.msra.mxu0 0
      %10717 = vmatpush.bf16.msra.mxu0 0
      %10718 = vmatpush.bf16.msra.mxu0 0
      %10719 = vmatpush.bf16.msra.mxu0 0
      %10720 = vmatpush.bf16.msra.mxu0 0
      %10721 = vmatpush.bf16.msra.mxu0 0
      %10722 = vmatpush.bf16.msra.mxu0 %v10651
      %10723 = vmatmul.bf16.gmra.mxu0 %v10671
      %v10724 = vpop.f32.mrf.mxu0
      %v10725 = vadd.f32 %v10711, %v10724
      %v10726 = vpop.f32.mrf.mxu0
      %v10727 = vadd.f32 %v10713, %v10726
      %10728 = vdwg.mxu0
      %v10729 = vsel %vm3361, %v8355, 0.0
      %v10730 = vadd.f32 %v8327, %v10729
      %10731 = vadd.xlane.f32.xlu0 %v10730
      %v10732 = vpop.xlane.xlu0 %10731
      %v10733 = vsel %vm3361, %v8357, 0.0
      %v10734 = vadd.f32 %v8329, %v10733
      %10735 = vadd.xlane.f32.xlu0 %v10734
      %v10736 = vpop.xlane.xlu0 %10735
      %v10737 = vsel %vm3361, %v8513, 0.0
      %v10738 = vadd.f32 %v8485, %v10737
      %10739 = vadd.xlane.f32.xlu0 %v10738
      %v10740 = vpop.xlane.xlu0 %10739
      %v10741 = vsel %vm3361, %v8515, 0.0
      %v10742 = vadd.f32 %v8487, %v10741
      %10743 = vadd.xlane.f32.xlu0 %v10742
      %v10744 = vpop.xlane.xlu0 %10743
      %v10745 = vsel %vm3361, %v8671, 0.0
      %v10746 = vadd.f32 %v8643, %v10745
      %10747 = vadd.xlane.f32.xlu0 %v10746
      %v10748 = vpop.xlane.xlu0 %10747
      %v10749 = vsel %vm3361, %v8673, 0.0
      %v10750 = vadd.f32 %v8645, %v10749
      %10751 = vadd.xlane.f32.xlu0 %v10750
      %v10752 = vpop.xlane.xlu0 %10751
      %v10753 = vsel %vm3361, %v8829, 0.0
      %v10754 = vadd.f32 %v8801, %v10753
      %10755 = vadd.xlane.f32.xlu0 %v10754
      %v10756 = vpop.xlane.xlu0 %10755
      %v10757 = vsel %vm3361, %v8831, 0.0
      %v10758 = vadd.f32 %v8803, %v10757
      %10759 = vadd.xlane.f32.xlu0 %v10758
      %v10760 = vpop.xlane.xlu0 %10759
      %v10761 = vsel %vm3361, %v8987, 0.0
      %v10762 = vadd.f32 %v8959, %v10761
      %10763 = vadd.xlane.f32.xlu0 %v10762
      %v10764 = vpop.xlane.xlu0 %10763
      %v10765 = vsel %vm3361, %v8989, 0.0
      %v10766 = vadd.f32 %v8961, %v10765
      %10767 = vadd.xlane.f32.xlu0 %v10766
      %v10768 = vpop.xlane.xlu0 %10767
      %v10769 = vsel %vm3361, %v9145, 0.0
      %v10770 = vadd.f32 %v9117, %v10769
      %10771 = vadd.xlane.f32.xlu0 %v10770
      %v10772 = vpop.xlane.xlu0 %10771
      %v10773 = vsel %vm3361, %v9147, 0.0
      %v10774 = vadd.f32 %v9119, %v10773
      %10775 = vadd.xlane.f32.xlu0 %v10774
      %v10776 = vpop.xlane.xlu0 %10775
      %v10777 = vsel %vm3361, %v9303, 0.0
      %v10778 = vadd.f32 %v9275, %v10777
      %10779 = vadd.xlane.f32.xlu0 %v10778
      %v10780 = vpop.xlane.xlu0 %10779
      %v10781 = vsel %vm3361, %v9305, 0.0
      %v10782 = vadd.f32 %v9277, %v10781
      %10783 = vadd.xlane.f32.xlu0 %v10782
      %v10784 = vpop.xlane.xlu0 %10783
      %v10785 = vsel %vm3361, %v9461, 0.0
      %v10786 = vadd.f32 %v9433, %v10785
      %10787 = vadd.xlane.f32.xlu0 %v10786
      %v10788 = vpop.xlane.xlu0 %10787
      %v10789 = vsel %vm3361, %v9463, 0.0
      %v10790 = vadd.f32 %v9435, %v10789
      %10791 = vadd.xlane.f32.xlu0 %v10790
      %v10792 = vpop.xlane.xlu0 %10791
      %v10793 = vsel %vm3361, %v9619, 0.0
      %v10794 = vadd.f32 %v9591, %v10793
      %10795 = vadd.xlane.f32.xlu0 %v10794
      %v10796 = vpop.xlane.xlu0 %10795
      %v10797 = vsel %vm3361, %v9621, 0.0
      %v10798 = vadd.f32 %v9593, %v10797
      %10799 = vadd.xlane.f32.xlu0 %v10798
      %v10800 = vpop.xlane.xlu0 %10799
      %v10801 = vsel %vm3361, %v9777, 0.0
      %v10802 = vadd.f32 %v9749, %v10801
      %10803 = vadd.xlane.f32.xlu0 %v10802
      %v10804 = vpop.xlane.xlu0 %10803
      %v10805 = vsel %vm3361, %v9779, 0.0
      %v10806 = vadd.f32 %v9751, %v10805
      %10807 = vadd.xlane.f32.xlu0 %v10806
      %v10808 = vpop.xlane.xlu0 %10807
      %v10809 = vsel %vm3361, %v9935, 0.0
      %v10810 = vadd.f32 %v9907, %v10809
      %10811 = vadd.xlane.f32.xlu0 %v10810
      %v10812 = vpop.xlane.xlu0 %10811
      %v10813 = vsel %vm3361, %v9937, 0.0
      %v10814 = vadd.f32 %v9909, %v10813
      %10815 = vadd.xlane.f32.xlu0 %v10814
      %v10816 = vpop.xlane.xlu0 %10815
      %v10817 = vsel %vm3361, %v10093, 0.0
      %v10818 = vadd.f32 %v10065, %v10817
      %10819 = vadd.xlane.f32.xlu0 %v10818
      %v10820 = vpop.xlane.xlu0 %10819
      %v10821 = vsel %vm3361, %v10095, 0.0
      %v10822 = vadd.f32 %v10067, %v10821
      %10823 = vadd.xlane.f32.xlu0 %v10822
      %v10824 = vpop.xlane.xlu0 %10823
      %v10825 = vsel %vm3361, %v10251, 0.0
      %v10826 = vadd.f32 %v10223, %v10825
      %10827 = vadd.xlane.f32.xlu0 %v10826
      %v10828 = vpop.xlane.xlu0 %10827
      %v10829 = vsel %vm3361, %v10253, 0.0
      %v10830 = vadd.f32 %v10225, %v10829
      %10831 = vadd.xlane.f32.xlu0 %v10830
      %v10832 = vpop.xlane.xlu0 %10831
      %v10833 = vsel %vm3361, %v10409, 0.0
      %v10834 = vadd.f32 %v10381, %v10833
      %10835 = vadd.xlane.f32.xlu0 %v10834
      %v10836 = vpop.xlane.xlu0 %10835
      %v10837 = vsel %vm3361, %v10411, 0.0
      %v10838 = vadd.f32 %v10383, %v10837
      %10839 = vadd.xlane.f32.xlu0 %v10838
      %v10840 = vpop.xlane.xlu0 %10839
      %v10841 = vsel %vm3361, %v10567, 0.0
      %v10842 = vadd.f32 %v10539, %v10841
      %10843 = vadd.xlane.f32.xlu0 %v10842
      %v10844 = vpop.xlane.xlu0 %10843
      %v10845 = vsel %vm3361, %v10569, 0.0
      %v10846 = vadd.f32 %v10541, %v10845
      %10847 = vadd.xlane.f32.xlu0 %v10846
      %v10848 = vpop.xlane.xlu0 %10847
      %v10849 = vsel %vm3361, %v10725, 0.0
      %v10850 = vadd.f32 %v10697, %v10849
      %10851 = vadd.xlane.f32.xlu0 %v10850
      %v10852 = vpop.xlane.xlu0 %10851
      %v10853 = vsel %vm3361, %v10727, 0.0
      %v10854 = vadd.f32 %v10699, %v10853
      %10855 = vadd.xlane.f32.xlu0 %v10854
      %v10856 = vpop.xlane.xlu0 %10855
      %v10857 = vmul.f32 %v10732, 0.0051020407
      %v10858 = vmul.f32 %v10736, 0.0051020407
      %v10859 = vmul.f32 %v10740, 0.0051020407
      %v10860 = vmul.f32 %v10744, 0.0051020407
      %v10861 = vmul.f32 %v10748, 0.0051020407
      %v10862 = vmul.f32 %v10752, 0.0051020407
      %v10863 = vmul.f32 %v10756, 0.0051020407
      %v10864 = vmul.f32 %v10760, 0.0051020407
      %v10865 = vmul.f32 %v10764, 0.0051020407
      %v10866 = vmul.f32 %v10768, 0.0051020407
      %v10867 = vmul.f32 %v10772, 0.0051020407
      %v10868 = vmul.f32 %v10776, 0.0051020407
      %v10869 = vmul.f32 %v10780, 0.0051020407
      %v10870 = vmul.f32 %v10784, 0.0051020407
      %v10871 = vmul.f32 %v10788, 0.0051020407
      %v10872 = vmul.f32 %v10792, 0.0051020407
      %v10873 = vmul.f32 %v10796, 0.0051020407
      %v10874 = vmul.f32 %v10800, 0.0051020407
      %v10875 = vmul.f32 %v10804, 0.0051020407
      %v10876 = vmul.f32 %v10808, 0.0051020407
      %v10877 = vmul.f32 %v10812, 0.0051020407
      %v10878 = vmul.f32 %v10816, 0.0051020407
      %v10879 = vmul.f32 %v10820, 0.0051020407
      %v10880 = vmul.f32 %v10824, 0.0051020407
      %v10881 = vmul.f32 %v10828, 0.0051020407
      %v10882 = vmul.f32 %v10832, 0.0051020407
      %v10883 = vmul.f32 %v10836, 0.0051020407
      %v10884 = vmul.f32 %v10840, 0.0051020407
      %v10885 = vmul.f32 %v10844, 0.0051020407
      %v10886 = vmul.f32 %v10848, 0.0051020407
      %v10887 = vmul.f32 %v10852, 0.0051020407
      %v10888 = vmul.f32 %v10856, 0.0051020407
      %v10889 = vmul.f32 %v8327, %v8327
      %v10890 = vmul.f32 %v8355, %v8355
      %v10891 = vmul.f32 %v8329, %v8329
      %v10892 = vmul.f32 %v8357, %v8357
      %v10893 = vmul.f32 %v8485, %v8485
      %v10894 = vmul.f32 %v8513, %v8513
      %v10895 = vmul.f32 %v8487, %v8487
      %v10896 = vmul.f32 %v8515, %v8515
      %v10897 = vmul.f32 %v8643, %v8643
      %v10898 = vmul.f32 %v8671, %v8671
      %v10899 = vmul.f32 %v8645, %v8645
      %v10900 = vmul.f32 %v8673, %v8673
      %v10901 = vmul.f32 %v8801, %v8801
      %v10902 = vmul.f32 %v8829, %v8829
      %v10903 = vmul.f32 %v8803, %v8803
      %v10904 = vmul.f32 %v8831, %v8831
      %v10905 = vmul.f32 %v8959, %v8959
      %v10906 = vmul.f32 %v8987, %v8987
      %v10907 = vmul.f32 %v8961, %v8961
      %v10908 = vmul.f32 %v8989, %v8989
      %v10909 = vmul.f32 %v9117, %v9117
      %v10910 = vmul.f32 %v9145, %v9145
      %v10911 = vmul.f32 %v9119, %v9119
      %v10912 = vmul.f32 %v9147, %v9147
      %v10913 = vmul.f32 %v9275, %v9275
      %v10914 = vmul.f32 %v9303, %v9303
      %v10915 = vmul.f32 %v9277, %v9277
      %v10916 = vmul.f32 %v9305, %v9305
      %v10917 = vmul.f32 %v9433, %v9433
      %v10918 = vmul.f32 %v9461, %v9461
      %v10919 = vmul.f32 %v9435, %v9435
      %v10920 = vmul.f32 %v9463, %v9463
      %v10921 = vmul.f32 %v9591, %v9591
      %v10922 = vmul.f32 %v9619, %v9619
      %v10923 = vmul.f32 %v9593, %v9593
      %v10924 = vmul.f32 %v9621, %v9621
      %v10925 = vmul.f32 %v9749, %v9749
      %v10926 = vmul.f32 %v9777, %v9777
      %v10927 = vmul.f32 %v9751, %v9751
      %v10928 = vmul.f32 %v9779, %v9779
      %v10929 = vmul.f32 %v9907, %v9907
      %v10930 = vmul.f32 %v9935, %v9935
      %v10931 = vmul.f32 %v9909, %v9909
      %v10932 = vmul.f32 %v9937, %v9937
      %v10933 = vmul.f32 %v10065, %v10065
      %v10934 = vmul.f32 %v10093, %v10093
      %v10935 = vmul.f32 %v10067, %v10067
      %v10936 = vmul.f32 %v10095, %v10095
      %v10937 = vmul.f32 %v10223, %v10223
      %v10938 = vmul.f32 %v10251, %v10251
      %v10939 = vmul.f32 %v10225, %v10225
      %v10940 = vmul.f32 %v10253, %v10253
      %v10941 = vmul.f32 %v10381, %v10381
      %v10942 = vmul.f32 %v10409, %v10409
      %v10943 = vmul.f32 %v10383, %v10383
      %v10944 = vmul.f32 %v10411, %v10411
      %v10945 = vmul.f32 %v10539, %v10539
      %v10946 = vmul.f32 %v10567, %v10567
      %v10947 = vmul.f32 %v10541, %v10541
      %v10948 = vmul.f32 %v10569, %v10569
      %v10949 = vmul.f32 %v10697, %v10697
      %v10950 = vmul.f32 %v10725, %v10725
      %v10951 = vmul.f32 %v10699, %v10699
      %v10952 = vmul.f32 %v10727, %v10727
      %v10953 = vsel %vm3361, %v10890, 0.0
      %v10954 = vadd.f32 %v10889, %v10953
      %10955 = vadd.xlane.f32.xlu0 %v10954
      %v10956 = vpop.xlane.xlu0 %10955
      %v10957 = vsel %vm3361, %v10892, 0.0
      %v10958 = vadd.f32 %v10891, %v10957
      %10959 = vadd.xlane.f32.xlu0 %v10958
      %v10960 = vpop.xlane.xlu0 %10959
      %v10961 = vsel %vm3361, %v10894, 0.0
      %v10962 = vadd.f32 %v10893, %v10961
      %10963 = vadd.xlane.f32.xlu0 %v10962
      %v10964 = vpop.xlane.xlu0 %10963
      %v10965 = vsel %vm3361, %v10896, 0.0
      %v10966 = vadd.f32 %v10895, %v10965
      %10967 = vadd.xlane.f32.xlu0 %v10966
      %v10968 = vpop.xlane.xlu0 %10967
      %v10969 = vsel %vm3361, %v10898, 0.0
      %v10970 = vadd.f32 %v10897, %v10969
      %10971 = vadd.xlane.f32.xlu0 %v10970
      %v10972 = vpop.xlane.xlu0 %10971
      %v10973 = vsel %vm3361, %v10900, 0.0
      %v10974 = vadd.f32 %v10899, %v10973
      %10975 = vadd.xlane.f32.xlu0 %v10974
      %v10976 = vpop.xlane.xlu0 %10975
      %v10977 = vsel %vm3361, %v10902, 0.0
      %v10978 = vadd.f32 %v10901, %v10977
      %10979 = vadd.xlane.f32.xlu0 %v10978
      %v10980 = vpop.xlane.xlu0 %10979
      %v10981 = vsel %vm3361, %v10904, 0.0
      %v10982 = vadd.f32 %v10903, %v10981
      %10983 = vadd.xlane.f32.xlu0 %v10982
      %v10984 = vpop.xlane.xlu0 %10983
      %v10985 = vsel %vm3361, %v10906, 0.0
      %v10986 = vadd.f32 %v10905, %v10985
      %10987 = vadd.xlane.f32.xlu0 %v10986
      %v10988 = vpop.xlane.xlu0 %10987
      %v10989 = vsel %vm3361, %v10908, 0.0
      %v10990 = vadd.f32 %v10907, %v10989
      %10991 = vadd.xlane.f32.xlu0 %v10990
      %v10992 = vpop.xlane.xlu0 %10991
      %v10993 = vsel %vm3361, %v10910, 0.0
      %v10994 = vadd.f32 %v10909, %v10993
      %10995 = vadd.xlane.f32.xlu0 %v10994
      %v10996 = vpop.xlane.xlu0 %10995
      %v10997 = vsel %vm3361, %v10912, 0.0
      %v10998 = vadd.f32 %v10911, %v10997
      %10999 = vadd.xlane.f32.xlu0 %v10998
      %v11000 = vpop.xlane.xlu0 %10999
      %v11001 = vsel %vm3361, %v10914, 0.0
      %v11002 = vadd.f32 %v10913, %v11001
      %11003 = vadd.xlane.f32.xlu0 %v11002
      %v11004 = vpop.xlane.xlu0 %11003
      %v11005 = vsel %vm3361, %v10916, 0.0
      %v11006 = vadd.f32 %v10915, %v11005
      %11007 = vadd.xlane.f32.xlu0 %v11006
      %v11008 = vpop.xlane.xlu0 %11007
      %v11009 = vsel %vm3361, %v10918, 0.0
      %v11010 = vadd.f32 %v10917, %v11009
      %11011 = vadd.xlane.f32.xlu0 %v11010
      %v11012 = vpop.xlane.xlu0 %11011
      %v11013 = vsel %vm3361, %v10920, 0.0
      %v11014 = vadd.f32 %v10919, %v11013
      %11015 = vadd.xlane.f32.xlu0 %v11014
      %v11016 = vpop.xlane.xlu0 %11015
      %v11017 = vsel %vm3361, %v10922, 0.0
      %v11018 = vadd.f32 %v10921, %v11017
      %11019 = vadd.xlane.f32.xlu0 %v11018
      %v11020 = vpop.xlane.xlu0 %11019
      %v11021 = vsel %vm3361, %v10924, 0.0
      %v11022 = vadd.f32 %v10923, %v11021
      %11023 = vadd.xlane.f32.xlu0 %v11022
      %v11024 = vpop.xlane.xlu0 %11023
      %v11025 = vsel %vm3361, %v10926, 0.0
      %v11026 = vadd.f32 %v10925, %v11025
      %11027 = vadd.xlane.f32.xlu0 %v11026
      %v11028 = vpop.xlane.xlu0 %11027
      %v11029 = vsel %vm3361, %v10928, 0.0
      %v11030 = vadd.f32 %v10927, %v11029
      %11031 = vadd.xlane.f32.xlu0 %v11030
      %v11032 = vpop.xlane.xlu0 %11031
      %v11033 = vsel %vm3361, %v10930, 0.0
      %v11034 = vadd.f32 %v10929, %v11033
      %11035 = vadd.xlane.f32.xlu0 %v11034
      %v11036 = vpop.xlane.xlu0 %11035
      %v11037 = vsel %vm3361, %v10932, 0.0
      %v11038 = vadd.f32 %v10931, %v11037
      %11039 = vadd.xlane.f32.xlu0 %v11038
      %v11040 = vpop.xlane.xlu0 %11039
      %v11041 = vsel %vm3361, %v10934, 0.0
      %v11042 = vadd.f32 %v10933, %v11041
      %11043 = vadd.xlane.f32.xlu0 %v11042
      %v11044 = vpop.xlane.xlu0 %11043
      %v11045 = vsel %vm3361, %v10936, 0.0
      %v11046 = vadd.f32 %v10935, %v11045
      %11047 = vadd.xlane.f32.xlu0 %v11046
      %v11048 = vpop.xlane.xlu0 %11047
      %v11049 = vsel %vm3361, %v10938, 0.0
      %v11050 = vadd.f32 %v10937, %v11049
      %11051 = vadd.xlane.f32.xlu0 %v11050
      %v11052 = vpop.xlane.xlu0 %11051
      %v11053 = vsel %vm3361, %v10940, 0.0
      %v11054 = vadd.f32 %v10939, %v11053
      %11055 = vadd.xlane.f32.xlu0 %v11054
      %v11056 = vpop.xlane.xlu0 %11055
      %v11057 = vsel %vm3361, %v10942, 0.0
      %v11058 = vadd.f32 %v10941, %v11057
      %11059 = vadd.xlane.f32.xlu0 %v11058
      %v11060 = vpop.xlane.xlu0 %11059
      %v11061 = vsel %vm3361, %v10944, 0.0
      %v11062 = vadd.f32 %v10943, %v11061
      %11063 = vadd.xlane.f32.xlu0 %v11062
      %v11064 = vpop.xlane.xlu0 %11063
      %v11065 = vsel %vm3361, %v10946, 0.0
      %v11066 = vadd.f32 %v10945, %v11065
      %11067 = vadd.xlane.f32.xlu0 %v11066
      %v11068 = vpop.xlane.xlu0 %11067
      %v11069 = vsel %vm3361, %v10948, 0.0
      %v11070 = vadd.f32 %v10947, %v11069
      %11071 = vadd.xlane.f32.xlu0 %v11070
      %v11072 = vpop.xlane.xlu0 %11071
      %v11073 = vsel %vm3361, %v10950, 0.0
      %v11074 = vadd.f32 %v10949, %v11073
      %11075 = vadd.xlane.f32.xlu0 %v11074
      %v11076 = vpop.xlane.xlu0 %11075
      %v11077 = vsel %vm3361, %v10952, 0.0
      %v11078 = vadd.f32 %v10951, %v11077
      %11079 = vadd.xlane.f32.xlu0 %v11078
      %v11080 = vpop.xlane.xlu0 %11079
      %v11081 = vmul.f32 %v10956, 0.0051020407
      %v11082 = vmul.f32 %v10960, 0.0051020407
      %v11083 = vmul.f32 %v10964, 0.0051020407
      %v11084 = vmul.f32 %v10968, 0.0051020407
      %v11085 = vmul.f32 %v10972, 0.0051020407
      %v11086 = vmul.f32 %v10976, 0.0051020407
      %v11087 = vmul.f32 %v10980, 0.0051020407
      %v11088 = vmul.f32 %v10984, 0.0051020407
      %v11089 = vmul.f32 %v10988, 0.0051020407
      %v11090 = vmul.f32 %v10992, 0.0051020407
      %v11091 = vmul.f32 %v10996, 0.0051020407
      %v11092 = vmul.f32 %v11000, 0.0051020407
      %v11093 = vmul.f32 %v11004, 0.0051020407
      %v11094 = vmul.f32 %v11008, 0.0051020407
      %v11095 = vmul.f32 %v11012, 0.0051020407
      %v11096 = vmul.f32 %v11016, 0.0051020407
      %v11097 = vmul.f32 %v11020, 0.0051020407
      %v11098 = vmul.f32 %v11024, 0.0051020407
      %v11099 = vmul.f32 %v11028, 0.0051020407
      %v11100 = vmul.f32 %v11032, 0.0051020407
      %v11101 = vmul.f32 %v11036, 0.0051020407
      %v11102 = vmul.f32 %v11040, 0.0051020407
      %v11103 = vmul.f32 %v11044, 0.0051020407
      %v11104 = vmul.f32 %v11048, 0.0051020407
      %v11105 = vmul.f32 %v11052, 0.0051020407
      %v11106 = vmul.f32 %v11056, 0.0051020407
      %v11107 = vmul.f32 %v11060, 0.0051020407
      %v11108 = vmul.f32 %v11064, 0.0051020407
      %v11109 = vmul.f32 %v11068, 0.0051020407
      %v11110 = vmul.f32 %v11072, 0.0051020407
      %v11111 = vmul.f32 %v11076, 0.0051020407
      %v11112 = vmul.f32 %v11080, 0.0051020407
      %v11113 = vmul.f32 %v10857, %v10857
      %v11114 = vmul.f32 %v10858, %v10858
      %v11115 = vmul.f32 %v10859, %v10859
      %v11116 = vmul.f32 %v10860, %v10860
      %v11117 = vmul.f32 %v10861, %v10861
      %v11118 = vmul.f32 %v10862, %v10862
      %v11119 = vmul.f32 %v10863, %v10863
      %v11120 = vmul.f32 %v10864, %v10864
      %v11121 = vmul.f32 %v10865, %v10865
      %v11122 = vmul.f32 %v10866, %v10866
      %v11123 = vmul.f32 %v10867, %v10867
      %v11124 = vmul.f32 %v10868, %v10868
      %v11125 = vmul.f32 %v10869, %v10869
      %v11126 = vmul.f32 %v10870, %v10870
      %v11127 = vmul.f32 %v10871, %v10871
      %v11128 = vmul.f32 %v10872, %v10872
      %v11129 = vmul.f32 %v10873, %v10873
      %v11130 = vmul.f32 %v10874, %v10874
      %v11131 = vmul.f32 %v10875, %v10875
      %v11132 = vmul.f32 %v10876, %v10876
      %v11133 = vmul.f32 %v10877, %v10877
      %v11134 = vmul.f32 %v10878, %v10878
      %v11135 = vmul.f32 %v10879, %v10879
      %v11136 = vmul.f32 %v10880, %v10880
      %v11137 = vmul.f32 %v10881, %v10881
      %v11138 = vmul.f32 %v10882, %v10882
      %v11139 = vmul.f32 %v10883, %v10883
      %v11140 = vmul.f32 %v10884, %v10884
      %v11141 = vmul.f32 %v10885, %v10885
      %v11142 = vmul.f32 %v10886, %v10886
      %v11143 = vmul.f32 %v10887, %v10887
      %v11144 = vmul.f32 %v10888, %v10888
      %v11145 = vsub.f32 %v11081, %v11113
      %v11146 = vsub.f32 %v11082, %v11114
      %v11147 = vsub.f32 %v11083, %v11115
      %v11148 = vsub.f32 %v11084, %v11116
      %v11149 = vsub.f32 %v11085, %v11117
      %v11150 = vsub.f32 %v11086, %v11118
      %v11151 = vsub.f32 %v11087, %v11119
      %v11152 = vsub.f32 %v11088, %v11120
      %v11153 = vsub.f32 %v11089, %v11121
      %v11154 = vsub.f32 %v11090, %v11122
      %v11155 = vsub.f32 %v11091, %v11123
      %v11156 = vsub.f32 %v11092, %v11124
      %v11157 = vsub.f32 %v11093, %v11125
      %v11158 = vsub.f32 %v11094, %v11126
      %v11159 = vsub.f32 %v11095, %v11127
      %v11160 = vsub.f32 %v11096, %v11128
      %v11161 = vsub.f32 %v11097, %v11129
      %v11162 = vsub.f32 %v11098, %v11130
      %v11163 = vsub.f32 %v11099, %v11131
      %v11164 = vsub.f32 %v11100, %v11132
      %v11165 = vsub.f32 %v11101, %v11133
      %v11166 = vsub.f32 %v11102, %v11134
      %v11167 = vsub.f32 %v11103, %v11135
      %v11168 = vsub.f32 %v11104, %v11136
      %v11169 = vsub.f32 %v11105, %v11137
      %v11170 = vsub.f32 %v11106, %v11138
      %v11171 = vsub.f32 %v11107, %v11139
      %v11172 = vsub.f32 %v11108, %v11140
      %v11173 = vsub.f32 %v11109, %v11141
      %v11174 = vsub.f32 %v11110, %v11142
      %v11175 = vsub.f32 %v11111, %v11143
      %v11176 = vsub.f32 %v11112, %v11144
      %v11177 = vld [vmem:[%s385] sm:$0xff]
      %v11178 = vld [vmem:[%s385 + $0x8] sm:$0xff]
      %v11179 = vld [vmem:[%s385 + $0x10] sm:$0xff]
      %v11180 = vld [vmem:[%s385 + $0x18] sm:$0xff]
      %v11181 = vld [vmem:[%s385 + $0x20] sm:$0xff]
      %v11182 = vld [vmem:[%s385 + $0x28] sm:$0xff]
      %v11183 = vld [vmem:[%s385 + $0x30] sm:$0xff]
      %v11184 = vld [vmem:[%s385 + $0x38] sm:$0xff]
      %v11185 = vld [vmem:[%s385 + $0x40] sm:$0xff]
      %v11186 = vld [vmem:[%s385 + $0x48] sm:$0xff]
      %v11187 = vld [vmem:[%s385 + $0x50] sm:$0xff]
      %v11188 = vld [vmem:[%s385 + $0x58] sm:$0xff]
      %v11189 = vld [vmem:[%s385 + $0x60] sm:$0xff]
      %v11190 = vld [vmem:[%s385 + $0x68] sm:$0xff]
      %v11191 = vld [vmem:[%s385 + $0x70] sm:$0xff]
      %v11192 = vld [vmem:[%s385 + $0x78] sm:$0xff]
      %v11193 = vld [vmem:[%s385 + $0x80] sm:$0xff]
      %v11194 = vld [vmem:[%s385 + $0x88] sm:$0xff]
      %v11195 = vld [vmem:[%s385 + $0x90] sm:$0xff]
      %v11196 = vld [vmem:[%s385 + $0x98] sm:$0xff]
      %v11197 = vld [vmem:[%s385 + $0xa0] sm:$0xff]
      %v11198 = vld [vmem:[%s385 + $0xa8] sm:$0xff]
      %v11199 = vld [vmem:[%s385 + $0xb0] sm:$0xff]
      %v11200 = vld [vmem:[%s385 + $0xb8] sm:$0xff]
      %v11201 = vld [vmem:[%s385 + $0xc0] sm:$0xff]
      %v11202 = vld [vmem:[%s385 + $0xc8] sm:$0xff]
      %v11203 = vld [vmem:[%s385 + $0xd0] sm:$0xff]
      %v11204 = vld [vmem:[%s385 + $0xd8] sm:$0xff]
      %v11205 = vld [vmem:[%s385 + $0xe0] sm:$0xff]
      %v11206 = vld [vmem:[%s385 + $0xe8] sm:$0xff]
      %v11207 = vld [vmem:[%s385 + $0xf0] sm:$0xff]
      %v11208 = vld [vmem:[%s385 + $0xf8] sm:$0xff]
      %v11209 = vadd.f32 %v11145, 1e-05
      %v11210 = vadd.f32 %v11146, 1e-05
      %v11211 = vadd.f32 %v11147, 1e-05
      %v11212 = vadd.f32 %v11148, 1e-05
      %v11213 = vadd.f32 %v11149, 1e-05
      %v11214 = vadd.f32 %v11150, 1e-05
      %v11215 = vadd.f32 %v11151, 1e-05
      %v11216 = vadd.f32 %v11152, 1e-05
      %v11217 = vadd.f32 %v11153, 1e-05
      %v11218 = vadd.f32 %v11154, 1e-05
      %v11219 = vadd.f32 %v11155, 1e-05
      %v11220 = vadd.f32 %v11156, 1e-05
      %v11221 = vadd.f32 %v11157, 1e-05
      %v11222 = vadd.f32 %v11158, 1e-05
      %v11223 = vadd.f32 %v11159, 1e-05
      %v11224 = vadd.f32 %v11160, 1e-05
      %v11225 = vadd.f32 %v11161, 1e-05
      %v11226 = vadd.f32 %v11162, 1e-05
      %v11227 = vadd.f32 %v11163, 1e-05
      %v11228 = vadd.f32 %v11164, 1e-05
      %v11229 = vadd.f32 %v11165, 1e-05
      %v11230 = vadd.f32 %v11166, 1e-05
      %v11231 = vadd.f32 %v11167, 1e-05
      %v11232 = vadd.f32 %v11168, 1e-05
      %v11233 = vadd.f32 %v11169, 1e-05
      %v11234 = vadd.f32 %v11170, 1e-05
      %v11235 = vadd.f32 %v11171, 1e-05
      %v11236 = vadd.f32 %v11172, 1e-05
      %v11237 = vadd.f32 %v11173, 1e-05
      %v11238 = vadd.f32 %v11174, 1e-05
      %v11239 = vadd.f32 %v11175, 1e-05
      %v11240 = vadd.f32 %v11176, 1e-05
      %v11241 = vrsqrt.pop %v11209
      %v11242 = vmul.f32 %v11241, %v11209
      %v11243 = vmul.f32 %v11242, %v11241
      %v11244 = vmul.f32 0.5, %v11243
      %v11245 = vsub.f32 1.5, %v11244
      %v11246 = vmul.f32 %v11241, %v11245
      %vm11247 = vweird.f32 %v11209
      %vm11248 = vweird.f32 %v11241
      %vm11249 = vmor %vm11247, %vm11248
      %v11250 = vsel %vm11249, %v11241, %v11246
      %v11251 = vrsqrt.pop %v11210
      %v11252 = vmul.f32 %v11251, %v11210
      %v11253 = vmul.f32 %v11252, %v11251
      %v11254 = vmul.f32 0.5, %v11253
      %v11255 = vsub.f32 1.5, %v11254
      %v11256 = vmul.f32 %v11251, %v11255
      %vm11257 = vweird.f32 %v11210
      %vm11258 = vweird.f32 %v11251
      %vm11259 = vmor %vm11257, %vm11258
      %v11260 = vsel %vm11259, %v11251, %v11256
      %v11261 = vrsqrt.pop %v11211
      %v11262 = vmul.f32 %v11261, %v11211
      %v11263 = vmul.f32 %v11262, %v11261
      %v11264 = vmul.f32 0.5, %v11263
      %v11265 = vsub.f32 1.5, %v11264
      %v11266 = vmul.f32 %v11261, %v11265
      %vm11267 = vweird.f32 %v11211
      %vm11268 = vweird.f32 %v11261
      %vm11269 = vmor %vm11267, %vm11268
      %v11270 = vsel %vm11269, %v11261, %v11266
      %v11271 = vrsqrt.pop %v11212
      %v11272 = vmul.f32 %v11271, %v11212
      %v11273 = vmul.f32 %v11272, %v11271
      %v11274 = vmul.f32 0.5, %v11273
      %v11275 = vsub.f32 1.5, %v11274
      %v11276 = vmul.f32 %v11271, %v11275
      %vm11277 = vweird.f32 %v11212
      %vm11278 = vweird.f32 %v11271
      %vm11279 = vmor %vm11277, %vm11278
      %v11280 = vsel %vm11279, %v11271, %v11276
      %v11281 = vrsqrt.pop %v11213
      %v11282 = vmul.f32 %v11281, %v11213
      %v11283 = vmul.f32 %v11282, %v11281
      %v11284 = vmul.f32 0.5, %v11283
      %v11285 = vsub.f32 1.5, %v11284
      %v11286 = vmul.f32 %v11281, %v11285
      %vm11287 = vweird.f32 %v11213
      %vm11288 = vweird.f32 %v11281
      %vm11289 = vmor %vm11287, %vm11288
      %v11290 = vsel %vm11289, %v11281, %v11286
      %v11291 = vrsqrt.pop %v11214
      %v11292 = vmul.f32 %v11291, %v11214
      %v11293 = vmul.f32 %v11292, %v11291
      %v11294 = vmul.f32 0.5, %v11293
      %v11295 = vsub.f32 1.5, %v11294
      %v11296 = vmul.f32 %v11291, %v11295
      %vm11297 = vweird.f32 %v11214
      %vm11298 = vweird.f32 %v11291
      %vm11299 = vmor %vm11297, %vm11298
      %v11300 = vsel %vm11299, %v11291, %v11296
      %v11301 = vrsqrt.pop %v11215
      %v11302 = vmul.f32 %v11301, %v11215
      %v11303 = vmul.f32 %v11302, %v11301
      %v11304 = vmul.f32 0.5, %v11303
      %v11305 = vsub.f32 1.5, %v11304
      %v11306 = vmul.f32 %v11301, %v11305
      %vm11307 = vweird.f32 %v11215
      %vm11308 = vweird.f32 %v11301
      %vm11309 = vmor %vm11307, %vm11308
      %v11310 = vsel %vm11309, %v11301, %v11306
      %v11311 = vrsqrt.pop %v11216
      %v11312 = vmul.f32 %v11311, %v11216
      %v11313 = vmul.f32 %v11312, %v11311
      %v11314 = vmul.f32 0.5, %v11313
      %v11315 = vsub.f32 1.5, %v11314
      %v11316 = vmul.f32 %v11311, %v11315
      %vm11317 = vweird.f32 %v11216
      %vm11318 = vweird.f32 %v11311
      %vm11319 = vmor %vm11317, %vm11318
      %v11320 = vsel %vm11319, %v11311, %v11316
      %v11321 = vrsqrt.pop %v11217
      %v11322 = vmul.f32 %v11321, %v11217
      %v11323 = vmul.f32 %v11322, %v11321
      %v11324 = vmul.f32 0.5, %v11323
      %v11325 = vsub.f32 1.5, %v11324
      %v11326 = vmul.f32 %v11321, %v11325
      %vm11327 = vweird.f32 %v11217
      %vm11328 = vweird.f32 %v11321
      %vm11329 = vmor %vm11327, %vm11328
      %v11330 = vsel %vm11329, %v11321, %v11326
      %v11331 = vrsqrt.pop %v11218
      %v11332 = vmul.f32 %v11331, %v11218
      %v11333 = vmul.f32 %v11332, %v11331
      %v11334 = vmul.f32 0.5, %v11333
      %v11335 = vsub.f32 1.5, %v11334
      %v11336 = vmul.f32 %v11331, %v11335
      %vm11337 = vweird.f32 %v11218
      %vm11338 = vweird.f32 %v11331
      %vm11339 = vmor %vm11337, %vm11338
      %v11340 = vsel %vm11339, %v11331, %v11336
      %v11341 = vrsqrt.pop %v11219
      %v11342 = vmul.f32 %v11341, %v11219
      %v11343 = vmul.f32 %v11342, %v11341
      %v11344 = vmul.f32 0.5, %v11343
      %v11345 = vsub.f32 1.5, %v11344
      %v11346 = vmul.f32 %v11341, %v11345
      %vm11347 = vweird.f32 %v11219
      %vm11348 = vweird.f32 %v11341
      %vm11349 = vmor %vm11347, %vm11348
      %v11350 = vsel %vm11349, %v11341, %v11346
      %v11351 = vrsqrt.pop %v11220
      %v11352 = vmul.f32 %v11351, %v11220
      %v11353 = vmul.f32 %v11352, %v11351
      %v11354 = vmul.f32 0.5, %v11353
      %v11355 = vsub.f32 1.5, %v11354
      %v11356 = vmul.f32 %v11351, %v11355
      %vm11357 = vweird.f32 %v11220
      %vm11358 = vweird.f32 %v11351
      %vm11359 = vmor %vm11357, %vm11358
      %v11360 = vsel %vm11359, %v11351, %v11356
      %v11361 = vrsqrt.pop %v11221
      %v11362 = vmul.f32 %v11361, %v11221
      %v11363 = vmul.f32 %v11362, %v11361
      %v11364 = vmul.f32 0.5, %v11363
      %v11365 = vsub.f32 1.5, %v11364
      %v11366 = vmul.f32 %v11361, %v11365
      %vm11367 = vweird.f32 %v11221
      %vm11368 = vweird.f32 %v11361
      %vm11369 = vmor %vm11367, %vm11368
      %v11370 = vsel %vm11369, %v11361, %v11366
      %v11371 = vrsqrt.pop %v11222
      %v11372 = vmul.f32 %v11371, %v11222
      %v11373 = vmul.f32 %v11372, %v11371
      %v11374 = vmul.f32 0.5, %v11373
      %v11375 = vsub.f32 1.5, %v11374
      %v11376 = vmul.f32 %v11371, %v11375
      %vm11377 = vweird.f32 %v11222
      %vm11378 = vweird.f32 %v11371
      %vm11379 = vmor %vm11377, %vm11378
      %v11380 = vsel %vm11379, %v11371, %v11376
      %v11381 = vrsqrt.pop %v11223
      %v11382 = vmul.f32 %v11381, %v11223
      %v11383 = vmul.f32 %v11382, %v11381
      %v11384 = vmul.f32 0.5, %v11383
      %v11385 = vsub.f32 1.5, %v11384
      %v11386 = vmul.f32 %v11381, %v11385
      %vm11387 = vweird.f32 %v11223
      %vm11388 = vweird.f32 %v11381
      %vm11389 = vmor %vm11387, %vm11388
      %v11390 = vsel %vm11389, %v11381, %v11386
      %v11391 = vrsqrt.pop %v11224
      %v11392 = vmul.f32 %v11391, %v11224
      %v11393 = vmul.f32 %v11392, %v11391
      %v11394 = vmul.f32 0.5, %v11393
      %v11395 = vsub.f32 1.5, %v11394
      %v11396 = vmul.f32 %v11391, %v11395
      %vm11397 = vweird.f32 %v11224
      %vm11398 = vweird.f32 %v11391
      %vm11399 = vmor %vm11397, %vm11398
      %v11400 = vsel %vm11399, %v11391, %v11396
      %v11401 = vrsqrt.pop %v11225
      %v11402 = vmul.f32 %v11401, %v11225
      %v11403 = vmul.f32 %v11402, %v11401
      %v11404 = vmul.f32 0.5, %v11403
      %v11405 = vsub.f32 1.5, %v11404
      %v11406 = vmul.f32 %v11401, %v11405
      %vm11407 = vweird.f32 %v11225
      %vm11408 = vweird.f32 %v11401
      %vm11409 = vmor %vm11407, %vm11408
      %v11410 = vsel %vm11409, %v11401, %v11406
      %v11411 = vrsqrt.pop %v11226
      %v11412 = vmul.f32 %v11411, %v11226
      %v11413 = vmul.f32 %v11412, %v11411
      %v11414 = vmul.f32 0.5, %v11413
      %v11415 = vsub.f32 1.5, %v11414
      %v11416 = vmul.f32 %v11411, %v11415
      %vm11417 = vweird.f32 %v11226
      %vm11418 = vweird.f32 %v11411
      %vm11419 = vmor %vm11417, %vm11418
      %v11420 = vsel %vm11419, %v11411, %v11416
      %v11421 = vrsqrt.pop %v11227
      %v11422 = vmul.f32 %v11421, %v11227
      %v11423 = vmul.f32 %v11422, %v11421
      %v11424 = vmul.f32 0.5, %v11423
      %v11425 = vsub.f32 1.5, %v11424
      %v11426 = vmul.f32 %v11421, %v11425
      %vm11427 = vweird.f32 %v11227
      %vm11428 = vweird.f32 %v11421
      %vm11429 = vmor %vm11427, %vm11428
      %v11430 = vsel %vm11429, %v11421, %v11426
      %v11431 = vrsqrt.pop %v11228
      %v11432 = vmul.f32 %v11431, %v11228
      %v11433 = vmul.f32 %v11432, %v11431
      %v11434 = vmul.f32 0.5, %v11433
      %v11435 = vsub.f32 1.5, %v11434
      %v11436 = vmul.f32 %v11431, %v11435
      %vm11437 = vweird.f32 %v11228
      %vm11438 = vweird.f32 %v11431
      %vm11439 = vmor %vm11437, %vm11438
      %v11440 = vsel %vm11439, %v11431, %v11436
      %v11441 = vrsqrt.pop %v11229
      %v11442 = vmul.f32 %v11441, %v11229
      %v11443 = vmul.f32 %v11442, %v11441
      %v11444 = vmul.f32 0.5, %v11443
      %v11445 = vsub.f32 1.5, %v11444
      %v11446 = vmul.f32 %v11441, %v11445
      %vm11447 = vweird.f32 %v11229
      %vm11448 = vweird.f32 %v11441
      %vm11449 = vmor %vm11447, %vm11448
      %v11450 = vsel %vm11449, %v11441, %v11446
      %v11451 = vrsqrt.pop %v11230
      %v11452 = vmul.f32 %v11451, %v11230
      %v11453 = vmul.f32 %v11452, %v11451
      %v11454 = vmul.f32 0.5, %v11453
      %v11455 = vsub.f32 1.5, %v11454
      %v11456 = vmul.f32 %v11451, %v11455
      %vm11457 = vweird.f32 %v11230
      %vm11458 = vweird.f32 %v11451
      %vm11459 = vmor %vm11457, %vm11458
      %v11460 = vsel %vm11459, %v11451, %v11456
      %v11461 = vrsqrt.pop %v11231
      %v11462 = vmul.f32 %v11461, %v11231
      %v11463 = vmul.f32 %v11462, %v11461
      %v11464 = vmul.f32 0.5, %v11463
      %v11465 = vsub.f32 1.5, %v11464
      %v11466 = vmul.f32 %v11461, %v11465
      %vm11467 = vweird.f32 %v11231
      %vm11468 = vweird.f32 %v11461
      %vm11469 = vmor %vm11467, %vm11468
      %v11470 = vsel %vm11469, %v11461, %v11466
      %v11471 = vrsqrt.pop %v11232
      %v11472 = vmul.f32 %v11471, %v11232
      %v11473 = vmul.f32 %v11472, %v11471
      %v11474 = vmul.f32 0.5, %v11473
      %v11475 = vsub.f32 1.5, %v11474
      %v11476 = vmul.f32 %v11471, %v11475
      %vm11477 = vweird.f32 %v11232
      %vm11478 = vweird.f32 %v11471
      %vm11479 = vmor %vm11477, %vm11478
      %v11480 = vsel %vm11479, %v11471, %v11476
      %v11481 = vrsqrt.pop %v11233
      %v11482 = vmul.f32 %v11481, %v11233
      %v11483 = vmul.f32 %v11482, %v11481
      %v11484 = vmul.f32 0.5, %v11483
      %v11485 = vsub.f32 1.5, %v11484
      %v11486 = vmul.f32 %v11481, %v11485
      %vm11487 = vweird.f32 %v11233
      %vm11488 = vweird.f32 %v11481
      %vm11489 = vmor %vm11487, %vm11488
      %v11490 = vsel %vm11489, %v11481, %v11486
      %v11491 = vrsqrt.pop %v11234
      %v11492 = vmul.f32 %v11491, %v11234
      %v11493 = vmul.f32 %v11492, %v11491
      %v11494 = vmul.f32 0.5, %v11493
      %v11495 = vsub.f32 1.5, %v11494
      %v11496 = vmul.f32 %v11491, %v11495
      %vm11497 = vweird.f32 %v11234
      %vm11498 = vweird.f32 %v11491
      %vm11499 = vmor %vm11497, %vm11498
      %v11500 = vsel %vm11499, %v11491, %v11496
      %v11501 = vrsqrt.pop %v11235
      %v11502 = vmul.f32 %v11501, %v11235
      %v11503 = vmul.f32 %v11502, %v11501
      %v11504 = vmul.f32 0.5, %v11503
      %v11505 = vsub.f32 1.5, %v11504
      %v11506 = vmul.f32 %v11501, %v11505
      %vm11507 = vweird.f32 %v11235
      %vm11508 = vweird.f32 %v11501
      %vm11509 = vmor %vm11507, %vm11508
      %v11510 = vsel %vm11509, %v11501, %v11506
      %v11511 = vrsqrt.pop %v11236
      %v11512 = vmul.f32 %v11511, %v11236
      %v11513 = vmul.f32 %v11512, %v11511
      %v11514 = vmul.f32 0.5, %v11513
      %v11515 = vsub.f32 1.5, %v11514
      %v11516 = vmul.f32 %v11511, %v11515
      %vm11517 = vweird.f32 %v11236
      %vm11518 = vweird.f32 %v11511
      %vm11519 = vmor %vm11517, %vm11518
      %v11520 = vsel %vm11519, %v11511, %v11516
      %v11521 = vrsqrt.pop %v11237
      %v11522 = vmul.f32 %v11521, %v11237
      %v11523 = vmul.f32 %v11522, %v11521
      %v11524 = vmul.f32 0.5, %v11523
      %v11525 = vsub.f32 1.5, %v11524
      %v11526 = vmul.f32 %v11521, %v11525
      %vm11527 = vweird.f32 %v11237
      %vm11528 = vweird.f32 %v11521
      %vm11529 = vmor %vm11527, %vm11528
      %v11530 = vsel %vm11529, %v11521, %v11526
      %v11531 = vrsqrt.pop %v11238
      %v11532 = vmul.f32 %v11531, %v11238
      %v11533 = vmul.f32 %v11532, %v11531
      %v11534 = vmul.f32 0.5, %v11533
      %v11535 = vsub.f32 1.5, %v11534
      %v11536 = vmul.f32 %v11531, %v11535
      %vm11537 = vweird.f32 %v11238
      %vm11538 = vweird.f32 %v11531
      %vm11539 = vmor %vm11537, %vm11538
      %v11540 = vsel %vm11539, %v11531, %v11536
      %v11541 = vrsqrt.pop %v11239
      %v11542 = vmul.f32 %v11541, %v11239
      %v11543 = vmul.f32 %v11542, %v11541
      %v11544 = vmul.f32 0.5, %v11543
      %v11545 = vsub.f32 1.5, %v11544
      %v11546 = vmul.f32 %v11541, %v11545
      %vm11547 = vweird.f32 %v11239
      %vm11548 = vweird.f32 %v11541
      %vm11549 = vmor %vm11547, %vm11548
      %v11550 = vsel %vm11549, %v11541, %v11546
      %v11551 = vrsqrt.pop %v11240
      %v11552 = vmul.f32 %v11551, %v11240
      %v11553 = vmul.f32 %v11552, %v11551
      %v11554 = vmul.f32 0.5, %v11553
      %v11555 = vsub.f32 1.5, %v11554
      %v11556 = vmul.f32 %v11551, %v11555
      %vm11557 = vweird.f32 %v11240
      %vm11558 = vweird.f32 %v11551
      %vm11559 = vmor %vm11557, %vm11558
      %v11560 = vsel %vm11559, %v11551, %v11556
      %v11561 = vmul.f32 %v11177, %v11250
      %v11562 = vmul.f32 %v11178, %v11260
      %v11563 = vmul.f32 %v11179, %v11270
      %v11564 = vmul.f32 %v11180, %v11280
      %v11565 = vmul.f32 %v11181, %v11290
      %v11566 = vmul.f32 %v11182, %v11300
      %v11567 = vmul.f32 %v11183, %v11310
      %v11568 = vmul.f32 %v11184, %v11320
      %v11569 = vmul.f32 %v11185, %v11330
      %v11570 = vmul.f32 %v11186, %v11340
      %v11571 = vmul.f32 %v11187, %v11350
      %v11572 = vmul.f32 %v11188, %v11360
      %v11573 = vmul.f32 %v11189, %v11370
      %v11574 = vmul.f32 %v11190, %v11380
      %v11575 = vmul.f32 %v11191, %v11390
      %v11576 = vmul.f32 %v11192, %v11400
      %v11577 = vmul.f32 %v11193, %v11410
      %v11578 = vmul.f32 %v11194, %v11420
      %v11579 = vmul.f32 %v11195, %v11430
      %v11580 = vmul.f32 %v11196, %v11440
      %v11581 = vmul.f32 %v11197, %v11450
      %v11582 = vmul.f32 %v11198, %v11460
      %v11583 = vmul.f32 %v11199, %v11470
      %v11584 = vmul.f32 %v11200, %v11480
      %v11585 = vmul.f32 %v11201, %v11490
      %v11586 = vmul.f32 %v11202, %v11500
      %v11587 = vmul.f32 %v11203, %v11510
      %v11588 = vmul.f32 %v11204, %v11520
      %v11589 = vmul.f32 %v11205, %v11530
      %v11590 = vmul.f32 %v11206, %v11540
      %v11591 = vmul.f32 %v11207, %v11550
      %v11592 = vmul.f32 %v11208, %v11560
      %11594 = vset.pattern.permute.xlu0 0
      %11595 = vperm.xlu0 %11594, %v11561
      %v11596 = vpop.permute.xlu0 %11595
      %11599 = vset.pattern.permute.xlu0 0
      %11600 = vperm.xlu0 %11599, %v11562
      %v11601 = vpop.permute.xlu0 %11600
      %11604 = vset.pattern.permute.xlu0 0
      %11605 = vperm.xlu0 %11604, %v11563
      %v11606 = vpop.permute.xlu0 %11605
      %11609 = vset.pattern.permute.xlu0 0
      %11610 = vperm.xlu0 %11609, %v11564
      %v11611 = vpop.permute.xlu0 %11610
      %11614 = vset.pattern.permute.xlu0 0
      %11615 = vperm.xlu0 %11614, %v11565
      %v11616 = vpop.permute.xlu0 %11615
      %11619 = vset.pattern.permute.xlu0 0
      %11620 = vperm.xlu0 %11619, %v11566
      %v11621 = vpop.permute.xlu0 %11620
      %11624 = vset.pattern.permute.xlu0 0
      %11625 = vperm.xlu0 %11624, %v11567
      %v11626 = vpop.permute.xlu0 %11625
      %11629 = vset.pattern.permute.xlu0 0
      %11630 = vperm.xlu0 %11629, %v11568
      %v11631 = vpop.permute.xlu0 %11630
      %11634 = vset.pattern.permute.xlu0 0
      %11635 = vperm.xlu0 %11634, %v11569
      %v11636 = vpop.permute.xlu0 %11635
      %11639 = vset.pattern.permute.xlu0 0
      %11640 = vperm.xlu0 %11639, %v11570
      %v11641 = vpop.permute.xlu0 %11640
      %11644 = vset.pattern.permute.xlu0 0
      %11645 = vperm.xlu0 %11644, %v11571
      %v11646 = vpop.permute.xlu0 %11645
      %11649 = vset.pattern.permute.xlu0 0
      %11650 = vperm.xlu0 %11649, %v11572
      %v11651 = vpop.permute.xlu0 %11650
      %11654 = vset.pattern.permute.xlu0 0
      %11655 = vperm.xlu0 %11654, %v11573
      %v11656 = vpop.permute.xlu0 %11655
      %11659 = vset.pattern.permute.xlu0 0
      %11660 = vperm.xlu0 %11659, %v11574
      %v11661 = vpop.permute.xlu0 %11660
      %11664 = vset.pattern.permute.xlu0 0
      %11665 = vperm.xlu0 %11664, %v11575
      %v11666 = vpop.permute.xlu0 %11665
      %11669 = vset.pattern.permute.xlu0 0
      %11670 = vperm.xlu0 %11669, %v11576
      %v11671 = vpop.permute.xlu0 %11670
      %11674 = vset.pattern.permute.xlu0 0
      %11675 = vperm.xlu0 %11674, %v11577
      %v11676 = vpop.permute.xlu0 %11675
      %11679 = vset.pattern.permute.xlu0 0
      %11680 = vperm.xlu0 %11679, %v11578
      %v11681 = vpop.permute.xlu0 %11680
      %11684 = vset.pattern.permute.xlu0 0
      %11685 = vperm.xlu0 %11684, %v11579
      %v11686 = vpop.permute.xlu0 %11685
      %11689 = vset.pattern.permute.xlu0 0
      %11690 = vperm.xlu0 %11689, %v11580
      %v11691 = vpop.permute.xlu0 %11690
      %11694 = vset.pattern.permute.xlu0 0
      %11695 = vperm.xlu0 %11694, %v11581
      %v11696 = vpop.permute.xlu0 %11695
      %11699 = vset.pattern.permute.xlu0 0
      %11700 = vperm.xlu0 %11699, %v11582
      %v11701 = vpop.permute.xlu0 %11700
      %11704 = vset.pattern.permute.xlu0 0
      %11705 = vperm.xlu0 %11704, %v11583
      %v11706 = vpop.permute.xlu0 %11705
      %11709 = vset.pattern.permute.xlu0 0
      %11710 = vperm.xlu0 %11709, %v11584
      %v11711 = vpop.permute.xlu0 %11710
      %11714 = vset.pattern.permute.xlu0 0
      %11715 = vperm.xlu0 %11714, %v11585
      %v11716 = vpop.permute.xlu0 %11715
      %11719 = vset.pattern.permute.xlu0 0
      %11720 = vperm.xlu0 %11719, %v11586
      %v11721 = vpop.permute.xlu0 %11720
      %11724 = vset.pattern.permute.xlu0 0
      %11725 = vperm.xlu0 %11724, %v11587
      %v11726 = vpop.permute.xlu0 %11725
      %11729 = vset.pattern.permute.xlu0 0
      %11730 = vperm.xlu0 %11729, %v11588
      %v11731 = vpop.permute.xlu0 %11730
      %11734 = vset.pattern.permute.xlu0 0
      %11735 = vperm.xlu0 %11734, %v11589
      %v11736 = vpop.permute.xlu0 %11735
      %11739 = vset.pattern.permute.xlu0 0
      %11740 = vperm.xlu0 %11739, %v11590
      %v11741 = vpop.permute.xlu0 %11740
      %11744 = vset.pattern.permute.xlu0 0
      %11745 = vperm.xlu0 %11744, %v11591
      %v11746 = vpop.permute.xlu0 %11745
      %11749 = vset.pattern.permute.xlu0 0
      %11750 = vperm.xlu0 %11749, %v11592
      %v11751 = vpop.permute.xlu0 %11750
      %v11753 = vmul.f32 %v8327, %v11596
      %v11754 = vmul.f32 %v8355, %v11596
      %v11755 = vmul.f32 %v8329, %v11601
      %v11756 = vmul.f32 %v8357, %v11601
      %v11757 = vmul.f32 %v8485, %v11606
      %v11758 = vmul.f32 %v8513, %v11606
      %v11759 = vmul.f32 %v8487, %v11611
      %v11760 = vmul.f32 %v8515, %v11611
      %v11761 = vmul.f32 %v8643, %v11616
      %v11762 = vmul.f32 %v8671, %v11616
      %v11763 = vmul.f32 %v8645, %v11621
      %v11764 = vmul.f32 %v8673, %v11621
      %v11765 = vmul.f32 %v8801, %v11626
      %v11766 = vmul.f32 %v8829, %v11626
      %v11767 = vmul.f32 %v8803, %v11631
      %v11768 = vmul.f32 %v8831, %v11631
      %v11769 = vmul.f32 %v8959, %v11636
      %v11770 = vmul.f32 %v8987, %v11636
      %v11771 = vmul.f32 %v8961, %v11641
      %v11772 = vmul.f32 %v8989, %v11641
      %v11773 = vmul.f32 %v9117, %v11646
      %v11774 = vmul.f32 %v9145, %v11646
      %v11775 = vmul.f32 %v9119, %v11651
      %v11776 = vmul.f32 %v9147, %v11651
      %v11777 = vmul.f32 %v9275, %v11656
      %v11778 = vmul.f32 %v9303, %v11656
      %v11779 = vmul.f32 %v9277, %v11661
      %v11780 = vmul.f32 %v9305, %v11661
      %v11781 = vmul.f32 %v9433, %v11666
      %v11782 = vmul.f32 %v9461, %v11666
      %v11783 = vmul.f32 %v9435, %v11671
      %v11784 = vmul.f32 %v9463, %v11671
      %v11785 = vmul.f32 %v9591, %v11676
      %v11786 = vmul.f32 %v9619, %v11676
      %v11787 = vmul.f32 %v9593, %v11681
      %v11788 = vmul.f32 %v9621, %v11681
      %v11789 = vmul.f32 %v9749, %v11686
      %v11790 = vmul.f32 %v9777, %v11686
      %v11791 = vmul.f32 %v9751, %v11691
      %v11792 = vmul.f32 %v9779, %v11691
      %v11793 = vmul.f32 %v9907, %v11696
      %v11794 = vmul.f32 %v9935, %v11696
      %v11795 = vmul.f32 %v9909, %v11701
      %v11796 = vmul.f32 %v9937, %v11701
      %v11797 = vmul.f32 %v10065, %v11706
      %v11798 = vmul.f32 %v10093, %v11706
      %v11799 = vmul.f32 %v10067, %v11711
      %v11800 = vmul.f32 %v10095, %v11711
      %v11801 = vmul.f32 %v10223, %v11716
      %v11802 = vmul.f32 %v10251, %v11716
      %v11803 = vmul.f32 %v10225, %v11721
      %v11804 = vmul.f32 %v10253, %v11721
      %v11805 = vmul.f32 %v10381, %v11726
      %v11806 = vmul.f32 %v10409, %v11726
      %v11807 = vmul.f32 %v10383, %v11731
      %v11808 = vmul.f32 %v10411, %v11731
      %v11809 = vmul.f32 %v10539, %v11736
      %v11810 = vmul.f32 %v10567, %v11736
      %v11811 = vmul.f32 %v10541, %v11741
      %v11812 = vmul.f32 %v10569, %v11741
      %v11813 = vmul.f32 %v10697, %v11746
      %v11814 = vmul.f32 %v10725, %v11746
      %v11815 = vmul.f32 %v10699, %v11751
      %v11816 = vmul.f32 %v10727, %v11751
      %v11817 = vld [vmem:[%s391] sm:$0xff]
      %v11818 = vld [vmem:[%s391 + $0x8] sm:$0xff]
      %v11819 = vld [vmem:[%s391 + $0x10] sm:$0xff]
      %v11820 = vld [vmem:[%s391 + $0x18] sm:$0xff]
      %v11821 = vld [vmem:[%s391 + $0x20] sm:$0xff]
      %v11822 = vld [vmem:[%s391 + $0x28] sm:$0xff]
      %v11823 = vld [vmem:[%s391 + $0x30] sm:$0xff]
      %v11824 = vld [vmem:[%s391 + $0x38] sm:$0xff]
      %v11825 = vld [vmem:[%s391 + $0x40] sm:$0xff]
      %v11826 = vld [vmem:[%s391 + $0x48] sm:$0xff]
      %v11827 = vld [vmem:[%s391 + $0x50] sm:$0xff]
      %v11828 = vld [vmem:[%s391 + $0x58] sm:$0xff]
      %v11829 = vld [vmem:[%s391 + $0x60] sm:$0xff]
      %v11830 = vld [vmem:[%s391 + $0x68] sm:$0xff]
      %v11831 = vld [vmem:[%s391 + $0x70] sm:$0xff]
      %v11832 = vld [vmem:[%s391 + $0x78] sm:$0xff]
      %v11833 = vld [vmem:[%s391 + $0x80] sm:$0xff]
      %v11834 = vld [vmem:[%s391 + $0x88] sm:$0xff]
      %v11835 = vld [vmem:[%s391 + $0x90] sm:$0xff]
      %v11836 = vld [vmem:[%s391 + $0x98] sm:$0xff]
      %v11837 = vld [vmem:[%s391 + $0xa0] sm:$0xff]
      %v11838 = vld [vmem:[%s391 + $0xa8] sm:$0xff]
      %v11839 = vld [vmem:[%s391 + $0xb0] sm:$0xff]
      %v11840 = vld [vmem:[%s391 + $0xb8] sm:$0xff]
      %v11841 = vld [vmem:[%s391 + $0xc0] sm:$0xff]
      %v11842 = vld [vmem:[%s391 + $0xc8] sm:$0xff]
      %v11843 = vld [vmem:[%s391 + $0xd0] sm:$0xff]
      %v11844 = vld [vmem:[%s391 + $0xd8] sm:$0xff]
      %v11845 = vld [vmem:[%s391 + $0xe0] sm:$0xff]
      %v11846 = vld [vmem:[%s391 + $0xe8] sm:$0xff]
      %v11847 = vld [vmem:[%s391 + $0xf0] sm:$0xff]
      %v11848 = vld [vmem:[%s391 + $0xf8] sm:$0xff]
      %v11849 = vmul.f32 %v10857, %v11561
      %v11850 = vmul.f32 %v10858, %v11562
      %v11851 = vmul.f32 %v10859, %v11563
      %v11852 = vmul.f32 %v10860, %v11564
      %v11853 = vmul.f32 %v10861, %v11565
      %v11854 = vmul.f32 %v10862, %v11566
      %v11855 = vmul.f32 %v10863, %v11567
      %v11856 = vmul.f32 %v10864, %v11568
      %v11857 = vmul.f32 %v10865, %v11569
      %v11858 = vmul.f32 %v10866, %v11570
      %v11859 = vmul.f32 %v10867, %v11571
      %v11860 = vmul.f32 %v10868, %v11572
      %v11861 = vmul.f32 %v10869, %v11573
      %v11862 = vmul.f32 %v10870, %v11574
      %v11863 = vmul.f32 %v10871, %v11575
      %v11864 = vmul.f32 %v10872, %v11576
      %v11865 = vmul.f32 %v10873, %v11577
      %v11866 = vmul.f32 %v10874, %v11578
      %v11867 = vmul.f32 %v10875, %v11579
      %v11868 = vmul.f32 %v10876, %v11580
      %v11869 = vmul.f32 %v10877, %v11581
      %v11870 = vmul.f32 %v10878, %v11582
      %v11871 = vmul.f32 %v10879, %v11583
      %v11872 = vmul.f32 %v10880, %v11584
      %v11873 = vmul.f32 %v10881, %v11585
      %v11874 = vmul.f32 %v10882, %v11586
      %v11875 = vmul.f32 %v10883, %v11587
      %v11876 = vmul.f32 %v10884, %v11588
      %v11877 = vmul.f32 %v10885, %v11589
      %v11878 = vmul.f32 %v10886, %v11590
      %v11879 = vmul.f32 %v10887, %v11591
      %v11880 = vmul.f32 %v10888, %v11592
      %v11881 = vsub.f32 %v11817, %v11849
      %v11882 = vsub.f32 %v11818, %v11850
      %v11883 = vsub.f32 %v11819, %v11851
      %v11884 = vsub.f32 %v11820, %v11852
      %v11885 = vsub.f32 %v11821, %v11853
      %v11886 = vsub.f32 %v11822, %v11854
      %v11887 = vsub.f32 %v11823, %v11855
      %v11888 = vsub.f32 %v11824, %v11856
      %v11889 = vsub.f32 %v11825, %v11857
      %v11890 = vsub.f32 %v11826, %v11858
      %v11891 = vsub.f32 %v11827, %v11859
      %v11892 = vsub.f32 %v11828, %v11860
      %v11893 = vsub.f32 %v11829, %v11861
      %v11894 = vsub.f32 %v11830, %v11862
      %v11895 = vsub.f32 %v11831, %v11863
      %v11896 = vsub.f32 %v11832, %v11864
      %v11897 = vsub.f32 %v11833, %v11865
      %v11898 = vsub.f32 %v11834, %v11866
      %v11899 = vsub.f32 %v11835, %v11867
      %v11900 = vsub.f32 %v11836, %v11868
      %v11901 = vsub.f32 %v11837, %v11869
      %v11902 = vsub.f32 %v11838, %v11870
      %v11903 = vsub.f32 %v11839, %v11871
      %v11904 = vsub.f32 %v11840, %v11872
      %v11905 = vsub.f32 %v11841, %v11873
      %v11906 = vsub.f32 %v11842, %v11874
      %v11907 = vsub.f32 %v11843, %v11875
      %v11908 = vsub.f32 %v11844, %v11876
      %v11909 = vsub.f32 %v11845, %v11877
      %v11910 = vsub.f32 %v11846, %v11878
      %v11911 = vsub.f32 %v11847, %v11879
      %v11912 = vsub.f32 %v11848, %v11880
      %11914 = vset.pattern.permute.xlu0 0
      %11915 = vperm.xlu0 %11914, %v11881
      %v11916 = vpop.permute.xlu0 %11915
      %11919 = vset.pattern.permute.xlu0 0
      %11920 = vperm.xlu0 %11919, %v11882
      %v11921 = vpop.permute.xlu0 %11920
      %11924 = vset.pattern.permute.xlu0 0
      %11925 = vperm.xlu0 %11924, %v11883
      %v11926 = vpop.permute.xlu0 %11925
      %11929 = vset.pattern.permute.xlu0 0
      %11930 = vperm.xlu0 %11929, %v11884
      %v11931 = vpop.permute.xlu0 %11930
      %11934 = vset.pattern.permute.xlu0 0
      %11935 = vperm.xlu0 %11934, %v11885
      %v11936 = vpop.permute.xlu0 %11935
      %11939 = vset.pattern.permute.xlu0 0
      %11940 = vperm.xlu0 %11939, %v11886
      %v11941 = vpop.permute.xlu0 %11940
      %11944 = vset.pattern.permute.xlu0 0
      %11945 = vperm.xlu0 %11944, %v11887
      %v11946 = vpop.permute.xlu0 %11945
      %11949 = vset.pattern.permute.xlu0 0
      %11950 = vperm.xlu0 %11949, %v11888
      %v11951 = vpop.permute.xlu0 %11950
      %11954 = vset.pattern.permute.xlu0 0
      %11955 = vperm.xlu0 %11954, %v11889
      %v11956 = vpop.permute.xlu0 %11955
      %11959 = vset.pattern.permute.xlu0 0
      %11960 = vperm.xlu0 %11959, %v11890
      %v11961 = vpop.permute.xlu0 %11960
      %11964 = vset.pattern.permute.xlu0 0
      %11965 = vperm.xlu0 %11964, %v11891
      %v11966 = vpop.permute.xlu0 %11965
      %11969 = vset.pattern.permute.xlu0 0
      %11970 = vperm.xlu0 %11969, %v11892
      %v11971 = vpop.permute.xlu0 %11970
      %11974 = vset.pattern.permute.xlu0 0
      %11975 = vperm.xlu0 %11974, %v11893
      %v11976 = vpop.permute.xlu0 %11975
      %11979 = vset.pattern.permute.xlu0 0
      %11980 = vperm.xlu0 %11979, %v11894
      %v11981 = vpop.permute.xlu0 %11980
      %11984 = vset.pattern.permute.xlu0 0
      %11985 = vperm.xlu0 %11984, %v11895
      %v11986 = vpop.permute.xlu0 %11985
      %11989 = vset.pattern.permute.xlu0 0
      %11990 = vperm.xlu0 %11989, %v11896
      %v11991 = vpop.permute.xlu0 %11990
      %11994 = vset.pattern.permute.xlu0 0
      %11995 = vperm.xlu0 %11994, %v11897
      %v11996 = vpop.permute.xlu0 %11995
      %11999 = vset.pattern.permute.xlu0 0
      %12000 = vperm.xlu0 %11999, %v11898
      %v12001 = vpop.permute.xlu0 %12000
      %12004 = vset.pattern.permute.xlu0 0
      %12005 = vperm.xlu0 %12004, %v11899
      %v12006 = vpop.permute.xlu0 %12005
      %12009 = vset.pattern.permute.xlu0 0
      %12010 = vperm.xlu0 %12009, %v11900
      %v12011 = vpop.permute.xlu0 %12010
      %12014 = vset.pattern.permute.xlu0 0
      %12015 = vperm.xlu0 %12014, %v11901
      %v12016 = vpop.permute.xlu0 %12015
      %12019 = vset.pattern.permute.xlu0 0
      %12020 = vperm.xlu0 %12019, %v11902
      %v12021 = vpop.permute.xlu0 %12020
      %12024 = vset.pattern.permute.xlu0 0
      %12025 = vperm.xlu0 %12024, %v11903
      %v12026 = vpop.permute.xlu0 %12025
      %12029 = vset.pattern.permute.xlu0 0
      %12030 = vperm.xlu0 %12029, %v11904
      %v12031 = vpop.permute.xlu0 %12030
      %12034 = vset.pattern.permute.xlu0 0
      %12035 = vperm.xlu0 %12034, %v11905
      %v12036 = vpop.permute.xlu0 %12035
      %12039 = vset.pattern.permute.xlu0 0
      %12040 = vperm.xlu0 %12039, %v11906
      %v12041 = vpop.permute.xlu0 %12040
      %12044 = vset.pattern.permute.xlu0 0
      %12045 = vperm.xlu0 %12044, %v11907
      %v12046 = vpop.permute.xlu0 %12045
      %12049 = vset.pattern.permute.xlu0 0
      %12050 = vperm.xlu0 %12049, %v11908
      %v12051 = vpop.permute.xlu0 %12050
      %12054 = vset.pattern.permute.xlu0 0
      %12055 = vperm.xlu0 %12054, %v11909
      %v12056 = vpop.permute.xlu0 %12055
      %12059 = vset.pattern.permute.xlu0 0
      %12060 = vperm.xlu0 %12059, %v11910
      %v12061 = vpop.permute.xlu0 %12060
      %12064 = vset.pattern.permute.xlu0 0
      %12065 = vperm.xlu0 %12064, %v11911
      %v12066 = vpop.permute.xlu0 %12065
      %12069 = vset.pattern.permute.xlu0 0
      %12070 = vperm.xlu0 %12069, %v11912
      %v12071 = vpop.permute.xlu0 %12070
      %v12073 = vadd.f32 %v11753, %v11916
      %v12074 = vadd.f32 %v11754, %v11916
      %v12075 = vadd.f32 %v11755, %v11921
      %v12076 = vadd.f32 %v11756, %v11921
      %v12077 = vadd.f32 %v11757, %v11926
      %v12078 = vadd.f32 %v11758, %v11926
      %v12079 = vadd.f32 %v11759, %v11931
      %v12080 = vadd.f32 %v11760, %v11931
      %v12081 = vadd.f32 %v11761, %v11936
      %v12082 = vadd.f32 %v11762, %v11936
      %v12083 = vadd.f32 %v11763, %v11941
      %v12084 = vadd.f32 %v11764, %v11941
      %v12085 = vadd.f32 %v11765, %v11946
      %v12086 = vadd.f32 %v11766, %v11946
      %v12087 = vadd.f32 %v11767, %v11951
      %v12088 = vadd.f32 %v11768, %v11951
      %v12089 = vadd.f32 %v11769, %v11956
      %v12090 = vadd.f32 %v11770, %v11956
      %v12091 = vadd.f32 %v11771, %v11961
      %v12092 = vadd.f32 %v11772, %v11961
      %v12093 = vadd.f32 %v11773, %v11966
      %v12094 = vadd.f32 %v11774, %v11966
      %v12095 = vadd.f32 %v11775, %v11971
      %v12096 = vadd.f32 %v11776, %v11971
      %v12097 = vadd.f32 %v11777, %v11976
      %v12098 = vadd.f32 %v11778, %v11976
      %v12099 = vadd.f32 %v11779, %v11981
      %v12100 = vadd.f32 %v11780, %v11981
      %v12101 = vadd.f32 %v11781, %v11986
      %v12102 = vadd.f32 %v11782, %v11986
      %v12103 = vadd.f32 %v11783, %v11991
      %v12104 = vadd.f32 %v11784, %v11991
      %v12105 = vadd.f32 %v11785, %v11996
      %v12106 = vadd.f32 %v11786, %v11996
      %v12107 = vadd.f32 %v11787, %v12001
      %v12108 = vadd.f32 %v11788, %v12001
      %v12109 = vadd.f32 %v11789, %v12006
      %v12110 = vadd.f32 %v11790, %v12006
      %v12111 = vadd.f32 %v11791, %v12011
      %v12112 = vadd.f32 %v11792, %v12011
      %v12113 = vadd.f32 %v11793, %v12016
      %v12114 = vadd.f32 %v11794, %v12016
      %v12115 = vadd.f32 %v11795, %v12021
      %v12116 = vadd.f32 %v11796, %v12021
      %v12117 = vadd.f32 %v11797, %v12026
      %v12118 = vadd.f32 %v11798, %v12026
      %v12119 = vadd.f32 %v11799, %v12031
      %v12120 = vadd.f32 %v11800, %v12031
      %v12121 = vadd.f32 %v11801, %v12036
      %v12122 = vadd.f32 %v11802, %v12036
      %v12123 = vadd.f32 %v11803, %v12041
      %v12124 = vadd.f32 %v11804, %v12041
      %v12125 = vadd.f32 %v11805, %v12046
      %v12126 = vadd.f32 %v11806, %v12046
      %v12127 = vadd.f32 %v11807, %v12051
      %v12128 = vadd.f32 %v11808, %v12051
      %v12129 = vadd.f32 %v11809, %v12056
      %v12130 = vadd.f32 %v11810, %v12056
      %v12131 = vadd.f32 %v11811, %v12061
      %v12132 = vadd.f32 %v11812, %v12061
      %v12133 = vadd.f32 %v11813, %v12066
      %v12134 = vadd.f32 %v11814, %v12066
      %v12135 = vadd.f32 %v11815, %v12071
      %v12136 = vadd.f32 %v11816, %v12071
      %12137 = vst [vmem:[%s398] sm:$0xff] %v12073
      %12138 = vst.msk [vmem:[%s398 + $0x8] sm:$0xff] %vm3361, %v12074
      %12139 = vst [vmem:[%s398 + $0x10] sm:$0xff] %v12075
      %12140 = vst.msk [vmem:[%s398 + $0x18] sm:$0xff] %vm3361, %v12076
      %12141 = vst [vmem:[%s398 + $0x20] sm:$0xff] %v12077
      %12142 = vst.msk [vmem:[%s398 + $0x28] sm:$0xff] %vm3361, %v12078
      %12143 = vst [vmem:[%s398 + $0x30] sm:$0xff] %v12079
      %12144 = vst.msk [vmem:[%s398 + $0x38] sm:$0xff] %vm3361, %v12080
      %12145 = vst [vmem:[%s398 + $0x40] sm:$0xff] %v12081
      %12146 = vst.msk [vmem:[%s398 + $0x48] sm:$0xff] %vm3361, %v12082
      %12147 = vst [vmem:[%s398 + $0x50] sm:$0xff] %v12083
      %12148 = vst.msk [vmem:[%s398 + $0x58] sm:$0xff] %vm3361, %v12084
      %12149 = vst [vmem:[%s398 + $0x60] sm:$0xff] %v12085
      %12150 = vst.msk [vmem:[%s398 + $0x68] sm:$0xff] %vm3361, %v12086
      %12151 = vst [vmem:[%s398 + $0x70] sm:$0xff] %v12087
      %12152 = vst.msk [vmem:[%s398 + $0x78] sm:$0xff] %vm3361, %v12088
      %12153 = vst [vmem:[%s398 + $0x80] sm:$0xff] %v12089
      %12154 = vst.msk [vmem:[%s398 + $0x88] sm:$0xff] %vm3361, %v12090
      %12155 = vst [vmem:[%s398 + $0x90] sm:$0xff] %v12091
      %12156 = vst.msk [vmem:[%s398 + $0x98] sm:$0xff] %vm3361, %v12092
      %12157 = vst [vmem:[%s398 + $0xa0] sm:$0xff] %v12093
      %12158 = vst.msk [vmem:[%s398 + $0xa8] sm:$0xff] %vm3361, %v12094
      %12159 = vst [vmem:[%s398 + $0xb0] sm:$0xff] %v12095
      %12160 = vst.msk [vmem:[%s398 + $0xb8] sm:$0xff] %vm3361, %v12096
      %12161 = vst [vmem:[%s398 + $0xc0] sm:$0xff] %v12097
      %12162 = vst.msk [vmem:[%s398 + $0xc8] sm:$0xff] %vm3361, %v12098
      %12163 = vst [vmem:[%s398 + $0xd0] sm:$0xff] %v12099
      %12164 = vst.msk [vmem:[%s398 + $0xd8] sm:$0xff] %vm3361, %v12100
      %12165 = vst [vmem:[%s398 + $0xe0] sm:$0xff] %v12101
      %12166 = vst.msk [vmem:[%s398 + $0xe8] sm:$0xff] %vm3361, %v12102
      %12167 = vst [vmem:[%s398 + $0xf0] sm:$0xff] %v12103
      %12168 = vst.msk [vmem:[%s398 + $0xf8] sm:$0xff] %vm3361, %v12104
      %12169 = vst [vmem:[%s398 + $0x100] sm:$0xff] %v12105
      %12170 = vst.msk [vmem:[%s398 + $0x108] sm:$0xff] %vm3361, %v12106
      %12171 = vst [vmem:[%s398 + $0x110] sm:$0xff] %v12107
      %12172 = vst.msk [vmem:[%s398 + $0x118] sm:$0xff] %vm3361, %v12108
      %12173 = vst [vmem:[%s398 + $0x120] sm:$0xff] %v12109
      %12174 = vst.msk [vmem:[%s398 + $0x128] sm:$0xff] %vm3361, %v12110
      %12175 = vst [vmem:[%s398 + $0x130] sm:$0xff] %v12111
      %12176 = vst.msk [vmem:[%s398 + $0x138] sm:$0xff] %vm3361, %v12112
      %12177 = vst [vmem:[%s398 + $0x140] sm:$0xff] %v12113
      %12178 = vst.msk [vmem:[%s398 + $0x148] sm:$0xff] %vm3361, %v12114
      %12179 = vst [vmem:[%s398 + $0x150] sm:$0xff] %v12115
      %12180 = vst.msk [vmem:[%s398 + $0x158] sm:$0xff] %vm3361, %v12116
      %12181 = vst [vmem:[%s398 + $0x160] sm:$0xff] %v12117
      %12182 = vst.msk [vmem:[%s398 + $0x168] sm:$0xff] %vm3361, %v12118
      %12183 = vst [vmem:[%s398 + $0x170] sm:$0xff] %v12119
      %12184 = vst.msk [vmem:[%s398 + $0x178] sm:$0xff] %vm3361, %v12120
      %12185 = vst [vmem:[%s398 + $0x180] sm:$0xff] %v12121
      %12186 = vst.msk [vmem:[%s398 + $0x188] sm:$0xff] %vm3361, %v12122
      %12187 = vst [vmem:[%s398 + $0x190] sm:$0xff] %v12123
      %12188 = vst.msk [vmem:[%s398 + $0x198] sm:$0xff] %vm3361, %v12124
      %12189 = vst [vmem:[%s398 + $0x1a0] sm:$0xff] %v12125
      %12190 = vst.msk [vmem:[%s398 + $0x1a8] sm:$0xff] %vm3361, %v12126
      %12191 = vst [vmem:[%s398 + $0x1b0] sm:$0xff] %v12127
      %12192 = vst.msk [vmem:[%s398 + $0x1b8] sm:$0xff] %vm3361, %v12128
      %12193 = vst [vmem:[%s398 + $0x1c0] sm:$0xff] %v12129
      %12194 = vst.msk [vmem:[%s398 + $0x1c8] sm:$0xff] %vm3361, %v12130
      %12195 = vst [vmem:[%s398 + $0x1d0] sm:$0xff] %v12131
      %12196 = vst.msk [vmem:[%s398 + $0x1d8] sm:$0xff] %vm3361, %v12132
      %12197 = vst [vmem:[%s398 + $0x1e0] sm:$0xff] %v12133
      %12198 = vst.msk [vmem:[%s398 + $0x1e8] sm:$0xff] %vm3361, %v12134
      %12199 = vst [vmem:[%s398 + $0x1f0] sm:$0xff] %v12135
      %12200 = vst.msk [vmem:[%s398 + $0x1f8] sm:$0xff] %vm3361, %v12136
      %s12201 = smul.u32 32, %s18
      %p12202 = scmp.lt.s32.totalorder %s12201, 127
      %s12203 = scalar_select %p12202, %s12201, 127
      %s12204 = smul.addr %s12203, 2
      %s12205 = smul.addr %s12204, 8
      %s12206 = scalar_lea.vmem %s7, %s12205
      // Predicated region
      $region49: #{forward.1} parent=47 // pred_check
        %p12207 = pneg %p213
      $region50: #{forward.1} parent=47 // pred_check_branch
        %12209 = sbr.rel (%p12207) target = $region52
      $region51: #{forward.1} parent=47 // pred_region
        %s12210 = smul.u32 32, %s18
      $region52: #{forward.1} parent=47 // pred_fallthru
        _
    $region48: #{forward.1} parent=5 // pred_fallthru
      _
    %p12211 = scmp.le.s32.totalorder 2, %s13
    // Predicated region
    $region53: #{forward.1} parent=5 // pred_check
      %p12212 = pneg %p12211
    $region54: #{forward.1} parent=5 // pred_check_branch
      %12214 = sbr.rel (%p12212) target = $region56
    $region55: #{forward.1} parent=5 // pred_region
      %s12215 = ssub.s32 %s13, 2
      // Predicated region
      $region57: #{forward.1} parent=55 // pred_check
        %p12216 = pneg %p219
      $region58: #{forward.1} parent=55 // pred_check_branch
        %12218 = sbr.rel (%p12216) target = $region60
      $region59: #{forward.1} parent=55 // pred_region
        %s12219 = smul.u32 32, %s19
        %p12220 = scmp.lt.s32.totalorder %s12219, 127
        %s12221 = scalar_select %p12220, %s12219, 127
        %s12222 = smul.addr %s12221, 2
        %s12223 = smul.addr %s12222, 8
        %s12224 = scalar_lea.vmem %s7, %s12223
      $region60: #{forward.1} parent=55 // pred_fallthru
        _
    $region56: #{forward.1} parent=5 // pred_fallthru
      _
  $region6: #{forward.1} parent=0 // loop_footer
    %s17 = sadd.s32 1, %s13
  $region7: #{forward.1} parent=0 // loop_footer_branch
    %12 = sbr.rel target = $region3
  $region8: #{forward.1} parent=0 // loop_exit
    _

</llo_original>
